<compile_context>
chip_gen: v6e
topology: v6e:2x2x1
jax: 0.10.0
libtpu: 0.0.40
codegen_flags: <defaults>
</compile_context>

<pallas_src>
import functools

import jax
import jax.numpy as jnp
from jax.experimental import pallas as pl
from jax.experimental.pallas import tpu as pltpu

LANE = 128
SUBLANE = 8


def _round_up(x, m):
    return (x + m - 1) // m * m


def _cdiv(a, b):
    return (a + b - 1) // b


def _chunks(total, size):
    """Static (start, length) chunks covering [0, total)."""
    out, c = [], 0
    while c < total:
        n = min(size, total - c)
        out.append((c, n))
        c += n
    return out


def _shift_rows(v, k):
    """Flat-window shift: returns s with s[p] = v[p + k] (axis 0).

    The k wrapped rows at the end hold don't-care values that are only read
    for discarded (junk) output columns.  Lowered as two static slices + a
    concatenate (a sublane-shift relayout); `pltpu.roll(v, m - k, axis=0)` is
    the XLU-slot alternative.  Callers pass f32 values only.
    """
    if k == 0:
        return v
    return jnp.concatenate((v[k:], v[:k]), axis=0)


# --------------------------------------------------------------------------- #
# Fused kernel: conv3x3 -> (folded BN) -> ReLU -> conv3x3 -> (folded BN) -> ReLU
# for one (batch, row-tile) block.
# --------------------------------------------------------------------------- #
def _double_conv_kernel(x_main, x_halo, w1, b1, w2, b2, o_ref, win1, win2,
                        *, TH, H, W, Wa, Wo):
    """
    x_main: (1, TH, Wa, Cinp)   bf16  padded-input rows [r*TH, r*TH+TH)
    x_halo: (1, 4,  Wa, Cinp)   bf16  padded-input rows [r*TH+TH, r*TH+TH+4)
    w1:     (3, 3*Cinp, Cmidp)  bf16  ky-major, kx folded into K, BN folded
    b1:     (1, Cmidp)          f32
    w2:     (3, 3*Cmidp, Coutp) bf16
    b2:     (1, Coutp)          f32
    o_ref:  (1, TH, Wo, Coutp)
    win1:   ((TH+4)*Wa, 3*Cinp)  bf16  conv1 window  (im2col over kx)
    win2:   ((TH+2)*Wa, 3*Cmidp) bf16  conv1 output == conv2 window
    """
    Cinp = x_main.shape[-1]
    Cmidp = w1.shape[-1]
    Coutp = o_ref.shape[-1]
    r = pl.program_id(1)

    # Row-chunk sizes keeping (bf16 LHS patch + f32 register accumulator) under
    # ~half the 256 KiB vreg file, so each chunk's 3 ky-matmuls accumulate in
    # registers and the result is written exactly once.
    def rows_for(k_lanes, o_lanes):
        return max(1, min(8, (128 * 1024) // (Wa * (2 * k_lanes + 4 * o_lanes))))

    rc_build = max(1, min(8, (128 * 1024) // (Wa * Cinp * 8)))
    rc1 = rows_for(3 * Cinp, Cmidp)
    rc2 = rows_for(3 * Cmidp, Coutp)

    # ---- Stage 1: build conv1's window (kx folded into 128-lane blocks) ----
    def build(dst_row, src_ref, src_row, nrows):
        m = nrows * Wa
        v16 = src_ref[0, src_row:src_row + nrows, :, :].reshape(m, Cinp)
        v32 = v16.astype(jnp.float32)
        d0 = dst_row * Wa
        for kx in range(3):
            blk = v16 if kx == 0 else _shift_rows(v32, kx).astype(jnp.bfloat16)
            win1[d0:d0 + m, kx * Cinp:(kx + 1) * Cinp] = blk

    for c0, n in _chunks(TH, rc_build):
        build(c0, x_main, c0, n)
    for c0, n in _chunks(4, min(rc_build, 4)):
        build(TH + c0, x_halo, c0, n)

    # conv1-output buffer position (i, j) <-> image (row r*TH + i - 1, col j - 1).
    col_img = jax.lax.broadcasted_iota(jnp.int32, (1, Wa, 1), 1) - 1
    col_ok = jnp.logical_and(col_img >= 0, col_img < W)
    row0 = r * TH - 1

    # ---- Stage 2: conv1 + bias + ReLU, masked to conv2's zero padding,
    #               written straight into conv2's window (never leaves VMEM) --
    for c0, n in _chunks(TH + 2, rc1):
        m = n * Wa
        acc = None
        for ky in range(3):
            patch = win1[(c0 + ky) * Wa:(c0 + ky) * Wa + m, :]      # aligned
            part = jnp.dot(patch, w1[ky], preferred_element_type=jnp.float32)
            acc = part if acc is None else acc + part
        y = jnp.maximum(acc + b1[...], 0.0).reshape(n, Wa, Cmidp)
        row_img = row0 + c0 + jax.lax.broadcasted_iota(jnp.int32, (n, 1, 1), 0)
        ok = jnp.logical_and(jnp.logical_and(row_img >= 0, row_img < H), col_ok)
        y32 = jnp.where(ok, y, 0.0).reshape(m, Cmidp)
        d0 = c0 * Wa
        for kx in range(3):
            win2[d0:d0 + m, kx * Cmidp:(kx + 1) * Cmidp] = (
                _shift_rows(y32, kx).astype(jnp.bfloat16))

    # ---- Stage 3: conv2 + bias + ReLU -> sublane-aligned output rows --------
    for c0, n in _chunks(TH, rc2):
        m = n * Wa
        acc = None
        for ky in range(3):
            patch = win2[(c0 + ky) * Wa:(c0 + ky) * Wa + m, :]      # aligned
            part = jnp.dot(patch, w2[ky], preferred_element_type=jnp.float32)
            acc = part if acc is None else acc + part
        y = jnp.maximum(acc + b2[...], 0.0).reshape(n, Wa, Coutp)
        o_ref[0, c0:c0 + n, :, :] = y[:, :Wo, :].astype(o_ref.dtype)


# --------------------------------------------------------------------------- #
# Wrapper: row-tiled pallas_call with the 4-row halo via a second BlockSpec.
# --------------------------------------------------------------------------- #
def _vmem_caps():
    """(tile-picker budget, vmem_limit_bytes) sized from the chip's VMEM."""
    try:
        cap = int(pltpu.get_tpu_info().vmem_capacity_bytes)
    except Exception:  # conservative fallback (v7x-sized)
        cap = 64 * 1024 * 1024
    budget = cap // 2
    limit = min(int(cap * 0.75), cap - (4 << 20))
    return budget, limit


def _pick_tile_h(N, H, Wa, Wo, cinp, cmidp, coutp, out_bytes, budget):
    """Largest row tile (multiple of 4) fitting the VMEM budget, preferring a
    grid deep enough (>= 8, then >= 4 steps) to feed both v7x TensorCores."""
    def cost(th):
        return (2 * th * Wa * cinp * 2            # main input block (x2 bufs)
                + 2 * 4 * Wa * cinp * 2           # halo block
                + 2 * 3 * 3 * cinp * cmidp * 2    # conv1 weights
                + 2 * 3 * 3 * cmidp * coutp * 2   # conv2 weights
                + 2 * (cmidp + coutp) * 4         # biases
                + 2 * th * Wo * coutp * out_bytes # output block
                + (th + 4) * Wa * 3 * cinp * 2    # win1 scratch
                + (th + 2) * Wa * 3 * cmidp * 2)  # win2 scratch

    cap = max(4, min(_round_up(H, 4), 64))
    fitting = [th for th in range(4, cap + 1, 4) if cost(th) <= budget]
    if not fitting:
        return 4
    key = lambda th: (H % th == 0, th)
    for min_steps in (8, 4, 2, 1):
        cands = [th for th in fitting if th >= 8 and N * _cdiv(H, th) >= min_steps]
        if cands:
            return max(cands, key=key)
    return max(fitting, key=key)


def double_conv_fused(xp, w1, b1, w2, b2, *, H, W, TH, Wo, out_dtype, vmem_limit):
    N, hp4, Wa, Cinp = xp.shape
    Hp = hp4 - 4
    Cmidp = w1.shape[-1]
    Coutp = w2.shape[-1]
    kernel = functools.partial(_double_conv_kernel, TH=TH, H=H, W=W, Wa=Wa, Wo=Wo)

    return pl.pallas_call(
        kernel,
        out_shape=jax.ShapeDtypeStruct((N, Hp, Wo, Coutp), out_dtype),
        grid=(N, Hp // TH),
        in_specs=[
            # main row-tile: padded rows [r*TH, r*TH+TH)
            pl.BlockSpec((1, TH, Wa, Cinp), lambda b, r: (b, r, 0, 0)),
            # 4-row halo: padded rows [(r+1)*TH, (r+1)*TH + 4)
            pl.BlockSpec((1, 4, Wa, Cinp),
                         lambda b, r: (b, (r + 1) * (TH // 4), 0, 0)),
            pl.BlockSpec((3, 3 * Cinp, Cmidp), lambda b, r: (0, 0, 0)),
            pl.BlockSpec((1, Cmidp), lambda b, r: (0, 0)),
            pl.BlockSpec((3, 3 * Cmidp, Coutp), lambda b, r: (0, 0, 0)),
            pl.BlockSpec((1, Coutp), lambda b, r: (0, 0)),
        ],
        out_specs=pl.BlockSpec((1, TH, Wo, Coutp), lambda b, r: (b, r, 0, 0)),
        scratch_shapes=[
            pltpu.VMEM(((TH + 4) * Wa, 3 * Cinp), jnp.bfloat16),   # conv1 window
            pltpu.VMEM(((TH + 2) * Wa, 3 * Cmidp), jnp.bfloat16),  # conv2 window
        ],
        compiler_params=pltpu.CompilerParams(
            dimension_semantics=("parallel", "parallel"),
            vmem_limit_bytes=vmem_limit,
        ),
    )(xp, xp, w1, b1, w2, b2)


# --------------------------------------------------------------------------- #
# Parameter prep: fold BN into conv, pad channels, fold kx into K.
# --------------------------------------------------------------------------- #
def fold_conv_bn(w_hwio, conv_b, gamma, beta, mean, var, eps=1e-5):
    scale = gamma / jnp.sqrt(var + eps)
    return w_hwio * scale[None, None, None, :], (conv_b - mean) * scale + beta


def _pack_conv(w_hwio_f32, bias_f32):
    """(3,3,cin,cout) -> (3, 3*cin_p, cout_p) bf16 (ky-major, kx folded into K)
    plus (1, cout_p) f32 bias; channels padded to 128-lane multiples."""
    kh, kw, cin, cout = w_hwio_f32.shape
    cinp, coutp = _round_up(cin, LANE), _round_up(cout, LANE)
    w = jnp.zeros((kh, kw, cinp, coutp), jnp.float32)
    w = w.at[:, :, :cin, :cout].set(w_hwio_f32)
    b = jnp.zeros((1, coutp), jnp.float32).at[0, :cout].set(bias_f32)
    return w.reshape(kh, kw * cinp, coutp).astype(jnp.bfloat16), b


def init_up_params(key, in_ch, out_ch, mid_ch):
    """Deterministic params mirroring up(in_ch, out_ch, mid_ch), eval-mode BN."""
    k1, k2, k3, k4 = jax.random.split(key, 4)
    w1 = jax.random.normal(k1, (3, 3, in_ch, mid_ch), jnp.float32) * 0.1
    w2 = jax.random.normal(k2, (3, 3, mid_ch, out_ch), jnp.float32) * 0.1
    cb1 = jax.random.normal(k3, (mid_ch,), jnp.float32) * 0.01
    cb2 = jax.random.normal(k4, (out_ch,), jnp.float32) * 0.01
    ones_m, zeros_m = jnp.ones((mid_ch,)), jnp.zeros((mid_ch,))
    ones_o, zeros_o = jnp.ones((out_ch,)), jnp.zeros((out_ch,))
    # eval mode: running_mean=0, running_var=1, gamma=1, beta=0
    w1f, b1f = fold_conv_bn(w1, cb1, ones_m, zeros_m, zeros_m, ones_m)
    w2f, b2f = fold_conv_bn(w2, cb2, ones_o, zeros_o, zeros_o, ones_o)
    w1p, b1p = _pack_conv(w1f, b1f)
    w2p, b2p = _pack_conv(w2f, b2f)
    params = {"w1": w1p, "b1": b1p, "w2": w2p, "b2": b2p}
    ref_params = {"w1": w1f, "b1": b1f, "w2": w2f, "b2": b2f}
    return params, ref_params


# --------------------------------------------------------------------------- #
# Forward pass (Pallas) and pure-JAX reference.
# --------------------------------------------------------------------------- #
@functools.partial(jax.jit, static_argnames=("out_ch",))
def up_forward(params, x1, x2=None, x3=None, *, out_ch):
    """Pallas equivalent of up.forward (NHWC in / NHWC out), eval-mode BN."""
    w1, b1, w2, b2 = params["w1"], params["b1"], params["w2"], params["b2"]
    cinp = w1.shape[1] // 3
    cmidp, coutp = w1.shape[-1], w2.shape[-1]

    # Nearest-upsample + skip concat (fused by XLA with the pad/cast below).
    x1u = jnp.repeat(jnp.repeat(x1, 2, axis=1), 2, axis=2)
    parts = [p for p in (x2, x3) if p is not None] + [x1u]
    x = parts[0] if len(parts) == 1 else jnp.concatenate(parts, axis=-1)
    N, H, W, C = x.shape

    Wa = _round_up(W + 4, SUBLANE)   # conv1-window width (2-col halo each side)
    Wo = _round_up(W, SUBLANE)       # sublane-aligned stored output width
    budget, vmem_limit = _vmem_caps()
    TH = _pick_tile_h(N, H, Wa, Wo, cinp, cmidp, coutp, 4, budget)
    Hp = _round_up(H, TH)

    # Single prep pass: bf16 cast + 2-row/2-col zero halo + channel pad.
    xp = jnp.pad(x.astype(jnp.bfloat16),
                 ((0, 0), (2, Hp + 2 - H), (2, Wa - W - 2), (0, cinp - C)))

    y = double_conv_fused(xp, w1, b1, w2, b2, H=H, W=W, TH=TH, Wo=Wo,
                          out_dtype=jnp.float32, vmem_limit=vmem_limit)
    return y[:, :H, :W, :out_ch]


def _conv3x3_bn_relu_ref(x, w_hwio, bias):
    y = jax.lax.conv_general_dilated(
        x, w_hwio, window_strides=(1, 1), padding="SAME",
        dimension_numbers=("NHWC", "HWIO", "NHWC"))
    return jnp.maximum(y + bias, 0.0)


def up_forward_ref(ref_params, x1, x2=None, x3=None):
    x1u = jnp.repeat(jnp.repeat(x1, 2, axis=1), 2, axis=2)
    parts = [p for p in (x2, x3) if p is not None] + [x1u]
    x = parts[0] if len(parts) == 1 else jnp.concatenate(parts, axis=-1)
    h = _conv3x3_bn_relu_ref(x, ref_params["w1"], ref_params["b1"])
    return _conv3x3_bn_relu_ref(h, ref_params["w2"], ref_params["b2"])


if __name__ == "__main__":
    key = jax.random.PRNGKey(0)
    kx1, kx2, kp = jax.random.split(key, 3)

    # x1 (N=2, 8, 8, 4) -> upsampled to 16x16, concatenated with skip x2
    # (N=2, 16, 16, 4)  ->  in_ch = 8, mid_ch = 16, out_ch = 8.
    N, H1, W1, c1, c2 = 2, 8, 8, 4, 4
    in_ch, mid_ch, out_ch = c1 + c2, 16, 8

    x1 = jax.random.normal(kx1, (N, H1, W1, c1), jnp.float32)
    x2 = jax.random.normal(kx2, (N, 2 * H1, 2 * W1, c2), jnp.float32)

    params, ref_params = init_up_params(kp, in_ch, out_ch, mid_ch)

    out = jax.block_until_ready(up_forward(params, x1, x2, out_ch=out_ch))
    assert out.shape == (N, 2 * H1, 2 * W1, out_ch), out.shape

    ref = jax.block_until_ready(up_forward_ref(ref_params, x1, x2))
    err = float(jnp.max(jnp.abs(out - ref)))
    scale = float(jnp.max(jnp.abs(ref)))
    assert err <= 5e-2 + 5e-2 * scale, f"max abs err {err} (ref max {scale})"

    print("KERNEL_OK")
</pallas_src>

<mosaic_0001>
module attributes {stable_mosaic.version = 11 : i64} {
  func.func @_double_conv_kernel(%arg0: i32, %arg1: i32, %arg2: memref<1x8x24x128xbf16, #tpu.memory_space<vmem>>, %arg3: memref<1x4x24x128xbf16, #tpu.memory_space<vmem>>, %arg4: memref<3x384x128xbf16, #tpu.memory_space<vmem>>, %arg5: memref<1x128xf32, #tpu.memory_space<vmem>>, %arg6: memref<3x384x128xbf16, #tpu.memory_space<vmem>>, %arg7: memref<1x128xf32, #tpu.memory_space<vmem>>, %arg8: memref<1x8x16x128xf32, #tpu.memory_space<vmem>>, %arg9: memref<288x384xbf16, #tpu.memory_space<vmem>>, %arg10: memref<240x384xbf16, #tpu.memory_space<vmem>>) attributes {dimension_semantics = [#tpu.dimension_semantics<parallel>, #tpu.dimension_semantics<parallel>], iteration_bounds = array<i64: 2, 2>, scalar_prefetch = 0 : i64, scratch_operands = 2 : i64, tpu.core_type = #tpu.core_type<tc>, window_params = [{transform_indices = @transform_0, window_bounds = array<i64: 1, 8, 24, 128>}, {transform_indices = @transform_1, window_bounds = array<i64: 1, 4, 24, 128>}, {pipeline_mode = #tpu.pipeline_mode<synchronous>, transform_indices = @transform_2, window_bounds = array<i64: 3, 384, 128>}, {pipeline_mode = #tpu.pipeline_mode<synchronous>, transform_indices = @transform_3, window_bounds = array<i64: 1, 128>}, {pipeline_mode = #tpu.pipeline_mode<synchronous>, transform_indices = @transform_4, window_bounds = array<i64: 3, 384, 128>}, {pipeline_mode = #tpu.pipeline_mode<synchronous>, transform_indices = @transform_5, window_bounds = array<i64: 1, 128>}, {transform_indices = @transform_6, window_bounds = array<i64: 1, 8, 16, 128>}]} {
    %c0 = arith.constant 0 : index
    %c0_0 = arith.constant 0 : index
    %c0_1 = arith.constant 0 : index
    %c0_2 = arith.constant 0 : index
    %0 = vector.load %arg2[%c0, %c0_0, %c0_1, %c0_2] : memref<1x8x24x128xbf16, #tpu.memory_space<vmem>>, vector<1x5x24x128xbf16>
    %1 = vector.shape_cast %0 : vector<1x5x24x128xbf16> to vector<5x24x128xbf16>
    %2 = vector.shape_cast %1 : vector<5x24x128xbf16> to vector<120x128xbf16>
    %3 = arith.extf %2 : vector<120x128xbf16> to vector<120x128xf32>
    %c0_3 = arith.constant 0 : index
    %c0_4 = arith.constant 0 : index
    %4 = vector.load %arg9[%c0_3, %c0_4] : memref<288x384xbf16, #tpu.memory_space<vmem>>, vector<120x128xbf16>
    tpu.vector_store %arg9[%c0_3, %c0_4], %2 {strides = array<i32>} : memref<288x384xbf16, #tpu.memory_space<vmem>>, vector<120x128xbf16>,
    %5 = vector.extract_strided_slice %3 {offsets = [1, 0], sizes = [119, 128], strides = [1, 1]} : vector<120x128xf32> to vector<119x128xf32>
    %6 = vector.extract_strided_slice %3 {offsets = [0, 0], sizes = [1, 128], strides = [1, 1]} : vector<120x128xf32> to vector<1x128xf32>
    %7 = tpu.concatenate %5, %6 in 0 : vector<119x128xf32>, vector<1x128xf32> -> vector<120x128xf32>
    %8 = arith.truncf %7 : vector<120x128xf32> to vector<120x128xbf16>
    %c0_5 = arith.constant 0 : index
    %c128 = arith.constant 128 : index
    %9 = vector.load %arg9[%c0_5, %c128] : memref<288x384xbf16, #tpu.memory_space<vmem>>, vector<120x128xbf16>
    tpu.vector_store %arg9[%c0_5, %c128], %8 {strides = array<i32>} : memref<288x384xbf16, #tpu.memory_space<vmem>>, vector<120x128xbf16>,
    %10 = vector.extract_strided_slice %3 {offsets = [2, 0], sizes = [118, 128], strides = [1, 1]} : vector<120x128xf32> to vector<118x128xf32>
    %11 = vector.extract_strided_slice %3 {offsets = [0, 0], sizes = [2, 128], strides = [1, 1]} : vector<120x128xf32> to vector<2x128xf32>
    %12 = tpu.concatenate %10, %11 in 0 : vector<118x128xf32>, vector<2x128xf32> -> vector<120x128xf32>
    %13 = arith.truncf %12 : vector<120x128xf32> to vector<120x128xbf16>
    %c0_6 = arith.constant 0 : index
    %c256 = arith.constant 256 : index
    %14 = vector.load %arg9[%c0_6, %c256] : memref<288x384xbf16, #tpu.memory_space<vmem>>, vector<120x128xbf16>
    tpu.vector_store %arg9[%c0_6, %c256], %13 {strides = array<i32>} : memref<288x384xbf16, #tpu.memory_space<vmem>>, vector<120x128xbf16>,
    %c0_7 = arith.constant 0 : index
    %c5 = arith.constant 5 : index
    %c0_8 = arith.constant 0 : index
    %c0_9 = arith.constant 0 : index
    %15 = vector.load %arg2[%c0_7, %c5, %c0_8, %c0_9] : memref<1x8x24x128xbf16, #tpu.memory_space<vmem>>, vector<1x3x24x128xbf16>
    %16 = vector.shape_cast %15 : vector<1x3x24x128xbf16> to vector<3x24x128xbf16>
    %17 = vector.shape_cast %16 : vector<3x24x128xbf16> to vector<72x128xbf16>
    %18 = arith.extf %17 : vector<72x128xbf16> to vector<72x128xf32>
    %c120 = arith.constant 120 : index
    %c0_10 = arith.constant 0 : index
    %19 = vector.load %arg9[%c120, %c0_10] : memref<288x384xbf16, #tpu.memory_space<vmem>>, vector<72x128xbf16>
    tpu.vector_store %arg9[%c120, %c0_10], %17 {strides = array<i32>} : memref<288x384xbf16, #tpu.memory_space<vmem>>, vector<72x128xbf16>,
    %20 = vector.extract_strided_slice %18 {offsets = [1, 0], sizes = [71, 128], strides = [1, 1]} : vector<72x128xf32> to vector<71x128xf32>
    %21 = vector.extract_strided_slice %18 {offsets = [0, 0], sizes = [1, 128], strides = [1, 1]} : vector<72x128xf32> to vector<1x128xf32>
    %22 = tpu.concatenate %20, %21 in 0 : vector<71x128xf32>, vector<1x128xf32> -> vector<72x128xf32>
    %23 = arith.truncf %22 : vector<72x128xf32> to vector<72x128xbf16>
    %c120_11 = arith.constant 120 : index
    %c128_12 = arith.constant 128 : index
    %24 = vector.load %arg9[%c120_11, %c128_12] : memref<288x384xbf16, #tpu.memory_space<vmem>>, vector<72x128xbf16>
    tpu.vector_store %arg9[%c120_11, %c128_12], %23 {strides = array<i32>} : memref<288x384xbf16, #tpu.memory_space<vmem>>, vector<72x128xbf16>,
    %25 = vector.extract_strided_slice %18 {offsets = [2, 0], sizes = [70, 128], strides = [1, 1]} : vector<72x128xf32> to vector<70x128xf32>
    %26 = vector.extract_strided_slice %18 {offsets = [0, 0], sizes = [2, 128], strides = [1, 1]} : vector<72x128xf32> to vector<2x128xf32>
    %27 = tpu.concatenate %25, %26 in 0 : vector<70x128xf32>, vector<2x128xf32> -> vector<72x128xf32>
    %28 = arith.truncf %27 : vector<72x128xf32> to vector<72x128xbf16>
    %c120_13 = arith.constant 120 : index
    %c256_14 = arith.constant 256 : index
    %29 = vector.load %arg9[%c120_13, %c256_14] : memref<288x384xbf16, #tpu.memory_space<vmem>>, vector<72x128xbf16>
    tpu.vector_store %arg9[%c120_13, %c256_14], %28 {strides = array<i32>} : memref<288x384xbf16, #tpu.memory_space<vmem>>, vector<72x128xbf16>,
    %c0_15 = arith.constant 0 : index
    %c0_16 = arith.constant 0 : index
    %c0_17 = arith.constant 0 : index
    %c0_18 = arith.constant 0 : index
    %30 = vector.load %arg3[%c0_15, %c0_16, %c0_17, %c0_18] : memref<1x4x24x128xbf16, #tpu.memory_space<vmem>>, vector<1x4x24x128xbf16>
    %31 = vector.shape_cast %30 : vector<1x4x24x128xbf16> to vector<4x24x128xbf16>
    %32 = vector.shape_cast %31 : vector<4x24x128xbf16> to vector<96x128xbf16>
    %33 = arith.extf %32 : vector<96x128xbf16> to vector<96x128xf32>
    %c192 = arith.constant 192 : index
    %c0_19 = arith.constant 0 : index
    %34 = vector.load %arg9[%c192, %c0_19] : memref<288x384xbf16, #tpu.memory_space<vmem>>, vector<96x128xbf16>
    tpu.vector_store %arg9[%c192, %c0_19], %32 {strides = array<i32>} : memref<288x384xbf16, #tpu.memory_space<vmem>>, vector<96x128xbf16>,
    %35 = vector.extract_strided_slice %33 {offsets = [1, 0], sizes = [95, 128], strides = [1, 1]} : vector<96x128xf32> to vector<95x128xf32>
    %36 = vector.extract_strided_slice %33 {offsets = [0, 0], sizes = [1, 128], strides = [1, 1]} : vector<96x128xf32> to vector<1x128xf32>
    %37 = tpu.concatenate %35, %36 in 0 : vector<95x128xf32>, vector<1x128xf32> -> vector<96x128xf32>
    %38 = arith.truncf %37 : vector<96x128xf32> to vector<96x128xbf16>
    %c192_20 = arith.constant 192 : index
    %c128_21 = arith.constant 128 : index
    %39 = vector.load %arg9[%c192_20, %c128_21] : memref<288x384xbf16, #tpu.memory_space<vmem>>, vector<96x128xbf16>
    tpu.vector_store %arg9[%c192_20, %c128_21], %38 {strides = array<i32>} : memref<288x384xbf16, #tpu.memory_space<vmem>>, vector<96x128xbf16>,
    %40 = vector.extract_strided_slice %33 {offsets = [2, 0], sizes = [94, 128], strides = [1, 1]} : vector<96x128xf32> to vector<94x128xf32>
    %41 = vector.extract_strided_slice %33 {offsets = [0, 0], sizes = [2, 128], strides = [1, 1]} : vector<96x128xf32> to vector<2x128xf32>
    %42 = tpu.concatenate %40, %41 in 0 : vector<94x128xf32>, vector<2x128xf32> -> vector<96x128xf32>
    %43 = arith.truncf %42 : vector<96x128xf32> to vector<96x128xbf16>
    %c192_22 = arith.constant 192 : index
    %c256_23 = arith.constant 256 : index
    %44 = vector.load %arg9[%c192_22, %c256_23] : memref<288x384xbf16, #tpu.memory_space<vmem>>, vector<96x128xbf16>
    tpu.vector_store %arg9[%c192_22, %c256_23], %43 {strides = array<i32>} : memref<288x384xbf16, #tpu.memory_space<vmem>>, vector<96x128xbf16>,
    %45 = tpu.iota {dimensions = array<i32: 1>} : vector<1x24x1xi32>
    %c1_i32 = arith.constant 1 : i32
    %46 = vector.broadcast %c1_i32 : i32 to vector<1x24x1xi32>
    %47 = arith.subi %45, %46 : vector<1x24x1xi32>
    %c0_i32 = arith.constant 0 : i32
    %48 = vector.broadcast %c0_i32 : i32 to vector<1x24x1xi32>
    %49 = arith.cmpi sge, %47, %48 : vector<1x24x1xi32>
    %c16_i32 = arith.constant 16 : i32
    %50 = vector.broadcast %c16_i32 : i32 to vector<1x24x1xi32>
    %51 = arith.cmpi slt, %47, %50 : vector<1x24x1xi32>
    %52 = arith.andi %49, %51 : vector<1x24x1xi1>
    %c8_i32 = arith.constant 8 : i32
    %53 = arith.muli %arg1, %c8_i32 : i32
    %c1_i32_24 = arith.constant 1 : i32
    %54 = arith.subi %53, %c1_i32_24 : i32
    %c0_25 = arith.constant 0 : index
    %c0_26 = arith.constant 0 : index
    %55 = vector.load %arg9[%c0_25, %c0_26] : memref<288x384xbf16, #tpu.memory_space<vmem>>, vector<96x384xbf16>
    %c0_27 = arith.constant 0 : index
    %c0_28 = arith.constant 0 : index
    %c0_29 = arith.constant 0 : index
    %56 = vector.load %arg4[%c0_27, %c0_28, %c0_29] : memref<3x384x128xbf16, #tpu.memory_space<vmem>>, vector<1x384x128xbf16>
    %57 = vector.shape_cast %56 : vector<1x384x128xbf16> to vector<384x128xbf16>
    %cst = arith.constant dense<0.000000e+00> : vector<96x128xf32>
    %58 = tpu.matmul %55, %57, %cst {dimension_numbers = #tpu.dot_dimension_numbers<[1], [0], [0], [1], [0, 0, 1, 1], [], []>} : vector<96x384xbf16>, vector<384x128xbf16>, vector<96x128xf32> -> vector<96x128xf32>
    %c24 = arith.constant 24 : index
    %c0_30 = arith.constant 0 : index
    %59 = vector.load %arg9[%c24, %c0_30] : memref<288x384xbf16, #tpu.memory_space<vmem>>, vector<96x384xbf16>
    %c1 = arith.constant 1 : index
    %c0_31 = arith.constant 0 : index
    %c0_32 = arith.constant 0 : index
    %60 = vector.load %arg4[%c1, %c0_31, %c0_32] : memref<3x384x128xbf16, #tpu.memory_space<vmem>>, vector<1x384x128xbf16>
    %61 = vector.shape_cast %60 : vector<1x384x128xbf16> to vector<384x128xbf16>
    %cst_33 = arith.constant dense<0.000000e+00> : vector<96x128xf32>
    %62 = tpu.matmul %59, %61, %cst_33 {dimension_numbers = #tpu.dot_dimension_numbers<[1], [0], [0], [1], [0, 0, 1, 1], [], []>} : vector<96x384xbf16>, vector<384x128xbf16>, vector<96x128xf32> -> vector<96x128xf32>
    %63 = arith.addf %58, %62 : vector<96x128xf32>
    %c48 = arith.constant 48 : index
    %c0_34 = arith.constant 0 : index
    %64 = vector.load %arg9[%c48, %c0_34] : memref<288x384xbf16, #tpu.memory_space<vmem>>, vector<96x384xbf16>
    %c2 = arith.constant 2 : index
    %c0_35 = arith.constant 0 : index
    %c0_36 = arith.constant 0 : index
    %65 = vector.load %arg4[%c2, %c0_35, %c0_36] : memref<3x384x128xbf16, #tpu.memory_space<vmem>>, vector<1x384x128xbf16>
    %66 = vector.shape_cast %65 : vector<1x384x128xbf16> to vector<384x128xbf16>
    %cst_37 = arith.constant dense<0.000000e+00> : vector<96x128xf32>
    %67 = tpu.matmul %64, %66, %cst_37 {dimension_numbers = #tpu.dot_dimension_numbers<[1], [0], [0], [1], [0, 0, 1, 1], [], []>} : vector<96x384xbf16>, vector<384x128xbf16>, vector<96x128xf32> -> vector<96x128xf32>
    %68 = arith.addf %63, %67 : vector<96x128xf32>
    %c0_38 = arith.constant 0 : index
    %c0_39 = arith.constant 0 : index
    %69 = vector.load %arg5[%c0_38, %c0_39] : memref<1x128xf32, #tpu.memory_space<vmem>>, vector<1x128xf32>
    %70 = vector.broadcast %69 : vector<1x128xf32> to vector<96x128xf32>
    %71 = arith.addf %68, %70 : vector<96x128xf32>
    %cst_40 = arith.constant 0.000000e+00 : f32
    %72 = vector.broadcast %cst_40 : f32 to vector<96x128xf32>
    %73 = arith.maximumf %71, %72 : vector<96x128xf32>
    %74 = vector.shape_cast %73 : vector<96x128xf32> to vector<4x24x128xf32>
    %c0_i32_41 = arith.constant 0 : i32
    %75 = arith.addi %54, %c0_i32_41 : i32
    %76 = tpu.iota {dimensions = array<i32: 0>} : vector<4x1x1xi32>
    %77 = vector.broadcast %75 : i32 to vector<4x1x1xi32>
    %78 = arith.addi %77, %76 : vector<4x1x1xi32>
    %c0_i32_42 = arith.constant 0 : i32
    %79 = vector.broadcast %c0_i32_42 : i32 to vector<4x1x1xi32>
    %80 = arith.cmpi sge, %78, %79 : vector<4x1x1xi32>
    %c16_i32_43 = arith.constant 16 : i32
    %81 = vector.broadcast %c16_i32_43 : i32 to vector<4x1x1xi32>
    %82 = arith.cmpi slt, %78, %81 : vector<4x1x1xi32>
    %83 = arith.andi %80, %82 : vector<4x1x1xi1>
    %84 = vector.broadcast %83 : vector<4x1x1xi1> to vector<4x24x1xi1>
    %85 = vector.broadcast %52 : vector<1x24x1xi1> to vector<4x24x1xi1>
    %86 = arith.andi %84, %85 : vector<4x24x1xi1>
    %cst_44 = arith.constant 0.000000e+00 : f32
    %87 = vector.shape_cast %86 : vector<4x24x1xi1> to vector<4x24x1xi1>
    %88 = vector.broadcast %87 : vector<4x24x1xi1> to vector<4x24x128xi1>
    %89 = vector.broadcast %cst_44 : f32 to vector<4x24x128xf32>
    %90 = arith.select %88, %74, %89 : vector<4x24x128xi1>, vector<4x24x128xf32>
    %91 = vector.shape_cast %90 : vector<4x24x128xf32> to vector<96x128xf32>
    %92 = arith.truncf %91 : vector<96x128xf32> to vector<96x128xbf16>
    %c0_45 = arith.constant 0 : index
    %c0_46 = arith.constant 0 : index
    %93 = vector.load %arg10[%c0_45, %c0_46] : memref<240x384xbf16, #tpu.memory_space<vmem>>, vector<96x128xbf16>
    tpu.vector_store %arg10[%c0_45, %c0_46], %92 {strides = array<i32>} : memref<240x384xbf16, #tpu.memory_space<vmem>>, vector<96x128xbf16>,
    %94 = vector.extract_strided_slice %91 {offsets = [1, 0], sizes = [95, 128], strides = [1, 1]} : vector<96x128xf32> to vector<95x128xf32>
    %95 = vector.extract_strided_slice %91 {offsets = [0, 0], sizes = [1, 128], strides = [1, 1]} : vector<96x128xf32> to vector<1x128xf32>
    %96 = tpu.concatenate %94, %95 in 0 : vector<95x128xf32>, vector<1x128xf32> -> vector<96x128xf32>
    %97 = arith.truncf %96 : vector<96x128xf32> to vector<96x128xbf16>
    %c0_47 = arith.constant 0 : index
    %c128_48 = arith.constant 128 : index
    %98 = vector.load %arg10[%c0_47, %c128_48] : memref<240x384xbf16, #tpu.memory_space<vmem>>, vector<96x128xbf16>
    tpu.vector_store %arg10[%c0_47, %c128_48], %97 {strides = array<i32>} : memref<240x384xbf16, #tpu.memory_space<vmem>>, vector<96x128xbf16>,
    %99 = vector.extract_strided_slice %91 {offsets = [2, 0], sizes = [94, 128], strides = [1, 1]} : vector<96x128xf32> to vector<94x128xf32>
    %100 = vector.extract_strided_slice %91 {offsets = [0, 0], sizes = [2, 128], strides = [1, 1]} : vector<96x128xf32> to vector<2x128xf32>
    %101 = tpu.concatenate %99, %100 in 0 : vector<94x128xf32>, vector<2x128xf32> -> vector<96x128xf32>
    %102 = arith.truncf %101 : vector<96x128xf32> to vector<96x128xbf16>
    %c0_49 = arith.constant 0 : index
    %c256_50 = arith.constant 256 : index
    %103 = vector.load %arg10[%c0_49, %c256_50] : memref<240x384xbf16, #tpu.memory_space<vmem>>, vector<96x128xbf16>
    tpu.vector_store %arg10[%c0_49, %c256_50], %102 {strides = array<i32>} : memref<240x384xbf16, #tpu.memory_space<vmem>>, vector<96x128xbf16>,
    %c96 = arith.constant 96 : index
    %c0_51 = arith.constant 0 : index
    %104 = vector.load %arg9[%c96, %c0_51] : memref<288x384xbf16, #tpu.memory_space<vmem>>, vector<96x384xbf16>
    %c0_52 = arith.constant 0 : index
    %c0_53 = arith.constant 0 : index
    %c0_54 = arith.constant 0 : index
    %105 = vector.load %arg4[%c0_52, %c0_53, %c0_54] : memref<3x384x128xbf16, #tpu.memory_space<vmem>>, vector<1x384x128xbf16>
    %106 = vector.shape_cast %105 : vector<1x384x128xbf16> to vector<384x128xbf16>
    %cst_55 = arith.constant dense<0.000000e+00> : vector<96x128xf32>
    %107 = tpu.matmul %104, %106, %cst_55 {dimension_numbers = #tpu.dot_dimension_numbers<[1], [0], [0], [1], [0, 0, 1, 1], [], []>} : vector<96x384xbf16>, vector<384x128xbf16>, vector<96x128xf32> -> vector<96x128xf32>
    %c120_56 = arith.constant 120 : index
    %c0_57 = arith.constant 0 : index
    %108 = vector.load %arg9[%c120_56, %c0_57] : memref<288x384xbf16, #tpu.memory_space<vmem>>, vector<96x384xbf16>
    %c1_58 = arith.constant 1 : index
    %c0_59 = arith.constant 0 : index
    %c0_60 = arith.constant 0 : index
    %109 = vector.load %arg4[%c1_58, %c0_59, %c0_60] : memref<3x384x128xbf16, #tpu.memory_space<vmem>>, vector<1x384x128xbf16>
    %110 = vector.shape_cast %109 : vector<1x384x128xbf16> to vector<384x128xbf16>
    %cst_61 = arith.constant dense<0.000000e+00> : vector<96x128xf32>
    %111 = tpu.matmul %108, %110, %cst_61 {dimension_numbers = #tpu.dot_dimension_numbers<[1], [0], [0], [1], [0, 0, 1, 1], [], []>} : vector<96x384xbf16>, vector<384x128xbf16>, vector<96x128xf32> -> vector<96x128xf32>
    %112 = arith.addf %107, %111 : vector<96x128xf32>
    %c144 = arith.constant 144 : index
    %c0_62 = arith.constant 0 : index
    %113 = vector.load %arg9[%c144, %c0_62] : memref<288x384xbf16, #tpu.memory_space<vmem>>, vector<96x384xbf16>
    %c2_63 = arith.constant 2 : index
    %c0_64 = arith.constant 0 : index
    %c0_65 = arith.constant 0 : index
    %114 = vector.load %arg4[%c2_63, %c0_64, %c0_65] : memref<3x384x128xbf16, #tpu.memory_space<vmem>>, vector<1x384x128xbf16>
    %115 = vector.shape_cast %114 : vector<1x384x128xbf16> to vector<384x128xbf16>
    %cst_66 = arith.constant dense<0.000000e+00> : vector<96x128xf32>
    %116 = tpu.matmul %113, %115, %cst_66 {dimension_numbers = #tpu.dot_dimension_numbers<[1], [0], [0], [1], [0, 0, 1, 1], [], []>} : vector<96x384xbf16>, vector<384x128xbf16>, vector<96x128xf32> -> vector<96x128xf32>
    %117 = arith.addf %112, %116 : vector<96x128xf32>
    %c0_67 = arith.constant 0 : index
    %c0_68 = arith.constant 0 : index
    %118 = vector.load %arg5[%c0_67, %c0_68] : memref<1x128xf32, #tpu.memory_space<vmem>>, vector<1x128xf32>
    %119 = vector.broadcast %118 : vector<1x128xf32> to vector<96x128xf32>
    %120 = arith.addf %117, %119 : vector<96x128xf32>
    %cst_69 = arith.constant 0.000000e+00 : f32
    %121 = vector.broadcast %cst_69 : f32 to vector<96x128xf32>
    %122 = arith.maximumf %120, %121 : vector<96x128xf32>
    %123 = vector.shape_cast %122 : vector<96x128xf32> to vector<4x24x128xf32>
    %c4_i32 = arith.constant 4 : i32
    %124 = arith.addi %54, %c4_i32 : i32
    %125 = tpu.iota {dimensions = array<i32: 0>} : vector<4x1x1xi32>
    %126 = vector.broadcast %124 : i32 to vector<4x1x1xi32>
    %127 = arith.addi %126, %125 : vector<4x1x1xi32>
    %c0_i32_70 = arith.constant 0 : i32
    %128 = vector.broadcast %c0_i32_70 : i32 to vector<4x1x1xi32>
    %129 = arith.cmpi sge, %127, %128 : vector<4x1x1xi32>
    %c16_i32_71 = arith.constant 16 : i32
    %130 = vector.broadcast %c16_i32_71 : i32 to vector<4x1x1xi32>
    %131 = arith.cmpi slt, %127, %130 : vector<4x1x1xi32>
    %132 = arith.andi %129, %131 : vector<4x1x1xi1>
    %133 = vector.broadcast %132 : vector<4x1x1xi1> to vector<4x24x1xi1>
    %134 = vector.broadcast %52 : vector<1x24x1xi1> to vector<4x24x1xi1>
    %135 = arith.andi %133, %134 : vector<4x24x1xi1>
    %cst_72 = arith.constant 0.000000e+00 : f32
    %136 = vector.shape_cast %135 : vector<4x24x1xi1> to vector<4x24x1xi1>
    %137 = vector.broadcast %136 : vector<4x24x1xi1> to vector<4x24x128xi1>
    %138 = vector.broadcast %cst_72 : f32 to vector<4x24x128xf32>
    %139 = arith.select %137, %123, %138 : vector<4x24x128xi1>, vector<4x24x128xf32>
    %140 = vector.shape_cast %139 : vector<4x24x128xf32> to vector<96x128xf32>
    %141 = arith.truncf %140 : vector<96x128xf32> to vector<96x128xbf16>
    %c96_73 = arith.constant 96 : index
    %c0_74 = arith.constant 0 : index
    %142 = vector.load %arg10[%c96_73, %c0_74] : memref<240x384xbf16, #tpu.memory_space<vmem>>, vector<96x128xbf16>
    tpu.vector_store %arg10[%c96_73, %c0_74], %141 {strides = array<i32>} : memref<240x384xbf16, #tpu.memory_space<vmem>>, vector<96x128xbf16>,
    %143 = vector.extract_strided_slice %140 {offsets = [1, 0], sizes = [95, 128], strides = [1, 1]} : vector<96x128xf32> to vector<95x128xf32>
    %144 = vector.extract_strided_slice %140 {offsets = [0, 0], sizes = [1, 128], strides = [1, 1]} : vector<96x128xf32> to vector<1x128xf32>
    %145 = tpu.concatenate %143, %144 in 0 : vector<95x128xf32>, vector<1x128xf32> -> vector<96x128xf32>
    %146 = arith.truncf %145 : vector<96x128xf32> to vector<96x128xbf16>
    %c96_75 = arith.constant 96 : index
    %c128_76 = arith.constant 128 : index
    %147 = vector.load %arg10[%c96_75, %c128_76] : memref<240x384xbf16, #tpu.memory_space<vmem>>, vector<96x128xbf16>
    tpu.vector_store %arg10[%c96_75, %c128_76], %146 {strides = array<i32>} : memref<240x384xbf16, #tpu.memory_space<vmem>>, vector<96x128xbf16>,
    %148 = vector.extract_strided_slice %140 {offsets = [2, 0], sizes = [94, 128], strides = [1, 1]} : vector<96x128xf32> to vector<94x128xf32>
    %149 = vector.extract_strided_slice %140 {offsets = [0, 0], sizes = [2, 128], strides = [1, 1]} : vector<96x128xf32> to vector<2x128xf32>
    %150 = tpu.concatenate %148, %149 in 0 : vector<94x128xf32>, vector<2x128xf32> -> vector<96x128xf32>
    %151 = arith.truncf %150 : vector<96x128xf32> to vector<96x128xbf16>
    %c96_77 = arith.constant 96 : index
    %c256_78 = arith.constant 256 : index
    %152 = vector.load %arg10[%c96_77, %c256_78] : memref<240x384xbf16, #tpu.memory_space<vmem>>, vector<96x128xbf16>
    tpu.vector_store %arg10[%c96_77, %c256_78], %151 {strides = array<i32>} : memref<240x384xbf16, #tpu.memory_space<vmem>>, vector<96x128xbf16>,
    %c192_79 = arith.constant 192 : index
    %c0_80 = arith.constant 0 : index
    %153 = vector.load %arg9[%c192_79, %c0_80] : memref<288x384xbf16, #tpu.memory_space<vmem>>, vector<48x384xbf16>
    %c0_81 = arith.constant 0 : index
    %c0_82 = arith.constant 0 : index
    %c0_83 = arith.constant 0 : index
    %154 = vector.load %arg4[%c0_81, %c0_82, %c0_83] : memref<3x384x128xbf16, #tpu.memory_space<vmem>>, vector<1x384x128xbf16>
    %155 = vector.shape_cast %154 : vector<1x384x128xbf16> to vector<384x128xbf16>
    %cst_84 = arith.constant dense<0.000000e+00> : vector<48x128xf32>
    %156 = tpu.matmul %153, %155, %cst_84 {dimension_numbers = #tpu.dot_dimension_numbers<[1], [0], [0], [1], [0, 0, 1, 1], [], []>} : vector<48x384xbf16>, vector<384x128xbf16>, vector<48x128xf32> -> vector<48x128xf32>
    %c216 = arith.constant 216 : index
    %c0_85 = arith.constant 0 : index
    %157 = vector.load %arg9[%c216, %c0_85] : memref<288x384xbf16, #tpu.memory_space<vmem>>, vector<48x384xbf16>
    %c1_86 = arith.constant 1 : index
    %c0_87 = arith.constant 0 : index
    %c0_88 = arith.constant 0 : index
    %158 = vector.load %arg4[%c1_86, %c0_87, %c0_88] : memref<3x384x128xbf16, #tpu.memory_space<vmem>>, vector<1x384x128xbf16>
    %159 = vector.shape_cast %158 : vector<1x384x128xbf16> to vector<384x128xbf16>
    %cst_89 = arith.constant dense<0.000000e+00> : vector<48x128xf32>
    %160 = tpu.matmul %157, %159, %cst_89 {dimension_numbers = #tpu.dot_dimension_numbers<[1], [0], [0], [1], [0, 0, 1, 1], [], []>} : vector<48x384xbf16>, vector<384x128xbf16>, vector<48x128xf32> -> vector<48x128xf32>
    %161 = arith.addf %156, %160 : vector<48x128xf32>
    %c240 = arith.constant 240 : index
    %c0_90 = arith.constant 0 : index
    %162 = vector.load %arg9[%c240, %c0_90] : memref<288x384xbf16, #tpu.memory_space<vmem>>, vector<48x384xbf16>
    %c2_91 = arith.constant 2 : index
    %c0_92 = arith.constant 0 : index
    %c0_93 = arith.constant 0 : index
    %163 = vector.load %arg4[%c2_91, %c0_92, %c0_93] : memref<3x384x128xbf16, #tpu.memory_space<vmem>>, vector<1x384x128xbf16>
    %164 = vector.shape_cast %163 : vector<1x384x128xbf16> to vector<384x128xbf16>
    %cst_94 = arith.constant dense<0.000000e+00> : vector<48x128xf32>
    %165 = tpu.matmul %162, %164, %cst_94 {dimension_numbers = #tpu.dot_dimension_numbers<[1], [0], [0], [1], [0, 0, 1, 1], [], []>} : vector<48x384xbf16>, vector<384x128xbf16>, vector<48x128xf32> -> vector<48x128xf32>
    %166 = arith.addf %161, %165 : vector<48x128xf32>
    %c0_95 = arith.constant 0 : index
    %c0_96 = arith.constant 0 : index
    %167 = vector.load %arg5[%c0_95, %c0_96] : memref<1x128xf32, #tpu.memory_space<vmem>>, vector<1x128xf32>
    %168 = vector.broadcast %167 : vector<1x128xf32> to vector<48x128xf32>
    %169 = arith.addf %166, %168 : vector<48x128xf32>
    %cst_97 = arith.constant 0.000000e+00 : f32
    %170 = vector.broadcast %cst_97 : f32 to vector<48x128xf32>
    %171 = arith.maximumf %169, %170 : vector<48x128xf32>
    %172 = vector.shape_cast %171 : vector<48x128xf32> to vector<2x24x128xf32>
    %c8_i32_98 = arith.constant 8 : i32
    %173 = arith.addi %54, %c8_i32_98 : i32
    %174 = tpu.iota {dimensions = array<i32: 0>} : vector<2x1x1xi32>
    %175 = vector.broadcast %173 : i32 to vector<2x1x1xi32>
    %176 = arith.addi %175, %174 : vector<2x1x1xi32>
    %c0_i32_99 = arith.constant 0 : i32
    %177 = vector.broadcast %c0_i32_99 : i32 to vector<2x1x1xi32>
    %178 = arith.cmpi sge, %176, %177 : vector<2x1x1xi32>
    %c16_i32_100 = arith.constant 16 : i32
    %179 = vector.broadcast %c16_i32_100 : i32 to vector<2x1x1xi32>
    %180 = arith.cmpi slt, %176, %179 : vector<2x1x1xi32>
    %181 = arith.andi %178, %180 : vector<2x1x1xi1>
    %182 = vector.broadcast %181 : vector<2x1x1xi1> to vector<2x24x1xi1>
    %183 = vector.broadcast %52 : vector<1x24x1xi1> to vector<2x24x1xi1>
    %184 = arith.andi %182, %183 : vector<2x24x1xi1>
    %cst_101 = arith.constant 0.000000e+00 : f32
    %185 = vector.shape_cast %184 : vector<2x24x1xi1> to vector<2x24x1xi1>
    %186 = vector.broadcast %185 : vector<2x24x1xi1> to vector<2x24x128xi1>
    %187 = vector.broadcast %cst_101 : f32 to vector<2x24x128xf32>
    %188 = arith.select %186, %172, %187 : vector<2x24x128xi1>, vector<2x24x128xf32>
    %189 = vector.shape_cast %188 : vector<2x24x128xf32> to vector<48x128xf32>
    %190 = arith.truncf %189 : vector<48x128xf32> to vector<48x128xbf16>
    %c192_102 = arith.constant 192 : index
    %c0_103 = arith.constant 0 : index
    %191 = vector.load %arg10[%c192_102, %c0_103] : memref<240x384xbf16, #tpu.memory_space<vmem>>, vector<48x128xbf16>
    tpu.vector_store %arg10[%c192_102, %c0_103], %190 {strides = array<i32>} : memref<240x384xbf16, #tpu.memory_space<vmem>>, vector<48x128xbf16>,
    %192 = vector.extract_strided_slice %189 {offsets = [1, 0], sizes = [47, 128], strides = [1, 1]} : vector<48x128xf32> to vector<47x128xf32>
    %193 = vector.extract_strided_slice %189 {offsets = [0, 0], sizes = [1, 128], strides = [1, 1]} : vector<48x128xf32> to vector<1x128xf32>
    %194 = tpu.concatenate %192, %193 in 0 : vector<47x128xf32>, vector<1x128xf32> -> vector<48x128xf32>
    %195 = arith.truncf %194 : vector<48x128xf32> to vector<48x128xbf16>
    %c192_104 = arith.constant 192 : index
    %c128_105 = arith.constant 128 : index
    %196 = vector.load %arg10[%c192_104, %c128_105] : memref<240x384xbf16, #tpu.memory_space<vmem>>, vector<48x128xbf16>
    tpu.vector_store %arg10[%c192_104, %c128_105], %195 {strides = array<i32>} : memref<240x384xbf16, #tpu.memory_space<vmem>>, vector<48x128xbf16>,
    %197 = vector.extract_strided_slice %189 {offsets = [2, 0], sizes = [46, 128], strides = [1, 1]} : vector<48x128xf32> to vector<46x128xf32>
    %198 = vector.extract_strided_slice %189 {offsets = [0, 0], sizes = [2, 128], strides = [1, 1]} : vector<48x128xf32> to vector<2x128xf32>
    %199 = tpu.concatenate %197, %198 in 0 : vector<46x128xf32>, vector<2x128xf32> -> vector<48x128xf32>
    %200 = arith.truncf %199 : vector<48x128xf32> to vector<48x128xbf16>
    %c192_106 = arith.constant 192 : index
    %c256_107 = arith.constant 256 : index
    %201 = vector.load %arg10[%c192_106, %c256_107] : memref<240x384xbf16, #tpu.memory_space<vmem>>, vector<48x128xbf16>
    tpu.vector_store %arg10[%c192_106, %c256_107], %200 {strides = array<i32>} : memref<240x384xbf16, #tpu.memory_space<vmem>>, vector<48x128xbf16>,
    %c0_108 = arith.constant 0 : index
    %c0_109 = arith.constant 0 : index
    %202 = vector.load %arg10[%c0_108, %c0_109] : memref<240x384xbf16, #tpu.memory_space<vmem>>, vector<96x384xbf16>
    %c0_110 = arith.constant 0 : index
    %c0_111 = arith.constant 0 : index
    %c0_112 = arith.constant 0 : index
    %203 = vector.load %arg6[%c0_110, %c0_111, %c0_112] : memref<3x384x128xbf16, #tpu.memory_space<vmem>>, vector<1x384x128xbf16>
    %204 = vector.shape_cast %203 : vector<1x384x128xbf16> to vector<384x128xbf16>
    %cst_113 = arith.constant dense<0.000000e+00> : vector<96x128xf32>
    %205 = tpu.matmul %202, %204, %cst_113 {dimension_numbers = #tpu.dot_dimension_numbers<[1], [0], [0], [1], [0, 0, 1, 1], [], []>} : vector<96x384xbf16>, vector<384x128xbf16>, vector<96x128xf32> -> vector<96x128xf32>
    %c24_114 = arith.constant 24 : index
    %c0_115 = arith.constant 0 : index
    %206 = vector.load %arg10[%c24_114, %c0_115] : memref<240x384xbf16, #tpu.memory_space<vmem>>, vector<96x384xbf16>
    %c1_116 = arith.constant 1 : index
    %c0_117 = arith.constant 0 : index
    %c0_118 = arith.constant 0 : index
    %207 = vector.load %arg6[%c1_116, %c0_117, %c0_118] : memref<3x384x128xbf16, #tpu.memory_space<vmem>>, vector<1x384x128xbf16>
    %208 = vector.shape_cast %207 : vector<1x384x128xbf16> to vector<384x128xbf16>
    %cst_119 = arith.constant dense<0.000000e+00> : vector<96x128xf32>
    %209 = tpu.matmul %206, %208, %cst_119 {dimension_numbers = #tpu.dot_dimension_numbers<[1], [0], [0], [1], [0, 0, 1, 1], [], []>} : vector<96x384xbf16>, vector<384x128xbf16>, vector<96x128xf32> -> vector<96x128xf32>
    %210 = arith.addf %205, %209 : vector<96x128xf32>
    %c48_120 = arith.constant 48 : index
    %c0_121 = arith.constant 0 : index
    %211 = vector.load %arg10[%c48_120, %c0_121] : memref<240x384xbf16, #tpu.memory_space<vmem>>, vector<96x384xbf16>
    %c2_122 = arith.constant 2 : index
    %c0_123 = arith.constant 0 : index
    %c0_124 = arith.constant 0 : index
    %212 = vector.load %arg6[%c2_122, %c0_123, %c0_124] : memref<3x384x128xbf16, #tpu.memory_space<vmem>>, vector<1x384x128xbf16>
    %213 = vector.shape_cast %212 : vector<1x384x128xbf16> to vector<384x128xbf16>
    %cst_125 = arith.constant dense<0.000000e+00> : vector<96x128xf32>
    %214 = tpu.matmul %211, %213, %cst_125 {dimension_numbers = #tpu.dot_dimension_numbers<[1], [0], [0], [1], [0, 0, 1, 1], [], []>} : vector<96x384xbf16>, vector<384x128xbf16>, vector<96x128xf32> -> vector<96x128xf32>
    %215 = arith.addf %210, %214 : vector<96x128xf32>
    %c0_126 = arith.constant 0 : index
    %c0_127 = arith.constant 0 : index
    %216 = vector.load %arg7[%c0_126, %c0_127] : memref<1x128xf32, #tpu.memory_space<vmem>>, vector<1x128xf32>
    %217 = vector.broadcast %216 : vector<1x128xf32> to vector<96x128xf32>
    %218 = arith.addf %215, %217 : vector<96x128xf32>
    %cst_128 = arith.constant 0.000000e+00 : f32
    %219 = vector.broadcast %cst_128 : f32 to vector<96x128xf32>
    %220 = arith.maximumf %218, %219 : vector<96x128xf32>
    %221 = vector.shape_cast %220 : vector<96x128xf32> to vector<4x24x128xf32>
    %222 = vector.extract_strided_slice %221 {offsets = [0, 0, 0], sizes = [4, 16, 128], strides = [1, 1, 1]} : vector<4x24x128xf32> to vector<4x16x128xf32>
    %c0_129 = arith.constant 0 : index
    %c0_130 = arith.constant 0 : index
    %c0_131 = arith.constant 0 : index
    %c0_132 = arith.constant 0 : index
    %223 = vector.load %arg8[%c0_129, %c0_130, %c0_131, %c0_132] : memref<1x8x16x128xf32, #tpu.memory_space<vmem>>, vector<1x4x16x128xf32>
    %224 = vector.shape_cast %223 : vector<1x4x16x128xf32> to vector<4x16x128xf32>
    %225 = vector.shape_cast %222 : vector<4x16x128xf32> to vector<1x4x16x128xf32>
    tpu.vector_store %arg8[%c0_129, %c0_130, %c0_131, %c0_132], %225 {strides = array<i32>} : memref<1x8x16x128xf32, #tpu.memory_space<vmem>>, vector<1x4x16x128xf32>,
    %c96_133 = arith.constant 96 : index
    %c0_134 = arith.constant 0 : index
    %226 = vector.load %arg10[%c96_133, %c0_134] : memref<240x384xbf16, #tpu.memory_space<vmem>>, vector<96x384xbf16>
    %c0_135 = arith.constant 0 : index
    %c0_136 = arith.constant 0 : index
    %c0_137 = arith.constant 0 : index
    %227 = vector.load %arg6[%c0_135, %c0_136, %c0_137] : memref<3x384x128xbf16, #tpu.memory_space<vmem>>, vector<1x384x128xbf16>
    %228 = vector.shape_cast %227 : vector<1x384x128xbf16> to vector<384x128xbf16>
    %cst_138 = arith.constant dense<0.000000e+00> : vector<96x128xf32>
    %229 = tpu.matmul %226, %228, %cst_138 {dimension_numbers = #tpu.dot_dimension_numbers<[1], [0], [0], [1], [0, 0, 1, 1], [], []>} : vector<96x384xbf16>, vector<384x128xbf16>, vector<96x128xf32> -> vector<96x128xf32>
    %c120_139 = arith.constant 120 : index
    %c0_140 = arith.constant 0 : index
    %230 = vector.load %arg10[%c120_139, %c0_140] : memref<240x384xbf16, #tpu.memory_space<vmem>>, vector<96x384xbf16>
    %c1_141 = arith.constant 1 : index
    %c0_142 = arith.constant 0 : index
    %c0_143 = arith.constant 0 : index
    %231 = vector.load %arg6[%c1_141, %c0_142, %c0_143] : memref<3x384x128xbf16, #tpu.memory_space<vmem>>, vector<1x384x128xbf16>
    %232 = vector.shape_cast %231 : vector<1x384x128xbf16> to vector<384x128xbf16>
    %cst_144 = arith.constant dense<0.000000e+00> : vector<96x128xf32>
    %233 = tpu.matmul %230, %232, %cst_144 {dimension_numbers = #tpu.dot_dimension_numbers<[1], [0], [0], [1], [0, 0, 1, 1], [], []>} : vector<96x384xbf16>, vector<384x128xbf16>, vector<96x128xf32> -> vector<96x128xf32>
    %234 = arith.addf %229, %233 : vector<96x128xf32>
    %c144_145 = arith.constant 144 : index
    %c0_146 = arith.constant 0 : index
    %235 = vector.load %arg10[%c144_145, %c0_146] : memref<240x384xbf16, #tpu.memory_space<vmem>>, vector<96x384xbf16>
    %c2_147 = arith.constant 2 : index
    %c0_148 = arith.constant 0 : index
    %c0_149 = arith.constant 0 : index
    %236 = vector.load %arg6[%c2_147, %c0_148, %c0_149] : memref<3x384x128xbf16, #tpu.memory_space<vmem>>, vector<1x384x128xbf16>
    %237 = vector.shape_cast %236 : vector<1x384x128xbf16> to vector<384x128xbf16>
    %cst_150 = arith.constant dense<0.000000e+00> : vector<96x128xf32>
    %238 = tpu.matmul %235, %237, %cst_150 {dimension_numbers = #tpu.dot_dimension_numbers<[1], [0], [0], [1], [0, 0, 1, 1], [], []>} : vector<96x384xbf16>, vector<384x128xbf16>, vector<96x128xf32> -> vector<96x128xf32>
    %239 = arith.addf %234, %238 : vector<96x128xf32>
    %c0_151 = arith.constant 0 : index
    %c0_152 = arith.constant 0 : index
    %240 = vector.load %arg7[%c0_151, %c0_152] : memref<1x128xf32, #tpu.memory_space<vmem>>, vector<1x128xf32>
    %241 = vector.broadcast %240 : vector<1x128xf32> to vector<96x128xf32>
    %242 = arith.addf %239, %241 : vector<96x128xf32>
    %cst_153 = arith.constant 0.000000e+00 : f32
    %243 = vector.broadcast %cst_153 : f32 to vector<96x128xf32>
    %244 = arith.maximumf %242, %243 : vector<96x128xf32>
    %245 = vector.shape_cast %244 : vector<96x128xf32> to vector<4x24x128xf32>
    %246 = vector.extract_strided_slice %245 {offsets = [0, 0, 0], sizes = [4, 16, 128], strides = [1, 1, 1]} : vector<4x24x128xf32> to vector<4x16x128xf32>
    %c0_154 = arith.constant 0 : index
    %c4 = arith.constant 4 : index
    %c0_155 = arith.constant 0 : index
    %c0_156 = arith.constant 0 : index
    %247 = vector.load %arg8[%c0_154, %c4, %c0_155, %c0_156] : memref<1x8x16x128xf32, #tpu.memory_space<vmem>>, vector<1x4x16x128xf32>
    %248 = vector.shape_cast %247 : vector<1x4x16x128xf32> to vector<4x16x128xf32>
    %249 = vector.shape_cast %246 : vector<4x16x128xf32> to vector<1x4x16x128xf32>
    tpu.vector_store %arg8[%c0_154, %c4, %c0_155, %c0_156], %249 {strides = array<i32>} : memref<1x8x16x128xf32, #tpu.memory_space<vmem>>, vector<1x4x16x128xf32>,
    return
  }
  func.func @transform_0(%arg0: i32, %arg1: i32) -> (i32, i32, i32, i32) {
    %c0_i32 = arith.constant 0 : i32
    %c0_i32_0 = arith.constant 0 : i32
    %c0_i32_1 = arith.constant 0 : i32
    return %arg0, %arg1, %c0_i32, %c0_i32_0 : i32, i32, i32, i32
  }
  func.func @transform_1(%arg0: i32, %arg1: i32) -> (i32, i32, i32, i32) {
    %c1_i32 = arith.constant 1 : i32
    %0 = arith.addi %arg1, %c1_i32 : i32
    %c2_i32 = arith.constant 2 : i32
    %1 = arith.muli %0, %c2_i32 : i32
    %c0_i32 = arith.constant 0 : i32
    %c0_i32_0 = arith.constant 0 : i32
    %c0_i32_1 = arith.constant 0 : i32
    return %arg0, %1, %c0_i32, %c0_i32_0 : i32, i32, i32, i32
  }
  func.func @transform_2(%arg0: i32, %arg1: i32) -> (i32, i32, i32) {
    %c0_i32 = arith.constant 0 : i32
    %c0_i32_0 = arith.constant 0 : i32
    %c0_i32_1 = arith.constant 0 : i32
    %c0_i32_2 = arith.constant 0 : i32
    return %c0_i32, %c0_i32_0, %c0_i32_1 : i32, i32, i32
  }
  func.func @transform_3(%arg0: i32, %arg1: i32) -> (i32, i32) {
    %c0_i32 = arith.constant 0 : i32
    %c0_i32_0 = arith.constant 0 : i32
    %c0_i32_1 = arith.constant 0 : i32
    return %c0_i32, %c0_i32_0 : i32, i32
  }
  func.func @transform_4(%arg0: i32, %arg1: i32) -> (i32, i32, i32) {
    %c0_i32 = arith.constant 0 : i32
    %c0_i32_0 = arith.constant 0 : i32
    %c0_i32_1 = arith.constant 0 : i32
    %c0_i32_2 = arith.constant 0 : i32
    return %c0_i32, %c0_i32_0, %c0_i32_1 : i32, i32, i32
  }
  func.func @transform_5(%arg0: i32, %arg1: i32) -> (i32, i32) {
    %c0_i32 = arith.constant 0 : i32
    %c0_i32_0 = arith.constant 0 : i32
    %c0_i32_1 = arith.constant 0 : i32
    return %c0_i32, %c0_i32_0 : i32, i32
  }
  func.func @transform_6(%arg0: i32, %arg1: i32) -> (i32, i32, i32, i32) {
    %c0_i32 = arith.constant 0 : i32
    %c0_i32_0 = arith.constant 0 : i32
    %c0_i32_1 = arith.constant 0 : i32
    return %arg0, %arg1, %c0_i32, %c0_i32_0 : i32, i32, i32, i32
  }
}

</mosaic_0001>

<llo_original>
// kernel: up_forward.1
$region0: #{up_forward.1}
  #allocation0 [shape = 'u32[]', space=smem, size = 0x4, offset = 0x4, fixed_abs, tag = 'smem constant byte address 0x4 - core index']
  #allocation1 [shape = 'u32[144,128]{1,0:T(1,128)}', space=vmem, size = 0x12000, scoped, tag = 'internal scratch']
  #allocation2 [shape = 'bf16[288,384]{1,0:T(8,128)(2,1)}', space=vmem, size = 0x36000, scoped, tag = 'scratch operand']
  #allocation3 [shape = 'bf16[240,384]{1,0:T(8,128)(2,1)}', space=vmem, size = 0x2d000, scoped, tag = 'scratch operand']
  %s0 = inlined_call_operand.vmem [shape: bf16[2,20,24,128], index: 0, kind: input, shape index: {}, may-alias: {0,1}]
  %s1 = inlined_call_operand.vmem [shape: bf16[2,20,24,128], index: 1, kind: input, shape index: {}, may-alias: {0,1}]
  %s2 = inlined_call_operand.vmem [shape: bf16[3,384,128], index: 2, kind: input, shape index: {}]
  %s3 = inlined_call_operand.vmem [shape: f32[1,128], index: 3, kind: input, shape index: {}]
  %s4 = inlined_call_operand.vmem [shape: bf16[3,384,128], index: 4, kind: input, shape index: {}]
  %s5 = inlined_call_operand.vmem [shape: f32[1,128], index: 5, kind: input, shape index: {}]
  %s6 = inlined_call_operand.vmem [shape: f32[2,16,16,128], index: 6, kind: output, shape index: {}]
  %s7 = sld [smem:[#allocation0]]
  $region57: #{up_forward.1} parent=0
    _
  %s9 = ssub.s32 1, %s7
  %s10 = scalar_select 0, %s9, %s7
  loop: start=0, step=1, limit=6
  $region2: #{up_forward.1} parent=0 // loop_pre_header
    _
  $region3: #{up_forward.1} parent=0 // loop_header
    %s12 = sphi 0, %s16
    %p13 = scmp.ge.s32.totalorder %s12, 6
    %s19 = sphi 0, %s31
    %s20 = sphi 0, %s27
    %s21 = sphi 0, %s19
    %s22 = sphi 0, %s20
    %s23 = sphi 0, %s21
    %s24 = sphi 0, %s22
    %s36 = sphi 0, %s38
    %s39 = sphi 0, %s36
    %s40 = sphi 0, %s39
    %s56 = sphi 0, %s40
    %s68 = sphi 0, %s70
    %s71 = sphi 0, %s68
    %s72 = sphi 0, %s71
    %s88 = sphi 0, %s72
    %s92 = sphi 0, %s92
    %s94 = sphi 0, %s92
    %s95 = sphi 0, %s94
    %s109 = sphi 0, %s95
    %s113 = sphi 0, %s113
    %s115 = sphi 0, %s113
    %s116 = sphi 0, %s115
    %s130 = sphi 0, %s116
    %s134 = sphi 0, %s134
    %s136 = sphi 0, %s134
    %s137 = sphi 0, %s136
    %s151 = sphi 0, %s137
    %s155 = sphi 0, %s155
    %s157 = sphi 0, %s155
    %s158 = sphi 0, %s157
    %s172 = sphi 0, %s158
    %s180 = sphi 0, %s182
    %s183 = sphi 0, %s180
    %s184 = sphi 0, %s183
    %s200 = sphi 0, %s184
  $region4: #{up_forward.1} parent=0 // loop_header_branch
    %15 = sbr.rel (%p13) target = $region8
  $region5: #{up_forward.1} parent=0 // loop_body
    %s17 = ssub.s32 %s12, 1
    %s18 = ssub.s32 %s12, 2
    %s25 = sadd.s32 1, %s20
    %p26 = scmp.ge.s32.totalorder %s25, 2
    %s27 = scalar_select %p26, 0, %s25
    %s28 = sadd.s32 1, %s19
    %s29 = scalar_select %p26, %s28, %s19
    %p30 = scmp.ge.s32.totalorder %s29, 2
    %s31 = scalar_select %p30, 0, %s29
    %s32 = ssub.s32 %s19, %s31
    %s33 = ssub.s32 %s20, %s27
    %s34 = sor.u32 %s32, %s33
    %p35 = scmp.eq.s32.totalorder %s34, 0
    %s37 = sadd.s32 %s36, 1
    %s38 = scalar_select %p35, %s36, %s37
    %p41 = pneg %p35
    %p42 = scmp.eq.s32.totalorder %s12, 3
    %p43 = por %p41, %p42
    %p44 = scmp.ne.s32.totalorder %s36, %s39
    %p45 = scmp.eq.s32.totalorder %s12, 0
    %p46 = por %p44, %p45
    %p47 = scmp.ne.s32.totalorder %s36, %s39
    %p48 = scmp.eq.s32.totalorder %s17, 3
    %p49 = por %p47, %p48
    %p50 = scmp.ne.s32.totalorder %s39, %s40
    %p51 = scmp.eq.s32.totalorder %s17, 0
    %p52 = por %p50, %p51
    %p53 = scmp.ne.s32.totalorder %s39, %s40
    %p54 = scmp.eq.s32.totalorder %s18, 3
    %p55 = por %p53, %p54
    %p57 = scmp.ne.s32.totalorder %s40, %s56
    %p58 = scmp.eq.s32.totalorder %s18, 0
    %p59 = por %p57, %p58
    %s60 = sadd.s32 %s20, 1
    %s61 = smul.u32 %s60, 2
    %s62 = sadd.s32 %s27, 1
    %s63 = smul.u32 %s62, 2
    %s64 = ssub.s32 %s19, %s31
    %s65 = ssub.s32 %s61, %s63
    %s66 = sor.u32 %s64, %s65
    %p67 = scmp.eq.s32.totalorder %s66, 0
    %s69 = sadd.s32 %s68, 1
    %s70 = scalar_select %p67, %s68, %s69
    %p73 = pneg %p67
    %p74 = scmp.eq.s32.totalorder %s12, 3
    %p75 = por %p73, %p74
    %p76 = scmp.ne.s32.totalorder %s68, %s71
    %p77 = scmp.eq.s32.totalorder %s12, 0
    %p78 = por %p76, %p77
    %p79 = scmp.ne.s32.totalorder %s68, %s71
    %p80 = scmp.eq.s32.totalorder %s17, 3
    %p81 = por %p79, %p80
    %p82 = scmp.ne.s32.totalorder %s71, %s72
    %p83 = scmp.eq.s32.totalorder %s17, 0
    %p84 = por %p82, %p83
    %p85 = scmp.ne.s32.totalorder %s71, %s72
    %p86 = scmp.eq.s32.totalorder %s18, 3
    %p87 = por %p85, %p86
    %p89 = scmp.ne.s32.totalorder %s72, %s88
    %p90 = scmp.eq.s32.totalorder %s18, 0
    %p91 = por %p89, %p90
    %s93 = sadd.s32 %s92, 1
    %p96 = scmp.eq.s32.totalorder %s12, 3
    %p97 = scmp.ne.s32.totalorder %s92, %s94
    %p98 = scmp.eq.s32.totalorder %s12, 0
    %p99 = por %p97, %p98
    %p100 = scmp.ne.s32.totalorder %s92, %s94
    %p101 = scmp.eq.s32.totalorder %s17, 3
    %p102 = por %p100, %p101
    %p103 = scmp.ne.s32.totalorder %s94, %s95
    %p104 = scmp.eq.s32.totalorder %s17, 0
    %p105 = por %p103, %p104
    %p106 = scmp.ne.s32.totalorder %s94, %s95
    %p107 = scmp.eq.s32.totalorder %s18, 3
    %p108 = por %p106, %p107
    %p110 = scmp.ne.s32.totalorder %s95, %s109
    %p111 = scmp.eq.s32.totalorder %s18, 0
    %p112 = por %p110, %p111
    %s114 = sadd.s32 %s113, 1
    %p117 = scmp.eq.s32.totalorder %s12, 3
    %p118 = scmp.ne.s32.totalorder %s113, %s115
    %p119 = scmp.eq.s32.totalorder %s12, 0
    %p120 = por %p118, %p119
    %p121 = scmp.ne.s32.totalorder %s113, %s115
    %p122 = scmp.eq.s32.totalorder %s17, 3
    %p123 = por %p121, %p122
    %p124 = scmp.ne.s32.totalorder %s115, %s116
    %p125 = scmp.eq.s32.totalorder %s17, 0
    %p126 = por %p124, %p125
    %p127 = scmp.ne.s32.totalorder %s115, %s116
    %p128 = scmp.eq.s32.totalorder %s18, 3
    %p129 = por %p127, %p128
    %p131 = scmp.ne.s32.totalorder %s116, %s130
    %p132 = scmp.eq.s32.totalorder %s18, 0
    %p133 = por %p131, %p132
    %s135 = sadd.s32 %s134, 1
    %p138 = scmp.eq.s32.totalorder %s12, 3
    %p139 = scmp.ne.s32.totalorder %s134, %s136
    %p140 = scmp.eq.s32.totalorder %s12, 0
    %p141 = por %p139, %p140
    %p142 = scmp.ne.s32.totalorder %s134, %s136
    %p143 = scmp.eq.s32.totalorder %s17, 3
    %p144 = por %p142, %p143
    %p145 = scmp.ne.s32.totalorder %s136, %s137
    %p146 = scmp.eq.s32.totalorder %s17, 0
    %p147 = por %p145, %p146
    %p148 = scmp.ne.s32.totalorder %s136, %s137
    %p149 = scmp.eq.s32.totalorder %s18, 3
    %p150 = por %p148, %p149
    %p152 = scmp.ne.s32.totalorder %s137, %s151
    %p153 = scmp.eq.s32.totalorder %s18, 0
    %p154 = por %p152, %p153
    %s156 = sadd.s32 %s155, 1
    %p159 = scmp.eq.s32.totalorder %s12, 3
    %p160 = scmp.ne.s32.totalorder %s155, %s157
    %p161 = scmp.eq.s32.totalorder %s12, 0
    %p162 = por %p160, %p161
    %p163 = scmp.ne.s32.totalorder %s155, %s157
    %p164 = scmp.eq.s32.totalorder %s17, 3
    %p165 = por %p163, %p164
    %p166 = scmp.ne.s32.totalorder %s157, %s158
    %p167 = scmp.eq.s32.totalorder %s17, 0
    %p168 = por %p166, %p167
    %p169 = scmp.ne.s32.totalorder %s157, %s158
    %p170 = scmp.eq.s32.totalorder %s18, 3
    %p171 = por %p169, %p170
    %p173 = scmp.ne.s32.totalorder %s158, %s172
    %p174 = scmp.eq.s32.totalorder %s18, 0
    %p175 = por %p173, %p174
    %s176 = ssub.s32 %s19, %s31
    %s177 = ssub.s32 %s20, %s27
    %s178 = sor.u32 %s176, %s177
    %p179 = scmp.eq.s32.totalorder %s178, 0
    %s181 = sadd.s32 %s180, 1
    %s182 = scalar_select %p179, %s180, %s181
    %p185 = pneg %p179
    %p186 = scmp.eq.s32.totalorder %s12, 3
    %p187 = por %p185, %p186
    %p188 = scmp.ne.s32.totalorder %s180, %s183
    %p189 = scmp.eq.s32.totalorder %s12, 0
    %p190 = por %p188, %p189
    %p191 = scmp.ne.s32.totalorder %s180, %s183
    %p192 = scmp.eq.s32.totalorder %s17, 3
    %p193 = por %p191, %p192
    %p194 = scmp.ne.s32.totalorder %s183, %s184
    %p195 = scmp.eq.s32.totalorder %s17, 0
    %p196 = por %p194, %p195
    %p197 = scmp.ne.s32.totalorder %s183, %s184
    %p198 = scmp.eq.s32.totalorder %s18, 3
    %p199 = por %p197, %p198
    %p201 = scmp.ne.s32.totalorder %s184, %s200
    %p202 = scmp.eq.s32.totalorder %s18, 0
    %p203 = por %p201, %p202
    %p204 = scmp.le.s32.totalorder 1, %s12
    %p205 = scmp.lt.s32.totalorder %s12, 5
    %p206 = pnand %p204, %p205
    %p207 = pneg %p206
    // Predicated region
    $region9: #{up_forward.1} parent=5 // pred_check
      _
    $region10: #{up_forward.1} parent=5 // pred_check_branch
      %209 = sbr.rel (%p206) target = $region12
    $region11: #{up_forward.1} parent=5 // pred_region
      %s210 = ssub.s32 %s12, 1
      // Predicated region
      $region13: #{up_forward.1} parent=11 // pred_check
        %p211 = pneg %p105
      $region14: #{up_forward.1} parent=11 // pred_check_branch
        %213 = sbr.rel (%p211) target = $region16
      $region15: #{up_forward.1} parent=11 // pred_region
        _
      $region16: #{up_forward.1} parent=11 // pred_fallthru
        _
      // Predicated region
      $region17: #{up_forward.1} parent=11 // pred_check
        %p214 = pneg %p126
      $region18: #{up_forward.1} parent=11 // pred_check_branch
        %216 = sbr.rel (%p214) target = $region20
      $region19: #{up_forward.1} parent=11 // pred_region
        _
      $region20: #{up_forward.1} parent=11 // pred_fallthru
        _
      // Predicated region
      $region21: #{up_forward.1} parent=11 // pred_check
        %p217 = pneg %p147
      $region22: #{up_forward.1} parent=11 // pred_check_branch
        %219 = sbr.rel (%p217) target = $region24
      $region23: #{up_forward.1} parent=11 // pred_region
        _
      $region24: #{up_forward.1} parent=11 // pred_fallthru
        _
      // Predicated region
      $region25: #{up_forward.1} parent=11 // pred_check
        %p220 = pneg %p168
      $region26: #{up_forward.1} parent=11 // pred_check_branch
        %222 = sbr.rel (%p220) target = $region28
      $region27: #{up_forward.1} parent=11 // pred_region
        _
      $region28: #{up_forward.1} parent=11 // pred_fallthru
        _
    $region12: #{up_forward.1} parent=5 // pred_fallthru
      _
    %p223 = scmp.lt.s32.totalorder %s12, 4
    // Predicated region
    $region29: #{up_forward.1} parent=5 // pred_check
      %p224 = pneg %p223
    $region30: #{up_forward.1} parent=5 // pred_check_branch
      %226 = sbr.rel (%p224) target = $region32
    $region31: #{up_forward.1} parent=5 // pred_region
      // Predicated region
      $region33: #{up_forward.1} parent=31 // pred_check
        %p227 = pneg %p46
      $region34: #{up_forward.1} parent=31 // pred_check_branch
        %229 = sbr.rel (%p227) target = $region36
      $region35: #{up_forward.1} parent=31 // pred_region
        %s230 = smul.u32 8, %s20
        %s231 = ssub.s32 20, %s230
        %p232 = scmp.lt.s32.totalorder %s231, 8
        %s233 = scalar_select %p232, %s231, 8
        %s234 = smul.u32 64, %s233
        %s235 = smul.u32 %s234, 3
        %p236 = scmp.lt.s32.totalorder %s19, 1
        %s237 = scalar_select %p236, %s19, 1
        %p238 = scmp.lt.s32.totalorder %s230, 19
        %s239 = scalar_select %p238, %s230, 19
        %s240 = smul.addr %s239, 3
        %s241 = smul.addr %s237, 60
        %s242 = sadd.s32 %s240, %s241
        %s243 = smul.addr %s242, 4
        %s244 = scalar_lea.vmem %s0, %s243
        %s245 = smul.u32 8, %s20
        %s246 = ssub.s32 20, %s245
        %p247 = scmp.lt.s32.totalorder %s246, 8
        %s248 = scalar_select %p247, %s246, 8
        %s249 = smul.u32 64, %s248
        %s250 = smul.u32 %s249, 3
      $region36: #{up_forward.1} parent=31 // pred_fallthru
        _
      // Predicated region
      $region37: #{up_forward.1} parent=31 // pred_check
        %p251 = pneg %p78
      $region38: #{up_forward.1} parent=31 // pred_check_branch
        %253 = sbr.rel (%p251) target = $region40
      $region39: #{up_forward.1} parent=31 // pred_region
        %s254 = sadd.s32 %s20, 1
        %s255 = smul.u32 %s254, 2
        %s256 = smul.u32 4, %s255
        %p257 = scmp.lt.s32.totalorder %s19, 1
        %s258 = scalar_select %p257, %s19, 1
        %p259 = scmp.lt.s32.totalorder %s256, 19
        %s260 = scalar_select %p259, %s256, 19
        %s261 = smul.addr %s260, 3
        %s262 = smul.addr %s258, 60
        %s263 = sadd.s32 %s261, %s262
        %s264 = smul.addr %s263, 4
        %s265 = scalar_lea.vmem %s1, %s264
        %s266 = sadd.s32 %s20, 1
        %s267 = smul.u32 %s266, 2
        %s268 = smul.u32 4, %s267
      $region40: #{up_forward.1} parent=31 // pred_fallthru
        _
    $region32: #{up_forward.1} parent=5 // pred_fallthru
      _
    %p269 = scmp.le.s32.totalorder 1, %s12
    %p270 = scmp.lt.s32.totalorder %s12, 5
    %p271 = pnand %p269, %p270
    %p272 = pneg %p271
    // Predicated region
    $region41: #{up_forward.1} parent=5 // pred_check
      _
    $region42: #{up_forward.1} parent=5 // pred_check_branch
      %274 = sbr.rel (%p271) target = $region44
    $region43: #{up_forward.1} parent=5 // pred_region
      %s275 = ssub.s32 %s12, 1
      %s276 = smul.u32 8, %s22
      %s277 = ssub.s32 20, %s276
      %p278 = scmp.lt.s32.totalorder %s277, 8
      %s279 = scalar_select %p278, %s277, 8
      %s280 = smul.u32 64, %s279
      %s281 = smul.u32 %s280, 3
      %p282 = scmp.lt.s32.totalorder %s21, 1
      %s283 = scalar_select %p282, %s21, 1
      %p284 = scmp.lt.s32.totalorder %s276, 19
      %s285 = scalar_select %p284, %s276, 19
      %s286 = smul.addr %s285, 3
      %s287 = smul.addr %s283, 60
      %s288 = sadd.s32 %s286, %s287
      %s289 = smul.addr %s288, 4
      %s290 = scalar_lea.vmem %s0, %s289
      %p291 = pneg %p52
      %p292 = pneg %p49
      %s293 = sadd.s32 %s22, 1
      %s294 = smul.u32 %s293, 2
      %s295 = smul.u32 4, %s294
      %p296 = scmp.lt.s32.totalorder %s21, 1
      %s297 = scalar_select %p296, %s21, 1
      %p298 = scmp.lt.s32.totalorder %s295, 19
      %s299 = scalar_select %p298, %s295, 19
      %s300 = smul.addr %s299, 3
      %s301 = smul.addr %s297, 60
      %s302 = sadd.s32 %s300, %s301
      %s303 = smul.addr %s302, 4
      %s304 = scalar_lea.vmem %s1, %s303
      %p305 = pneg %p84
      %p306 = pneg %p81
      %p307 = pneg %p105
      %p308 = pneg %p102
      %p309 = pneg %p126
      %p310 = pneg %p123
      %p311 = pneg %p147
      %p312 = pneg %p144
      %p313 = pneg %p168
      %p314 = pneg %p165
      %p315 = pneg %p196
      %p316 = pneg %p193
      %s317 = smul.u32 8, %s22
      %p318 = scmp.lt.s32.totalorder %s21, 1
      %s319 = scalar_select %p318, %s21, 1
      %p320 = scmp.lt.s32.totalorder %s317, 15
      %s321 = scalar_select %p320, %s317, 15
      %s322 = smul.addr %s321, 2
      %s323 = smul.addr %s319, 32
      %s324 = sadd.s32 %s322, %s323
      %s325 = smul.addr %s324, 8
      %s326 = scalar_lea.vmem %s6, %s325
      %s327 = smul.u32 8, %s22
      %s328 = ssub.s32 20, %s327
      %p329 = scmp.lt.s32.totalorder %s328, 8
      %s330 = scalar_select %p329, %s328, 8
      %s331 = smul.u32 64, %s330
      %s332 = smul.u32 %s331, 3
      %p333 = scmp.lt.s32.totalorder %s21, 1
      %s334 = scalar_select %p333, %s21, 1
      %p335 = scmp.lt.s32.totalorder %s327, 19
      %s336 = scalar_select %p335, %s327, 19
      %s337 = smul.addr %s336, 3
      %s338 = smul.addr %s334, 60
      %s339 = sadd.s32 %s337, %s338
      %s340 = smul.addr %s339, 4
      %s341 = scalar_lea.vmem %s0, %s340
      %s342 = smul.u32 8, %s22
      %s343 = ssub.s32 20, %s342
      %p344 = scmp.lt.s32.totalorder %s343, 8
      %s345 = scalar_select %p344, %s343, 8
      %s346 = smul.u32 64, %s345
      %s347 = smul.u32 %s346, 3
      %s348 = sadd.s32 %s22, 1
      %s349 = smul.u32 %s348, 2
      %s350 = smul.u32 4, %s349
      %p351 = scmp.lt.s32.totalorder %s21, 1
      %s352 = scalar_select %p351, %s21, 1
      %p353 = scmp.lt.s32.totalorder %s350, 19
      %s354 = scalar_select %p353, %s350, 19
      %s355 = smul.addr %s354, 3
      %s356 = smul.addr %s352, 60
      %s357 = sadd.s32 %s355, %s356
      %s358 = smul.addr %s357, 4
      %s359 = scalar_lea.vmem %s1, %s358
      %s360 = sadd.s32 %s22, 1
      %s361 = smul.u32 %s360, 2
      %s362 = smul.u32 4, %s361
      %s363 = smul.u32 8, %s22
      %p364 = scmp.lt.s32.totalorder %s21, 1
      %s365 = scalar_select %p364, %s21, 1
      %p366 = scmp.lt.s32.totalorder %s363, 15
      %s367 = scalar_select %p366, %s363, 15
      %s368 = smul.addr %s367, 2
      %s369 = smul.addr %s365, 32
      %s370 = sadd.s32 %s368, %s369
      %s371 = smul.addr %s370, 8
      %s372 = scalar_lea.vmem %s6, %s371
      %s373 = smul.u32 8, %s22
      %v375 = vld [vmem:[%s341] sm:$0xf]
      %v376 = vld [vmem:[%s341 + $0x4] sm:$0xf]
      %v377 = vld [vmem:[%s341 + $0x8] sm:$0xf]
      %v378 = vld [vmem:[%s341 + $0xc] sm:$0xf]
      %v379 = vld [vmem:[%s341 + $0x10] sm:$0xf]
      %v380 = vld [vmem:[%s341 + $0x14] sm:$0xf]
      %v381 = vld [vmem:[%s341 + $0x18] sm:$0xf]
      %v382 = vld [vmem:[%s341 + $0x1c] sm:$0xf]
      %v383 = vld [vmem:[%s341 + $0x20] sm:$0xf]
      %v384 = vld [vmem:[%s341 + $0x24] sm:$0xf]
      %v385 = vld [vmem:[%s341 + $0x28] sm:$0xf]
      %v386 = vld [vmem:[%s341 + $0x2c] sm:$0xf]
      %v387 = vld [vmem:[%s341 + $0x30] sm:$0xf]
      %v388 = vld [vmem:[%s341 + $0x34] sm:$0xf]
      %v389 = vld [vmem:[%s341 + $0x38] sm:$0xf]
      %v390 = vunpack.c.l.bf16 %v375
      %v391 = vunpack.c.l.bf16 %v376
      %v392 = vunpack.c.l.bf16 %v377
      %v393 = vunpack.c.l.bf16 %v378
      %v394 = vunpack.c.l.bf16 %v379
      %v395 = vunpack.c.l.bf16 %v380
      %v396 = vunpack.c.l.bf16 %v381
      %v397 = vunpack.c.l.bf16 %v382
      %v398 = vunpack.c.l.bf16 %v383
      %v399 = vunpack.c.l.bf16 %v384
      %v400 = vunpack.c.l.bf16 %v385
      %v401 = vunpack.c.l.bf16 %v386
      %v402 = vunpack.c.l.bf16 %v387
      %v403 = vunpack.c.l.bf16 %v388
      %v404 = vunpack.c.l.bf16 %v389
      %405 = vst [vmem:[#allocation2] sm:$0xf] %v375
      %406 = vst [vmem:[#allocation2 + $0xc] sm:$0xf] %v376
      %407 = vst [vmem:[#allocation2 + $0x18] sm:$0xf] %v377
      %408 = vst [vmem:[#allocation2 + $0x24] sm:$0xf] %v378
      %409 = vst [vmem:[#allocation2 + $0x30] sm:$0xf] %v379
      %410 = vst [vmem:[#allocation2 + $0x3c] sm:$0xf] %v380
      %411 = vst [vmem:[#allocation2 + $0x48] sm:$0xf] %v381
      %412 = vst [vmem:[#allocation2 + $0x54] sm:$0xf] %v382
      %413 = vst [vmem:[#allocation2 + $0x60] sm:$0xf] %v383
      %414 = vst [vmem:[#allocation2 + $0x6c] sm:$0xf] %v384
      %415 = vst [vmem:[#allocation2 + $0x78] sm:$0xf] %v385
      %416 = vst [vmem:[#allocation2 + $0x84] sm:$0xf] %v386
      %417 = vst [vmem:[#allocation2 + $0x90] sm:$0xf] %v387
      %418 = vst [vmem:[#allocation2 + $0x9c] sm:$0xf] %v388
      %419 = vst [vmem:[#allocation2 + $0xa8] sm:$0xf] %v389
      %vm435 = vcmask 1046528
      %v436 = vrot.slane %v390, 1
      %v437 = vrot.slane %v391, 1
      %v438 = vsel %vm435, %v436, %v437
      %v439 = vrot.slane %v392, 1
      %v440 = vsel %vm435, %v437, %v439
      %v441 = vrot.slane %v393, 1
      %v442 = vsel %vm435, %v439, %v441
      %v443 = vrot.slane %v394, 1
      %v444 = vsel %vm435, %v441, %v443
      %v445 = vrot.slane %v395, 1
      %v446 = vsel %vm435, %v443, %v445
      %v447 = vrot.slane %v396, 1
      %v448 = vsel %vm435, %v445, %v447
      %v449 = vrot.slane %v397, 1
      %v450 = vsel %vm435, %v447, %v449
      %v451 = vrot.slane %v398, 1
      %v452 = vsel %vm435, %v449, %v451
      %v453 = vrot.slane %v399, 1
      %v454 = vsel %vm435, %v451, %v453
      %v455 = vrot.slane %v400, 1
      %v456 = vsel %vm435, %v453, %v455
      %v457 = vrot.slane %v401, 1
      %v458 = vsel %vm435, %v455, %v457
      %v459 = vrot.slane %v402, 1
      %v460 = vsel %vm435, %v457, %v459
      %v461 = vrot.slane %v403, 1
      %v462 = vsel %vm435, %v459, %v461
      %v463 = vrot.slane %v404, 1
      %v464 = vsel %vm435, %v461, %v463
      %v481 = vsel %vm435, %v463, %v436
      %v482 = vpack.c.bf16 %v440, %v438
      %v483 = vpack.c.bf16 %v444, %v442
      %v484 = vpack.c.bf16 %v448, %v446
      %v485 = vpack.c.bf16 %v452, %v450
      %v486 = vpack.c.bf16 %v456, %v454
      %v487 = vpack.c.bf16 %v460, %v458
      %v488 = vpack.c.bf16 %v464, %v462
      %v489 = vpack.c.bf16 %v481, %v481
      %v498 = vunpack.c.l.b16 %v482
      %v499 = vunpack.c.h.b16 %v482
      %v500 = vunpack.c.l.b16 %v483
      %v501 = vunpack.c.h.b16 %v483
      %v502 = vunpack.c.l.b16 %v484
      %v503 = vunpack.c.h.b16 %v484
      %v504 = vunpack.c.l.b16 %v485
      %v505 = vunpack.c.h.b16 %v485
      %v506 = vunpack.c.l.b16 %v486
      %v507 = vunpack.c.h.b16 %v486
      %v508 = vunpack.c.l.b16 %v487
      %v509 = vunpack.c.h.b16 %v487
      %v510 = vunpack.c.l.b16 %v488
      %v511 = vunpack.c.h.b16 %v488
      %v512 = vunpack.c.l.b16 %v489
      %v513 = vpack.c.b16 %v498, %v498
      %v514 = vpack.c.b16 %v499, %v499
      %v515 = vpack.c.b16 %v500, %v500
      %v516 = vpack.c.b16 %v501, %v501
      %v517 = vpack.c.b16 %v502, %v502
      %v518 = vpack.c.b16 %v503, %v503
      %v519 = vpack.c.b16 %v504, %v504
      %v520 = vpack.c.b16 %v505, %v505
      %v521 = vpack.c.b16 %v506, %v506
      %v522 = vpack.c.b16 %v507, %v507
      %v523 = vpack.c.b16 %v508, %v508
      %v524 = vpack.c.b16 %v509, %v509
      %v525 = vpack.c.b16 %v510, %v510
      %v526 = vpack.c.b16 %v511, %v511
      %v527 = vpack.c.b16 %v512, %v512
      %543 = vst [vmem:[#allocation2 + $0x4] sm:$0xf] %v513
      %544 = vst [vmem:[#allocation2 + $0x10] sm:$0xf] %v514
      %545 = vst [vmem:[#allocation2 + $0x1c] sm:$0xf] %v515
      %546 = vst [vmem:[#allocation2 + $0x28] sm:$0xf] %v516
      %547 = vst [vmem:[#allocation2 + $0x34] sm:$0xf] %v517
      %548 = vst [vmem:[#allocation2 + $0x40] sm:$0xf] %v518
      %549 = vst [vmem:[#allocation2 + $0x4c] sm:$0xf] %v519
      %550 = vst [vmem:[#allocation2 + $0x58] sm:$0xf] %v520
      %551 = vst [vmem:[#allocation2 + $0x64] sm:$0xf] %v521
      %552 = vst [vmem:[#allocation2 + $0x70] sm:$0xf] %v522
      %553 = vst [vmem:[#allocation2 + $0x7c] sm:$0xf] %v523
      %554 = vst [vmem:[#allocation2 + $0x88] sm:$0xf] %v524
      %555 = vst [vmem:[#allocation2 + $0x94] sm:$0xf] %v525
      %556 = vst [vmem:[#allocation2 + $0xa0] sm:$0xf] %v526
      %557 = vst [vmem:[#allocation2 + $0xac] sm:$0xf] %v527
      %vm558 = vcmask 1045504
      %v559 = vrot.slane %v390, 2
      %v560 = vrot.slane %v391, 2
      %v561 = vsel %vm558, %v559, %v560
      %v562 = vrot.slane %v392, 2
      %v563 = vsel %vm558, %v560, %v562
      %v564 = vrot.slane %v393, 2
      %v565 = vsel %vm558, %v562, %v564
      %v566 = vrot.slane %v394, 2
      %v567 = vsel %vm558, %v564, %v566
      %v568 = vrot.slane %v395, 2
      %v569 = vsel %vm558, %v566, %v568
      %v570 = vrot.slane %v396, 2
      %v571 = vsel %vm558, %v568, %v570
      %v572 = vrot.slane %v397, 2
      %v573 = vsel %vm558, %v570, %v572
      %v574 = vrot.slane %v398, 2
      %v575 = vsel %vm558, %v572, %v574
      %v576 = vrot.slane %v399, 2
      %v577 = vsel %vm558, %v574, %v576
      %v578 = vrot.slane %v400, 2
      %v579 = vsel %vm558, %v576, %v578
      %v580 = vrot.slane %v401, 2
      %v581 = vsel %vm558, %v578, %v580
      %v582 = vrot.slane %v402, 2
      %v583 = vsel %vm558, %v580, %v582
      %v584 = vrot.slane %v403, 2
      %v585 = vsel %vm558, %v582, %v584
      %v586 = vrot.slane %v404, 2
      %v587 = vsel %vm558, %v584, %v586
      %v604 = vsel %vm558, %v586, %v559
      %v605 = vpack.c.bf16 %v563, %v561
      %v606 = vpack.c.bf16 %v567, %v565
      %v607 = vpack.c.bf16 %v571, %v569
      %v608 = vpack.c.bf16 %v575, %v573
      %v609 = vpack.c.bf16 %v579, %v577
      %v610 = vpack.c.bf16 %v583, %v581
      %v611 = vpack.c.bf16 %v587, %v585
      %v612 = vpack.c.bf16 %v604, %v604
      %v621 = vunpack.c.l.b16 %v605
      %v622 = vunpack.c.h.b16 %v605
      %v623 = vunpack.c.l.b16 %v606
      %v624 = vunpack.c.h.b16 %v606
      %v625 = vunpack.c.l.b16 %v607
      %v626 = vunpack.c.h.b16 %v607
      %v627 = vunpack.c.l.b16 %v608
      %v628 = vunpack.c.h.b16 %v608
      %v629 = vunpack.c.l.b16 %v609
      %v630 = vunpack.c.h.b16 %v609
      %v631 = vunpack.c.l.b16 %v610
      %v632 = vunpack.c.h.b16 %v610
      %v633 = vunpack.c.l.b16 %v611
      %v634 = vunpack.c.h.b16 %v611
      %v635 = vunpack.c.l.b16 %v612
      %v636 = vpack.c.b16 %v621, %v621
      %v637 = vpack.c.b16 %v622, %v622
      %v638 = vpack.c.b16 %v623, %v623
      %v639 = vpack.c.b16 %v624, %v624
      %v640 = vpack.c.b16 %v625, %v625
      %v641 = vpack.c.b16 %v626, %v626
      %v642 = vpack.c.b16 %v627, %v627
      %v643 = vpack.c.b16 %v628, %v628
      %v644 = vpack.c.b16 %v629, %v629
      %v645 = vpack.c.b16 %v630, %v630
      %v646 = vpack.c.b16 %v631, %v631
      %v647 = vpack.c.b16 %v632, %v632
      %v648 = vpack.c.b16 %v633, %v633
      %v649 = vpack.c.b16 %v634, %v634
      %v650 = vpack.c.b16 %v635, %v635
      %666 = vst [vmem:[#allocation2 + $0x8] sm:$0xf] %v636
      %667 = vst [vmem:[#allocation2 + $0x14] sm:$0xf] %v637
      %668 = vst [vmem:[#allocation2 + $0x20] sm:$0xf] %v638
      %669 = vst [vmem:[#allocation2 + $0x2c] sm:$0xf] %v639
      %670 = vst [vmem:[#allocation2 + $0x38] sm:$0xf] %v640
      %671 = vst [vmem:[#allocation2 + $0x44] sm:$0xf] %v641
      %672 = vst [vmem:[#allocation2 + $0x50] sm:$0xf] %v642
      %673 = vst [vmem:[#allocation2 + $0x5c] sm:$0xf] %v643
      %674 = vst [vmem:[#allocation2 + $0x68] sm:$0xf] %v644
      %675 = vst [vmem:[#allocation2 + $0x74] sm:$0xf] %v645
      %676 = vst [vmem:[#allocation2 + $0x80] sm:$0xf] %v646
      %677 = vst [vmem:[#allocation2 + $0x8c] sm:$0xf] %v647
      %678 = vst [vmem:[#allocation2 + $0x98] sm:$0xf] %v648
      %679 = vst [vmem:[#allocation2 + $0xa4] sm:$0xf] %v649
      %680 = vst [vmem:[#allocation2 + $0xb0] sm:$0xf] %v650
      %s681 = scalar_lea.vmem %s341, 60
      %v682 = vld [vmem:[%s681] sm:$0xf]
      %v683 = vld [vmem:[%s681 + $0x4] sm:$0xf]
      %v684 = vld [vmem:[%s681 + $0x8] sm:$0xf]
      %v685 = vld [vmem:[%s681 + $0xc] sm:$0xf]
      %v686 = vld [vmem:[%s681 + $0x10] sm:$0xf]
      %v687 = vld [vmem:[%s681 + $0x14] sm:$0xf]
      %v688 = vld [vmem:[%s681 + $0x18] sm:$0xf]
      %v689 = vld [vmem:[%s681 + $0x1c] sm:$0xf]
      %v690 = vld [vmem:[%s681 + $0x20] sm:$0xf]
      %v691 = vunpack.c.l.bf16 %v682
      %v692 = vunpack.c.l.bf16 %v683
      %v693 = vunpack.c.l.bf16 %v684
      %v694 = vunpack.c.l.bf16 %v685
      %v695 = vunpack.c.l.bf16 %v686
      %v696 = vunpack.c.l.bf16 %v687
      %v697 = vunpack.c.l.bf16 %v688
      %v698 = vunpack.c.l.bf16 %v689
      %v699 = vunpack.c.l.bf16 %v690
      %700 = vst [vmem:[#allocation2 + $0xb4] sm:$0xf] %v682
      %701 = vst [vmem:[#allocation2 + $0xc0] sm:$0xf] %v683
      %702 = vst [vmem:[#allocation2 + $0xcc] sm:$0xf] %v684
      %703 = vst [vmem:[#allocation2 + $0xd8] sm:$0xf] %v685
      %704 = vst [vmem:[#allocation2 + $0xe4] sm:$0xf] %v686
      %705 = vst [vmem:[#allocation2 + $0xf0] sm:$0xf] %v687
      %706 = vst [vmem:[#allocation2 + $0xfc] sm:$0xf] %v688
      %707 = vst [vmem:[#allocation2 + $0x108] sm:$0xf] %v689
      %708 = vst [vmem:[#allocation2 + $0x114] sm:$0xf] %v690
      %v718 = vrot.slane %v691, 1
      %v719 = vrot.slane %v692, 1
      %v720 = vsel %vm435, %v718, %v719
      %v721 = vrot.slane %v693, 1
      %v722 = vsel %vm435, %v719, %v721
      %v723 = vrot.slane %v694, 1
      %v724 = vsel %vm435, %v721, %v723
      %v725 = vrot.slane %v695, 1
      %v726 = vsel %vm435, %v723, %v725
      %v727 = vrot.slane %v696, 1
      %v728 = vsel %vm435, %v725, %v727
      %v729 = vrot.slane %v697, 1
      %v730 = vsel %vm435, %v727, %v729
      %v731 = vrot.slane %v698, 1
      %v732 = vsel %vm435, %v729, %v731
      %v733 = vrot.slane %v699, 1
      %v734 = vsel %vm435, %v731, %v733
      %v745 = vsel %vm435, %v733, %v718
      %v746 = vpack.c.bf16 %v722, %v720
      %v747 = vpack.c.bf16 %v726, %v724
      %v748 = vpack.c.bf16 %v730, %v728
      %v749 = vpack.c.bf16 %v734, %v732
      %v750 = vpack.c.bf16 %v745, %v745
      %v756 = vunpack.c.l.b16 %v746
      %v757 = vunpack.c.h.b16 %v746
      %v758 = vunpack.c.l.b16 %v747
      %v759 = vunpack.c.h.b16 %v747
      %v760 = vunpack.c.l.b16 %v748
      %v761 = vunpack.c.h.b16 %v748
      %v762 = vunpack.c.l.b16 %v749
      %v763 = vunpack.c.h.b16 %v749
      %v764 = vunpack.c.l.b16 %v750
      %v765 = vpack.c.b16 %v756, %v756
      %v766 = vpack.c.b16 %v757, %v757
      %v767 = vpack.c.b16 %v758, %v758
      %v768 = vpack.c.b16 %v759, %v759
      %v769 = vpack.c.b16 %v760, %v760
      %v770 = vpack.c.b16 %v761, %v761
      %v771 = vpack.c.b16 %v762, %v762
      %v772 = vpack.c.b16 %v763, %v763
      %v773 = vpack.c.b16 %v764, %v764
      %783 = vst [vmem:[#allocation2 + $0xb8] sm:$0xf] %v765
      %784 = vst [vmem:[#allocation2 + $0xc4] sm:$0xf] %v766
      %785 = vst [vmem:[#allocation2 + $0xd0] sm:$0xf] %v767
      %786 = vst [vmem:[#allocation2 + $0xdc] sm:$0xf] %v768
      %787 = vst [vmem:[#allocation2 + $0xe8] sm:$0xf] %v769
      %788 = vst [vmem:[#allocation2 + $0xf4] sm:$0xf] %v770
      %789 = vst [vmem:[#allocation2 + $0x100] sm:$0xf] %v771
      %790 = vst [vmem:[#allocation2 + $0x10c] sm:$0xf] %v772
      %791 = vst [vmem:[#allocation2 + $0x118] sm:$0xf] %v773
      %v792 = vrot.slane %v691, 2
      %v793 = vrot.slane %v692, 2
      %v794 = vsel %vm558, %v792, %v793
      %v795 = vrot.slane %v693, 2
      %v796 = vsel %vm558, %v793, %v795
      %v797 = vrot.slane %v694, 2
      %v798 = vsel %vm558, %v795, %v797
      %v799 = vrot.slane %v695, 2
      %v800 = vsel %vm558, %v797, %v799
      %v801 = vrot.slane %v696, 2
      %v802 = vsel %vm558, %v799, %v801
      %v803 = vrot.slane %v697, 2
      %v804 = vsel %vm558, %v801, %v803
      %v805 = vrot.slane %v698, 2
      %v806 = vsel %vm558, %v803, %v805
      %v807 = vrot.slane %v699, 2
      %v808 = vsel %vm558, %v805, %v807
      %v819 = vsel %vm558, %v807, %v792
      %v820 = vpack.c.bf16 %v796, %v794
      %v821 = vpack.c.bf16 %v800, %v798
      %v822 = vpack.c.bf16 %v804, %v802
      %v823 = vpack.c.bf16 %v808, %v806
      %v824 = vpack.c.bf16 %v819, %v819
      %v830 = vunpack.c.l.b16 %v820
      %v831 = vunpack.c.h.b16 %v820
      %v832 = vunpack.c.l.b16 %v821
      %v833 = vunpack.c.h.b16 %v821
      %v834 = vunpack.c.l.b16 %v822
      %v835 = vunpack.c.h.b16 %v822
      %v836 = vunpack.c.l.b16 %v823
      %v837 = vunpack.c.h.b16 %v823
      %v838 = vunpack.c.l.b16 %v824
      %v839 = vpack.c.b16 %v830, %v830
      %v840 = vpack.c.b16 %v831, %v831
      %v841 = vpack.c.b16 %v832, %v832
      %v842 = vpack.c.b16 %v833, %v833
      %v843 = vpack.c.b16 %v834, %v834
      %v844 = vpack.c.b16 %v835, %v835
      %v845 = vpack.c.b16 %v836, %v836
      %v846 = vpack.c.b16 %v837, %v837
      %v847 = vpack.c.b16 %v838, %v838
      %857 = vst [vmem:[#allocation2 + $0xbc] sm:$0xf] %v839
      %858 = vst [vmem:[#allocation2 + $0xc8] sm:$0xf] %v840
      %859 = vst [vmem:[#allocation2 + $0xd4] sm:$0xf] %v841
      %860 = vst [vmem:[#allocation2 + $0xe0] sm:$0xf] %v842
      %861 = vst [vmem:[#allocation2 + $0xec] sm:$0xf] %v843
      %862 = vst [vmem:[#allocation2 + $0xf8] sm:$0xf] %v844
      %863 = vst [vmem:[#allocation2 + $0x104] sm:$0xf] %v845
      %864 = vst [vmem:[#allocation2 + $0x110] sm:$0xf] %v846
      %865 = vst [vmem:[#allocation2 + $0x11c] sm:$0xf] %v847
      %v866 = vld [vmem:[%s359] sm:$0xf]
      %v867 = vld [vmem:[%s359 + $0x4] sm:$0xf]
      %v868 = vld [vmem:[%s359 + $0x8] sm:$0xf]
      %v869 = vld [vmem:[%s359 + $0xc] sm:$0xf]
      %v870 = vld [vmem:[%s359 + $0x10] sm:$0xf]
      %v871 = vld [vmem:[%s359 + $0x14] sm:$0xf]
      %v872 = vld [vmem:[%s359 + $0x18] sm:$0xf]
      %v873 = vld [vmem:[%s359 + $0x1c] sm:$0xf]
      %v874 = vld [vmem:[%s359 + $0x20] sm:$0xf]
      %v875 = vld [vmem:[%s359 + $0x24] sm:$0xf]
      %v876 = vld [vmem:[%s359 + $0x28] sm:$0xf]
      %v877 = vld [vmem:[%s359 + $0x2c] sm:$0xf]
      %v878 = vunpack.c.l.bf16 %v866
      %v879 = vunpack.c.l.bf16 %v867
      %v880 = vunpack.c.l.bf16 %v868
      %v881 = vunpack.c.l.bf16 %v869
      %v882 = vunpack.c.l.bf16 %v870
      %v883 = vunpack.c.l.bf16 %v871
      %v884 = vunpack.c.l.bf16 %v872
      %v885 = vunpack.c.l.bf16 %v873
      %v886 = vunpack.c.l.bf16 %v874
      %v887 = vunpack.c.l.bf16 %v875
      %v888 = vunpack.c.l.bf16 %v876
      %v889 = vunpack.c.l.bf16 %v877
      %890 = vst [vmem:[#allocation2 + $0x120] sm:$0xf] %v866
      %891 = vst [vmem:[#allocation2 + $0x12c] sm:$0xf] %v867
      %892 = vst [vmem:[#allocation2 + $0x138] sm:$0xf] %v868
      %893 = vst [vmem:[#allocation2 + $0x144] sm:$0xf] %v869
      %894 = vst [vmem:[#allocation2 + $0x150] sm:$0xf] %v870
      %895 = vst [vmem:[#allocation2 + $0x15c] sm:$0xf] %v871
      %896 = vst [vmem:[#allocation2 + $0x168] sm:$0xf] %v872
      %897 = vst [vmem:[#allocation2 + $0x174] sm:$0xf] %v873
      %898 = vst [vmem:[#allocation2 + $0x180] sm:$0xf] %v874
      %899 = vst [vmem:[#allocation2 + $0x18c] sm:$0xf] %v875
      %900 = vst [vmem:[#allocation2 + $0x198] sm:$0xf] %v876
      %901 = vst [vmem:[#allocation2 + $0x1a4] sm:$0xf] %v877
      %v914 = vrot.slane %v878, 1
      %v915 = vrot.slane %v879, 1
      %v916 = vsel %vm435, %v914, %v915
      %v917 = vrot.slane %v880, 1
      %v918 = vsel %vm435, %v915, %v917
      %v919 = vrot.slane %v881, 1
      %v920 = vsel %vm435, %v917, %v919
      %v921 = vrot.slane %v882, 1
      %v922 = vsel %vm435, %v919, %v921
      %v923 = vrot.slane %v883, 1
      %v924 = vsel %vm435, %v921, %v923
      %v925 = vrot.slane %v884, 1
      %v926 = vsel %vm435, %v923, %v925
      %v927 = vrot.slane %v885, 1
      %v928 = vsel %vm435, %v925, %v927
      %v929 = vrot.slane %v886, 1
      %v930 = vsel %vm435, %v927, %v929
      %v931 = vrot.slane %v887, 1
      %v932 = vsel %vm435, %v929, %v931
      %v933 = vrot.slane %v888, 1
      %v934 = vsel %vm435, %v931, %v933
      %v935 = vrot.slane %v889, 1
      %v936 = vsel %vm435, %v933, %v935
      %v950 = vsel %vm435, %v935, %v914
      %v951 = vpack.c.bf16 %v918, %v916
      %v952 = vpack.c.bf16 %v922, %v920
      %v953 = vpack.c.bf16 %v926, %v924
      %v954 = vpack.c.bf16 %v930, %v928
      %v955 = vpack.c.bf16 %v934, %v932
      %v956 = vpack.c.bf16 %v950, %v936
      %v963 = vunpack.c.l.b16 %v951
      %v964 = vunpack.c.h.b16 %v951
      %v965 = vunpack.c.l.b16 %v952
      %v966 = vunpack.c.h.b16 %v952
      %v967 = vunpack.c.l.b16 %v953
      %v968 = vunpack.c.h.b16 %v953
      %v969 = vunpack.c.l.b16 %v954
      %v970 = vunpack.c.h.b16 %v954
      %v971 = vunpack.c.l.b16 %v955
      %v972 = vunpack.c.h.b16 %v955
      %v973 = vunpack.c.l.b16 %v956
      %v974 = vunpack.c.h.b16 %v956
      %v975 = vpack.c.b16 %v963, %v963
      %v976 = vpack.c.b16 %v964, %v964
      %v977 = vpack.c.b16 %v965, %v965
      %v978 = vpack.c.b16 %v966, %v966
      %v979 = vpack.c.b16 %v967, %v967
      %v980 = vpack.c.b16 %v968, %v968
      %v981 = vpack.c.b16 %v969, %v969
      %v982 = vpack.c.b16 %v970, %v970
      %v983 = vpack.c.b16 %v971, %v971
      %v984 = vpack.c.b16 %v972, %v972
      %v985 = vpack.c.b16 %v973, %v973
      %v986 = vpack.c.b16 %v974, %v974
      %999 = vst [vmem:[#allocation2 + $0x124] sm:$0xf] %v975
      %1000 = vst [vmem:[#allocation2 + $0x130] sm:$0xf] %v976
      %1001 = vst [vmem:[#allocation2 + $0x13c] sm:$0xf] %v977
      %1002 = vst [vmem:[#allocation2 + $0x148] sm:$0xf] %v978
      %1003 = vst [vmem:[#allocation2 + $0x154] sm:$0xf] %v979
      %1004 = vst [vmem:[#allocation2 + $0x160] sm:$0xf] %v980
      %1005 = vst [vmem:[#allocation2 + $0x16c] sm:$0xf] %v981
      %1006 = vst [vmem:[#allocation2 + $0x178] sm:$0xf] %v982
      %1007 = vst [vmem:[#allocation2 + $0x184] sm:$0xf] %v983
      %1008 = vst [vmem:[#allocation2 + $0x190] sm:$0xf] %v984
      %1009 = vst [vmem:[#allocation2 + $0x19c] sm:$0xf] %v985
      %1010 = vst [vmem:[#allocation2 + $0x1a8] sm:$0xf] %v986
      %v1011 = vrot.slane %v878, 2
      %v1012 = vrot.slane %v879, 2
      %v1013 = vsel %vm558, %v1011, %v1012
      %v1014 = vrot.slane %v880, 2
      %v1015 = vsel %vm558, %v1012, %v1014
      %v1016 = vrot.slane %v881, 2
      %v1017 = vsel %vm558, %v1014, %v1016
      %v1018 = vrot.slane %v882, 2
      %v1019 = vsel %vm558, %v1016, %v1018
      %v1020 = vrot.slane %v883, 2
      %v1021 = vsel %vm558, %v1018, %v1020
      %v1022 = vrot.slane %v884, 2
      %v1023 = vsel %vm558, %v1020, %v1022
      %v1024 = vrot.slane %v885, 2
      %v1025 = vsel %vm558, %v1022, %v1024
      %v1026 = vrot.slane %v886, 2
      %v1027 = vsel %vm558, %v1024, %v1026
      %v1028 = vrot.slane %v887, 2
      %v1029 = vsel %vm558, %v1026, %v1028
      %v1030 = vrot.slane %v888, 2
      %v1031 = vsel %vm558, %v1028, %v1030
      %v1032 = vrot.slane %v889, 2
      %v1033 = vsel %vm558, %v1030, %v1032
      %v1047 = vsel %vm558, %v1032, %v1011
      %v1048 = vpack.c.bf16 %v1015, %v1013
      %v1049 = vpack.c.bf16 %v1019, %v1017
      %v1050 = vpack.c.bf16 %v1023, %v1021
      %v1051 = vpack.c.bf16 %v1027, %v1025
      %v1052 = vpack.c.bf16 %v1031, %v1029
      %v1053 = vpack.c.bf16 %v1047, %v1033
      %v1060 = vunpack.c.l.b16 %v1048
      %v1061 = vunpack.c.h.b16 %v1048
      %v1062 = vunpack.c.l.b16 %v1049
      %v1063 = vunpack.c.h.b16 %v1049
      %v1064 = vunpack.c.l.b16 %v1050
      %v1065 = vunpack.c.h.b16 %v1050
      %v1066 = vunpack.c.l.b16 %v1051
      %v1067 = vunpack.c.h.b16 %v1051
      %v1068 = vunpack.c.l.b16 %v1052
      %v1069 = vunpack.c.h.b16 %v1052
      %v1070 = vunpack.c.l.b16 %v1053
      %v1071 = vunpack.c.h.b16 %v1053
      %v1072 = vpack.c.b16 %v1060, %v1060
      %v1073 = vpack.c.b16 %v1061, %v1061
      %v1074 = vpack.c.b16 %v1062, %v1062
      %v1075 = vpack.c.b16 %v1063, %v1063
      %v1076 = vpack.c.b16 %v1064, %v1064
      %v1077 = vpack.c.b16 %v1065, %v1065
      %v1078 = vpack.c.b16 %v1066, %v1066
      %v1079 = vpack.c.b16 %v1067, %v1067
      %v1080 = vpack.c.b16 %v1068, %v1068
      %v1081 = vpack.c.b16 %v1069, %v1069
      %v1082 = vpack.c.b16 %v1070, %v1070
      %v1083 = vpack.c.b16 %v1071, %v1071
      %1096 = vst [vmem:[#allocation2 + $0x128] sm:$0xf] %v1072
      %1097 = vst [vmem:[#allocation2 + $0x134] sm:$0xf] %v1073
      %1098 = vst [vmem:[#allocation2 + $0x140] sm:$0xf] %v1074
      %1099 = vst [vmem:[#allocation2 + $0x14c] sm:$0xf] %v1075
      %1100 = vst [vmem:[#allocation2 + $0x158] sm:$0xf] %v1076
      %1101 = vst [vmem:[#allocation2 + $0x164] sm:$0xf] %v1077
      %1102 = vst [vmem:[#allocation2 + $0x170] sm:$0xf] %v1078
      %1103 = vst [vmem:[#allocation2 + $0x17c] sm:$0xf] %v1079
      %1104 = vst [vmem:[#allocation2 + $0x188] sm:$0xf] %v1080
      %1105 = vst [vmem:[#allocation2 + $0x194] sm:$0xf] %v1081
      %1106 = vst [vmem:[#allocation2 + $0x1a0] sm:$0xf] %v1082
      %1107 = vst [vmem:[#allocation2 + $0x1ac] sm:$0xf] %v1083
      %v1108 = vlaneseq
      %v1109 = vshrl.u32 %v1108, 7
      %v1110 = vadd.s32 %v1109, 8
      %v1111 = vadd.s32 %v1109, 16
      %v1112 = vsub.s32 %v1109, 1
      %v1113 = vsub.s32 %v1110, 1
      %v1114 = vsub.s32 %v1111, 1
      %vm1115 = vcmp.ge.s32.totalorder %v1112, 0
      %vm1116 = vcmp.ge.s32.totalorder %v1113, 0
      %vm1117 = vcmp.ge.s32.totalorder %v1114, 0
      %vm1118 = vcmp.lt.s32.totalorder %v1112, 16
      %vm1119 = vcmp.lt.s32.totalorder %v1113, 16
      %vm1120 = vcmp.lt.s32.totalorder %v1114, 16
      %vm1121 = vmand %vm1115, %vm1118
      %vm1122 = vmand %vm1116, %vm1119
      %vm1123 = vmand %vm1117, %vm1120
      %s1124 = smul.u32 %s22, 8
      %s1125 = ssub.s32 %s1124, 1
      %v1126 = vld [vmem:[#allocation2] sm:$0xff]
      %v1127 = vld [vmem:[#allocation2 + $0x8] sm:$0xf]
      %v1128 = vld [vmem:[#allocation2 + $0xc] sm:$0xff]
      %v1129 = vld [vmem:[#allocation2 + $0x14] sm:$0xf]
      %v1130 = vld [vmem:[#allocation2 + $0x18] sm:$0xff]
      %v1131 = vld [vmem:[#allocation2 + $0x20] sm:$0xf]
      %v1132 = vld [vmem:[#allocation2 + $0x24] sm:$0xff]
      %v1133 = vld [vmem:[#allocation2 + $0x2c] sm:$0xf]
      %v1134 = vld [vmem:[#allocation2 + $0x30] sm:$0xff]
      %v1135 = vld [vmem:[#allocation2 + $0x38] sm:$0xf]
      %v1136 = vld [vmem:[#allocation2 + $0x3c] sm:$0xff]
      %v1137 = vld [vmem:[#allocation2 + $0x44] sm:$0xf]
      %v1138 = vld [vmem:[#allocation2 + $0x48] sm:$0xff]
      %v1139 = vld [vmem:[#allocation2 + $0x50] sm:$0xf]
      %v1140 = vld [vmem:[#allocation2 + $0x54] sm:$0xff]
      %v1141 = vld [vmem:[#allocation2 + $0x5c] sm:$0xf]
      %v1142 = vld [vmem:[#allocation2 + $0x60] sm:$0xff]
      %v1143 = vld [vmem:[#allocation2 + $0x68] sm:$0xf]
      %v1144 = vld [vmem:[#allocation2 + $0x6c] sm:$0xff]
      %v1145 = vld [vmem:[#allocation2 + $0x74] sm:$0xf]
      %v1146 = vld [vmem:[#allocation2 + $0x78] sm:$0xff]
      %v1147 = vld [vmem:[#allocation2 + $0x80] sm:$0xf]
      %v1148 = vld [vmem:[#allocation2 + $0x84] sm:$0xff]
      %v1149 = vld [vmem:[#allocation2 + $0x8c] sm:$0xf]
      %v1150 = vld [vmem:[%s2] sm:$0xf]
      %v1151 = vld [vmem:[%s2 + $0x4] sm:$0xf]
      %v1152 = vld [vmem:[%s2 + $0x8] sm:$0xf]
      %v1153 = vld [vmem:[%s2 + $0xc] sm:$0xf]
      %v1154 = vld [vmem:[%s2 + $0x10] sm:$0xf]
      %v1155 = vld [vmem:[%s2 + $0x14] sm:$0xf]
      %v1156 = vld [vmem:[%s2 + $0x18] sm:$0xf]
      %v1157 = vld [vmem:[%s2 + $0x1c] sm:$0xf]
      %v1158 = vld [vmem:[%s2 + $0x20] sm:$0xf]
      %v1159 = vld [vmem:[%s2 + $0x24] sm:$0xf]
      %v1160 = vld [vmem:[%s2 + $0x28] sm:$0xf]
      %v1161 = vld [vmem:[%s2 + $0x2c] sm:$0xf]
      %v1162 = vld [vmem:[%s2 + $0x30] sm:$0xf]
      %v1163 = vld [vmem:[%s2 + $0x34] sm:$0xf]
      %v1164 = vld [vmem:[%s2 + $0x38] sm:$0xf]
      %v1165 = vld [vmem:[%s2 + $0x3c] sm:$0xf]
      %v1166 = vld [vmem:[%s2 + $0x40] sm:$0xf]
      %v1167 = vld [vmem:[%s2 + $0x44] sm:$0xf]
      %v1168 = vld [vmem:[%s2 + $0x48] sm:$0xf]
      %v1169 = vld [vmem:[%s2 + $0x4c] sm:$0xf]
      %v1170 = vld [vmem:[%s2 + $0x50] sm:$0xf]
      %v1171 = vld [vmem:[%s2 + $0x54] sm:$0xf]
      %v1172 = vld [vmem:[%s2 + $0x58] sm:$0xf]
      %v1173 = vld [vmem:[%s2 + $0x5c] sm:$0xf]
      %v1174 = vld [vmem:[%s2 + $0x60] sm:$0xf]
      %v1175 = vld [vmem:[%s2 + $0x64] sm:$0xf]
      %v1176 = vld [vmem:[%s2 + $0x68] sm:$0xf]
      %v1177 = vld [vmem:[%s2 + $0x6c] sm:$0xf]
      %v1178 = vld [vmem:[%s2 + $0x70] sm:$0xf]
      %v1179 = vld [vmem:[%s2 + $0x74] sm:$0xf]
      %v1180 = vld [vmem:[%s2 + $0x78] sm:$0xf]
      %v1181 = vld [vmem:[%s2 + $0x7c] sm:$0xf]
      %v1182 = vld [vmem:[%s2 + $0x80] sm:$0xf]
      %v1183 = vld [vmem:[%s2 + $0x84] sm:$0xf]
      %v1184 = vld [vmem:[%s2 + $0x88] sm:$0xf]
      %v1185 = vld [vmem:[%s2 + $0x8c] sm:$0xf]
      %v1186 = vld [vmem:[%s2 + $0x90] sm:$0xf]
      %v1187 = vld [vmem:[%s2 + $0x94] sm:$0xf]
      %v1188 = vld [vmem:[%s2 + $0x98] sm:$0xf]
      %v1189 = vld [vmem:[%s2 + $0x9c] sm:$0xf]
      %v1190 = vld [vmem:[%s2 + $0xa0] sm:$0xf]
      %v1191 = vld [vmem:[%s2 + $0xa4] sm:$0xf]
      %v1192 = vld [vmem:[%s2 + $0xa8] sm:$0xf]
      %v1193 = vld [vmem:[%s2 + $0xac] sm:$0xf]
      %v1194 = vld [vmem:[%s2 + $0xb0] sm:$0xf]
      %v1195 = vld [vmem:[%s2 + $0xb4] sm:$0xf]
      %v1196 = vld [vmem:[%s2 + $0xb8] sm:$0xf]
      %v1197 = vld [vmem:[%s2 + $0xbc] sm:$0xf]
      %v1198 = vld [vmem:[#allocation2 + $0x90] sm:$0xff]
      %v1199 = vld [vmem:[#allocation2 + $0x98] sm:$0xf]
      %v1200 = vld [vmem:[#allocation2 + $0x9c] sm:$0xff]
      %v1201 = vld [vmem:[#allocation2 + $0xa4] sm:$0xf]
      %v1202 = vld [vmem:[#allocation2 + $0xa8] sm:$0xff]
      %v1203 = vld [vmem:[#allocation2 + $0xb0] sm:$0xf]
      %s1204 = scalar_lea.vmem %s2, 192
      %v1205 = vld [vmem:[%s1204] sm:$0xf]
      %v1206 = vld [vmem:[%s1204 + $0x4] sm:$0xf]
      %v1207 = vld [vmem:[%s1204 + $0x8] sm:$0xf]
      %v1208 = vld [vmem:[%s1204 + $0xc] sm:$0xf]
      %v1209 = vld [vmem:[%s1204 + $0x10] sm:$0xf]
      %v1210 = vld [vmem:[%s1204 + $0x14] sm:$0xf]
      %v1211 = vld [vmem:[%s1204 + $0x18] sm:$0xf]
      %v1212 = vld [vmem:[%s1204 + $0x1c] sm:$0xf]
      %v1213 = vld [vmem:[%s1204 + $0x20] sm:$0xf]
      %v1214 = vld [vmem:[%s1204 + $0x24] sm:$0xf]
      %v1215 = vld [vmem:[%s1204 + $0x28] sm:$0xf]
      %v1216 = vld [vmem:[%s1204 + $0x2c] sm:$0xf]
      %v1217 = vld [vmem:[%s1204 + $0x30] sm:$0xf]
      %v1218 = vld [vmem:[%s1204 + $0x34] sm:$0xf]
      %v1219 = vld [vmem:[%s1204 + $0x38] sm:$0xf]
      %v1220 = vld [vmem:[%s1204 + $0x3c] sm:$0xf]
      %v1221 = vld [vmem:[%s1204 + $0x40] sm:$0xf]
      %v1222 = vld [vmem:[%s1204 + $0x44] sm:$0xf]
      %v1223 = vld [vmem:[%s1204 + $0x48] sm:$0xf]
      %v1224 = vld [vmem:[%s1204 + $0x4c] sm:$0xf]
      %v1225 = vld [vmem:[%s1204 + $0x50] sm:$0xf]
      %v1226 = vld [vmem:[%s1204 + $0x54] sm:$0xf]
      %v1227 = vld [vmem:[%s1204 + $0x58] sm:$0xf]
      %v1228 = vld [vmem:[%s1204 + $0x5c] sm:$0xf]
      %v1229 = vld [vmem:[%s1204 + $0x60] sm:$0xf]
      %v1230 = vld [vmem:[%s1204 + $0x64] sm:$0xf]
      %v1231 = vld [vmem:[%s1204 + $0x68] sm:$0xf]
      %v1232 = vld [vmem:[%s1204 + $0x6c] sm:$0xf]
      %v1233 = vld [vmem:[%s1204 + $0x70] sm:$0xf]
      %v1234 = vld [vmem:[%s1204 + $0x74] sm:$0xf]
      %v1235 = vld [vmem:[%s1204 + $0x78] sm:$0xf]
      %v1236 = vld [vmem:[%s1204 + $0x7c] sm:$0xf]
      %v1237 = vld [vmem:[%s1204 + $0x80] sm:$0xf]
      %v1238 = vld [vmem:[%s1204 + $0x84] sm:$0xf]
      %v1239 = vld [vmem:[%s1204 + $0x88] sm:$0xf]
      %v1240 = vld [vmem:[%s1204 + $0x8c] sm:$0xf]
      %v1241 = vld [vmem:[%s1204 + $0x90] sm:$0xf]
      %v1242 = vld [vmem:[%s1204 + $0x94] sm:$0xf]
      %v1243 = vld [vmem:[%s1204 + $0x98] sm:$0xf]
      %v1244 = vld [vmem:[%s1204 + $0x9c] sm:$0xf]
      %v1245 = vld [vmem:[%s1204 + $0xa0] sm:$0xf]
      %v1246 = vld [vmem:[%s1204 + $0xa4] sm:$0xf]
      %v1247 = vld [vmem:[%s1204 + $0xa8] sm:$0xf]
      %v1248 = vld [vmem:[%s1204 + $0xac] sm:$0xf]
      %v1249 = vld [vmem:[%s1204 + $0xb0] sm:$0xf]
      %v1250 = vld [vmem:[%s1204 + $0xb4] sm:$0xf]
      %v1251 = vld [vmem:[%s1204 + $0xb8] sm:$0xf]
      %v1252 = vld [vmem:[%s1204 + $0xbc] sm:$0xf]
      %v1277 = vunpack.c.l.b16 %v1132
      %v1278 = vunpack.c.h.b16 %v1132
      %v1279 = vunpack.c.l.b16 %v1133
      %v1280 = vunpack.c.l.b16 %v1134
      %v1281 = vunpack.c.h.b16 %v1134
      %v1282 = vunpack.c.l.b16 %v1135
      %v1283 = vunpack.c.l.b16 %v1136
      %v1284 = vunpack.c.h.b16 %v1136
      %v1285 = vunpack.c.l.b16 %v1137
      %v1286 = vunpack.c.l.b16 %v1138
      %v1287 = vunpack.c.h.b16 %v1138
      %v1288 = vunpack.c.l.b16 %v1139
      %v1289 = vunpack.c.l.b16 %v1140
      %v1290 = vunpack.c.h.b16 %v1140
      %v1291 = vunpack.c.l.b16 %v1141
      %v1292 = vunpack.c.l.b16 %v1142
      %v1293 = vunpack.c.h.b16 %v1142
      %v1294 = vunpack.c.l.b16 %v1143
      %v1295 = vunpack.c.l.b16 %v1144
      %v1296 = vunpack.c.h.b16 %v1144
      %v1297 = vunpack.c.l.b16 %v1145
      %v1298 = vunpack.c.l.b16 %v1146
      %v1299 = vunpack.c.h.b16 %v1146
      %v1300 = vunpack.c.l.b16 %v1147
      %v1301 = vunpack.c.l.b16 %v1148
      %v1302 = vunpack.c.h.b16 %v1148
      %v1303 = vunpack.c.l.b16 %v1149
      %v1304 = vunpack.c.l.b16 %v1198
      %v1305 = vunpack.c.h.b16 %v1198
      %v1306 = vunpack.c.l.b16 %v1199
      %v1307 = vunpack.c.l.b16 %v1200
      %v1308 = vunpack.c.h.b16 %v1200
      %v1309 = vunpack.c.l.b16 %v1201
      %v1310 = vunpack.c.l.b16 %v1202
      %v1311 = vunpack.c.h.b16 %v1202
      %v1312 = vunpack.c.l.b16 %v1203
      %v1313 = vpack.c.b16 %v1280, %v1277
      %v1314 = vpack.c.b16 %v1281, %v1278
      %v1315 = vpack.c.b16 %v1282, %v1279
      %v1316 = vpack.c.b16 %v1286, %v1283
      %v1317 = vpack.c.b16 %v1287, %v1284
      %v1318 = vpack.c.b16 %v1288, %v1285
      %v1319 = vpack.c.b16 %v1292, %v1289
      %v1320 = vpack.c.b16 %v1293, %v1290
      %v1321 = vpack.c.b16 %v1294, %v1291
      %v1322 = vpack.c.b16 %v1298, %v1295
      %v1323 = vpack.c.b16 %v1299, %v1296
      %v1324 = vpack.c.b16 %v1300, %v1297
      %v1325 = vpack.c.b16 %v1304, %v1301
      %v1326 = vpack.c.b16 %v1305, %v1302
      %v1327 = vpack.c.b16 %v1306, %v1303
      %v1328 = vpack.c.b16 %v1310, %v1307
      %v1329 = vpack.c.b16 %v1311, %v1308
      %v1330 = vpack.c.b16 %v1312, %v1309
      %v1397 = vunpack.c.l.b16 %v1205
      %v1398 = vunpack.c.l.b16 %v1206
      %v1399 = vunpack.c.l.b16 %v1207
      %v1400 = vunpack.c.l.b16 %v1208
      %v1401 = vunpack.c.l.b16 %v1209
      %v1402 = vunpack.c.l.b16 %v1210
      %v1403 = vunpack.c.l.b16 %v1211
      %v1404 = vunpack.c.l.b16 %v1212
      %v1405 = vunpack.c.l.b16 %v1213
      %v1406 = vunpack.c.l.b16 %v1214
      %v1407 = vunpack.c.l.b16 %v1215
      %v1408 = vunpack.c.l.b16 %v1216
      %v1409 = vunpack.c.l.b16 %v1217
      %v1410 = vunpack.c.l.b16 %v1218
      %v1411 = vunpack.c.l.b16 %v1219
      %v1412 = vunpack.c.l.b16 %v1220
      %v1413 = vunpack.c.l.b16 %v1221
      %v1414 = vunpack.c.l.b16 %v1222
      %v1415 = vunpack.c.l.b16 %v1223
      %v1416 = vunpack.c.l.b16 %v1224
      %v1417 = vunpack.c.l.b16 %v1225
      %v1418 = vunpack.c.l.b16 %v1226
      %v1419 = vunpack.c.l.b16 %v1227
      %v1420 = vunpack.c.l.b16 %v1228
      %v1421 = vunpack.c.l.b16 %v1229
      %v1422 = vunpack.c.l.b16 %v1230
      %v1423 = vunpack.c.l.b16 %v1231
      %v1424 = vunpack.c.l.b16 %v1232
      %v1425 = vunpack.c.l.b16 %v1233
      %v1426 = vunpack.c.l.b16 %v1234
      %v1427 = vunpack.c.l.b16 %v1235
      %v1428 = vunpack.c.l.b16 %v1236
      %v1429 = vunpack.c.l.b16 %v1237
      %v1430 = vunpack.c.l.b16 %v1238
      %v1431 = vunpack.c.l.b16 %v1239
      %v1432 = vunpack.c.l.b16 %v1240
      %v1433 = vunpack.c.l.b16 %v1241
      %v1434 = vunpack.c.l.b16 %v1242
      %v1435 = vunpack.c.l.b16 %v1243
      %v1436 = vunpack.c.l.b16 %v1244
      %v1437 = vunpack.c.l.b16 %v1245
      %v1438 = vunpack.c.l.b16 %v1246
      %v1439 = vunpack.c.l.b16 %v1247
      %v1440 = vunpack.c.l.b16 %v1248
      %v1441 = vunpack.c.l.b16 %v1249
      %v1442 = vunpack.c.l.b16 %v1250
      %v1443 = vunpack.c.l.b16 %v1251
      %v1444 = vunpack.c.l.b16 %v1252
      %v1445 = vpack.c.b16 %v1398, %v1397
      %v1446 = vpack.c.b16 %v1400, %v1399
      %v1447 = vpack.c.b16 %v1402, %v1401
      %v1448 = vpack.c.b16 %v1404, %v1403
      %v1449 = vpack.c.b16 %v1406, %v1405
      %v1450 = vpack.c.b16 %v1408, %v1407
      %v1451 = vpack.c.b16 %v1410, %v1409
      %v1452 = vpack.c.b16 %v1412, %v1411
      %v1453 = vpack.c.b16 %v1414, %v1413
      %v1454 = vpack.c.b16 %v1416, %v1415
      %v1455 = vpack.c.b16 %v1418, %v1417
      %v1456 = vpack.c.b16 %v1420, %v1419
      %v1457 = vpack.c.b16 %v1422, %v1421
      %v1458 = vpack.c.b16 %v1424, %v1423
      %v1459 = vpack.c.b16 %v1426, %v1425
      %v1460 = vpack.c.b16 %v1428, %v1427
      %v1461 = vpack.c.b16 %v1430, %v1429
      %v1462 = vpack.c.b16 %v1432, %v1431
      %v1463 = vpack.c.b16 %v1434, %v1433
      %v1464 = vpack.c.b16 %v1436, %v1435
      %v1465 = vpack.c.b16 %v1438, %v1437
      %v1466 = vpack.c.b16 %v1440, %v1439
      %v1467 = vpack.c.b16 %v1442, %v1441
      %v1468 = vpack.c.b16 %v1444, %v1443
      %1493 = vmatprep.subr.bf16.mxu0 0
      %1494 = vmatpush1.bf16.msra.mxu0 %v1452
      %1495 = vmatprep.subr.bf16.mxu0 0
      %1496 = vmatpush1.bf16.msra.mxu0 %v1451
      %1497 = vmatprep.subr.bf16.mxu0 0
      %1498 = vmatpush1.bf16.msra.mxu0 %v1450
      %1499 = vmatprep.subr.bf16.mxu0 0
      %1500 = vmatpush1.bf16.msra.mxu0 %v1449
      %1501 = vmatprep.subr.bf16.mxu0 0
      %1502 = vmatpush1.bf16.msra.mxu0 %v1448
      %1503 = vmatprep.subr.bf16.mxu0 0
      %1504 = vmatpush1.bf16.msra.mxu0 %v1447
      %1505 = vmatprep.subr.bf16.mxu0 0
      %1506 = vmatpush1.bf16.msra.mxu0 %v1446
      %1507 = vmatprep.subr.bf16.mxu0 0
      %1508 = vmatpush1.bf16.msra.mxu0 %v1445
      %1509 = vmatprep.subr.bf16.mxu0 0
      %1510 = vmatpush2.bf16.msra.mxu0 %v1460
      %1511 = vmatprep.subr.bf16.mxu0 0
      %1512 = vmatpush2.bf16.msra.mxu0 %v1459
      %1513 = vmatprep.subr.bf16.mxu0 0
      %1514 = vmatpush2.bf16.msra.mxu0 %v1458
      %1515 = vmatprep.subr.bf16.mxu0 0
      %1516 = vmatpush2.bf16.msra.mxu0 %v1457
      %1517 = vmatprep.subr.bf16.mxu0 0
      %1518 = vmatpush2.bf16.msra.mxu0 %v1456
      %1519 = vmatprep.subr.bf16.mxu0 0
      %1520 = vmatpush2.bf16.msra.mxu0 %v1455
      %1521 = vmatprep.subr.bf16.mxu0 0
      %1522 = vmatpush2.bf16.msra.mxu0 %v1454
      %1523 = vmatprep.subr.bf16.mxu0 0
      %1524 = vmatpush2.bf16.msra.mxu0 %v1453
      %1525 = vmatprep.mubr.bf16.mxu0 %v1314
      %1526 = vmatmul.mubr.bf16.gmra.mxu0 %v1313
      %v1527 = vpop.f32.mrf.mxu0
      %v1528 = vadd.f32 0.0, %v1527
      %v1529 = vpop.f32.mrf.mxu0
      %v1530 = vpop.f32.mrf.mxu0
      %v1531 = vadd.f32 0.0, %v1530
      %v1532 = vpop.f32.mrf.mxu0
      %1533 = vmatprep.mubr.bf16.mxu0 %v1317
      %1534 = vmatmul.mubr.bf16.gmra.mxu0 %v1316
      %v1535 = vpop.f32.mrf.mxu0
      %v1536 = vadd.f32 0.0, %v1535
      %v1537 = vpop.f32.mrf.mxu0
      %v1538 = vpop.f32.mrf.mxu0
      %v1539 = vadd.f32 0.0, %v1538
      %v1540 = vpop.f32.mrf.mxu0
      %1541 = vmatprep.mubr.bf16.mxu0 %v1320
      %1542 = vmatmul.mubr.bf16.gmra.mxu0 %v1319
      %v1543 = vpop.f32.mrf.mxu0
      %v1544 = vadd.f32 0.0, %v1543
      %v1545 = vpop.f32.mrf.mxu0
      %v1546 = vpop.f32.mrf.mxu0
      %v1547 = vadd.f32 0.0, %v1546
      %v1548 = vpop.f32.mrf.mxu0
      %1549 = vmatprep.mubr.bf16.mxu0 %v1323
      %1550 = vmatmul.mubr.bf16.gmra.mxu0 %v1322
      %v1551 = vpop.f32.mrf.mxu0
      %v1552 = vadd.f32 0.0, %v1551
      %v1553 = vpop.f32.mrf.mxu0
      %v1554 = vpop.f32.mrf.mxu0
      %v1555 = vadd.f32 0.0, %v1554
      %v1556 = vpop.f32.mrf.mxu0
      %1557 = vmatprep.mubr.bf16.mxu0 %v1326
      %1558 = vmatmul.mubr.bf16.gmra.mxu0 %v1325
      %v1559 = vpop.f32.mrf.mxu0
      %v1560 = vadd.f32 0.0, %v1559
      %v1561 = vpop.f32.mrf.mxu0
      %v1562 = vpop.f32.mrf.mxu0
      %v1563 = vadd.f32 0.0, %v1562
      %v1564 = vpop.f32.mrf.mxu0
      %1565 = vmatprep.mubr.bf16.mxu0 %v1329
      %1566 = vmatmul.mubr.bf16.gmra.mxu0 %v1328
      %v1567 = vpop.f32.mrf.mxu0
      %v1568 = vadd.f32 0.0, %v1567
      %v1569 = vpop.f32.mrf.mxu0
      %v1570 = vpop.f32.mrf.mxu0
      %v1571 = vadd.f32 0.0, %v1570
      %v1572 = vpop.f32.mrf.mxu0
      %1573 = vdwg.mxu0
      %1574 = vmatprep.subr.bf16.mxu0 0
      %1575 = vmatpush1.bf16.msra.mxu0 %v1468
      %1576 = vmatprep.subr.bf16.mxu0 0
      %1577 = vmatpush1.bf16.msra.mxu0 %v1467
      %1578 = vmatprep.subr.bf16.mxu0 0
      %1579 = vmatpush1.bf16.msra.mxu0 %v1466
      %1580 = vmatprep.subr.bf16.mxu0 0
      %1581 = vmatpush1.bf16.msra.mxu0 %v1465
      %1582 = vmatprep.subr.bf16.mxu0 0
      %1583 = vmatpush1.bf16.msra.mxu0 %v1464
      %1584 = vmatprep.subr.bf16.mxu0 0
      %1585 = vmatpush1.bf16.msra.mxu0 %v1463
      %1586 = vmatprep.subr.bf16.mxu0 0
      %1587 = vmatpush1.bf16.msra.mxu0 %v1462
      %1588 = vmatprep.subr.bf16.mxu0 0
      %1589 = vmatpush1.bf16.msra.mxu0 %v1461
      %1590 = vmatprep.subr.bf16.mxu0 0
      %1591 = vmatpush2.bf16.msra.mxu0 0
      %1592 = vmatprep.subr.bf16.mxu0 0
      %1593 = vmatpush2.bf16.msra.mxu0 0
      %1594 = vmatprep.subr.bf16.mxu0 0
      %1595 = vmatpush2.bf16.msra.mxu0 0
      %1596 = vmatprep.subr.bf16.mxu0 0
      %1597 = vmatpush2.bf16.msra.mxu0 0
      %1598 = vmatprep.subr.bf16.mxu0 0
      %1599 = vmatpush2.bf16.msra.mxu0 0
      %1600 = vmatprep.subr.bf16.mxu0 0
      %1601 = vmatpush2.bf16.msra.mxu0 0
      %1602 = vmatprep.subr.bf16.mxu0 0
      %1603 = vmatpush2.bf16.msra.mxu0 0
      %1604 = vmatprep.subr.bf16.mxu0 0
      %1605 = vmatpush2.bf16.msra.mxu0 0
      %1606 = vmatprep.mubr.bf16.mxu0 0
      %1607 = vmatmul.mubr.bf16.gmra.mxu0 %v1315
      %v1608 = vpop.f32.mrf.mxu0
      %v1609 = vadd.f32 %v1528, %v1608
      %v1610 = vpop.f32.mrf.mxu0
      %v1611 = vpop.f32.mrf.mxu0
      %v1612 = vadd.f32 %v1531, %v1611
      %v1613 = vpop.f32.mrf.mxu0
      %1614 = vmatprep.mubr.bf16.mxu0 0
      %1615 = vmatmul.mubr.bf16.gmra.mxu0 %v1318
      %v1616 = vpop.f32.mrf.mxu0
      %v1617 = vadd.f32 %v1536, %v1616
      %v1618 = vpop.f32.mrf.mxu0
      %v1619 = vpop.f32.mrf.mxu0
      %v1620 = vadd.f32 %v1539, %v1619
      %v1621 = vpop.f32.mrf.mxu0
      %1622 = vmatprep.mubr.bf16.mxu0 0
      %1623 = vmatmul.mubr.bf16.gmra.mxu0 %v1321
      %v1624 = vpop.f32.mrf.mxu0
      %v1625 = vadd.f32 %v1544, %v1624
      %v1626 = vpop.f32.mrf.mxu0
      %v1627 = vpop.f32.mrf.mxu0
      %v1628 = vadd.f32 %v1547, %v1627
      %v1629 = vpop.f32.mrf.mxu0
      %1630 = vmatprep.mubr.bf16.mxu0 0
      %1631 = vmatmul.mubr.bf16.gmra.mxu0 %v1324
      %v1632 = vpop.f32.mrf.mxu0
      %v1633 = vadd.f32 %v1552, %v1632
      %v1634 = vpop.f32.mrf.mxu0
      %v1635 = vpop.f32.mrf.mxu0
      %v1636 = vadd.f32 %v1555, %v1635
      %v1637 = vpop.f32.mrf.mxu0
      %1638 = vmatprep.mubr.bf16.mxu0 0
      %1639 = vmatmul.mubr.bf16.gmra.mxu0 %v1327
      %v1640 = vpop.f32.mrf.mxu0
      %v1641 = vadd.f32 %v1560, %v1640
      %v1642 = vpop.f32.mrf.mxu0
      %v1643 = vpop.f32.mrf.mxu0
      %v1644 = vadd.f32 %v1563, %v1643
      %v1645 = vpop.f32.mrf.mxu0
      %1646 = vmatprep.mubr.bf16.mxu0 0
      %1647 = vmatmul.mubr.bf16.gmra.mxu0 %v1330
      %v1648 = vpop.f32.mrf.mxu0
      %v1649 = vadd.f32 %v1568, %v1648
      %v1650 = vpop.f32.mrf.mxu0
      %v1651 = vpop.f32.mrf.mxu0
      %v1652 = vadd.f32 %v1571, %v1651
      %v1653 = vpop.f32.mrf.mxu0
      %1654 = vdwg.mxu0
      %v1661 = vunpack.c.l.b16 %v1126
      %v1662 = vunpack.c.h.b16 %v1126
      %v1663 = vunpack.c.l.b16 %v1127
      %v1664 = vunpack.c.l.b16 %v1128
      %v1665 = vunpack.c.h.b16 %v1128
      %v1666 = vunpack.c.l.b16 %v1129
      %v1667 = vunpack.c.l.b16 %v1130
      %v1668 = vunpack.c.h.b16 %v1130
      %v1669 = vunpack.c.l.b16 %v1131
      %v1670 = vpack.c.b16 %v1664, %v1661
      %v1671 = vpack.c.b16 %v1665, %v1662
      %v1672 = vpack.c.b16 %v1666, %v1663
      %v1673 = vpack.c.b16 %v1277, %v1667
      %v1674 = vpack.c.b16 %v1278, %v1668
      %v1675 = vpack.c.b16 %v1279, %v1669
      %v1676 = vpack.c.b16 %v1283, %v1280
      %v1677 = vpack.c.b16 %v1284, %v1281
      %v1678 = vpack.c.b16 %v1285, %v1282
      %v1679 = vpack.c.b16 %v1289, %v1286
      %v1680 = vpack.c.b16 %v1290, %v1287
      %v1681 = vpack.c.b16 %v1291, %v1288
      %v1682 = vpack.c.b16 %v1295, %v1292
      %v1683 = vpack.c.b16 %v1296, %v1293
      %v1684 = vpack.c.b16 %v1297, %v1294
      %v1685 = vpack.c.b16 %v1301, %v1298
      %v1686 = vpack.c.b16 %v1302, %v1299
      %v1687 = vpack.c.b16 %v1303, %v1300
      %v1754 = vunpack.c.l.b16 %v1150
      %v1755 = vunpack.c.l.b16 %v1151
      %v1756 = vunpack.c.l.b16 %v1152
      %v1757 = vunpack.c.l.b16 %v1153
      %v1758 = vunpack.c.l.b16 %v1154
      %v1759 = vunpack.c.l.b16 %v1155
      %v1760 = vunpack.c.l.b16 %v1156
      %v1761 = vunpack.c.l.b16 %v1157
      %v1762 = vunpack.c.l.b16 %v1158
      %v1763 = vunpack.c.l.b16 %v1159
      %v1764 = vunpack.c.l.b16 %v1160
      %v1765 = vunpack.c.l.b16 %v1161
      %v1766 = vunpack.c.l.b16 %v1162
      %v1767 = vunpack.c.l.b16 %v1163
      %v1768 = vunpack.c.l.b16 %v1164
      %v1769 = vunpack.c.l.b16 %v1165
      %v1770 = vunpack.c.l.b16 %v1166
      %v1771 = vunpack.c.l.b16 %v1167
      %v1772 = vunpack.c.l.b16 %v1168
      %v1773 = vunpack.c.l.b16 %v1169
      %v1774 = vunpack.c.l.b16 %v1170
      %v1775 = vunpack.c.l.b16 %v1171
      %v1776 = vunpack.c.l.b16 %v1172
      %v1777 = vunpack.c.l.b16 %v1173
      %v1778 = vunpack.c.l.b16 %v1174
      %v1779 = vunpack.c.l.b16 %v1175
      %v1780 = vunpack.c.l.b16 %v1176
      %v1781 = vunpack.c.l.b16 %v1177
      %v1782 = vunpack.c.l.b16 %v1178
      %v1783 = vunpack.c.l.b16 %v1179
      %v1784 = vunpack.c.l.b16 %v1180
      %v1785 = vunpack.c.l.b16 %v1181
      %v1786 = vunpack.c.l.b16 %v1182
      %v1787 = vunpack.c.l.b16 %v1183
      %v1788 = vunpack.c.l.b16 %v1184
      %v1789 = vunpack.c.l.b16 %v1185
      %v1790 = vunpack.c.l.b16 %v1186
      %v1791 = vunpack.c.l.b16 %v1187
      %v1792 = vunpack.c.l.b16 %v1188
      %v1793 = vunpack.c.l.b16 %v1189
      %v1794 = vunpack.c.l.b16 %v1190
      %v1795 = vunpack.c.l.b16 %v1191
      %v1796 = vunpack.c.l.b16 %v1192
      %v1797 = vunpack.c.l.b16 %v1193
      %v1798 = vunpack.c.l.b16 %v1194
      %v1799 = vunpack.c.l.b16 %v1195
      %v1800 = vunpack.c.l.b16 %v1196
      %v1801 = vunpack.c.l.b16 %v1197
      %v1802 = vpack.c.b16 %v1755, %v1754
      %v1803 = vpack.c.b16 %v1757, %v1756
      %v1804 = vpack.c.b16 %v1759, %v1758
      %v1805 = vpack.c.b16 %v1761, %v1760
      %v1806 = vpack.c.b16 %v1763, %v1762
      %v1807 = vpack.c.b16 %v1765, %v1764
      %v1808 = vpack.c.b16 %v1767, %v1766
      %v1809 = vpack.c.b16 %v1769, %v1768
      %v1810 = vpack.c.b16 %v1771, %v1770
      %v1811 = vpack.c.b16 %v1773, %v1772
      %v1812 = vpack.c.b16 %v1775, %v1774
      %v1813 = vpack.c.b16 %v1777, %v1776
      %v1814 = vpack.c.b16 %v1779, %v1778
      %v1815 = vpack.c.b16 %v1781, %v1780
      %v1816 = vpack.c.b16 %v1783, %v1782
      %v1817 = vpack.c.b16 %v1785, %v1784
      %v1818 = vpack.c.b16 %v1787, %v1786
      %v1819 = vpack.c.b16 %v1789, %v1788
      %v1820 = vpack.c.b16 %v1791, %v1790
      %v1821 = vpack.c.b16 %v1793, %v1792
      %v1822 = vpack.c.b16 %v1795, %v1794
      %v1823 = vpack.c.b16 %v1797, %v1796
      %v1824 = vpack.c.b16 %v1799, %v1798
      %v1825 = vpack.c.b16 %v1801, %v1800
      %1850 = vmatprep.subr.bf16.mxu0 0
      %1851 = vmatpush1.bf16.msra.mxu0 %v1809
      %1852 = vmatprep.subr.bf16.mxu0 0
      %1853 = vmatpush1.bf16.msra.mxu0 %v1808
      %1854 = vmatprep.subr.bf16.mxu0 0
      %1855 = vmatpush1.bf16.msra.mxu0 %v1807
      %1856 = vmatprep.subr.bf16.mxu0 0
      %1857 = vmatpush1.bf16.msra.mxu0 %v1806
      %1858 = vmatprep.subr.bf16.mxu0 0
      %1859 = vmatpush1.bf16.msra.mxu0 %v1805
      %1860 = vmatprep.subr.bf16.mxu0 0
      %1861 = vmatpush1.bf16.msra.mxu0 %v1804
      %1862 = vmatprep.subr.bf16.mxu0 0
      %1863 = vmatpush1.bf16.msra.mxu0 %v1803
      %1864 = vmatprep.subr.bf16.mxu0 0
      %1865 = vmatpush1.bf16.msra.mxu0 %v1802
      %1866 = vmatprep.subr.bf16.mxu0 0
      %1867 = vmatpush2.bf16.msra.mxu0 %v1817
      %1868 = vmatprep.subr.bf16.mxu0 0
      %1869 = vmatpush2.bf16.msra.mxu0 %v1816
      %1870 = vmatprep.subr.bf16.mxu0 0
      %1871 = vmatpush2.bf16.msra.mxu0 %v1815
      %1872 = vmatprep.subr.bf16.mxu0 0
      %1873 = vmatpush2.bf16.msra.mxu0 %v1814
      %1874 = vmatprep.subr.bf16.mxu0 0
      %1875 = vmatpush2.bf16.msra.mxu0 %v1813
      %1876 = vmatprep.subr.bf16.mxu0 0
      %1877 = vmatpush2.bf16.msra.mxu0 %v1812
      %1878 = vmatprep.subr.bf16.mxu0 0
      %1879 = vmatpush2.bf16.msra.mxu0 %v1811
      %1880 = vmatprep.subr.bf16.mxu0 0
      %1881 = vmatpush2.bf16.msra.mxu0 %v1810
      %1882 = vmatprep.mubr.bf16.mxu0 %v1671
      %1883 = vmatmul.mubr.bf16.gmra.mxu0 %v1670
      %v1884 = vpop.f32.mrf.mxu0
      %v1885 = vadd.f32 %v1609, %v1884
      %v1886 = vpop.f32.mrf.mxu0
      %v1887 = vpop.f32.mrf.mxu0
      %v1888 = vadd.f32 %v1612, %v1887
      %v1889 = vpop.f32.mrf.mxu0
      %1890 = vmatprep.mubr.bf16.mxu0 %v1674
      %1891 = vmatmul.mubr.bf16.gmra.mxu0 %v1673
      %v1892 = vpop.f32.mrf.mxu0
      %v1893 = vadd.f32 %v1617, %v1892
      %v1894 = vpop.f32.mrf.mxu0
      %v1895 = vpop.f32.mrf.mxu0
      %v1896 = vadd.f32 %v1620, %v1895
      %v1897 = vpop.f32.mrf.mxu0
      %1898 = vmatprep.mubr.bf16.mxu0 %v1677
      %1899 = vmatmul.mubr.bf16.gmra.mxu0 %v1676
      %v1900 = vpop.f32.mrf.mxu0
      %v1901 = vadd.f32 %v1625, %v1900
      %v1902 = vpop.f32.mrf.mxu0
      %v1903 = vpop.f32.mrf.mxu0
      %v1904 = vadd.f32 %v1628, %v1903
      %v1905 = vpop.f32.mrf.mxu0
      %1906 = vmatprep.mubr.bf16.mxu0 %v1680
      %1907 = vmatmul.mubr.bf16.gmra.mxu0 %v1679
      %v1908 = vpop.f32.mrf.mxu0
      %v1909 = vadd.f32 %v1633, %v1908
      %v1910 = vpop.f32.mrf.mxu0
      %v1911 = vpop.f32.mrf.mxu0
      %v1912 = vadd.f32 %v1636, %v1911
      %v1913 = vpop.f32.mrf.mxu0
      %1914 = vmatprep.mubr.bf16.mxu0 %v1683
      %1915 = vmatmul.mubr.bf16.gmra.mxu0 %v1682
      %v1916 = vpop.f32.mrf.mxu0
      %v1917 = vadd.f32 %v1641, %v1916
      %v1918 = vpop.f32.mrf.mxu0
      %v1919 = vpop.f32.mrf.mxu0
      %v1920 = vadd.f32 %v1644, %v1919
      %v1921 = vpop.f32.mrf.mxu0
      %1922 = vmatprep.mubr.bf16.mxu0 %v1686
      %1923 = vmatmul.mubr.bf16.gmra.mxu0 %v1685
      %v1924 = vpop.f32.mrf.mxu0
      %v1925 = vadd.f32 %v1649, %v1924
      %v1926 = vpop.f32.mrf.mxu0
      %v1927 = vpop.f32.mrf.mxu0
      %v1928 = vadd.f32 %v1652, %v1927
      %v1929 = vpop.f32.mrf.mxu0
      %1930 = vdwg.mxu0
      %1931 = vmatprep.subr.bf16.mxu0 0
      %1932 = vmatpush1.bf16.msra.mxu0 %v1825
      %1933 = vmatprep.subr.bf16.mxu0 0
      %1934 = vmatpush1.bf16.msra.mxu0 %v1824
      %1935 = vmatprep.subr.bf16.mxu0 0
      %1936 = vmatpush1.bf16.msra.mxu0 %v1823
      %1937 = vmatprep.subr.bf16.mxu0 0
      %1938 = vmatpush1.bf16.msra.mxu0 %v1822
      %1939 = vmatprep.subr.bf16.mxu0 0
      %1940 = vmatpush1.bf16.msra.mxu0 %v1821
      %1941 = vmatprep.subr.bf16.mxu0 0
      %1942 = vmatpush1.bf16.msra.mxu0 %v1820
      %1943 = vmatprep.subr.bf16.mxu0 0
      %1944 = vmatpush1.bf16.msra.mxu0 %v1819
      %1945 = vmatprep.subr.bf16.mxu0 0
      %1946 = vmatpush1.bf16.msra.mxu0 %v1818
      %1947 = vmatprep.subr.bf16.mxu0 0
      %1948 = vmatpush2.bf16.msra.mxu0 0
      %1949 = vmatprep.subr.bf16.mxu0 0
      %1950 = vmatpush2.bf16.msra.mxu0 0
      %1951 = vmatprep.subr.bf16.mxu0 0
      %1952 = vmatpush2.bf16.msra.mxu0 0
      %1953 = vmatprep.subr.bf16.mxu0 0
      %1954 = vmatpush2.bf16.msra.mxu0 0
      %1955 = vmatprep.subr.bf16.mxu0 0
      %1956 = vmatpush2.bf16.msra.mxu0 0
      %1957 = vmatprep.subr.bf16.mxu0 0
      %1958 = vmatpush2.bf16.msra.mxu0 0
      %1959 = vmatprep.subr.bf16.mxu0 0
      %1960 = vmatpush2.bf16.msra.mxu0 0
      %1961 = vmatprep.subr.bf16.mxu0 0
      %1962 = vmatpush2.bf16.msra.mxu0 0
      %1963 = vmatprep.mubr.bf16.mxu0 0
      %1964 = vmatmul.mubr.bf16.gmra.mxu0 %v1672
      %v1965 = vpop.f32.mrf.mxu0
      %v1966 = vadd.f32 %v1885, %v1965
      %v1967 = vpop.f32.mrf.mxu0
      %v1968 = vpop.f32.mrf.mxu0
      %v1969 = vadd.f32 %v1888, %v1968
      %v1970 = vpop.f32.mrf.mxu0
      %1971 = vmatprep.mubr.bf16.mxu0 0
      %1972 = vmatmul.mubr.bf16.gmra.mxu0 %v1675
      %v1973 = vpop.f32.mrf.mxu0
      %v1974 = vadd.f32 %v1893, %v1973
      %v1975 = vpop.f32.mrf.mxu0
      %v1976 = vpop.f32.mrf.mxu0
      %v1977 = vadd.f32 %v1896, %v1976
      %v1978 = vpop.f32.mrf.mxu0
      %1979 = vmatprep.mubr.bf16.mxu0 0
      %1980 = vmatmul.mubr.bf16.gmra.mxu0 %v1678
      %v1981 = vpop.f32.mrf.mxu0
      %v1982 = vadd.f32 %v1901, %v1981
      %v1983 = vpop.f32.mrf.mxu0
      %v1984 = vpop.f32.mrf.mxu0
      %v1985 = vadd.f32 %v1904, %v1984
      %v1986 = vpop.f32.mrf.mxu0
      %1987 = vmatprep.mubr.bf16.mxu0 0
      %1988 = vmatmul.mubr.bf16.gmra.mxu0 %v1681
      %v1989 = vpop.f32.mrf.mxu0
      %v1990 = vadd.f32 %v1909, %v1989
      %v1991 = vpop.f32.mrf.mxu0
      %v1992 = vpop.f32.mrf.mxu0
      %v1993 = vadd.f32 %v1912, %v1992
      %v1994 = vpop.f32.mrf.mxu0
      %1995 = vmatprep.mubr.bf16.mxu0 0
      %1996 = vmatmul.mubr.bf16.gmra.mxu0 %v1684
      %v1997 = vpop.f32.mrf.mxu0
      %v1998 = vadd.f32 %v1917, %v1997
      %v1999 = vpop.f32.mrf.mxu0
      %v2000 = vpop.f32.mrf.mxu0
      %v2001 = vadd.f32 %v1920, %v2000
      %v2002 = vpop.f32.mrf.mxu0
      %2003 = vmatprep.mubr.bf16.mxu0 0
      %2004 = vmatmul.mubr.bf16.gmra.mxu0 %v1687
      %v2005 = vpop.f32.mrf.mxu0
      %v2006 = vadd.f32 %v1925, %v2005
      %v2007 = vpop.f32.mrf.mxu0
      %v2008 = vpop.f32.mrf.mxu0
      %v2009 = vadd.f32 %v1928, %v2008
      %v2010 = vpop.f32.mrf.mxu0
      %2011 = vdwg.mxu0
      %v2012 = vld [vmem:[#allocation2 + $0x48] sm:$0xff]
      %v2013 = vld [vmem:[#allocation2 + $0x50] sm:$0xf]
      %v2014 = vld [vmem:[#allocation2 + $0x54] sm:$0xff]
      %v2015 = vld [vmem:[#allocation2 + $0x5c] sm:$0xf]
      %v2016 = vld [vmem:[#allocation2 + $0x60] sm:$0xff]
      %v2017 = vld [vmem:[#allocation2 + $0x68] sm:$0xf]
      %v2018 = vld [vmem:[#allocation2 + $0x6c] sm:$0xff]
      %v2019 = vld [vmem:[#allocation2 + $0x74] sm:$0xf]
      %v2020 = vld [vmem:[#allocation2 + $0x78] sm:$0xff]
      %v2021 = vld [vmem:[#allocation2 + $0x80] sm:$0xf]
      %v2022 = vld [vmem:[#allocation2 + $0x84] sm:$0xff]
      %v2023 = vld [vmem:[#allocation2 + $0x8c] sm:$0xf]
      %v2024 = vld [vmem:[#allocation2 + $0x90] sm:$0xff]
      %v2025 = vld [vmem:[#allocation2 + $0x98] sm:$0xf]
      %v2026 = vld [vmem:[#allocation2 + $0x9c] sm:$0xff]
      %v2027 = vld [vmem:[#allocation2 + $0xa4] sm:$0xf]
      %v2028 = vld [vmem:[#allocation2 + $0xa8] sm:$0xff]
      %v2029 = vld [vmem:[#allocation2 + $0xb0] sm:$0xf]
      %v2030 = vld [vmem:[#allocation2 + $0xb4] sm:$0xff]
      %v2031 = vld [vmem:[#allocation2 + $0xbc] sm:$0xf]
      %v2032 = vld [vmem:[#allocation2 + $0xc0] sm:$0xff]
      %v2033 = vld [vmem:[#allocation2 + $0xc8] sm:$0xf]
      %v2034 = vld [vmem:[#allocation2 + $0xcc] sm:$0xff]
      %v2035 = vld [vmem:[#allocation2 + $0xd4] sm:$0xf]
      %s2036 = scalar_lea.vmem %s2, 384
      %v2037 = vld [vmem:[%s2036] sm:$0xf]
      %v2038 = vld [vmem:[%s2036 + $0x4] sm:$0xf]
      %v2039 = vld [vmem:[%s2036 + $0x8] sm:$0xf]
      %v2040 = vld [vmem:[%s2036 + $0xc] sm:$0xf]
      %v2041 = vld [vmem:[%s2036 + $0x10] sm:$0xf]
      %v2042 = vld [vmem:[%s2036 + $0x14] sm:$0xf]
      %v2043 = vld [vmem:[%s2036 + $0x18] sm:$0xf]
      %v2044 = vld [vmem:[%s2036 + $0x1c] sm:$0xf]
      %v2045 = vld [vmem:[%s2036 + $0x20] sm:$0xf]
      %v2046 = vld [vmem:[%s2036 + $0x24] sm:$0xf]
      %v2047 = vld [vmem:[%s2036 + $0x28] sm:$0xf]
      %v2048 = vld [vmem:[%s2036 + $0x2c] sm:$0xf]
      %v2049 = vld [vmem:[%s2036 + $0x30] sm:$0xf]
      %v2050 = vld [vmem:[%s2036 + $0x34] sm:$0xf]
      %v2051 = vld [vmem:[%s2036 + $0x38] sm:$0xf]
      %v2052 = vld [vmem:[%s2036 + $0x3c] sm:$0xf]
      %v2053 = vld [vmem:[%s2036 + $0x40] sm:$0xf]
      %v2054 = vld [vmem:[%s2036 + $0x44] sm:$0xf]
      %v2055 = vld [vmem:[%s2036 + $0x48] sm:$0xf]
      %v2056 = vld [vmem:[%s2036 + $0x4c] sm:$0xf]
      %v2057 = vld [vmem:[%s2036 + $0x50] sm:$0xf]
      %v2058 = vld [vmem:[%s2036 + $0x54] sm:$0xf]
      %v2059 = vld [vmem:[%s2036 + $0x58] sm:$0xf]
      %v2060 = vld [vmem:[%s2036 + $0x5c] sm:$0xf]
      %v2061 = vld [vmem:[%s2036 + $0x60] sm:$0xf]
      %v2062 = vld [vmem:[%s2036 + $0x64] sm:$0xf]
      %v2063 = vld [vmem:[%s2036 + $0x68] sm:$0xf]
      %v2064 = vld [vmem:[%s2036 + $0x6c] sm:$0xf]
      %v2065 = vld [vmem:[%s2036 + $0x70] sm:$0xf]
      %v2066 = vld [vmem:[%s2036 + $0x74] sm:$0xf]
      %v2067 = vld [vmem:[%s2036 + $0x78] sm:$0xf]
      %v2068 = vld [vmem:[%s2036 + $0x7c] sm:$0xf]
      %v2069 = vld [vmem:[%s2036 + $0x80] sm:$0xf]
      %v2070 = vld [vmem:[%s2036 + $0x84] sm:$0xf]
      %v2071 = vld [vmem:[%s2036 + $0x88] sm:$0xf]
      %v2072 = vld [vmem:[%s2036 + $0x8c] sm:$0xf]
      %v2073 = vld [vmem:[%s2036 + $0x90] sm:$0xf]
      %v2074 = vld [vmem:[%s2036 + $0x94] sm:$0xf]
      %v2075 = vld [vmem:[%s2036 + $0x98] sm:$0xf]
      %v2076 = vld [vmem:[%s2036 + $0x9c] sm:$0xf]
      %v2077 = vld [vmem:[%s2036 + $0xa0] sm:$0xf]
      %v2078 = vld [vmem:[%s2036 + $0xa4] sm:$0xf]
      %v2079 = vld [vmem:[%s2036 + $0xa8] sm:$0xf]
      %v2080 = vld [vmem:[%s2036 + $0xac] sm:$0xf]
      %v2081 = vld [vmem:[%s2036 + $0xb0] sm:$0xf]
      %v2082 = vld [vmem:[%s2036 + $0xb4] sm:$0xf]
      %v2083 = vld [vmem:[%s2036 + $0xb8] sm:$0xf]
      %v2084 = vld [vmem:[%s2036 + $0xbc] sm:$0xf]
      %v2109 = vunpack.c.l.b16 %v2012
      %v2110 = vunpack.c.h.b16 %v2012
      %v2111 = vunpack.c.l.b16 %v2013
      %v2112 = vunpack.c.l.b16 %v2014
      %v2113 = vunpack.c.h.b16 %v2014
      %v2114 = vunpack.c.l.b16 %v2015
      %v2115 = vunpack.c.l.b16 %v2016
      %v2116 = vunpack.c.h.b16 %v2016
      %v2117 = vunpack.c.l.b16 %v2017
      %v2118 = vunpack.c.l.b16 %v2018
      %v2119 = vunpack.c.h.b16 %v2018
      %v2120 = vunpack.c.l.b16 %v2019
      %v2121 = vunpack.c.l.b16 %v2020
      %v2122 = vunpack.c.h.b16 %v2020
      %v2123 = vunpack.c.l.b16 %v2021
      %v2124 = vunpack.c.l.b16 %v2022
      %v2125 = vunpack.c.h.b16 %v2022
      %v2126 = vunpack.c.l.b16 %v2023
      %v2127 = vunpack.c.l.b16 %v2024
      %v2128 = vunpack.c.h.b16 %v2024
      %v2129 = vunpack.c.l.b16 %v2025
      %v2130 = vunpack.c.l.b16 %v2026
      %v2131 = vunpack.c.h.b16 %v2026
      %v2132 = vunpack.c.l.b16 %v2027
      %v2133 = vunpack.c.l.b16 %v2028
      %v2134 = vunpack.c.h.b16 %v2028
      %v2135 = vunpack.c.l.b16 %v2029
      %v2136 = vunpack.c.l.b16 %v2030
      %v2137 = vunpack.c.h.b16 %v2030
      %v2138 = vunpack.c.l.b16 %v2031
      %v2139 = vunpack.c.l.b16 %v2032
      %v2140 = vunpack.c.h.b16 %v2032
      %v2141 = vunpack.c.l.b16 %v2033
      %v2142 = vunpack.c.l.b16 %v2034
      %v2143 = vunpack.c.h.b16 %v2034
      %v2144 = vunpack.c.l.b16 %v2035
      %v2145 = vpack.c.b16 %v2112, %v2109
      %v2146 = vpack.c.b16 %v2113, %v2110
      %v2147 = vpack.c.b16 %v2114, %v2111
      %v2148 = vpack.c.b16 %v2118, %v2115
      %v2149 = vpack.c.b16 %v2119, %v2116
      %v2150 = vpack.c.b16 %v2120, %v2117
      %v2151 = vpack.c.b16 %v2124, %v2121
      %v2152 = vpack.c.b16 %v2125, %v2122
      %v2153 = vpack.c.b16 %v2126, %v2123
      %v2154 = vpack.c.b16 %v2130, %v2127
      %v2155 = vpack.c.b16 %v2131, %v2128
      %v2156 = vpack.c.b16 %v2132, %v2129
      %v2157 = vpack.c.b16 %v2136, %v2133
      %v2158 = vpack.c.b16 %v2137, %v2134
      %v2159 = vpack.c.b16 %v2138, %v2135
      %v2160 = vpack.c.b16 %v2142, %v2139
      %v2161 = vpack.c.b16 %v2143, %v2140
      %v2162 = vpack.c.b16 %v2144, %v2141
      %v2229 = vunpack.c.l.b16 %v2037
      %v2230 = vunpack.c.l.b16 %v2038
      %v2231 = vunpack.c.l.b16 %v2039
      %v2232 = vunpack.c.l.b16 %v2040
      %v2233 = vunpack.c.l.b16 %v2041
      %v2234 = vunpack.c.l.b16 %v2042
      %v2235 = vunpack.c.l.b16 %v2043
      %v2236 = vunpack.c.l.b16 %v2044
      %v2237 = vunpack.c.l.b16 %v2045
      %v2238 = vunpack.c.l.b16 %v2046
      %v2239 = vunpack.c.l.b16 %v2047
      %v2240 = vunpack.c.l.b16 %v2048
      %v2241 = vunpack.c.l.b16 %v2049
      %v2242 = vunpack.c.l.b16 %v2050
      %v2243 = vunpack.c.l.b16 %v2051
      %v2244 = vunpack.c.l.b16 %v2052
      %v2245 = vunpack.c.l.b16 %v2053
      %v2246 = vunpack.c.l.b16 %v2054
      %v2247 = vunpack.c.l.b16 %v2055
      %v2248 = vunpack.c.l.b16 %v2056
      %v2249 = vunpack.c.l.b16 %v2057
      %v2250 = vunpack.c.l.b16 %v2058
      %v2251 = vunpack.c.l.b16 %v2059
      %v2252 = vunpack.c.l.b16 %v2060
      %v2253 = vunpack.c.l.b16 %v2061
      %v2254 = vunpack.c.l.b16 %v2062
      %v2255 = vunpack.c.l.b16 %v2063
      %v2256 = vunpack.c.l.b16 %v2064
      %v2257 = vunpack.c.l.b16 %v2065
      %v2258 = vunpack.c.l.b16 %v2066
      %v2259 = vunpack.c.l.b16 %v2067
      %v2260 = vunpack.c.l.b16 %v2068
      %v2261 = vunpack.c.l.b16 %v2069
      %v2262 = vunpack.c.l.b16 %v2070
      %v2263 = vunpack.c.l.b16 %v2071
      %v2264 = vunpack.c.l.b16 %v2072
      %v2265 = vunpack.c.l.b16 %v2073
      %v2266 = vunpack.c.l.b16 %v2074
      %v2267 = vunpack.c.l.b16 %v2075
      %v2268 = vunpack.c.l.b16 %v2076
      %v2269 = vunpack.c.l.b16 %v2077
      %v2270 = vunpack.c.l.b16 %v2078
      %v2271 = vunpack.c.l.b16 %v2079
      %v2272 = vunpack.c.l.b16 %v2080
      %v2273 = vunpack.c.l.b16 %v2081
      %v2274 = vunpack.c.l.b16 %v2082
      %v2275 = vunpack.c.l.b16 %v2083
      %v2276 = vunpack.c.l.b16 %v2084
      %v2277 = vpack.c.b16 %v2230, %v2229
      %v2278 = vpack.c.b16 %v2232, %v2231
      %v2279 = vpack.c.b16 %v2234, %v2233
      %v2280 = vpack.c.b16 %v2236, %v2235
      %v2281 = vpack.c.b16 %v2238, %v2237
      %v2282 = vpack.c.b16 %v2240, %v2239
      %v2283 = vpack.c.b16 %v2242, %v2241
      %v2284 = vpack.c.b16 %v2244, %v2243
      %v2285 = vpack.c.b16 %v2246, %v2245
      %v2286 = vpack.c.b16 %v2248, %v2247
      %v2287 = vpack.c.b16 %v2250, %v2249
      %v2288 = vpack.c.b16 %v2252, %v2251
      %v2289 = vpack.c.b16 %v2254, %v2253
      %v2290 = vpack.c.b16 %v2256, %v2255
      %v2291 = vpack.c.b16 %v2258, %v2257
      %v2292 = vpack.c.b16 %v2260, %v2259
      %v2293 = vpack.c.b16 %v2262, %v2261
      %v2294 = vpack.c.b16 %v2264, %v2263
      %v2295 = vpack.c.b16 %v2266, %v2265
      %v2296 = vpack.c.b16 %v2268, %v2267
      %v2297 = vpack.c.b16 %v2270, %v2269
      %v2298 = vpack.c.b16 %v2272, %v2271
      %v2299 = vpack.c.b16 %v2274, %v2273
      %v2300 = vpack.c.b16 %v2276, %v2275
      %2325 = vmatprep.subr.bf16.mxu0 0
      %2326 = vmatpush1.bf16.msra.mxu0 %v2284
      %2327 = vmatprep.subr.bf16.mxu0 0
      %2328 = vmatpush1.bf16.msra.mxu0 %v2283
      %2329 = vmatprep.subr.bf16.mxu0 0
      %2330 = vmatpush1.bf16.msra.mxu0 %v2282
      %2331 = vmatprep.subr.bf16.mxu0 0
      %2332 = vmatpush1.bf16.msra.mxu0 %v2281
      %2333 = vmatprep.subr.bf16.mxu0 0
      %2334 = vmatpush1.bf16.msra.mxu0 %v2280
      %2335 = vmatprep.subr.bf16.mxu0 0
      %2336 = vmatpush1.bf16.msra.mxu0 %v2279
      %2337 = vmatprep.subr.bf16.mxu0 0
      %2338 = vmatpush1.bf16.msra.mxu0 %v2278
      %2339 = vmatprep.subr.bf16.mxu0 0
      %2340 = vmatpush1.bf16.msra.mxu0 %v2277
      %2341 = vmatprep.subr.bf16.mxu0 0
      %2342 = vmatpush2.bf16.msra.mxu0 %v2292
      %2343 = vmatprep.subr.bf16.mxu0 0
      %2344 = vmatpush2.bf16.msra.mxu0 %v2291
      %2345 = vmatprep.subr.bf16.mxu0 0
      %2346 = vmatpush2.bf16.msra.mxu0 %v2290
      %2347 = vmatprep.subr.bf16.mxu0 0
      %2348 = vmatpush2.bf16.msra.mxu0 %v2289
      %2349 = vmatprep.subr.bf16.mxu0 0
      %2350 = vmatpush2.bf16.msra.mxu0 %v2288
      %2351 = vmatprep.subr.bf16.mxu0 0
      %2352 = vmatpush2.bf16.msra.mxu0 %v2287
      %2353 = vmatprep.subr.bf16.mxu0 0
      %2354 = vmatpush2.bf16.msra.mxu0 %v2286
      %2355 = vmatprep.subr.bf16.mxu0 0
      %2356 = vmatpush2.bf16.msra.mxu0 %v2285
      %2357 = vmatprep.mubr.bf16.mxu0 %v2146
      %2358 = vmatmul.mubr.bf16.gmra.mxu0 %v2145
      %v2359 = vpop.f32.mrf.mxu0
      %v2360 = vadd.f32 0.0, %v2359
      %v2361 = vpop.f32.mrf.mxu0
      %v2362 = vpop.f32.mrf.mxu0
      %v2363 = vadd.f32 0.0, %v2362
      %v2364 = vpop.f32.mrf.mxu0
      %2365 = vmatprep.mubr.bf16.mxu0 %v2149
      %2366 = vmatmul.mubr.bf16.gmra.mxu0 %v2148
      %v2367 = vpop.f32.mrf.mxu0
      %v2368 = vadd.f32 0.0, %v2367
      %v2369 = vpop.f32.mrf.mxu0
      %v2370 = vpop.f32.mrf.mxu0
      %v2371 = vadd.f32 0.0, %v2370
      %v2372 = vpop.f32.mrf.mxu0
      %2373 = vmatprep.mubr.bf16.mxu0 %v2152
      %2374 = vmatmul.mubr.bf16.gmra.mxu0 %v2151
      %v2375 = vpop.f32.mrf.mxu0
      %v2376 = vadd.f32 0.0, %v2375
      %v2377 = vpop.f32.mrf.mxu0
      %v2378 = vpop.f32.mrf.mxu0
      %v2379 = vadd.f32 0.0, %v2378
      %v2380 = vpop.f32.mrf.mxu0
      %2381 = vmatprep.mubr.bf16.mxu0 %v2155
      %2382 = vmatmul.mubr.bf16.gmra.mxu0 %v2154
      %v2383 = vpop.f32.mrf.mxu0
      %v2384 = vadd.f32 0.0, %v2383
      %v2385 = vpop.f32.mrf.mxu0
      %v2386 = vpop.f32.mrf.mxu0
      %v2387 = vadd.f32 0.0, %v2386
      %v2388 = vpop.f32.mrf.mxu0
      %2389 = vmatprep.mubr.bf16.mxu0 %v2158
      %2390 = vmatmul.mubr.bf16.gmra.mxu0 %v2157
      %v2391 = vpop.f32.mrf.mxu0
      %v2392 = vadd.f32 0.0, %v2391
      %v2393 = vpop.f32.mrf.mxu0
      %v2394 = vpop.f32.mrf.mxu0
      %v2395 = vadd.f32 0.0, %v2394
      %v2396 = vpop.f32.mrf.mxu0
      %2397 = vmatprep.mubr.bf16.mxu0 %v2161
      %2398 = vmatmul.mubr.bf16.gmra.mxu0 %v2160
      %v2399 = vpop.f32.mrf.mxu0
      %v2400 = vadd.f32 0.0, %v2399
      %v2401 = vpop.f32.mrf.mxu0
      %v2402 = vpop.f32.mrf.mxu0
      %v2403 = vadd.f32 0.0, %v2402
      %v2404 = vpop.f32.mrf.mxu0
      %2405 = vdwg.mxu0
      %2406 = vmatprep.subr.bf16.mxu0 0
      %2407 = vmatpush1.bf16.msra.mxu0 %v2300
      %2408 = vmatprep.subr.bf16.mxu0 0
      %2409 = vmatpush1.bf16.msra.mxu0 %v2299
      %2410 = vmatprep.subr.bf16.mxu0 0
      %2411 = vmatpush1.bf16.msra.mxu0 %v2298
      %2412 = vmatprep.subr.bf16.mxu0 0
      %2413 = vmatpush1.bf16.msra.mxu0 %v2297
      %2414 = vmatprep.subr.bf16.mxu0 0
      %2415 = vmatpush1.bf16.msra.mxu0 %v2296
      %2416 = vmatprep.subr.bf16.mxu0 0
      %2417 = vmatpush1.bf16.msra.mxu0 %v2295
      %2418 = vmatprep.subr.bf16.mxu0 0
      %2419 = vmatpush1.bf16.msra.mxu0 %v2294
      %2420 = vmatprep.subr.bf16.mxu0 0
      %2421 = vmatpush1.bf16.msra.mxu0 %v2293
      %2422 = vmatprep.subr.bf16.mxu0 0
      %2423 = vmatpush2.bf16.msra.mxu0 0
      %2424 = vmatprep.subr.bf16.mxu0 0
      %2425 = vmatpush2.bf16.msra.mxu0 0
      %2426 = vmatprep.subr.bf16.mxu0 0
      %2427 = vmatpush2.bf16.msra.mxu0 0
      %2428 = vmatprep.subr.bf16.mxu0 0
      %2429 = vmatpush2.bf16.msra.mxu0 0
      %2430 = vmatprep.subr.bf16.mxu0 0
      %2431 = vmatpush2.bf16.msra.mxu0 0
      %2432 = vmatprep.subr.bf16.mxu0 0
      %2433 = vmatpush2.bf16.msra.mxu0 0
      %2434 = vmatprep.subr.bf16.mxu0 0
      %2435 = vmatpush2.bf16.msra.mxu0 0
      %2436 = vmatprep.subr.bf16.mxu0 0
      %2437 = vmatpush2.bf16.msra.mxu0 0
      %2438 = vmatprep.mubr.bf16.mxu0 0
      %2439 = vmatmul.mubr.bf16.gmra.mxu0 %v2147
      %v2440 = vpop.f32.mrf.mxu0
      %v2441 = vadd.f32 %v2360, %v2440
      %v2442 = vpop.f32.mrf.mxu0
      %v2443 = vpop.f32.mrf.mxu0
      %v2444 = vadd.f32 %v2363, %v2443
      %v2445 = vpop.f32.mrf.mxu0
      %2446 = vmatprep.mubr.bf16.mxu0 0
      %2447 = vmatmul.mubr.bf16.gmra.mxu0 %v2150
      %v2448 = vpop.f32.mrf.mxu0
      %v2449 = vadd.f32 %v2368, %v2448
      %v2450 = vpop.f32.mrf.mxu0
      %v2451 = vpop.f32.mrf.mxu0
      %v2452 = vadd.f32 %v2371, %v2451
      %v2453 = vpop.f32.mrf.mxu0
      %2454 = vmatprep.mubr.bf16.mxu0 0
      %2455 = vmatmul.mubr.bf16.gmra.mxu0 %v2153
      %v2456 = vpop.f32.mrf.mxu0
      %v2457 = vadd.f32 %v2376, %v2456
      %v2458 = vpop.f32.mrf.mxu0
      %v2459 = vpop.f32.mrf.mxu0
      %v2460 = vadd.f32 %v2379, %v2459
      %v2461 = vpop.f32.mrf.mxu0
      %2462 = vmatprep.mubr.bf16.mxu0 0
      %2463 = vmatmul.mubr.bf16.gmra.mxu0 %v2156
      %v2464 = vpop.f32.mrf.mxu0
      %v2465 = vadd.f32 %v2384, %v2464
      %v2466 = vpop.f32.mrf.mxu0
      %v2467 = vpop.f32.mrf.mxu0
      %v2468 = vadd.f32 %v2387, %v2467
      %v2469 = vpop.f32.mrf.mxu0
      %2470 = vmatprep.mubr.bf16.mxu0 0
      %2471 = vmatmul.mubr.bf16.gmra.mxu0 %v2159
      %v2472 = vpop.f32.mrf.mxu0
      %v2473 = vadd.f32 %v2392, %v2472
      %v2474 = vpop.f32.mrf.mxu0
      %v2475 = vpop.f32.mrf.mxu0
      %v2476 = vadd.f32 %v2395, %v2475
      %v2477 = vpop.f32.mrf.mxu0
      %2478 = vmatprep.mubr.bf16.mxu0 0
      %2479 = vmatmul.mubr.bf16.gmra.mxu0 %v2162
      %v2480 = vpop.f32.mrf.mxu0
      %v2481 = vadd.f32 %v2400, %v2480
      %v2482 = vpop.f32.mrf.mxu0
      %v2483 = vpop.f32.mrf.mxu0
      %v2484 = vadd.f32 %v2403, %v2483
      %v2485 = vpop.f32.mrf.mxu0
      %2486 = vdwg.mxu0
      %v2487 = vadd.f32 %v1966, %v2441
      %v2488 = vadd.f32 %v1969, %v2444
      %v2489 = vadd.f32 %v1974, %v2449
      %v2490 = vadd.f32 %v1977, %v2452
      %v2491 = vadd.f32 %v1982, %v2457
      %v2492 = vadd.f32 %v1985, %v2460
      %v2493 = vadd.f32 %v1990, %v2465
      %v2494 = vadd.f32 %v1993, %v2468
      %v2495 = vadd.f32 %v1998, %v2473
      %v2496 = vadd.f32 %v2001, %v2476
      %v2497 = vadd.f32 %v2006, %v2481
      %v2498 = vadd.f32 %v2009, %v2484
      %v2499 = vld [vmem:[%s3] sm:$0x1]
      %v2501 = vlaneseq
      %v2502 = vshrl.u32 %v2501, 7
      %v2503 = vsub.s32 0, %v2502
      %v2504 = vrot.slane %v2499, %v2503
      %v2506 = vadd.f32 %v2487, %v2504
      %v2507 = vadd.f32 %v2488, %v2504
      %v2508 = vadd.f32 %v2489, %v2504
      %v2509 = vadd.f32 %v2490, %v2504
      %v2510 = vadd.f32 %v2491, %v2504
      %v2511 = vadd.f32 %v2492, %v2504
      %v2512 = vadd.f32 %v2493, %v2504
      %v2513 = vadd.f32 %v2494, %v2504
      %v2514 = vadd.f32 %v2495, %v2504
      %v2515 = vadd.f32 %v2496, %v2504
      %v2516 = vadd.f32 %v2497, %v2504
      %v2517 = vadd.f32 %v2498, %v2504
      %v2518 = vmax.f32 %v2506, 0.0
      %v2519 = vmax.f32 %v2507, 0.0
      %v2520 = vmax.f32 %v2508, 0.0
      %v2521 = vmax.f32 %v2509, 0.0
      %v2522 = vmax.f32 %v2510, 0.0
      %v2523 = vmax.f32 %v2511, 0.0
      %v2524 = vmax.f32 %v2512, 0.0
      %v2525 = vmax.f32 %v2513, 0.0
      %v2526 = vmax.f32 %v2514, 0.0
      %v2527 = vmax.f32 %v2515, 0.0
      %v2528 = vmax.f32 %v2516, 0.0
      %v2529 = vmax.f32 %v2517, 0.0
      %v2530 = vstv %s1125
      %v2531 = vadd.s32 %v2530, 1
      %v2532 = vadd.s32 %v2530, 2
      %v2533 = vadd.s32 %v2530, 3
      %vm2534 = vcmp.ge.s32.totalorder %v2530, 0
      %vm2535 = vcmp.ge.s32.totalorder %v2531, 0
      %vm2536 = vcmp.ge.s32.totalorder %v2532, 0
      %vm2537 = vcmp.ge.s32.totalorder %v2533, 0
      %vm2538 = vcmp.lt.s32.totalorder %v2530, 16
      %vm2539 = vcmp.lt.s32.totalorder %v2531, 16
      %vm2540 = vcmp.lt.s32.totalorder %v2532, 16
      %vm2541 = vcmp.lt.s32.totalorder %v2533, 16
      %vm2542 = vmand %vm2534, %vm2538
      %vm2543 = vmand %vm2535, %vm2539
      %vm2544 = vmand %vm2536, %vm2540
      %vm2545 = vmand %vm2537, %vm2541
      %v2546 = vsel %vm2542, 1, 0
      %v2547 = vsel %vm2543, 1, 0
      %v2548 = vsel %vm2544, 1, 0
      %v2549 = vsel %vm2545, 1, 0
      %vm2550 = vcmp.eq.s32.totalorder %v2546, 1
      %vm2551 = vcmp.eq.s32.totalorder %v2547, 1
      %vm2552 = vcmp.eq.s32.totalorder %v2548, 1
      %vm2553 = vcmp.eq.s32.totalorder %v2549, 1
      %v2554 = vsel %vm1121, 1, 0
      %v2555 = vsel %vm1122, 1, 0
      %v2556 = vsel %vm1123, 1, 0
      %vm2557 = vcmp.eq.s32.totalorder %v2554, 1
      %vm2558 = vcmp.eq.s32.totalorder %v2555, 1
      %vm2559 = vcmp.eq.s32.totalorder %v2556, 1
      %vm2560 = vmand %vm2550, %vm2557
      %vm2561 = vmand %vm2550, %vm2558
      %vm2562 = vmand %vm2550, %vm2559
      %vm2563 = vmand %vm2551, %vm2557
      %vm2564 = vmand %vm2551, %vm2558
      %vm2565 = vmand %vm2551, %vm2559
      %vm2566 = vmand %vm2552, %vm2557
      %vm2567 = vmand %vm2552, %vm2558
      %vm2568 = vmand %vm2552, %vm2559
      %vm2569 = vmand %vm2553, %vm2557
      %vm2570 = vmand %vm2553, %vm2558
      %vm2571 = vmand %vm2553, %vm2559
      %v2572 = vsel %vm2560, 1, 0
      %v2573 = vsel %vm2561, 1, 0
      %v2574 = vsel %vm2562, 1, 0
      %v2575 = vsel %vm2563, 1, 0
      %v2576 = vsel %vm2564, 1, 0
      %v2577 = vsel %vm2565, 1, 0
      %v2578 = vsel %vm2566, 1, 0
      %v2579 = vsel %vm2567, 1, 0
      %v2580 = vsel %vm2568, 1, 0
      %v2581 = vsel %vm2569, 1, 0
      %v2582 = vsel %vm2570, 1, 0
      %v2583 = vsel %vm2571, 1, 0
      %vm2584 = vcmp.eq.s32.totalorder %v2572, 1
      %vm2585 = vcmp.eq.s32.totalorder %v2573, 1
      %vm2586 = vcmp.eq.s32.totalorder %v2574, 1
      %vm2587 = vcmp.eq.s32.totalorder %v2575, 1
      %vm2588 = vcmp.eq.s32.totalorder %v2576, 1
      %vm2589 = vcmp.eq.s32.totalorder %v2577, 1
      %vm2590 = vcmp.eq.s32.totalorder %v2578, 1
      %vm2591 = vcmp.eq.s32.totalorder %v2579, 1
      %vm2592 = vcmp.eq.s32.totalorder %v2580, 1
      %vm2593 = vcmp.eq.s32.totalorder %v2581, 1
      %vm2594 = vcmp.eq.s32.totalorder %v2582, 1
      %vm2595 = vcmp.eq.s32.totalorder %v2583, 1
      %v2596 = vsel %vm2584, %v2518, 0.0
      %v2597 = vsel %vm2585, %v2519, 0.0
      %v2598 = vsel %vm2586, %v2520, 0.0
      %v2599 = vsel %vm2587, %v2521, 0.0
      %v2600 = vsel %vm2588, %v2522, 0.0
      %v2601 = vsel %vm2589, %v2523, 0.0
      %v2602 = vsel %vm2590, %v2524, 0.0
      %v2603 = vsel %vm2591, %v2525, 0.0
      %v2604 = vsel %vm2592, %v2526, 0.0
      %v2605 = vsel %vm2593, %v2527, 0.0
      %v2606 = vsel %vm2594, %v2528, 0.0
      %v2607 = vsel %vm2595, %v2529, 0.0
      %v2608 = vpack.c.bf16 %v2597, %v2596
      %v2609 = vpack.c.bf16 %v2599, %v2598
      %v2610 = vpack.c.bf16 %v2601, %v2600
      %v2611 = vpack.c.bf16 %v2603, %v2602
      %v2612 = vpack.c.bf16 %v2605, %v2604
      %v2613 = vpack.c.bf16 %v2607, %v2606
      %v2620 = vunpack.c.l.b16 %v2608
      %v2621 = vunpack.c.h.b16 %v2608
      %v2622 = vunpack.c.l.b16 %v2609
      %v2623 = vunpack.c.h.b16 %v2609
      %v2624 = vunpack.c.l.b16 %v2610
      %v2625 = vunpack.c.h.b16 %v2610
      %v2626 = vunpack.c.l.b16 %v2611
      %v2627 = vunpack.c.h.b16 %v2611
      %v2628 = vunpack.c.l.b16 %v2612
      %v2629 = vunpack.c.h.b16 %v2612
      %v2630 = vunpack.c.l.b16 %v2613
      %v2631 = vunpack.c.h.b16 %v2613
      %v2632 = vpack.c.b16 %v2620, %v2620
      %v2633 = vpack.c.b16 %v2621, %v2621
      %v2634 = vpack.c.b16 %v2622, %v2622
      %v2635 = vpack.c.b16 %v2623, %v2623
      %v2636 = vpack.c.b16 %v2624, %v2624
      %v2637 = vpack.c.b16 %v2625, %v2625
      %v2638 = vpack.c.b16 %v2626, %v2626
      %v2639 = vpack.c.b16 %v2627, %v2627
      %v2640 = vpack.c.b16 %v2628, %v2628
      %v2641 = vpack.c.b16 %v2629, %v2629
      %v2642 = vpack.c.b16 %v2630, %v2630
      %v2643 = vpack.c.b16 %v2631, %v2631
      %2656 = vst [vmem:[#allocation3] sm:$0xf] %v2632
      %2657 = vst [vmem:[#allocation3 + $0xc] sm:$0xf] %v2633
      %2658 = vst [vmem:[#allocation3 + $0x18] sm:$0xf] %v2634
      %2659 = vst [vmem:[#allocation3 + $0x24] sm:$0xf] %v2635
      %2660 = vst [vmem:[#allocation3 + $0x30] sm:$0xf] %v2636
      %2661 = vst [vmem:[#allocation3 + $0x3c] sm:$0xf] %v2637
      %2662 = vst [vmem:[#allocation3 + $0x48] sm:$0xf] %v2638
      %2663 = vst [vmem:[#allocation3 + $0x54] sm:$0xf] %v2639
      %2664 = vst [vmem:[#allocation3 + $0x60] sm:$0xf] %v2640
      %2665 = vst [vmem:[#allocation3 + $0x6c] sm:$0xf] %v2641
      %2666 = vst [vmem:[#allocation3 + $0x78] sm:$0xf] %v2642
      %2667 = vst [vmem:[#allocation3 + $0x84] sm:$0xf] %v2643
      %v2680 = vrot.slane %v2596, 1
      %v2681 = vrot.slane %v2597, 1
      %v2682 = vsel %vm435, %v2680, %v2681
      %v2683 = vrot.slane %v2598, 1
      %v2684 = vsel %vm435, %v2681, %v2683
      %v2685 = vrot.slane %v2599, 1
      %v2686 = vsel %vm435, %v2683, %v2685
      %v2687 = vrot.slane %v2600, 1
      %v2688 = vsel %vm435, %v2685, %v2687
      %v2689 = vrot.slane %v2601, 1
      %v2690 = vsel %vm435, %v2687, %v2689
      %v2691 = vrot.slane %v2602, 1
      %v2692 = vsel %vm435, %v2689, %v2691
      %v2693 = vrot.slane %v2603, 1
      %v2694 = vsel %vm435, %v2691, %v2693
      %v2695 = vrot.slane %v2604, 1
      %v2696 = vsel %vm435, %v2693, %v2695
      %v2697 = vrot.slane %v2605, 1
      %v2698 = vsel %vm435, %v2695, %v2697
      %v2699 = vrot.slane %v2606, 1
      %v2700 = vsel %vm435, %v2697, %v2699
      %v2701 = vrot.slane %v2607, 1
      %v2702 = vsel %vm435, %v2699, %v2701
      %v2716 = vsel %vm435, %v2701, %v2680
      %v2717 = vpack.c.bf16 %v2684, %v2682
      %v2718 = vpack.c.bf16 %v2688, %v2686
      %v2719 = vpack.c.bf16 %v2692, %v2690
      %v2720 = vpack.c.bf16 %v2696, %v2694
      %v2721 = vpack.c.bf16 %v2700, %v2698
      %v2722 = vpack.c.bf16 %v2716, %v2702
      %v2729 = vunpack.c.l.b16 %v2717
      %v2730 = vunpack.c.h.b16 %v2717
      %v2731 = vunpack.c.l.b16 %v2718
      %v2732 = vunpack.c.h.b16 %v2718
      %v2733 = vunpack.c.l.b16 %v2719
      %v2734 = vunpack.c.h.b16 %v2719
      %v2735 = vunpack.c.l.b16 %v2720
      %v2736 = vunpack.c.h.b16 %v2720
      %v2737 = vunpack.c.l.b16 %v2721
      %v2738 = vunpack.c.h.b16 %v2721
      %v2739 = vunpack.c.l.b16 %v2722
      %v2740 = vunpack.c.h.b16 %v2722
      %v2741 = vpack.c.b16 %v2729, %v2729
      %v2742 = vpack.c.b16 %v2730, %v2730
      %v2743 = vpack.c.b16 %v2731, %v2731
      %v2744 = vpack.c.b16 %v2732, %v2732
      %v2745 = vpack.c.b16 %v2733, %v2733
      %v2746 = vpack.c.b16 %v2734, %v2734
      %v2747 = vpack.c.b16 %v2735, %v2735
      %v2748 = vpack.c.b16 %v2736, %v2736
      %v2749 = vpack.c.b16 %v2737, %v2737
      %v2750 = vpack.c.b16 %v2738, %v2738
      %v2751 = vpack.c.b16 %v2739, %v2739
      %v2752 = vpack.c.b16 %v2740, %v2740
      %2765 = vst [vmem:[#allocation3 + $0x4] sm:$0xf] %v2741
      %2766 = vst [vmem:[#allocation3 + $0x10] sm:$0xf] %v2742
      %2767 = vst [vmem:[#allocation3 + $0x1c] sm:$0xf] %v2743
      %2768 = vst [vmem:[#allocation3 + $0x28] sm:$0xf] %v2744
      %2769 = vst [vmem:[#allocation3 + $0x34] sm:$0xf] %v2745
      %2770 = vst [vmem:[#allocation3 + $0x40] sm:$0xf] %v2746
      %2771 = vst [vmem:[#allocation3 + $0x4c] sm:$0xf] %v2747
      %2772 = vst [vmem:[#allocation3 + $0x58] sm:$0xf] %v2748
      %2773 = vst [vmem:[#allocation3 + $0x64] sm:$0xf] %v2749
      %2774 = vst [vmem:[#allocation3 + $0x70] sm:$0xf] %v2750
      %2775 = vst [vmem:[#allocation3 + $0x7c] sm:$0xf] %v2751
      %2776 = vst [vmem:[#allocation3 + $0x88] sm:$0xf] %v2752
      %v2777 = vrot.slane %v2596, 2
      %v2778 = vrot.slane %v2597, 2
      %v2779 = vsel %vm558, %v2777, %v2778
      %v2780 = vrot.slane %v2598, 2
      %v2781 = vsel %vm558, %v2778, %v2780
      %v2782 = vrot.slane %v2599, 2
      %v2783 = vsel %vm558, %v2780, %v2782
      %v2784 = vrot.slane %v2600, 2
      %v2785 = vsel %vm558, %v2782, %v2784
      %v2786 = vrot.slane %v2601, 2
      %v2787 = vsel %vm558, %v2784, %v2786
      %v2788 = vrot.slane %v2602, 2
      %v2789 = vsel %vm558, %v2786, %v2788
      %v2790 = vrot.slane %v2603, 2
      %v2791 = vsel %vm558, %v2788, %v2790
      %v2792 = vrot.slane %v2604, 2
      %v2793 = vsel %vm558, %v2790, %v2792
      %v2794 = vrot.slane %v2605, 2
      %v2795 = vsel %vm558, %v2792, %v2794
      %v2796 = vrot.slane %v2606, 2
      %v2797 = vsel %vm558, %v2794, %v2796
      %v2798 = vrot.slane %v2607, 2
      %v2799 = vsel %vm558, %v2796, %v2798
      %v2813 = vsel %vm558, %v2798, %v2777
      %v2814 = vpack.c.bf16 %v2781, %v2779
      %v2815 = vpack.c.bf16 %v2785, %v2783
      %v2816 = vpack.c.bf16 %v2789, %v2787
      %v2817 = vpack.c.bf16 %v2793, %v2791
      %v2818 = vpack.c.bf16 %v2797, %v2795
      %v2819 = vpack.c.bf16 %v2813, %v2799
      %v2826 = vunpack.c.l.b16 %v2814
      %v2827 = vunpack.c.h.b16 %v2814
      %v2828 = vunpack.c.l.b16 %v2815
      %v2829 = vunpack.c.h.b16 %v2815
      %v2830 = vunpack.c.l.b16 %v2816
      %v2831 = vunpack.c.h.b16 %v2816
      %v2832 = vunpack.c.l.b16 %v2817
      %v2833 = vunpack.c.h.b16 %v2817
      %v2834 = vunpack.c.l.b16 %v2818
      %v2835 = vunpack.c.h.b16 %v2818
      %v2836 = vunpack.c.l.b16 %v2819
      %v2837 = vunpack.c.h.b16 %v2819
      %v2838 = vpack.c.b16 %v2826, %v2826
      %v2839 = vpack.c.b16 %v2827, %v2827
      %v2840 = vpack.c.b16 %v2828, %v2828
      %v2841 = vpack.c.b16 %v2829, %v2829
      %v2842 = vpack.c.b16 %v2830, %v2830
      %v2843 = vpack.c.b16 %v2831, %v2831
      %v2844 = vpack.c.b16 %v2832, %v2832
      %v2845 = vpack.c.b16 %v2833, %v2833
      %v2846 = vpack.c.b16 %v2834, %v2834
      %v2847 = vpack.c.b16 %v2835, %v2835
      %v2848 = vpack.c.b16 %v2836, %v2836
      %v2849 = vpack.c.b16 %v2837, %v2837
      %2862 = vst [vmem:[#allocation3 + $0x8] sm:$0xf] %v2838
      %2863 = vst [vmem:[#allocation3 + $0x14] sm:$0xf] %v2839
      %2864 = vst [vmem:[#allocation3 + $0x20] sm:$0xf] %v2840
      %2865 = vst [vmem:[#allocation3 + $0x2c] sm:$0xf] %v2841
      %2866 = vst [vmem:[#allocation3 + $0x38] sm:$0xf] %v2842
      %2867 = vst [vmem:[#allocation3 + $0x44] sm:$0xf] %v2843
      %2868 = vst [vmem:[#allocation3 + $0x50] sm:$0xf] %v2844
      %2869 = vst [vmem:[#allocation3 + $0x5c] sm:$0xf] %v2845
      %2870 = vst [vmem:[#allocation3 + $0x68] sm:$0xf] %v2846
      %2871 = vst [vmem:[#allocation3 + $0x74] sm:$0xf] %v2847
      %2872 = vst [vmem:[#allocation3 + $0x80] sm:$0xf] %v2848
      %2873 = vst [vmem:[#allocation3 + $0x8c] sm:$0xf] %v2849
      %v2874 = vld [vmem:[#allocation2 + $0x90] sm:$0xff]
      %v2875 = vld [vmem:[#allocation2 + $0x98] sm:$0xf]
      %v2876 = vld [vmem:[#allocation2 + $0x9c] sm:$0xff]
      %v2877 = vld [vmem:[#allocation2 + $0xa4] sm:$0xf]
      %v2878 = vld [vmem:[#allocation2 + $0xa8] sm:$0xff]
      %v2879 = vld [vmem:[#allocation2 + $0xb0] sm:$0xf]
      %v2880 = vld [vmem:[#allocation2 + $0xb4] sm:$0xff]
      %v2881 = vld [vmem:[#allocation2 + $0xbc] sm:$0xf]
      %v2882 = vld [vmem:[#allocation2 + $0xc0] sm:$0xff]
      %v2883 = vld [vmem:[#allocation2 + $0xc8] sm:$0xf]
      %v2884 = vld [vmem:[#allocation2 + $0xcc] sm:$0xff]
      %v2885 = vld [vmem:[#allocation2 + $0xd4] sm:$0xf]
      %v2886 = vld [vmem:[#allocation2 + $0xd8] sm:$0xff]
      %v2887 = vld [vmem:[#allocation2 + $0xe0] sm:$0xf]
      %v2888 = vld [vmem:[#allocation2 + $0xe4] sm:$0xff]
      %v2889 = vld [vmem:[#allocation2 + $0xec] sm:$0xf]
      %v2890 = vld [vmem:[#allocation2 + $0xf0] sm:$0xff]
      %v2891 = vld [vmem:[#allocation2 + $0xf8] sm:$0xf]
      %v2892 = vld [vmem:[#allocation2 + $0xfc] sm:$0xff]
      %v2893 = vld [vmem:[#allocation2 + $0x104] sm:$0xf]
      %v2894 = vld [vmem:[#allocation2 + $0x108] sm:$0xff]
      %v2895 = vld [vmem:[#allocation2 + $0x110] sm:$0xf]
      %v2896 = vld [vmem:[#allocation2 + $0x114] sm:$0xff]
      %v2897 = vld [vmem:[#allocation2 + $0x11c] sm:$0xf]
      %v2898 = vld [vmem:[%s2] sm:$0xf]
      %v2899 = vld [vmem:[%s2 + $0x4] sm:$0xf]
      %v2900 = vld [vmem:[%s2 + $0x8] sm:$0xf]
      %v2901 = vld [vmem:[%s2 + $0xc] sm:$0xf]
      %v2902 = vld [vmem:[%s2 + $0x10] sm:$0xf]
      %v2903 = vld [vmem:[%s2 + $0x14] sm:$0xf]
      %v2904 = vld [vmem:[%s2 + $0x18] sm:$0xf]
      %v2905 = vld [vmem:[%s2 + $0x1c] sm:$0xf]
      %v2906 = vld [vmem:[%s2 + $0x20] sm:$0xf]
      %v2907 = vld [vmem:[%s2 + $0x24] sm:$0xf]
      %v2908 = vld [vmem:[%s2 + $0x28] sm:$0xf]
      %v2909 = vld [vmem:[%s2 + $0x2c] sm:$0xf]
      %v2910 = vld [vmem:[%s2 + $0x30] sm:$0xf]
      %v2911 = vld [vmem:[%s2 + $0x34] sm:$0xf]
      %v2912 = vld [vmem:[%s2 + $0x38] sm:$0xf]
      %v2913 = vld [vmem:[%s2 + $0x3c] sm:$0xf]
      %v2914 = vld [vmem:[%s2 + $0x40] sm:$0xf]
      %v2915 = vld [vmem:[%s2 + $0x44] sm:$0xf]
      %v2916 = vld [vmem:[%s2 + $0x48] sm:$0xf]
      %v2917 = vld [vmem:[%s2 + $0x4c] sm:$0xf]
      %v2918 = vld [vmem:[%s2 + $0x50] sm:$0xf]
      %v2919 = vld [vmem:[%s2 + $0x54] sm:$0xf]
      %v2920 = vld [vmem:[%s2 + $0x58] sm:$0xf]
      %v2921 = vld [vmem:[%s2 + $0x5c] sm:$0xf]
      %v2922 = vld [vmem:[%s2 + $0x60] sm:$0xf]
      %v2923 = vld [vmem:[%s2 + $0x64] sm:$0xf]
      %v2924 = vld [vmem:[%s2 + $0x68] sm:$0xf]
      %v2925 = vld [vmem:[%s2 + $0x6c] sm:$0xf]
      %v2926 = vld [vmem:[%s2 + $0x70] sm:$0xf]
      %v2927 = vld [vmem:[%s2 + $0x74] sm:$0xf]
      %v2928 = vld [vmem:[%s2 + $0x78] sm:$0xf]
      %v2929 = vld [vmem:[%s2 + $0x7c] sm:$0xf]
      %v2930 = vld [vmem:[%s2 + $0x80] sm:$0xf]
      %v2931 = vld [vmem:[%s2 + $0x84] sm:$0xf]
      %v2932 = vld [vmem:[%s2 + $0x88] sm:$0xf]
      %v2933 = vld [vmem:[%s2 + $0x8c] sm:$0xf]
      %v2934 = vld [vmem:[%s2 + $0x90] sm:$0xf]
      %v2935 = vld [vmem:[%s2 + $0x94] sm:$0xf]
      %v2936 = vld [vmem:[%s2 + $0x98] sm:$0xf]
      %v2937 = vld [vmem:[%s2 + $0x9c] sm:$0xf]
      %v2938 = vld [vmem:[%s2 + $0xa0] sm:$0xf]
      %v2939 = vld [vmem:[%s2 + $0xa4] sm:$0xf]
      %v2940 = vld [vmem:[%s2 + $0xa8] sm:$0xf]
      %v2941 = vld [vmem:[%s2 + $0xac] sm:$0xf]
      %v2942 = vld [vmem:[%s2 + $0xb0] sm:$0xf]
      %v2943 = vld [vmem:[%s2 + $0xb4] sm:$0xf]
      %v2944 = vld [vmem:[%s2 + $0xb8] sm:$0xf]
      %v2945 = vld [vmem:[%s2 + $0xbc] sm:$0xf]
      %v2946 = vld [vmem:[#allocation2 + $0x120] sm:$0xff]
      %v2947 = vld [vmem:[#allocation2 + $0x128] sm:$0xf]
      %v2948 = vld [vmem:[#allocation2 + $0x12c] sm:$0xff]
      %v2949 = vld [vmem:[#allocation2 + $0x134] sm:$0xf]
      %v2950 = vld [vmem:[#allocation2 + $0x138] sm:$0xff]
      %v2951 = vld [vmem:[#allocation2 + $0x140] sm:$0xf]
      %v2952 = vld [vmem:[%s1204] sm:$0xf]
      %v2953 = vld [vmem:[%s1204 + $0x4] sm:$0xf]
      %v2954 = vld [vmem:[%s1204 + $0x8] sm:$0xf]
      %v2955 = vld [vmem:[%s1204 + $0xc] sm:$0xf]
      %v2956 = vld [vmem:[%s1204 + $0x10] sm:$0xf]
      %v2957 = vld [vmem:[%s1204 + $0x14] sm:$0xf]
      %v2958 = vld [vmem:[%s1204 + $0x18] sm:$0xf]
      %v2959 = vld [vmem:[%s1204 + $0x1c] sm:$0xf]
      %v2960 = vld [vmem:[%s1204 + $0x20] sm:$0xf]
      %v2961 = vld [vmem:[%s1204 + $0x24] sm:$0xf]
      %v2962 = vld [vmem:[%s1204 + $0x28] sm:$0xf]
      %v2963 = vld [vmem:[%s1204 + $0x2c] sm:$0xf]
      %v2964 = vld [vmem:[%s1204 + $0x30] sm:$0xf]
      %v2965 = vld [vmem:[%s1204 + $0x34] sm:$0xf]
      %v2966 = vld [vmem:[%s1204 + $0x38] sm:$0xf]
      %v2967 = vld [vmem:[%s1204 + $0x3c] sm:$0xf]
      %v2968 = vld [vmem:[%s1204 + $0x40] sm:$0xf]
      %v2969 = vld [vmem:[%s1204 + $0x44] sm:$0xf]
      %v2970 = vld [vmem:[%s1204 + $0x48] sm:$0xf]
      %v2971 = vld [vmem:[%s1204 + $0x4c] sm:$0xf]
      %v2972 = vld [vmem:[%s1204 + $0x50] sm:$0xf]
      %v2973 = vld [vmem:[%s1204 + $0x54] sm:$0xf]
      %v2974 = vld [vmem:[%s1204 + $0x58] sm:$0xf]
      %v2975 = vld [vmem:[%s1204 + $0x5c] sm:$0xf]
      %v2976 = vld [vmem:[%s1204 + $0x60] sm:$0xf]
      %v2977 = vld [vmem:[%s1204 + $0x64] sm:$0xf]
      %v2978 = vld [vmem:[%s1204 + $0x68] sm:$0xf]
      %v2979 = vld [vmem:[%s1204 + $0x6c] sm:$0xf]
      %v2980 = vld [vmem:[%s1204 + $0x70] sm:$0xf]
      %v2981 = vld [vmem:[%s1204 + $0x74] sm:$0xf]
      %v2982 = vld [vmem:[%s1204 + $0x78] sm:$0xf]
      %v2983 = vld [vmem:[%s1204 + $0x7c] sm:$0xf]
      %v2984 = vld [vmem:[%s1204 + $0x80] sm:$0xf]
      %v2985 = vld [vmem:[%s1204 + $0x84] sm:$0xf]
      %v2986 = vld [vmem:[%s1204 + $0x88] sm:$0xf]
      %v2987 = vld [vmem:[%s1204 + $0x8c] sm:$0xf]
      %v2988 = vld [vmem:[%s1204 + $0x90] sm:$0xf]
      %v2989 = vld [vmem:[%s1204 + $0x94] sm:$0xf]
      %v2990 = vld [vmem:[%s1204 + $0x98] sm:$0xf]
      %v2991 = vld [vmem:[%s1204 + $0x9c] sm:$0xf]
      %v2992 = vld [vmem:[%s1204 + $0xa0] sm:$0xf]
      %v2993 = vld [vmem:[%s1204 + $0xa4] sm:$0xf]
      %v2994 = vld [vmem:[%s1204 + $0xa8] sm:$0xf]
      %v2995 = vld [vmem:[%s1204 + $0xac] sm:$0xf]
      %v2996 = vld [vmem:[%s1204 + $0xb0] sm:$0xf]
      %v2997 = vld [vmem:[%s1204 + $0xb4] sm:$0xf]
      %v2998 = vld [vmem:[%s1204 + $0xb8] sm:$0xf]
      %v2999 = vld [vmem:[%s1204 + $0xbc] sm:$0xf]
      %v3024 = vunpack.c.l.b16 %v2880
      %v3025 = vunpack.c.h.b16 %v2880
      %v3026 = vunpack.c.l.b16 %v2881
      %v3027 = vunpack.c.l.b16 %v2882
      %v3028 = vunpack.c.h.b16 %v2882
      %v3029 = vunpack.c.l.b16 %v2883
      %v3030 = vunpack.c.l.b16 %v2884
      %v3031 = vunpack.c.h.b16 %v2884
      %v3032 = vunpack.c.l.b16 %v2885
      %v3033 = vunpack.c.l.b16 %v2886
      %v3034 = vunpack.c.h.b16 %v2886
      %v3035 = vunpack.c.l.b16 %v2887
      %v3036 = vunpack.c.l.b16 %v2888
      %v3037 = vunpack.c.h.b16 %v2888
      %v3038 = vunpack.c.l.b16 %v2889
      %v3039 = vunpack.c.l.b16 %v2890
      %v3040 = vunpack.c.h.b16 %v2890
      %v3041 = vunpack.c.l.b16 %v2891
      %v3042 = vunpack.c.l.b16 %v2892
      %v3043 = vunpack.c.h.b16 %v2892
      %v3044 = vunpack.c.l.b16 %v2893
      %v3045 = vunpack.c.l.b16 %v2894
      %v3046 = vunpack.c.h.b16 %v2894
      %v3047 = vunpack.c.l.b16 %v2895
      %v3048 = vunpack.c.l.b16 %v2896
      %v3049 = vunpack.c.h.b16 %v2896
      %v3050 = vunpack.c.l.b16 %v2897
      %v3051 = vunpack.c.l.b16 %v2946
      %v3052 = vunpack.c.h.b16 %v2946
      %v3053 = vunpack.c.l.b16 %v2947
      %v3054 = vunpack.c.l.b16 %v2948
      %v3055 = vunpack.c.h.b16 %v2948
      %v3056 = vunpack.c.l.b16 %v2949
      %v3057 = vunpack.c.l.b16 %v2950
      %v3058 = vunpack.c.h.b16 %v2950
      %v3059 = vunpack.c.l.b16 %v2951
      %v3060 = vpack.c.b16 %v3027, %v3024
      %v3061 = vpack.c.b16 %v3028, %v3025
      %v3062 = vpack.c.b16 %v3029, %v3026
      %v3063 = vpack.c.b16 %v3033, %v3030
      %v3064 = vpack.c.b16 %v3034, %v3031
      %v3065 = vpack.c.b16 %v3035, %v3032
      %v3066 = vpack.c.b16 %v3039, %v3036
      %v3067 = vpack.c.b16 %v3040, %v3037
      %v3068 = vpack.c.b16 %v3041, %v3038
      %v3069 = vpack.c.b16 %v3045, %v3042
      %v3070 = vpack.c.b16 %v3046, %v3043
      %v3071 = vpack.c.b16 %v3047, %v3044
      %v3072 = vpack.c.b16 %v3051, %v3048
      %v3073 = vpack.c.b16 %v3052, %v3049
      %v3074 = vpack.c.b16 %v3053, %v3050
      %v3075 = vpack.c.b16 %v3057, %v3054
      %v3076 = vpack.c.b16 %v3058, %v3055
      %v3077 = vpack.c.b16 %v3059, %v3056
      %v3144 = vunpack.c.l.b16 %v2952
      %v3145 = vunpack.c.l.b16 %v2953
      %v3146 = vunpack.c.l.b16 %v2954
      %v3147 = vunpack.c.l.b16 %v2955
      %v3148 = vunpack.c.l.b16 %v2956
      %v3149 = vunpack.c.l.b16 %v2957
      %v3150 = vunpack.c.l.b16 %v2958
      %v3151 = vunpack.c.l.b16 %v2959
      %v3152 = vunpack.c.l.b16 %v2960
      %v3153 = vunpack.c.l.b16 %v2961
      %v3154 = vunpack.c.l.b16 %v2962
      %v3155 = vunpack.c.l.b16 %v2963
      %v3156 = vunpack.c.l.b16 %v2964
      %v3157 = vunpack.c.l.b16 %v2965
      %v3158 = vunpack.c.l.b16 %v2966
      %v3159 = vunpack.c.l.b16 %v2967
      %v3160 = vunpack.c.l.b16 %v2968
      %v3161 = vunpack.c.l.b16 %v2969
      %v3162 = vunpack.c.l.b16 %v2970
      %v3163 = vunpack.c.l.b16 %v2971
      %v3164 = vunpack.c.l.b16 %v2972
      %v3165 = vunpack.c.l.b16 %v2973
      %v3166 = vunpack.c.l.b16 %v2974
      %v3167 = vunpack.c.l.b16 %v2975
      %v3168 = vunpack.c.l.b16 %v2976
      %v3169 = vunpack.c.l.b16 %v2977
      %v3170 = vunpack.c.l.b16 %v2978
      %v3171 = vunpack.c.l.b16 %v2979
      %v3172 = vunpack.c.l.b16 %v2980
      %v3173 = vunpack.c.l.b16 %v2981
      %v3174 = vunpack.c.l.b16 %v2982
      %v3175 = vunpack.c.l.b16 %v2983
      %v3176 = vunpack.c.l.b16 %v2984
      %v3177 = vunpack.c.l.b16 %v2985
      %v3178 = vunpack.c.l.b16 %v2986
      %v3179 = vunpack.c.l.b16 %v2987
      %v3180 = vunpack.c.l.b16 %v2988
      %v3181 = vunpack.c.l.b16 %v2989
      %v3182 = vunpack.c.l.b16 %v2990
      %v3183 = vunpack.c.l.b16 %v2991
      %v3184 = vunpack.c.l.b16 %v2992
      %v3185 = vunpack.c.l.b16 %v2993
      %v3186 = vunpack.c.l.b16 %v2994
      %v3187 = vunpack.c.l.b16 %v2995
      %v3188 = vunpack.c.l.b16 %v2996
      %v3189 = vunpack.c.l.b16 %v2997
      %v3190 = vunpack.c.l.b16 %v2998
      %v3191 = vunpack.c.l.b16 %v2999
      %v3192 = vpack.c.b16 %v3145, %v3144
      %v3193 = vpack.c.b16 %v3147, %v3146
      %v3194 = vpack.c.b16 %v3149, %v3148
      %v3195 = vpack.c.b16 %v3151, %v3150
      %v3196 = vpack.c.b16 %v3153, %v3152
      %v3197 = vpack.c.b16 %v3155, %v3154
      %v3198 = vpack.c.b16 %v3157, %v3156
      %v3199 = vpack.c.b16 %v3159, %v3158
      %v3200 = vpack.c.b16 %v3161, %v3160
      %v3201 = vpack.c.b16 %v3163, %v3162
      %v3202 = vpack.c.b16 %v3165, %v3164
      %v3203 = vpack.c.b16 %v3167, %v3166
      %v3204 = vpack.c.b16 %v3169, %v3168
      %v3205 = vpack.c.b16 %v3171, %v3170
      %v3206 = vpack.c.b16 %v3173, %v3172
      %v3207 = vpack.c.b16 %v3175, %v3174
      %v3208 = vpack.c.b16 %v3177, %v3176
      %v3209 = vpack.c.b16 %v3179, %v3178
      %v3210 = vpack.c.b16 %v3181, %v3180
      %v3211 = vpack.c.b16 %v3183, %v3182
      %v3212 = vpack.c.b16 %v3185, %v3184
      %v3213 = vpack.c.b16 %v3187, %v3186
      %v3214 = vpack.c.b16 %v3189, %v3188
      %v3215 = vpack.c.b16 %v3191, %v3190
      %3240 = vmatprep.subr.bf16.mxu0 0
      %3241 = vmatpush1.bf16.msra.mxu0 %v3199
      %3242 = vmatprep.subr.bf16.mxu0 0
      %3243 = vmatpush1.bf16.msra.mxu0 %v3198
      %3244 = vmatprep.subr.bf16.mxu0 0
      %3245 = vmatpush1.bf16.msra.mxu0 %v3197
      %3246 = vmatprep.subr.bf16.mxu0 0
      %3247 = vmatpush1.bf16.msra.mxu0 %v3196
      %3248 = vmatprep.subr.bf16.mxu0 0
      %3249 = vmatpush1.bf16.msra.mxu0 %v3195
      %3250 = vmatprep.subr.bf16.mxu0 0
      %3251 = vmatpush1.bf16.msra.mxu0 %v3194
      %3252 = vmatprep.subr.bf16.mxu0 0
      %3253 = vmatpush1.bf16.msra.mxu0 %v3193
      %3254 = vmatprep.subr.bf16.mxu0 0
      %3255 = vmatpush1.bf16.msra.mxu0 %v3192
      %3256 = vmatprep.subr.bf16.mxu0 0
      %3257 = vmatpush2.bf16.msra.mxu0 %v3207
      %3258 = vmatprep.subr.bf16.mxu0 0
      %3259 = vmatpush2.bf16.msra.mxu0 %v3206
      %3260 = vmatprep.subr.bf16.mxu0 0
      %3261 = vmatpush2.bf16.msra.mxu0 %v3205
      %3262 = vmatprep.subr.bf16.mxu0 0
      %3263 = vmatpush2.bf16.msra.mxu0 %v3204
      %3264 = vmatprep.subr.bf16.mxu0 0
      %3265 = vmatpush2.bf16.msra.mxu0 %v3203
      %3266 = vmatprep.subr.bf16.mxu0 0
      %3267 = vmatpush2.bf16.msra.mxu0 %v3202
      %3268 = vmatprep.subr.bf16.mxu0 0
      %3269 = vmatpush2.bf16.msra.mxu0 %v3201
      %3270 = vmatprep.subr.bf16.mxu0 0
      %3271 = vmatpush2.bf16.msra.mxu0 %v3200
      %3272 = vmatprep.mubr.bf16.mxu0 %v3061
      %3273 = vmatmul.mubr.bf16.gmra.mxu0 %v3060
      %v3274 = vpop.f32.mrf.mxu0
      %v3275 = vadd.f32 0.0, %v3274
      %v3276 = vpop.f32.mrf.mxu0
      %v3277 = vpop.f32.mrf.mxu0
      %v3278 = vadd.f32 0.0, %v3277
      %v3279 = vpop.f32.mrf.mxu0
      %3280 = vmatprep.mubr.bf16.mxu0 %v3064
      %3281 = vmatmul.mubr.bf16.gmra.mxu0 %v3063
      %v3282 = vpop.f32.mrf.mxu0
      %v3283 = vadd.f32 0.0, %v3282
      %v3284 = vpop.f32.mrf.mxu0
      %v3285 = vpop.f32.mrf.mxu0
      %v3286 = vadd.f32 0.0, %v3285
      %v3287 = vpop.f32.mrf.mxu0
      %3288 = vmatprep.mubr.bf16.mxu0 %v3067
      %3289 = vmatmul.mubr.bf16.gmra.mxu0 %v3066
      %v3290 = vpop.f32.mrf.mxu0
      %v3291 = vadd.f32 0.0, %v3290
      %v3292 = vpop.f32.mrf.mxu0
      %v3293 = vpop.f32.mrf.mxu0
      %v3294 = vadd.f32 0.0, %v3293
      %v3295 = vpop.f32.mrf.mxu0
      %3296 = vmatprep.mubr.bf16.mxu0 %v3070
      %3297 = vmatmul.mubr.bf16.gmra.mxu0 %v3069
      %v3298 = vpop.f32.mrf.mxu0
      %v3299 = vadd.f32 0.0, %v3298
      %v3300 = vpop.f32.mrf.mxu0
      %v3301 = vpop.f32.mrf.mxu0
      %v3302 = vadd.f32 0.0, %v3301
      %v3303 = vpop.f32.mrf.mxu0
      %3304 = vmatprep.mubr.bf16.mxu0 %v3073
      %3305 = vmatmul.mubr.bf16.gmra.mxu0 %v3072
      %v3306 = vpop.f32.mrf.mxu0
      %v3307 = vadd.f32 0.0, %v3306
      %v3308 = vpop.f32.mrf.mxu0
      %v3309 = vpop.f32.mrf.mxu0
      %v3310 = vadd.f32 0.0, %v3309
      %v3311 = vpop.f32.mrf.mxu0
      %3312 = vmatprep.mubr.bf16.mxu0 %v3076
      %3313 = vmatmul.mubr.bf16.gmra.mxu0 %v3075
      %v3314 = vpop.f32.mrf.mxu0
      %v3315 = vadd.f32 0.0, %v3314
      %v3316 = vpop.f32.mrf.mxu0
      %v3317 = vpop.f32.mrf.mxu0
      %v3318 = vadd.f32 0.0, %v3317
      %v3319 = vpop.f32.mrf.mxu0
      %3320 = vdwg.mxu0
      %3321 = vmatprep.subr.bf16.mxu0 0
      %3322 = vmatpush1.bf16.msra.mxu0 %v3215
      %3323 = vmatprep.subr.bf16.mxu0 0
      %3324 = vmatpush1.bf16.msra.mxu0 %v3214
      %3325 = vmatprep.subr.bf16.mxu0 0
      %3326 = vmatpush1.bf16.msra.mxu0 %v3213
      %3327 = vmatprep.subr.bf16.mxu0 0
      %3328 = vmatpush1.bf16.msra.mxu0 %v3212
      %3329 = vmatprep.subr.bf16.mxu0 0
      %3330 = vmatpush1.bf16.msra.mxu0 %v3211
      %3331 = vmatprep.subr.bf16.mxu0 0
      %3332 = vmatpush1.bf16.msra.mxu0 %v3210
      %3333 = vmatprep.subr.bf16.mxu0 0
      %3334 = vmatpush1.bf16.msra.mxu0 %v3209
      %3335 = vmatprep.subr.bf16.mxu0 0
      %3336 = vmatpush1.bf16.msra.mxu0 %v3208
      %3337 = vmatprep.subr.bf16.mxu0 0
      %3338 = vmatpush2.bf16.msra.mxu0 0
      %3339 = vmatprep.subr.bf16.mxu0 0
      %3340 = vmatpush2.bf16.msra.mxu0 0
      %3341 = vmatprep.subr.bf16.mxu0 0
      %3342 = vmatpush2.bf16.msra.mxu0 0
      %3343 = vmatprep.subr.bf16.mxu0 0
      %3344 = vmatpush2.bf16.msra.mxu0 0
      %3345 = vmatprep.subr.bf16.mxu0 0
      %3346 = vmatpush2.bf16.msra.mxu0 0
      %3347 = vmatprep.subr.bf16.mxu0 0
      %3348 = vmatpush2.bf16.msra.mxu0 0
      %3349 = vmatprep.subr.bf16.mxu0 0
      %3350 = vmatpush2.bf16.msra.mxu0 0
      %3351 = vmatprep.subr.bf16.mxu0 0
      %3352 = vmatpush2.bf16.msra.mxu0 0
      %3353 = vmatprep.mubr.bf16.mxu0 0
      %3354 = vmatmul.mubr.bf16.gmra.mxu0 %v3062
      %v3355 = vpop.f32.mrf.mxu0
      %v3356 = vadd.f32 %v3275, %v3355
      %v3357 = vpop.f32.mrf.mxu0
      %v3358 = vpop.f32.mrf.mxu0
      %v3359 = vadd.f32 %v3278, %v3358
      %v3360 = vpop.f32.mrf.mxu0
      %3361 = vmatprep.mubr.bf16.mxu0 0
      %3362 = vmatmul.mubr.bf16.gmra.mxu0 %v3065
      %v3363 = vpop.f32.mrf.mxu0
      %v3364 = vadd.f32 %v3283, %v3363
      %v3365 = vpop.f32.mrf.mxu0
      %v3366 = vpop.f32.mrf.mxu0
      %v3367 = vadd.f32 %v3286, %v3366
      %v3368 = vpop.f32.mrf.mxu0
      %3369 = vmatprep.mubr.bf16.mxu0 0
      %3370 = vmatmul.mubr.bf16.gmra.mxu0 %v3068
      %v3371 = vpop.f32.mrf.mxu0
      %v3372 = vadd.f32 %v3291, %v3371
      %v3373 = vpop.f32.mrf.mxu0
      %v3374 = vpop.f32.mrf.mxu0
      %v3375 = vadd.f32 %v3294, %v3374
      %v3376 = vpop.f32.mrf.mxu0
      %3377 = vmatprep.mubr.bf16.mxu0 0
      %3378 = vmatmul.mubr.bf16.gmra.mxu0 %v3071
      %v3379 = vpop.f32.mrf.mxu0
      %v3380 = vadd.f32 %v3299, %v3379
      %v3381 = vpop.f32.mrf.mxu0
      %v3382 = vpop.f32.mrf.mxu0
      %v3383 = vadd.f32 %v3302, %v3382
      %v3384 = vpop.f32.mrf.mxu0
      %3385 = vmatprep.mubr.bf16.mxu0 0
      %3386 = vmatmul.mubr.bf16.gmra.mxu0 %v3074
      %v3387 = vpop.f32.mrf.mxu0
      %v3388 = vadd.f32 %v3307, %v3387
      %v3389 = vpop.f32.mrf.mxu0
      %v3390 = vpop.f32.mrf.mxu0
      %v3391 = vadd.f32 %v3310, %v3390
      %v3392 = vpop.f32.mrf.mxu0
      %3393 = vmatprep.mubr.bf16.mxu0 0
      %3394 = vmatmul.mubr.bf16.gmra.mxu0 %v3077
      %v3395 = vpop.f32.mrf.mxu0
      %v3396 = vadd.f32 %v3315, %v3395
      %v3397 = vpop.f32.mrf.mxu0
      %v3398 = vpop.f32.mrf.mxu0
      %v3399 = vadd.f32 %v3318, %v3398
      %v3400 = vpop.f32.mrf.mxu0
      %3401 = vdwg.mxu0
      %v3408 = vunpack.c.l.b16 %v2874
      %v3409 = vunpack.c.h.b16 %v2874
      %v3410 = vunpack.c.l.b16 %v2875
      %v3411 = vunpack.c.l.b16 %v2876
      %v3412 = vunpack.c.h.b16 %v2876
      %v3413 = vunpack.c.l.b16 %v2877
      %v3414 = vunpack.c.l.b16 %v2878
      %v3415 = vunpack.c.h.b16 %v2878
      %v3416 = vunpack.c.l.b16 %v2879
      %v3417 = vpack.c.b16 %v3411, %v3408
      %v3418 = vpack.c.b16 %v3412, %v3409
      %v3419 = vpack.c.b16 %v3413, %v3410
      %v3420 = vpack.c.b16 %v3024, %v3414
      %v3421 = vpack.c.b16 %v3025, %v3415
      %v3422 = vpack.c.b16 %v3026, %v3416
      %v3423 = vpack.c.b16 %v3030, %v3027
      %v3424 = vpack.c.b16 %v3031, %v3028
      %v3425 = vpack.c.b16 %v3032, %v3029
      %v3426 = vpack.c.b16 %v3036, %v3033
      %v3427 = vpack.c.b16 %v3037, %v3034
      %v3428 = vpack.c.b16 %v3038, %v3035
      %v3429 = vpack.c.b16 %v3042, %v3039
      %v3430 = vpack.c.b16 %v3043, %v3040
      %v3431 = vpack.c.b16 %v3044, %v3041
      %v3432 = vpack.c.b16 %v3048, %v3045
      %v3433 = vpack.c.b16 %v3049, %v3046
      %v3434 = vpack.c.b16 %v3050, %v3047
      %v3501 = vunpack.c.l.b16 %v2898
      %v3502 = vunpack.c.l.b16 %v2899
      %v3503 = vunpack.c.l.b16 %v2900
      %v3504 = vunpack.c.l.b16 %v2901
      %v3505 = vunpack.c.l.b16 %v2902
      %v3506 = vunpack.c.l.b16 %v2903
      %v3507 = vunpack.c.l.b16 %v2904
      %v3508 = vunpack.c.l.b16 %v2905
      %v3509 = vunpack.c.l.b16 %v2906
      %v3510 = vunpack.c.l.b16 %v2907
      %v3511 = vunpack.c.l.b16 %v2908
      %v3512 = vunpack.c.l.b16 %v2909
      %v3513 = vunpack.c.l.b16 %v2910
      %v3514 = vunpack.c.l.b16 %v2911
      %v3515 = vunpack.c.l.b16 %v2912
      %v3516 = vunpack.c.l.b16 %v2913
      %v3517 = vunpack.c.l.b16 %v2914
      %v3518 = vunpack.c.l.b16 %v2915
      %v3519 = vunpack.c.l.b16 %v2916
      %v3520 = vunpack.c.l.b16 %v2917
      %v3521 = vunpack.c.l.b16 %v2918
      %v3522 = vunpack.c.l.b16 %v2919
      %v3523 = vunpack.c.l.b16 %v2920
      %v3524 = vunpack.c.l.b16 %v2921
      %v3525 = vunpack.c.l.b16 %v2922
      %v3526 = vunpack.c.l.b16 %v2923
      %v3527 = vunpack.c.l.b16 %v2924
      %v3528 = vunpack.c.l.b16 %v2925
      %v3529 = vunpack.c.l.b16 %v2926
      %v3530 = vunpack.c.l.b16 %v2927
      %v3531 = vunpack.c.l.b16 %v2928
      %v3532 = vunpack.c.l.b16 %v2929
      %v3533 = vunpack.c.l.b16 %v2930
      %v3534 = vunpack.c.l.b16 %v2931
      %v3535 = vunpack.c.l.b16 %v2932
      %v3536 = vunpack.c.l.b16 %v2933
      %v3537 = vunpack.c.l.b16 %v2934
      %v3538 = vunpack.c.l.b16 %v2935
      %v3539 = vunpack.c.l.b16 %v2936
      %v3540 = vunpack.c.l.b16 %v2937
      %v3541 = vunpack.c.l.b16 %v2938
      %v3542 = vunpack.c.l.b16 %v2939
      %v3543 = vunpack.c.l.b16 %v2940
      %v3544 = vunpack.c.l.b16 %v2941
      %v3545 = vunpack.c.l.b16 %v2942
      %v3546 = vunpack.c.l.b16 %v2943
      %v3547 = vunpack.c.l.b16 %v2944
      %v3548 = vunpack.c.l.b16 %v2945
      %v3549 = vpack.c.b16 %v3502, %v3501
      %v3550 = vpack.c.b16 %v3504, %v3503
      %v3551 = vpack.c.b16 %v3506, %v3505
      %v3552 = vpack.c.b16 %v3508, %v3507
      %v3553 = vpack.c.b16 %v3510, %v3509
      %v3554 = vpack.c.b16 %v3512, %v3511
      %v3555 = vpack.c.b16 %v3514, %v3513
      %v3556 = vpack.c.b16 %v3516, %v3515
      %v3557 = vpack.c.b16 %v3518, %v3517
      %v3558 = vpack.c.b16 %v3520, %v3519
      %v3559 = vpack.c.b16 %v3522, %v3521
      %v3560 = vpack.c.b16 %v3524, %v3523
      %v3561 = vpack.c.b16 %v3526, %v3525
      %v3562 = vpack.c.b16 %v3528, %v3527
      %v3563 = vpack.c.b16 %v3530, %v3529
      %v3564 = vpack.c.b16 %v3532, %v3531
      %v3565 = vpack.c.b16 %v3534, %v3533
      %v3566 = vpack.c.b16 %v3536, %v3535
      %v3567 = vpack.c.b16 %v3538, %v3537
      %v3568 = vpack.c.b16 %v3540, %v3539
      %v3569 = vpack.c.b16 %v3542, %v3541
      %v3570 = vpack.c.b16 %v3544, %v3543
      %v3571 = vpack.c.b16 %v3546, %v3545
      %v3572 = vpack.c.b16 %v3548, %v3547
      %3597 = vmatprep.subr.bf16.mxu0 0
      %3598 = vmatpush1.bf16.msra.mxu0 %v3556
      %3599 = vmatprep.subr.bf16.mxu0 0
      %3600 = vmatpush1.bf16.msra.mxu0 %v3555
      %3601 = vmatprep.subr.bf16.mxu0 0
      %3602 = vmatpush1.bf16.msra.mxu0 %v3554
      %3603 = vmatprep.subr.bf16.mxu0 0
      %3604 = vmatpush1.bf16.msra.mxu0 %v3553
      %3605 = vmatprep.subr.bf16.mxu0 0
      %3606 = vmatpush1.bf16.msra.mxu0 %v3552
      %3607 = vmatprep.subr.bf16.mxu0 0
      %3608 = vmatpush1.bf16.msra.mxu0 %v3551
      %3609 = vmatprep.subr.bf16.mxu0 0
      %3610 = vmatpush1.bf16.msra.mxu0 %v3550
      %3611 = vmatprep.subr.bf16.mxu0 0
      %3612 = vmatpush1.bf16.msra.mxu0 %v3549
      %3613 = vmatprep.subr.bf16.mxu0 0
      %3614 = vmatpush2.bf16.msra.mxu0 %v3564
      %3615 = vmatprep.subr.bf16.mxu0 0
      %3616 = vmatpush2.bf16.msra.mxu0 %v3563
      %3617 = vmatprep.subr.bf16.mxu0 0
      %3618 = vmatpush2.bf16.msra.mxu0 %v3562
      %3619 = vmatprep.subr.bf16.mxu0 0
      %3620 = vmatpush2.bf16.msra.mxu0 %v3561
      %3621 = vmatprep.subr.bf16.mxu0 0
      %3622 = vmatpush2.bf16.msra.mxu0 %v3560
      %3623 = vmatprep.subr.bf16.mxu0 0
      %3624 = vmatpush2.bf16.msra.mxu0 %v3559
      %3625 = vmatprep.subr.bf16.mxu0 0
      %3626 = vmatpush2.bf16.msra.mxu0 %v3558
      %3627 = vmatprep.subr.bf16.mxu0 0
      %3628 = vmatpush2.bf16.msra.mxu0 %v3557
      %3629 = vmatprep.mubr.bf16.mxu0 %v3418
      %3630 = vmatmul.mubr.bf16.gmra.mxu0 %v3417
      %v3631 = vpop.f32.mrf.mxu0
      %v3632 = vadd.f32 %v3356, %v3631
      %v3633 = vpop.f32.mrf.mxu0
      %v3634 = vpop.f32.mrf.mxu0
      %v3635 = vadd.f32 %v3359, %v3634
      %v3636 = vpop.f32.mrf.mxu0
      %3637 = vmatprep.mubr.bf16.mxu0 %v3421
      %3638 = vmatmul.mubr.bf16.gmra.mxu0 %v3420
      %v3639 = vpop.f32.mrf.mxu0
      %v3640 = vadd.f32 %v3364, %v3639
      %v3641 = vpop.f32.mrf.mxu0
      %v3642 = vpop.f32.mrf.mxu0
      %v3643 = vadd.f32 %v3367, %v3642
      %v3644 = vpop.f32.mrf.mxu0
      %3645 = vmatprep.mubr.bf16.mxu0 %v3424
      %3646 = vmatmul.mubr.bf16.gmra.mxu0 %v3423
      %v3647 = vpop.f32.mrf.mxu0
      %v3648 = vadd.f32 %v3372, %v3647
      %v3649 = vpop.f32.mrf.mxu0
      %v3650 = vpop.f32.mrf.mxu0
      %v3651 = vadd.f32 %v3375, %v3650
      %v3652 = vpop.f32.mrf.mxu0
      %3653 = vmatprep.mubr.bf16.mxu0 %v3427
      %3654 = vmatmul.mubr.bf16.gmra.mxu0 %v3426
      %v3655 = vpop.f32.mrf.mxu0
      %v3656 = vadd.f32 %v3380, %v3655
      %v3657 = vpop.f32.mrf.mxu0
      %v3658 = vpop.f32.mrf.mxu0
      %v3659 = vadd.f32 %v3383, %v3658
      %v3660 = vpop.f32.mrf.mxu0
      %3661 = vmatprep.mubr.bf16.mxu0 %v3430
      %3662 = vmatmul.mubr.bf16.gmra.mxu0 %v3429
      %v3663 = vpop.f32.mrf.mxu0
      %v3664 = vadd.f32 %v3388, %v3663
      %v3665 = vpop.f32.mrf.mxu0
      %v3666 = vpop.f32.mrf.mxu0
      %v3667 = vadd.f32 %v3391, %v3666
      %v3668 = vpop.f32.mrf.mxu0
      %3669 = vmatprep.mubr.bf16.mxu0 %v3433
      %3670 = vmatmul.mubr.bf16.gmra.mxu0 %v3432
      %v3671 = vpop.f32.mrf.mxu0
      %v3672 = vadd.f32 %v3396, %v3671
      %v3673 = vpop.f32.mrf.mxu0
      %v3674 = vpop.f32.mrf.mxu0
      %v3675 = vadd.f32 %v3399, %v3674
      %v3676 = vpop.f32.mrf.mxu0
      %3677 = vdwg.mxu0
      %3678 = vmatprep.subr.bf16.mxu0 0
      %3679 = vmatpush1.bf16.msra.mxu0 %v3572
      %3680 = vmatprep.subr.bf16.mxu0 0
      %3681 = vmatpush1.bf16.msra.mxu0 %v3571
      %3682 = vmatprep.subr.bf16.mxu0 0
      %3683 = vmatpush1.bf16.msra.mxu0 %v3570
      %3684 = vmatprep.subr.bf16.mxu0 0
      %3685 = vmatpush1.bf16.msra.mxu0 %v3569
      %3686 = vmatprep.subr.bf16.mxu0 0
      %3687 = vmatpush1.bf16.msra.mxu0 %v3568
      %3688 = vmatprep.subr.bf16.mxu0 0
      %3689 = vmatpush1.bf16.msra.mxu0 %v3567
      %3690 = vmatprep.subr.bf16.mxu0 0
      %3691 = vmatpush1.bf16.msra.mxu0 %v3566
      %3692 = vmatprep.subr.bf16.mxu0 0
      %3693 = vmatpush1.bf16.msra.mxu0 %v3565
      %3694 = vmatprep.subr.bf16.mxu0 0
      %3695 = vmatpush2.bf16.msra.mxu0 0
      %3696 = vmatprep.subr.bf16.mxu0 0
      %3697 = vmatpush2.bf16.msra.mxu0 0
      %3698 = vmatprep.subr.bf16.mxu0 0
      %3699 = vmatpush2.bf16.msra.mxu0 0
      %3700 = vmatprep.subr.bf16.mxu0 0
      %3701 = vmatpush2.bf16.msra.mxu0 0
      %3702 = vmatprep.subr.bf16.mxu0 0
      %3703 = vmatpush2.bf16.msra.mxu0 0
      %3704 = vmatprep.subr.bf16.mxu0 0
      %3705 = vmatpush2.bf16.msra.mxu0 0
      %3706 = vmatprep.subr.bf16.mxu0 0
      %3707 = vmatpush2.bf16.msra.mxu0 0
      %3708 = vmatprep.subr.bf16.mxu0 0
      %3709 = vmatpush2.bf16.msra.mxu0 0
      %3710 = vmatprep.mubr.bf16.mxu0 0
      %3711 = vmatmul.mubr.bf16.gmra.mxu0 %v3419
      %v3712 = vpop.f32.mrf.mxu0
      %v3713 = vadd.f32 %v3632, %v3712
      %v3714 = vpop.f32.mrf.mxu0
      %v3715 = vpop.f32.mrf.mxu0
      %v3716 = vadd.f32 %v3635, %v3715
      %v3717 = vpop.f32.mrf.mxu0
      %3718 = vmatprep.mubr.bf16.mxu0 0
      %3719 = vmatmul.mubr.bf16.gmra.mxu0 %v3422
      %v3720 = vpop.f32.mrf.mxu0
      %v3721 = vadd.f32 %v3640, %v3720
      %v3722 = vpop.f32.mrf.mxu0
      %v3723 = vpop.f32.mrf.mxu0
      %v3724 = vadd.f32 %v3643, %v3723
      %v3725 = vpop.f32.mrf.mxu0
      %3726 = vmatprep.mubr.bf16.mxu0 0
      %3727 = vmatmul.mubr.bf16.gmra.mxu0 %v3425
      %v3728 = vpop.f32.mrf.mxu0
      %v3729 = vadd.f32 %v3648, %v3728
      %v3730 = vpop.f32.mrf.mxu0
      %v3731 = vpop.f32.mrf.mxu0
      %v3732 = vadd.f32 %v3651, %v3731
      %v3733 = vpop.f32.mrf.mxu0
      %3734 = vmatprep.mubr.bf16.mxu0 0
      %3735 = vmatmul.mubr.bf16.gmra.mxu0 %v3428
      %v3736 = vpop.f32.mrf.mxu0
      %v3737 = vadd.f32 %v3656, %v3736
      %v3738 = vpop.f32.mrf.mxu0
      %v3739 = vpop.f32.mrf.mxu0
      %v3740 = vadd.f32 %v3659, %v3739
      %v3741 = vpop.f32.mrf.mxu0
      %3742 = vmatprep.mubr.bf16.mxu0 0
      %3743 = vmatmul.mubr.bf16.gmra.mxu0 %v3431
      %v3744 = vpop.f32.mrf.mxu0
      %v3745 = vadd.f32 %v3664, %v3744
      %v3746 = vpop.f32.mrf.mxu0
      %v3747 = vpop.f32.mrf.mxu0
      %v3748 = vadd.f32 %v3667, %v3747
      %v3749 = vpop.f32.mrf.mxu0
      %3750 = vmatprep.mubr.bf16.mxu0 0
      %3751 = vmatmul.mubr.bf16.gmra.mxu0 %v3434
      %v3752 = vpop.f32.mrf.mxu0
      %v3753 = vadd.f32 %v3672, %v3752
      %v3754 = vpop.f32.mrf.mxu0
      %v3755 = vpop.f32.mrf.mxu0
      %v3756 = vadd.f32 %v3675, %v3755
      %v3757 = vpop.f32.mrf.mxu0
      %3758 = vdwg.mxu0
      %v3759 = vld [vmem:[#allocation2 + $0xd8] sm:$0xff]
      %v3760 = vld [vmem:[#allocation2 + $0xe0] sm:$0xf]
      %v3761 = vld [vmem:[#allocation2 + $0xe4] sm:$0xff]
      %v3762 = vld [vmem:[#allocation2 + $0xec] sm:$0xf]
      %v3763 = vld [vmem:[#allocation2 + $0xf0] sm:$0xff]
      %v3764 = vld [vmem:[#allocation2 + $0xf8] sm:$0xf]
      %v3765 = vld [vmem:[#allocation2 + $0xfc] sm:$0xff]
      %v3766 = vld [vmem:[#allocation2 + $0x104] sm:$0xf]
      %v3767 = vld [vmem:[#allocation2 + $0x108] sm:$0xff]
      %v3768 = vld [vmem:[#allocation2 + $0x110] sm:$0xf]
      %v3769 = vld [vmem:[#allocation2 + $0x114] sm:$0xff]
      %v3770 = vld [vmem:[#allocation2 + $0x11c] sm:$0xf]
      %v3771 = vld [vmem:[#allocation2 + $0x120] sm:$0xff]
      %v3772 = vld [vmem:[#allocation2 + $0x128] sm:$0xf]
      %v3773 = vld [vmem:[#allocation2 + $0x12c] sm:$0xff]
      %v3774 = vld [vmem:[#allocation2 + $0x134] sm:$0xf]
      %v3775 = vld [vmem:[#allocation2 + $0x138] sm:$0xff]
      %v3776 = vld [vmem:[#allocation2 + $0x140] sm:$0xf]
      %v3777 = vld [vmem:[#allocation2 + $0x144] sm:$0xff]
      %v3778 = vld [vmem:[#allocation2 + $0x14c] sm:$0xf]
      %v3779 = vld [vmem:[#allocation2 + $0x150] sm:$0xff]
      %v3780 = vld [vmem:[#allocation2 + $0x158] sm:$0xf]
      %v3781 = vld [vmem:[#allocation2 + $0x15c] sm:$0xff]
      %v3782 = vld [vmem:[#allocation2 + $0x164] sm:$0xf]
      %v3783 = vld [vmem:[%s2036] sm:$0xf]
      %v3784 = vld [vmem:[%s2036 + $0x4] sm:$0xf]
      %v3785 = vld [vmem:[%s2036 + $0x8] sm:$0xf]
      %v3786 = vld [vmem:[%s2036 + $0xc] sm:$0xf]
      %v3787 = vld [vmem:[%s2036 + $0x10] sm:$0xf]
      %v3788 = vld [vmem:[%s2036 + $0x14] sm:$0xf]
      %v3789 = vld [vmem:[%s2036 + $0x18] sm:$0xf]
      %v3790 = vld [vmem:[%s2036 + $0x1c] sm:$0xf]
      %v3791 = vld [vmem:[%s2036 + $0x20] sm:$0xf]
      %v3792 = vld [vmem:[%s2036 + $0x24] sm:$0xf]
      %v3793 = vld [vmem:[%s2036 + $0x28] sm:$0xf]
      %v3794 = vld [vmem:[%s2036 + $0x2c] sm:$0xf]
      %v3795 = vld [vmem:[%s2036 + $0x30] sm:$0xf]
      %v3796 = vld [vmem:[%s2036 + $0x34] sm:$0xf]
      %v3797 = vld [vmem:[%s2036 + $0x38] sm:$0xf]
      %v3798 = vld [vmem:[%s2036 + $0x3c] sm:$0xf]
      %v3799 = vld [vmem:[%s2036 + $0x40] sm:$0xf]
      %v3800 = vld [vmem:[%s2036 + $0x44] sm:$0xf]
      %v3801 = vld [vmem:[%s2036 + $0x48] sm:$0xf]
      %v3802 = vld [vmem:[%s2036 + $0x4c] sm:$0xf]
      %v3803 = vld [vmem:[%s2036 + $0x50] sm:$0xf]
      %v3804 = vld [vmem:[%s2036 + $0x54] sm:$0xf]
      %v3805 = vld [vmem:[%s2036 + $0x58] sm:$0xf]
      %v3806 = vld [vmem:[%s2036 + $0x5c] sm:$0xf]
      %v3807 = vld [vmem:[%s2036 + $0x60] sm:$0xf]
      %v3808 = vld [vmem:[%s2036 + $0x64] sm:$0xf]
      %v3809 = vld [vmem:[%s2036 + $0x68] sm:$0xf]
      %v3810 = vld [vmem:[%s2036 + $0x6c] sm:$0xf]
      %v3811 = vld [vmem:[%s2036 + $0x70] sm:$0xf]
      %v3812 = vld [vmem:[%s2036 + $0x74] sm:$0xf]
      %v3813 = vld [vmem:[%s2036 + $0x78] sm:$0xf]
      %v3814 = vld [vmem:[%s2036 + $0x7c] sm:$0xf]
      %v3815 = vld [vmem:[%s2036 + $0x80] sm:$0xf]
      %v3816 = vld [vmem:[%s2036 + $0x84] sm:$0xf]
      %v3817 = vld [vmem:[%s2036 + $0x88] sm:$0xf]
      %v3818 = vld [vmem:[%s2036 + $0x8c] sm:$0xf]
      %v3819 = vld [vmem:[%s2036 + $0x90] sm:$0xf]
      %v3820 = vld [vmem:[%s2036 + $0x94] sm:$0xf]
      %v3821 = vld [vmem:[%s2036 + $0x98] sm:$0xf]
      %v3822 = vld [vmem:[%s2036 + $0x9c] sm:$0xf]
      %v3823 = vld [vmem:[%s2036 + $0xa0] sm:$0xf]
      %v3824 = vld [vmem:[%s2036 + $0xa4] sm:$0xf]
      %v3825 = vld [vmem:[%s2036 + $0xa8] sm:$0xf]
      %v3826 = vld [vmem:[%s2036 + $0xac] sm:$0xf]
      %v3827 = vld [vmem:[%s2036 + $0xb0] sm:$0xf]
      %v3828 = vld [vmem:[%s2036 + $0xb4] sm:$0xf]
      %v3829 = vld [vmem:[%s2036 + $0xb8] sm:$0xf]
      %v3830 = vld [vmem:[%s2036 + $0xbc] sm:$0xf]
      %v3855 = vunpack.c.l.b16 %v3759
      %v3856 = vunpack.c.h.b16 %v3759
      %v3857 = vunpack.c.l.b16 %v3760
      %v3858 = vunpack.c.l.b16 %v3761
      %v3859 = vunpack.c.h.b16 %v3761
      %v3860 = vunpack.c.l.b16 %v3762
      %v3861 = vunpack.c.l.b16 %v3763
      %v3862 = vunpack.c.h.b16 %v3763
      %v3863 = vunpack.c.l.b16 %v3764
      %v3864 = vunpack.c.l.b16 %v3765
      %v3865 = vunpack.c.h.b16 %v3765
      %v3866 = vunpack.c.l.b16 %v3766
      %v3867 = vunpack.c.l.b16 %v3767
      %v3868 = vunpack.c.h.b16 %v3767
      %v3869 = vunpack.c.l.b16 %v3768
      %v3870 = vunpack.c.l.b16 %v3769
      %v3871 = vunpack.c.h.b16 %v3769
      %v3872 = vunpack.c.l.b16 %v3770
      %v3873 = vunpack.c.l.b16 %v3771
      %v3874 = vunpack.c.h.b16 %v3771
      %v3875 = vunpack.c.l.b16 %v3772
      %v3876 = vunpack.c.l.b16 %v3773
      %v3877 = vunpack.c.h.b16 %v3773
      %v3878 = vunpack.c.l.b16 %v3774
      %v3879 = vunpack.c.l.b16 %v3775
      %v3880 = vunpack.c.h.b16 %v3775
      %v3881 = vunpack.c.l.b16 %v3776
      %v3882 = vunpack.c.l.b16 %v3777
      %v3883 = vunpack.c.h.b16 %v3777
      %v3884 = vunpack.c.l.b16 %v3778
      %v3885 = vunpack.c.l.b16 %v3779
      %v3886 = vunpack.c.h.b16 %v3779
      %v3887 = vunpack.c.l.b16 %v3780
      %v3888 = vunpack.c.l.b16 %v3781
      %v3889 = vunpack.c.h.b16 %v3781
      %v3890 = vunpack.c.l.b16 %v3782
      %v3891 = vpack.c.b16 %v3858, %v3855
      %v3892 = vpack.c.b16 %v3859, %v3856
      %v3893 = vpack.c.b16 %v3860, %v3857
      %v3894 = vpack.c.b16 %v3864, %v3861
      %v3895 = vpack.c.b16 %v3865, %v3862
      %v3896 = vpack.c.b16 %v3866, %v3863
      %v3897 = vpack.c.b16 %v3870, %v3867
      %v3898 = vpack.c.b16 %v3871, %v3868
      %v3899 = vpack.c.b16 %v3872, %v3869
      %v3900 = vpack.c.b16 %v3876, %v3873
      %v3901 = vpack.c.b16 %v3877, %v3874
      %v3902 = vpack.c.b16 %v3878, %v3875
      %v3903 = vpack.c.b16 %v3882, %v3879
      %v3904 = vpack.c.b16 %v3883, %v3880
      %v3905 = vpack.c.b16 %v3884, %v3881
      %v3906 = vpack.c.b16 %v3888, %v3885
      %v3907 = vpack.c.b16 %v3889, %v3886
      %v3908 = vpack.c.b16 %v3890, %v3887
      %v3975 = vunpack.c.l.b16 %v3783
      %v3976 = vunpack.c.l.b16 %v3784
      %v3977 = vunpack.c.l.b16 %v3785
      %v3978 = vunpack.c.l.b16 %v3786
      %v3979 = vunpack.c.l.b16 %v3787
      %v3980 = vunpack.c.l.b16 %v3788
      %v3981 = vunpack.c.l.b16 %v3789
      %v3982 = vunpack.c.l.b16 %v3790
      %v3983 = vunpack.c.l.b16 %v3791
      %v3984 = vunpack.c.l.b16 %v3792
      %v3985 = vunpack.c.l.b16 %v3793
      %v3986 = vunpack.c.l.b16 %v3794
      %v3987 = vunpack.c.l.b16 %v3795
      %v3988 = vunpack.c.l.b16 %v3796
      %v3989 = vunpack.c.l.b16 %v3797
      %v3990 = vunpack.c.l.b16 %v3798
      %v3991 = vunpack.c.l.b16 %v3799
      %v3992 = vunpack.c.l.b16 %v3800
      %v3993 = vunpack.c.l.b16 %v3801
      %v3994 = vunpack.c.l.b16 %v3802
      %v3995 = vunpack.c.l.b16 %v3803
      %v3996 = vunpack.c.l.b16 %v3804
      %v3997 = vunpack.c.l.b16 %v3805
      %v3998 = vunpack.c.l.b16 %v3806
      %v3999 = vunpack.c.l.b16 %v3807
      %v4000 = vunpack.c.l.b16 %v3808
      %v4001 = vunpack.c.l.b16 %v3809
      %v4002 = vunpack.c.l.b16 %v3810
      %v4003 = vunpack.c.l.b16 %v3811
      %v4004 = vunpack.c.l.b16 %v3812
      %v4005 = vunpack.c.l.b16 %v3813
      %v4006 = vunpack.c.l.b16 %v3814
      %v4007 = vunpack.c.l.b16 %v3815
      %v4008 = vunpack.c.l.b16 %v3816
      %v4009 = vunpack.c.l.b16 %v3817
      %v4010 = vunpack.c.l.b16 %v3818
      %v4011 = vunpack.c.l.b16 %v3819
      %v4012 = vunpack.c.l.b16 %v3820
      %v4013 = vunpack.c.l.b16 %v3821
      %v4014 = vunpack.c.l.b16 %v3822
      %v4015 = vunpack.c.l.b16 %v3823
      %v4016 = vunpack.c.l.b16 %v3824
      %v4017 = vunpack.c.l.b16 %v3825
      %v4018 = vunpack.c.l.b16 %v3826
      %v4019 = vunpack.c.l.b16 %v3827
      %v4020 = vunpack.c.l.b16 %v3828
      %v4021 = vunpack.c.l.b16 %v3829
      %v4022 = vunpack.c.l.b16 %v3830
      %v4023 = vpack.c.b16 %v3976, %v3975
      %v4024 = vpack.c.b16 %v3978, %v3977
      %v4025 = vpack.c.b16 %v3980, %v3979
      %v4026 = vpack.c.b16 %v3982, %v3981
      %v4027 = vpack.c.b16 %v3984, %v3983
      %v4028 = vpack.c.b16 %v3986, %v3985
      %v4029 = vpack.c.b16 %v3988, %v3987
      %v4030 = vpack.c.b16 %v3990, %v3989
      %v4031 = vpack.c.b16 %v3992, %v3991
      %v4032 = vpack.c.b16 %v3994, %v3993
      %v4033 = vpack.c.b16 %v3996, %v3995
      %v4034 = vpack.c.b16 %v3998, %v3997
      %v4035 = vpack.c.b16 %v4000, %v3999
      %v4036 = vpack.c.b16 %v4002, %v4001
      %v4037 = vpack.c.b16 %v4004, %v4003
      %v4038 = vpack.c.b16 %v4006, %v4005
      %v4039 = vpack.c.b16 %v4008, %v4007
      %v4040 = vpack.c.b16 %v4010, %v4009
      %v4041 = vpack.c.b16 %v4012, %v4011
      %v4042 = vpack.c.b16 %v4014, %v4013
      %v4043 = vpack.c.b16 %v4016, %v4015
      %v4044 = vpack.c.b16 %v4018, %v4017
      %v4045 = vpack.c.b16 %v4020, %v4019
      %v4046 = vpack.c.b16 %v4022, %v4021
      %4071 = vmatprep.subr.bf16.mxu0 0
      %4072 = vmatpush1.bf16.msra.mxu0 %v4030
      %4073 = vmatprep.subr.bf16.mxu0 0
      %4074 = vmatpush1.bf16.msra.mxu0 %v4029
      %4075 = vmatprep.subr.bf16.mxu0 0
      %4076 = vmatpush1.bf16.msra.mxu0 %v4028
      %4077 = vmatprep.subr.bf16.mxu0 0
      %4078 = vmatpush1.bf16.msra.mxu0 %v4027
      %4079 = vmatprep.subr.bf16.mxu0 0
      %4080 = vmatpush1.bf16.msra.mxu0 %v4026
      %4081 = vmatprep.subr.bf16.mxu0 0
      %4082 = vmatpush1.bf16.msra.mxu0 %v4025
      %4083 = vmatprep.subr.bf16.mxu0 0
      %4084 = vmatpush1.bf16.msra.mxu0 %v4024
      %4085 = vmatprep.subr.bf16.mxu0 0
      %4086 = vmatpush1.bf16.msra.mxu0 %v4023
      %4087 = vmatprep.subr.bf16.mxu0 0
      %4088 = vmatpush2.bf16.msra.mxu0 %v4038
      %4089 = vmatprep.subr.bf16.mxu0 0
      %4090 = vmatpush2.bf16.msra.mxu0 %v4037
      %4091 = vmatprep.subr.bf16.mxu0 0
      %4092 = vmatpush2.bf16.msra.mxu0 %v4036
      %4093 = vmatprep.subr.bf16.mxu0 0
      %4094 = vmatpush2.bf16.msra.mxu0 %v4035
      %4095 = vmatprep.subr.bf16.mxu0 0
      %4096 = vmatpush2.bf16.msra.mxu0 %v4034
      %4097 = vmatprep.subr.bf16.mxu0 0
      %4098 = vmatpush2.bf16.msra.mxu0 %v4033
      %4099 = vmatprep.subr.bf16.mxu0 0
      %4100 = vmatpush2.bf16.msra.mxu0 %v4032
      %4101 = vmatprep.subr.bf16.mxu0 0
      %4102 = vmatpush2.bf16.msra.mxu0 %v4031
      %4103 = vmatprep.mubr.bf16.mxu0 %v3892
      %4104 = vmatmul.mubr.bf16.gmra.mxu0 %v3891
      %v4105 = vpop.f32.mrf.mxu0
      %v4106 = vadd.f32 0.0, %v4105
      %v4107 = vpop.f32.mrf.mxu0
      %v4108 = vpop.f32.mrf.mxu0
      %v4109 = vadd.f32 0.0, %v4108
      %v4110 = vpop.f32.mrf.mxu0
      %4111 = vmatprep.mubr.bf16.mxu0 %v3895
      %4112 = vmatmul.mubr.bf16.gmra.mxu0 %v3894
      %v4113 = vpop.f32.mrf.mxu0
      %v4114 = vadd.f32 0.0, %v4113
      %v4115 = vpop.f32.mrf.mxu0
      %v4116 = vpop.f32.mrf.mxu0
      %v4117 = vadd.f32 0.0, %v4116
      %v4118 = vpop.f32.mrf.mxu0
      %4119 = vmatprep.mubr.bf16.mxu0 %v3898
      %4120 = vmatmul.mubr.bf16.gmra.mxu0 %v3897
      %v4121 = vpop.f32.mrf.mxu0
      %v4122 = vadd.f32 0.0, %v4121
      %v4123 = vpop.f32.mrf.mxu0
      %v4124 = vpop.f32.mrf.mxu0
      %v4125 = vadd.f32 0.0, %v4124
      %v4126 = vpop.f32.mrf.mxu0
      %4127 = vmatprep.mubr.bf16.mxu0 %v3901
      %4128 = vmatmul.mubr.bf16.gmra.mxu0 %v3900
      %v4129 = vpop.f32.mrf.mxu0
      %v4130 = vadd.f32 0.0, %v4129
      %v4131 = vpop.f32.mrf.mxu0
      %v4132 = vpop.f32.mrf.mxu0
      %v4133 = vadd.f32 0.0, %v4132
      %v4134 = vpop.f32.mrf.mxu0
      %4135 = vmatprep.mubr.bf16.mxu0 %v3904
      %4136 = vmatmul.mubr.bf16.gmra.mxu0 %v3903
      %v4137 = vpop.f32.mrf.mxu0
      %v4138 = vadd.f32 0.0, %v4137
      %v4139 = vpop.f32.mrf.mxu0
      %v4140 = vpop.f32.mrf.mxu0
      %v4141 = vadd.f32 0.0, %v4140
      %v4142 = vpop.f32.mrf.mxu0
      %4143 = vmatprep.mubr.bf16.mxu0 %v3907
      %4144 = vmatmul.mubr.bf16.gmra.mxu0 %v3906
      %v4145 = vpop.f32.mrf.mxu0
      %v4146 = vadd.f32 0.0, %v4145
      %v4147 = vpop.f32.mrf.mxu0
      %v4148 = vpop.f32.mrf.mxu0
      %v4149 = vadd.f32 0.0, %v4148
      %v4150 = vpop.f32.mrf.mxu0
      %4151 = vdwg.mxu0
      %4152 = vmatprep.subr.bf16.mxu0 0
      %4153 = vmatpush1.bf16.msra.mxu0 %v4046
      %4154 = vmatprep.subr.bf16.mxu0 0
      %4155 = vmatpush1.bf16.msra.mxu0 %v4045
      %4156 = vmatprep.subr.bf16.mxu0 0
      %4157 = vmatpush1.bf16.msra.mxu0 %v4044
      %4158 = vmatprep.subr.bf16.mxu0 0
      %4159 = vmatpush1.bf16.msra.mxu0 %v4043
      %4160 = vmatprep.subr.bf16.mxu0 0
      %4161 = vmatpush1.bf16.msra.mxu0 %v4042
      %4162 = vmatprep.subr.bf16.mxu0 0
      %4163 = vmatpush1.bf16.msra.mxu0 %v4041
      %4164 = vmatprep.subr.bf16.mxu0 0
      %4165 = vmatpush1.bf16.msra.mxu0 %v4040
      %4166 = vmatprep.subr.bf16.mxu0 0
      %4167 = vmatpush1.bf16.msra.mxu0 %v4039
      %4168 = vmatprep.subr.bf16.mxu0 0
      %4169 = vmatpush2.bf16.msra.mxu0 0
      %4170 = vmatprep.subr.bf16.mxu0 0
      %4171 = vmatpush2.bf16.msra.mxu0 0
      %4172 = vmatprep.subr.bf16.mxu0 0
      %4173 = vmatpush2.bf16.msra.mxu0 0
      %4174 = vmatprep.subr.bf16.mxu0 0
      %4175 = vmatpush2.bf16.msra.mxu0 0
      %4176 = vmatprep.subr.bf16.mxu0 0
      %4177 = vmatpush2.bf16.msra.mxu0 0
      %4178 = vmatprep.subr.bf16.mxu0 0
      %4179 = vmatpush2.bf16.msra.mxu0 0
      %4180 = vmatprep.subr.bf16.mxu0 0
      %4181 = vmatpush2.bf16.msra.mxu0 0
      %4182 = vmatprep.subr.bf16.mxu0 0
      %4183 = vmatpush2.bf16.msra.mxu0 0
      %4184 = vmatprep.mubr.bf16.mxu0 0
      %4185 = vmatmul.mubr.bf16.gmra.mxu0 %v3893
      %v4186 = vpop.f32.mrf.mxu0
      %v4187 = vadd.f32 %v4106, %v4186
      %v4188 = vpop.f32.mrf.mxu0
      %v4189 = vpop.f32.mrf.mxu0
      %v4190 = vadd.f32 %v4109, %v4189
      %v4191 = vpop.f32.mrf.mxu0
      %4192 = vmatprep.mubr.bf16.mxu0 0
      %4193 = vmatmul.mubr.bf16.gmra.mxu0 %v3896
      %v4194 = vpop.f32.mrf.mxu0
      %v4195 = vadd.f32 %v4114, %v4194
      %v4196 = vpop.f32.mrf.mxu0
      %v4197 = vpop.f32.mrf.mxu0
      %v4198 = vadd.f32 %v4117, %v4197
      %v4199 = vpop.f32.mrf.mxu0
      %4200 = vmatprep.mubr.bf16.mxu0 0
      %4201 = vmatmul.mubr.bf16.gmra.mxu0 %v3899
      %v4202 = vpop.f32.mrf.mxu0
      %v4203 = vadd.f32 %v4122, %v4202
      %v4204 = vpop.f32.mrf.mxu0
      %v4205 = vpop.f32.mrf.mxu0
      %v4206 = vadd.f32 %v4125, %v4205
      %v4207 = vpop.f32.mrf.mxu0
      %4208 = vmatprep.mubr.bf16.mxu0 0
      %4209 = vmatmul.mubr.bf16.gmra.mxu0 %v3902
      %v4210 = vpop.f32.mrf.mxu0
      %v4211 = vadd.f32 %v4130, %v4210
      %v4212 = vpop.f32.mrf.mxu0
      %v4213 = vpop.f32.mrf.mxu0
      %v4214 = vadd.f32 %v4133, %v4213
      %v4215 = vpop.f32.mrf.mxu0
      %4216 = vmatprep.mubr.bf16.mxu0 0
      %4217 = vmatmul.mubr.bf16.gmra.mxu0 %v3905
      %v4218 = vpop.f32.mrf.mxu0
      %v4219 = vadd.f32 %v4138, %v4218
      %v4220 = vpop.f32.mrf.mxu0
      %v4221 = vpop.f32.mrf.mxu0
      %v4222 = vadd.f32 %v4141, %v4221
      %v4223 = vpop.f32.mrf.mxu0
      %4224 = vmatprep.mubr.bf16.mxu0 0
      %4225 = vmatmul.mubr.bf16.gmra.mxu0 %v3908
      %v4226 = vpop.f32.mrf.mxu0
      %v4227 = vadd.f32 %v4146, %v4226
      %v4228 = vpop.f32.mrf.mxu0
      %v4229 = vpop.f32.mrf.mxu0
      %v4230 = vadd.f32 %v4149, %v4229
      %v4231 = vpop.f32.mrf.mxu0
      %4232 = vdwg.mxu0
      %v4233 = vadd.f32 %v3713, %v4187
      %v4234 = vadd.f32 %v3716, %v4190
      %v4235 = vadd.f32 %v3721, %v4195
      %v4236 = vadd.f32 %v3724, %v4198
      %v4237 = vadd.f32 %v3729, %v4203
      %v4238 = vadd.f32 %v3732, %v4206
      %v4239 = vadd.f32 %v3737, %v4211
      %v4240 = vadd.f32 %v3740, %v4214
      %v4241 = vadd.f32 %v3745, %v4219
      %v4242 = vadd.f32 %v3748, %v4222
      %v4243 = vadd.f32 %v3753, %v4227
      %v4244 = vadd.f32 %v3756, %v4230
      %v4245 = vld [vmem:[%s3] sm:$0x1]
      %v4247 = vlaneseq
      %v4248 = vshrl.u32 %v4247, 7
      %v4249 = vsub.s32 0, %v4248
      %v4250 = vrot.slane %v4245, %v4249
      %v4252 = vadd.f32 %v4233, %v4250
      %v4253 = vadd.f32 %v4234, %v4250
      %v4254 = vadd.f32 %v4235, %v4250
      %v4255 = vadd.f32 %v4236, %v4250
      %v4256 = vadd.f32 %v4237, %v4250
      %v4257 = vadd.f32 %v4238, %v4250
      %v4258 = vadd.f32 %v4239, %v4250
      %v4259 = vadd.f32 %v4240, %v4250
      %v4260 = vadd.f32 %v4241, %v4250
      %v4261 = vadd.f32 %v4242, %v4250
      %v4262 = vadd.f32 %v4243, %v4250
      %v4263 = vadd.f32 %v4244, %v4250
      %v4264 = vmax.f32 %v4252, 0.0
      %v4265 = vmax.f32 %v4253, 0.0
      %v4266 = vmax.f32 %v4254, 0.0
      %v4267 = vmax.f32 %v4255, 0.0
      %v4268 = vmax.f32 %v4256, 0.0
      %v4269 = vmax.f32 %v4257, 0.0
      %v4270 = vmax.f32 %v4258, 0.0
      %v4271 = vmax.f32 %v4259, 0.0
      %v4272 = vmax.f32 %v4260, 0.0
      %v4273 = vmax.f32 %v4261, 0.0
      %v4274 = vmax.f32 %v4262, 0.0
      %v4275 = vmax.f32 %v4263, 0.0
      %s4276 = sadd.s32 %s1124, 3
      %v4277 = vstv %s4276
      %v4278 = vadd.s32 %v4277, 1
      %v4279 = vadd.s32 %v4277, 2
      %v4280 = vadd.s32 %v4277, 3
      %vm4281 = vcmp.ge.s32.totalorder %v4277, 0
      %vm4282 = vcmp.ge.s32.totalorder %v4278, 0
      %vm4283 = vcmp.ge.s32.totalorder %v4279, 0
      %vm4284 = vcmp.ge.s32.totalorder %v4280, 0
      %vm4285 = vcmp.lt.s32.totalorder %v4277, 16
      %vm4286 = vcmp.lt.s32.totalorder %v4278, 16
      %vm4287 = vcmp.lt.s32.totalorder %v4279, 16
      %vm4288 = vcmp.lt.s32.totalorder %v4280, 16
      %vm4289 = vmand %vm4281, %vm4285
      %vm4290 = vmand %vm4282, %vm4286
      %vm4291 = vmand %vm4283, %vm4287
      %vm4292 = vmand %vm4284, %vm4288
      %v4293 = vsel %vm4289, 1, 0
      %v4294 = vsel %vm4290, 1, 0
      %v4295 = vsel %vm4291, 1, 0
      %v4296 = vsel %vm4292, 1, 0
      %vm4297 = vcmp.eq.s32.totalorder %v4293, 1
      %vm4298 = vcmp.eq.s32.totalorder %v4294, 1
      %vm4299 = vcmp.eq.s32.totalorder %v4295, 1
      %vm4300 = vcmp.eq.s32.totalorder %v4296, 1
      %vm4301 = vmand %vm4297, %vm2557
      %vm4302 = vmand %vm4297, %vm2558
      %vm4303 = vmand %vm4297, %vm2559
      %vm4304 = vmand %vm4298, %vm2557
      %vm4305 = vmand %vm4298, %vm2558
      %vm4306 = vmand %vm4298, %vm2559
      %vm4307 = vmand %vm4299, %vm2557
      %vm4308 = vmand %vm4299, %vm2558
      %vm4309 = vmand %vm4299, %vm2559
      %vm4310 = vmand %vm4300, %vm2557
      %vm4311 = vmand %vm4300, %vm2558
      %vm4312 = vmand %vm4300, %vm2559
      %v4313 = vsel %vm4301, 1, 0
      %v4314 = vsel %vm4302, 1, 0
      %v4315 = vsel %vm4303, 1, 0
      %v4316 = vsel %vm4304, 1, 0
      %v4317 = vsel %vm4305, 1, 0
      %v4318 = vsel %vm4306, 1, 0
      %v4319 = vsel %vm4307, 1, 0
      %v4320 = vsel %vm4308, 1, 0
      %v4321 = vsel %vm4309, 1, 0
      %v4322 = vsel %vm4310, 1, 0
      %v4323 = vsel %vm4311, 1, 0
      %v4324 = vsel %vm4312, 1, 0
      %vm4325 = vcmp.eq.s32.totalorder %v4313, 1
      %vm4326 = vcmp.eq.s32.totalorder %v4314, 1
      %vm4327 = vcmp.eq.s32.totalorder %v4315, 1
      %vm4328 = vcmp.eq.s32.totalorder %v4316, 1
      %vm4329 = vcmp.eq.s32.totalorder %v4317, 1
      %vm4330 = vcmp.eq.s32.totalorder %v4318, 1
      %vm4331 = vcmp.eq.s32.totalorder %v4319, 1
      %vm4332 = vcmp.eq.s32.totalorder %v4320, 1
      %vm4333 = vcmp.eq.s32.totalorder %v4321, 1
      %vm4334 = vcmp.eq.s32.totalorder %v4322, 1
      %vm4335 = vcmp.eq.s32.totalorder %v4323, 1
      %vm4336 = vcmp.eq.s32.totalorder %v4324, 1
      %v4337 = vsel %vm4325, %v4264, 0.0
      %v4338 = vsel %vm4326, %v4265, 0.0
      %v4339 = vsel %vm4327, %v4266, 0.0
      %v4340 = vsel %vm4328, %v4267, 0.0
      %v4341 = vsel %vm4329, %v4268, 0.0
      %v4342 = vsel %vm4330, %v4269, 0.0
      %v4343 = vsel %vm4331, %v4270, 0.0
      %v4344 = vsel %vm4332, %v4271, 0.0
      %v4345 = vsel %vm4333, %v4272, 0.0
      %v4346 = vsel %vm4334, %v4273, 0.0
      %v4347 = vsel %vm4335, %v4274, 0.0
      %v4348 = vsel %vm4336, %v4275, 0.0
      %v4349 = vpack.c.bf16 %v4338, %v4337
      %v4350 = vpack.c.bf16 %v4340, %v4339
      %v4351 = vpack.c.bf16 %v4342, %v4341
      %v4352 = vpack.c.bf16 %v4344, %v4343
      %v4353 = vpack.c.bf16 %v4346, %v4345
      %v4354 = vpack.c.bf16 %v4348, %v4347
      %v4361 = vunpack.c.l.b16 %v4349
      %v4362 = vunpack.c.h.b16 %v4349
      %v4363 = vunpack.c.l.b16 %v4350
      %v4364 = vunpack.c.h.b16 %v4350
      %v4365 = vunpack.c.l.b16 %v4351
      %v4366 = vunpack.c.h.b16 %v4351
      %v4367 = vunpack.c.l.b16 %v4352
      %v4368 = vunpack.c.h.b16 %v4352
      %v4369 = vunpack.c.l.b16 %v4353
      %v4370 = vunpack.c.h.b16 %v4353
      %v4371 = vunpack.c.l.b16 %v4354
      %v4372 = vunpack.c.h.b16 %v4354
      %v4373 = vpack.c.b16 %v4361, %v4361
      %v4374 = vpack.c.b16 %v4362, %v4362
      %v4375 = vpack.c.b16 %v4363, %v4363
      %v4376 = vpack.c.b16 %v4364, %v4364
      %v4377 = vpack.c.b16 %v4365, %v4365
      %v4378 = vpack.c.b16 %v4366, %v4366
      %v4379 = vpack.c.b16 %v4367, %v4367
      %v4380 = vpack.c.b16 %v4368, %v4368
      %v4381 = vpack.c.b16 %v4369, %v4369
      %v4382 = vpack.c.b16 %v4370, %v4370
      %v4383 = vpack.c.b16 %v4371, %v4371
      %v4384 = vpack.c.b16 %v4372, %v4372
      %4397 = vst [vmem:[#allocation3 + $0x90] sm:$0xf] %v4373
      %4398 = vst [vmem:[#allocation3 + $0x9c] sm:$0xf] %v4374
      %4399 = vst [vmem:[#allocation3 + $0xa8] sm:$0xf] %v4375
      %4400 = vst [vmem:[#allocation3 + $0xb4] sm:$0xf] %v4376
      %4401 = vst [vmem:[#allocation3 + $0xc0] sm:$0xf] %v4377
      %4402 = vst [vmem:[#allocation3 + $0xcc] sm:$0xf] %v4378
      %4403 = vst [vmem:[#allocation3 + $0xd8] sm:$0xf] %v4379
      %4404 = vst [vmem:[#allocation3 + $0xe4] sm:$0xf] %v4380
      %4405 = vst [vmem:[#allocation3 + $0xf0] sm:$0xf] %v4381
      %4406 = vst [vmem:[#allocation3 + $0xfc] sm:$0xf] %v4382
      %4407 = vst [vmem:[#allocation3 + $0x108] sm:$0xf] %v4383
      %4408 = vst [vmem:[#allocation3 + $0x114] sm:$0xf] %v4384
      %v4421 = vrot.slane %v4337, 1
      %v4422 = vrot.slane %v4338, 1
      %v4423 = vsel %vm435, %v4421, %v4422
      %v4424 = vrot.slane %v4339, 1
      %v4425 = vsel %vm435, %v4422, %v4424
      %v4426 = vrot.slane %v4340, 1
      %v4427 = vsel %vm435, %v4424, %v4426
      %v4428 = vrot.slane %v4341, 1
      %v4429 = vsel %vm435, %v4426, %v4428
      %v4430 = vrot.slane %v4342, 1
      %v4431 = vsel %vm435, %v4428, %v4430
      %v4432 = vrot.slane %v4343, 1
      %v4433 = vsel %vm435, %v4430, %v4432
      %v4434 = vrot.slane %v4344, 1
      %v4435 = vsel %vm435, %v4432, %v4434
      %v4436 = vrot.slane %v4345, 1
      %v4437 = vsel %vm435, %v4434, %v4436
      %v4438 = vrot.slane %v4346, 1
      %v4439 = vsel %vm435, %v4436, %v4438
      %v4440 = vrot.slane %v4347, 1
      %v4441 = vsel %vm435, %v4438, %v4440
      %v4442 = vrot.slane %v4348, 1
      %v4443 = vsel %vm435, %v4440, %v4442
      %v4457 = vsel %vm435, %v4442, %v4421
      %v4458 = vpack.c.bf16 %v4425, %v4423
      %v4459 = vpack.c.bf16 %v4429, %v4427
      %v4460 = vpack.c.bf16 %v4433, %v4431
      %v4461 = vpack.c.bf16 %v4437, %v4435
      %v4462 = vpack.c.bf16 %v4441, %v4439
      %v4463 = vpack.c.bf16 %v4457, %v4443
      %v4470 = vunpack.c.l.b16 %v4458
      %v4471 = vunpack.c.h.b16 %v4458
      %v4472 = vunpack.c.l.b16 %v4459
      %v4473 = vunpack.c.h.b16 %v4459
      %v4474 = vunpack.c.l.b16 %v4460
      %v4475 = vunpack.c.h.b16 %v4460
      %v4476 = vunpack.c.l.b16 %v4461
      %v4477 = vunpack.c.h.b16 %v4461
      %v4478 = vunpack.c.l.b16 %v4462
      %v4479 = vunpack.c.h.b16 %v4462
      %v4480 = vunpack.c.l.b16 %v4463
      %v4481 = vunpack.c.h.b16 %v4463
      %v4482 = vpack.c.b16 %v4470, %v4470
      %v4483 = vpack.c.b16 %v4471, %v4471
      %v4484 = vpack.c.b16 %v4472, %v4472
      %v4485 = vpack.c.b16 %v4473, %v4473
      %v4486 = vpack.c.b16 %v4474, %v4474
      %v4487 = vpack.c.b16 %v4475, %v4475
      %v4488 = vpack.c.b16 %v4476, %v4476
      %v4489 = vpack.c.b16 %v4477, %v4477
      %v4490 = vpack.c.b16 %v4478, %v4478
      %v4491 = vpack.c.b16 %v4479, %v4479
      %v4492 = vpack.c.b16 %v4480, %v4480
      %v4493 = vpack.c.b16 %v4481, %v4481
      %4506 = vst [vmem:[#allocation3 + $0x94] sm:$0xf] %v4482
      %4507 = vst [vmem:[#allocation3 + $0xa0] sm:$0xf] %v4483
      %4508 = vst [vmem:[#allocation3 + $0xac] sm:$0xf] %v4484
      %4509 = vst [vmem:[#allocation3 + $0xb8] sm:$0xf] %v4485
      %4510 = vst [vmem:[#allocation3 + $0xc4] sm:$0xf] %v4486
      %4511 = vst [vmem:[#allocation3 + $0xd0] sm:$0xf] %v4487
      %4512 = vst [vmem:[#allocation3 + $0xdc] sm:$0xf] %v4488
      %4513 = vst [vmem:[#allocation3 + $0xe8] sm:$0xf] %v4489
      %4514 = vst [vmem:[#allocation3 + $0xf4] sm:$0xf] %v4490
      %4515 = vst [vmem:[#allocation3 + $0x100] sm:$0xf] %v4491
      %4516 = vst [vmem:[#allocation3 + $0x10c] sm:$0xf] %v4492
      %4517 = vst [vmem:[#allocation3 + $0x118] sm:$0xf] %v4493
      %v4518 = vrot.slane %v4337, 2
      %v4519 = vrot.slane %v4338, 2
      %v4520 = vsel %vm558, %v4518, %v4519
      %v4521 = vrot.slane %v4339, 2
      %v4522 = vsel %vm558, %v4519, %v4521
      %v4523 = vrot.slane %v4340, 2
      %v4524 = vsel %vm558, %v4521, %v4523
      %v4525 = vrot.slane %v4341, 2
      %v4526 = vsel %vm558, %v4523, %v4525
      %v4527 = vrot.slane %v4342, 2
      %v4528 = vsel %vm558, %v4525, %v4527
      %v4529 = vrot.slane %v4343, 2
      %v4530 = vsel %vm558, %v4527, %v4529
      %v4531 = vrot.slane %v4344, 2
      %v4532 = vsel %vm558, %v4529, %v4531
      %v4533 = vrot.slane %v4345, 2
      %v4534 = vsel %vm558, %v4531, %v4533
      %v4535 = vrot.slane %v4346, 2
      %v4536 = vsel %vm558, %v4533, %v4535
      %v4537 = vrot.slane %v4347, 2
      %v4538 = vsel %vm558, %v4535, %v4537
      %v4539 = vrot.slane %v4348, 2
      %v4540 = vsel %vm558, %v4537, %v4539
      %v4554 = vsel %vm558, %v4539, %v4518
      %v4555 = vpack.c.bf16 %v4522, %v4520
      %v4556 = vpack.c.bf16 %v4526, %v4524
      %v4557 = vpack.c.bf16 %v4530, %v4528
      %v4558 = vpack.c.bf16 %v4534, %v4532
      %v4559 = vpack.c.bf16 %v4538, %v4536
      %v4560 = vpack.c.bf16 %v4554, %v4540
      %v4567 = vunpack.c.l.b16 %v4555
      %v4568 = vunpack.c.h.b16 %v4555
      %v4569 = vunpack.c.l.b16 %v4556
      %v4570 = vunpack.c.h.b16 %v4556
      %v4571 = vunpack.c.l.b16 %v4557
      %v4572 = vunpack.c.h.b16 %v4557
      %v4573 = vunpack.c.l.b16 %v4558
      %v4574 = vunpack.c.h.b16 %v4558
      %v4575 = vunpack.c.l.b16 %v4559
      %v4576 = vunpack.c.h.b16 %v4559
      %v4577 = vunpack.c.l.b16 %v4560
      %v4578 = vunpack.c.h.b16 %v4560
      %v4579 = vpack.c.b16 %v4567, %v4567
      %v4580 = vpack.c.b16 %v4568, %v4568
      %v4581 = vpack.c.b16 %v4569, %v4569
      %v4582 = vpack.c.b16 %v4570, %v4570
      %v4583 = vpack.c.b16 %v4571, %v4571
      %v4584 = vpack.c.b16 %v4572, %v4572
      %v4585 = vpack.c.b16 %v4573, %v4573
      %v4586 = vpack.c.b16 %v4574, %v4574
      %v4587 = vpack.c.b16 %v4575, %v4575
      %v4588 = vpack.c.b16 %v4576, %v4576
      %v4589 = vpack.c.b16 %v4577, %v4577
      %v4590 = vpack.c.b16 %v4578, %v4578
      %4603 = vst [vmem:[#allocation3 + $0x98] sm:$0xf] %v4579
      %4604 = vst [vmem:[#allocation3 + $0xa4] sm:$0xf] %v4580
      %4605 = vst [vmem:[#allocation3 + $0xb0] sm:$0xf] %v4581
      %4606 = vst [vmem:[#allocation3 + $0xbc] sm:$0xf] %v4582
      %4607 = vst [vmem:[#allocation3 + $0xc8] sm:$0xf] %v4583
      %4608 = vst [vmem:[#allocation3 + $0xd4] sm:$0xf] %v4584
      %4609 = vst [vmem:[#allocation3 + $0xe0] sm:$0xf] %v4585
      %4610 = vst [vmem:[#allocation3 + $0xec] sm:$0xf] %v4586
      %4611 = vst [vmem:[#allocation3 + $0xf8] sm:$0xf] %v4587
      %4612 = vst [vmem:[#allocation3 + $0x104] sm:$0xf] %v4588
      %4613 = vst [vmem:[#allocation3 + $0x110] sm:$0xf] %v4589
      %4614 = vst [vmem:[#allocation3 + $0x11c] sm:$0xf] %v4590
      %v4615 = vld [vmem:[#allocation2 + $0x120] sm:$0xff]
      %v4616 = vld [vmem:[#allocation2 + $0x128] sm:$0xf]
      %v4617 = vld [vmem:[#allocation2 + $0x12c] sm:$0xff]
      %v4618 = vld [vmem:[#allocation2 + $0x134] sm:$0xf]
      %v4619 = vld [vmem:[#allocation2 + $0x138] sm:$0xff]
      %v4620 = vld [vmem:[#allocation2 + $0x140] sm:$0xf]
      %v4621 = vld [vmem:[#allocation2 + $0x144] sm:$0xff]
      %v4622 = vld [vmem:[#allocation2 + $0x14c] sm:$0xf]
      %v4623 = vld [vmem:[#allocation2 + $0x150] sm:$0xff]
      %v4624 = vld [vmem:[#allocation2 + $0x158] sm:$0xf]
      %v4625 = vld [vmem:[#allocation2 + $0x15c] sm:$0xff]
      %v4626 = vld [vmem:[#allocation2 + $0x164] sm:$0xf]
      %v4627 = vld [vmem:[%s2] sm:$0xf]
      %v4628 = vld [vmem:[%s2 + $0x4] sm:$0xf]
      %v4629 = vld [vmem:[%s2 + $0x8] sm:$0xf]
      %v4630 = vld [vmem:[%s2 + $0xc] sm:$0xf]
      %v4631 = vld [vmem:[%s2 + $0x10] sm:$0xf]
      %v4632 = vld [vmem:[%s2 + $0x14] sm:$0xf]
      %v4633 = vld [vmem:[%s2 + $0x18] sm:$0xf]
      %v4634 = vld [vmem:[%s2 + $0x1c] sm:$0xf]
      %v4635 = vld [vmem:[%s2 + $0x20] sm:$0xf]
      %v4636 = vld [vmem:[%s2 + $0x24] sm:$0xf]
      %v4637 = vld [vmem:[%s2 + $0x28] sm:$0xf]
      %v4638 = vld [vmem:[%s2 + $0x2c] sm:$0xf]
      %v4639 = vld [vmem:[%s2 + $0x30] sm:$0xf]
      %v4640 = vld [vmem:[%s2 + $0x34] sm:$0xf]
      %v4641 = vld [vmem:[%s2 + $0x38] sm:$0xf]
      %v4642 = vld [vmem:[%s2 + $0x3c] sm:$0xf]
      %v4643 = vld [vmem:[%s2 + $0x40] sm:$0xf]
      %v4644 = vld [vmem:[%s2 + $0x44] sm:$0xf]
      %v4645 = vld [vmem:[%s2 + $0x48] sm:$0xf]
      %v4646 = vld [vmem:[%s2 + $0x4c] sm:$0xf]
      %v4647 = vld [vmem:[%s2 + $0x50] sm:$0xf]
      %v4648 = vld [vmem:[%s2 + $0x54] sm:$0xf]
      %v4649 = vld [vmem:[%s2 + $0x58] sm:$0xf]
      %v4650 = vld [vmem:[%s2 + $0x5c] sm:$0xf]
      %v4651 = vld [vmem:[%s2 + $0x60] sm:$0xf]
      %v4652 = vld [vmem:[%s2 + $0x64] sm:$0xf]
      %v4653 = vld [vmem:[%s2 + $0x68] sm:$0xf]
      %v4654 = vld [vmem:[%s2 + $0x6c] sm:$0xf]
      %v4655 = vld [vmem:[%s2 + $0x70] sm:$0xf]
      %v4656 = vld [vmem:[%s2 + $0x74] sm:$0xf]
      %v4657 = vld [vmem:[%s2 + $0x78] sm:$0xf]
      %v4658 = vld [vmem:[%s2 + $0x7c] sm:$0xf]
      %v4659 = vld [vmem:[%s2 + $0x80] sm:$0xf]
      %v4660 = vld [vmem:[%s2 + $0x84] sm:$0xf]
      %v4661 = vld [vmem:[%s2 + $0x88] sm:$0xf]
      %v4662 = vld [vmem:[%s2 + $0x8c] sm:$0xf]
      %v4663 = vld [vmem:[%s2 + $0x90] sm:$0xf]
      %v4664 = vld [vmem:[%s2 + $0x94] sm:$0xf]
      %v4665 = vld [vmem:[%s2 + $0x98] sm:$0xf]
      %v4666 = vld [vmem:[%s2 + $0x9c] sm:$0xf]
      %v4667 = vld [vmem:[%s2 + $0xa0] sm:$0xf]
      %v4668 = vld [vmem:[%s2 + $0xa4] sm:$0xf]
      %v4669 = vld [vmem:[%s2 + $0xa8] sm:$0xf]
      %v4670 = vld [vmem:[%s2 + $0xac] sm:$0xf]
      %v4671 = vld [vmem:[%s2 + $0xb0] sm:$0xf]
      %v4672 = vld [vmem:[%s2 + $0xb4] sm:$0xf]
      %v4673 = vld [vmem:[%s2 + $0xb8] sm:$0xf]
      %v4674 = vld [vmem:[%s2 + $0xbc] sm:$0xf]
      %v4675 = vld [vmem:[#allocation2 + $0x168] sm:$0xff]
      %v4676 = vld [vmem:[#allocation2 + $0x170] sm:$0xf]
      %v4677 = vld [vmem:[#allocation2 + $0x174] sm:$0xff]
      %v4678 = vld [vmem:[#allocation2 + $0x17c] sm:$0xf]
      %v4679 = vld [vmem:[#allocation2 + $0x180] sm:$0xff]
      %v4680 = vld [vmem:[#allocation2 + $0x188] sm:$0xf]
      %v4681 = vld [vmem:[%s1204] sm:$0xf]
      %v4682 = vld [vmem:[%s1204 + $0x4] sm:$0xf]
      %v4683 = vld [vmem:[%s1204 + $0x8] sm:$0xf]
      %v4684 = vld [vmem:[%s1204 + $0xc] sm:$0xf]
      %v4685 = vld [vmem:[%s1204 + $0x10] sm:$0xf]
      %v4686 = vld [vmem:[%s1204 + $0x14] sm:$0xf]
      %v4687 = vld [vmem:[%s1204 + $0x18] sm:$0xf]
      %v4688 = vld [vmem:[%s1204 + $0x1c] sm:$0xf]
      %v4689 = vld [vmem:[%s1204 + $0x20] sm:$0xf]
      %v4690 = vld [vmem:[%s1204 + $0x24] sm:$0xf]
      %v4691 = vld [vmem:[%s1204 + $0x28] sm:$0xf]
      %v4692 = vld [vmem:[%s1204 + $0x2c] sm:$0xf]
      %v4693 = vld [vmem:[%s1204 + $0x30] sm:$0xf]
      %v4694 = vld [vmem:[%s1204 + $0x34] sm:$0xf]
      %v4695 = vld [vmem:[%s1204 + $0x38] sm:$0xf]
      %v4696 = vld [vmem:[%s1204 + $0x3c] sm:$0xf]
      %v4697 = vld [vmem:[%s1204 + $0x40] sm:$0xf]
      %v4698 = vld [vmem:[%s1204 + $0x44] sm:$0xf]
      %v4699 = vld [vmem:[%s1204 + $0x48] sm:$0xf]
      %v4700 = vld [vmem:[%s1204 + $0x4c] sm:$0xf]
      %v4701 = vld [vmem:[%s1204 + $0x50] sm:$0xf]
      %v4702 = vld [vmem:[%s1204 + $0x54] sm:$0xf]
      %v4703 = vld [vmem:[%s1204 + $0x58] sm:$0xf]
      %v4704 = vld [vmem:[%s1204 + $0x5c] sm:$0xf]
      %v4705 = vld [vmem:[%s1204 + $0x60] sm:$0xf]
      %v4706 = vld [vmem:[%s1204 + $0x64] sm:$0xf]
      %v4707 = vld [vmem:[%s1204 + $0x68] sm:$0xf]
      %v4708 = vld [vmem:[%s1204 + $0x6c] sm:$0xf]
      %v4709 = vld [vmem:[%s1204 + $0x70] sm:$0xf]
      %v4710 = vld [vmem:[%s1204 + $0x74] sm:$0xf]
      %v4711 = vld [vmem:[%s1204 + $0x78] sm:$0xf]
      %v4712 = vld [vmem:[%s1204 + $0x7c] sm:$0xf]
      %v4713 = vld [vmem:[%s1204 + $0x80] sm:$0xf]
      %v4714 = vld [vmem:[%s1204 + $0x84] sm:$0xf]
      %v4715 = vld [vmem:[%s1204 + $0x88] sm:$0xf]
      %v4716 = vld [vmem:[%s1204 + $0x8c] sm:$0xf]
      %v4717 = vld [vmem:[%s1204 + $0x90] sm:$0xf]
      %v4718 = vld [vmem:[%s1204 + $0x94] sm:$0xf]
      %v4719 = vld [vmem:[%s1204 + $0x98] sm:$0xf]
      %v4720 = vld [vmem:[%s1204 + $0x9c] sm:$0xf]
      %v4721 = vld [vmem:[%s1204 + $0xa0] sm:$0xf]
      %v4722 = vld [vmem:[%s1204 + $0xa4] sm:$0xf]
      %v4723 = vld [vmem:[%s1204 + $0xa8] sm:$0xf]
      %v4724 = vld [vmem:[%s1204 + $0xac] sm:$0xf]
      %v4725 = vld [vmem:[%s1204 + $0xb0] sm:$0xf]
      %v4726 = vld [vmem:[%s1204 + $0xb4] sm:$0xf]
      %v4727 = vld [vmem:[%s1204 + $0xb8] sm:$0xf]
      %v4728 = vld [vmem:[%s1204 + $0xbc] sm:$0xf]
      %v4741 = vunpack.c.l.b16 %v4621
      %v4742 = vunpack.c.h.b16 %v4621
      %v4743 = vunpack.c.l.b16 %v4622
      %v4744 = vunpack.c.l.b16 %v4623
      %v4745 = vunpack.c.h.b16 %v4623
      %v4746 = vunpack.c.l.b16 %v4624
      %v4747 = vunpack.c.l.b16 %v4625
      %v4748 = vunpack.c.h.b16 %v4625
      %v4749 = vunpack.c.l.b16 %v4626
      %v4750 = vunpack.c.l.b16 %v4675
      %v4751 = vunpack.c.h.b16 %v4675
      %v4752 = vunpack.c.l.b16 %v4676
      %v4753 = vunpack.c.l.b16 %v4677
      %v4754 = vunpack.c.h.b16 %v4677
      %v4755 = vunpack.c.l.b16 %v4678
      %v4756 = vunpack.c.l.b16 %v4679
      %v4757 = vunpack.c.h.b16 %v4679
      %v4758 = vunpack.c.l.b16 %v4680
      %v4759 = vpack.c.b16 %v4744, %v4741
      %v4760 = vpack.c.b16 %v4745, %v4742
      %v4761 = vpack.c.b16 %v4746, %v4743
      %v4762 = vpack.c.b16 %v4750, %v4747
      %v4763 = vpack.c.b16 %v4751, %v4748
      %v4764 = vpack.c.b16 %v4752, %v4749
      %v4765 = vpack.c.b16 %v4756, %v4753
      %v4766 = vpack.c.b16 %v4757, %v4754
      %v4767 = vpack.c.b16 %v4758, %v4755
      %v4825 = vunpack.c.l.b16 %v4681
      %v4826 = vunpack.c.l.b16 %v4682
      %v4827 = vunpack.c.l.b16 %v4683
      %v4828 = vunpack.c.l.b16 %v4684
      %v4829 = vunpack.c.l.b16 %v4685
      %v4830 = vunpack.c.l.b16 %v4686
      %v4831 = vunpack.c.l.b16 %v4687
      %v4832 = vunpack.c.l.b16 %v4688
      %v4833 = vunpack.c.l.b16 %v4689
      %v4834 = vunpack.c.l.b16 %v4690
      %v4835 = vunpack.c.l.b16 %v4691
      %v4836 = vunpack.c.l.b16 %v4692
      %v4837 = vunpack.c.l.b16 %v4693
      %v4838 = vunpack.c.l.b16 %v4694
      %v4839 = vunpack.c.l.b16 %v4695
      %v4840 = vunpack.c.l.b16 %v4696
      %v4841 = vunpack.c.l.b16 %v4697
      %v4842 = vunpack.c.l.b16 %v4698
      %v4843 = vunpack.c.l.b16 %v4699
      %v4844 = vunpack.c.l.b16 %v4700
      %v4845 = vunpack.c.l.b16 %v4701
      %v4846 = vunpack.c.l.b16 %v4702
      %v4847 = vunpack.c.l.b16 %v4703
      %v4848 = vunpack.c.l.b16 %v4704
      %v4849 = vunpack.c.l.b16 %v4705
      %v4850 = vunpack.c.l.b16 %v4706
      %v4851 = vunpack.c.l.b16 %v4707
      %v4852 = vunpack.c.l.b16 %v4708
      %v4853 = vunpack.c.l.b16 %v4709
      %v4854 = vunpack.c.l.b16 %v4710
      %v4855 = vunpack.c.l.b16 %v4711
      %v4856 = vunpack.c.l.b16 %v4712
      %v4857 = vunpack.c.l.b16 %v4713
      %v4858 = vunpack.c.l.b16 %v4714
      %v4859 = vunpack.c.l.b16 %v4715
      %v4860 = vunpack.c.l.b16 %v4716
      %v4861 = vunpack.c.l.b16 %v4717
      %v4862 = vunpack.c.l.b16 %v4718
      %v4863 = vunpack.c.l.b16 %v4719
      %v4864 = vunpack.c.l.b16 %v4720
      %v4865 = vunpack.c.l.b16 %v4721
      %v4866 = vunpack.c.l.b16 %v4722
      %v4867 = vunpack.c.l.b16 %v4723
      %v4868 = vunpack.c.l.b16 %v4724
      %v4869 = vunpack.c.l.b16 %v4725
      %v4870 = vunpack.c.l.b16 %v4726
      %v4871 = vunpack.c.l.b16 %v4727
      %v4872 = vunpack.c.l.b16 %v4728
      %v4873 = vpack.c.b16 %v4826, %v4825
      %v4874 = vpack.c.b16 %v4828, %v4827
      %v4875 = vpack.c.b16 %v4830, %v4829
      %v4876 = vpack.c.b16 %v4832, %v4831
      %v4877 = vpack.c.b16 %v4834, %v4833
      %v4878 = vpack.c.b16 %v4836, %v4835
      %v4879 = vpack.c.b16 %v4838, %v4837
      %v4880 = vpack.c.b16 %v4840, %v4839
      %v4881 = vpack.c.b16 %v4842, %v4841
      %v4882 = vpack.c.b16 %v4844, %v4843
      %v4883 = vpack.c.b16 %v4846, %v4845
      %v4884 = vpack.c.b16 %v4848, %v4847
      %v4885 = vpack.c.b16 %v4850, %v4849
      %v4886 = vpack.c.b16 %v4852, %v4851
      %v4887 = vpack.c.b16 %v4854, %v4853
      %v4888 = vpack.c.b16 %v4856, %v4855
      %v4889 = vpack.c.b16 %v4858, %v4857
      %v4890 = vpack.c.b16 %v4860, %v4859
      %v4891 = vpack.c.b16 %v4862, %v4861
      %v4892 = vpack.c.b16 %v4864, %v4863
      %v4893 = vpack.c.b16 %v4866, %v4865
      %v4894 = vpack.c.b16 %v4868, %v4867
      %v4895 = vpack.c.b16 %v4870, %v4869
      %v4896 = vpack.c.b16 %v4872, %v4871
      %4921 = vmatprep.subr.bf16.mxu0 0
      %4922 = vmatpush1.bf16.msra.mxu0 %v4880
      %4923 = vmatprep.subr.bf16.mxu0 0
      %4924 = vmatpush1.bf16.msra.mxu0 %v4879
      %4925 = vmatprep.subr.bf16.mxu0 0
      %4926 = vmatpush1.bf16.msra.mxu0 %v4878
      %4927 = vmatprep.subr.bf16.mxu0 0
      %4928 = vmatpush1.bf16.msra.mxu0 %v4877
      %4929 = vmatprep.subr.bf16.mxu0 0
      %4930 = vmatpush1.bf16.msra.mxu0 %v4876
      %4931 = vmatprep.subr.bf16.mxu0 0
      %4932 = vmatpush1.bf16.msra.mxu0 %v4875
      %4933 = vmatprep.subr.bf16.mxu0 0
      %4934 = vmatpush1.bf16.msra.mxu0 %v4874
      %4935 = vmatprep.subr.bf16.mxu0 0
      %4936 = vmatpush1.bf16.msra.mxu0 %v4873
      %4937 = vmatprep.subr.bf16.mxu0 0
      %4938 = vmatpush2.bf16.msra.mxu0 %v4888
      %4939 = vmatprep.subr.bf16.mxu0 0
      %4940 = vmatpush2.bf16.msra.mxu0 %v4887
      %4941 = vmatprep.subr.bf16.mxu0 0
      %4942 = vmatpush2.bf16.msra.mxu0 %v4886
      %4943 = vmatprep.subr.bf16.mxu0 0
      %4944 = vmatpush2.bf16.msra.mxu0 %v4885
      %4945 = vmatprep.subr.bf16.mxu0 0
      %4946 = vmatpush2.bf16.msra.mxu0 %v4884
      %4947 = vmatprep.subr.bf16.mxu0 0
      %4948 = vmatpush2.bf16.msra.mxu0 %v4883
      %4949 = vmatprep.subr.bf16.mxu0 0
      %4950 = vmatpush2.bf16.msra.mxu0 %v4882
      %4951 = vmatprep.subr.bf16.mxu0 0
      %4952 = vmatpush2.bf16.msra.mxu0 %v4881
      %4953 = vmatprep.mubr.bf16.mxu0 %v4760
      %4954 = vmatmul.mubr.bf16.gmra.mxu0 %v4759
      %v4955 = vpop.f32.mrf.mxu0
      %v4956 = vadd.f32 0.0, %v4955
      %v4957 = vpop.f32.mrf.mxu0
      %v4958 = vpop.f32.mrf.mxu0
      %v4959 = vadd.f32 0.0, %v4958
      %v4960 = vpop.f32.mrf.mxu0
      %4961 = vmatprep.mubr.bf16.mxu0 %v4763
      %4962 = vmatmul.mubr.bf16.gmra.mxu0 %v4762
      %v4963 = vpop.f32.mrf.mxu0
      %v4964 = vadd.f32 0.0, %v4963
      %v4965 = vpop.f32.mrf.mxu0
      %v4966 = vpop.f32.mrf.mxu0
      %v4967 = vadd.f32 0.0, %v4966
      %v4968 = vpop.f32.mrf.mxu0
      %4969 = vmatprep.mubr.bf16.mxu0 %v4766
      %4970 = vmatmul.mubr.bf16.gmra.mxu0 %v4765
      %v4971 = vpop.f32.mrf.mxu0
      %v4972 = vadd.f32 0.0, %v4971
      %v4973 = vpop.f32.mrf.mxu0
      %v4974 = vpop.f32.mrf.mxu0
      %v4975 = vadd.f32 0.0, %v4974
      %v4976 = vpop.f32.mrf.mxu0
      %4977 = vdwg.mxu0
      %4978 = vmatprep.subr.bf16.mxu0 0
      %4979 = vmatpush1.bf16.msra.mxu0 %v4896
      %4980 = vmatprep.subr.bf16.mxu0 0
      %4981 = vmatpush1.bf16.msra.mxu0 %v4895
      %4982 = vmatprep.subr.bf16.mxu0 0
      %4983 = vmatpush1.bf16.msra.mxu0 %v4894
      %4984 = vmatprep.subr.bf16.mxu0 0
      %4985 = vmatpush1.bf16.msra.mxu0 %v4893
      %4986 = vmatprep.subr.bf16.mxu0 0
      %4987 = vmatpush1.bf16.msra.mxu0 %v4892
      %4988 = vmatprep.subr.bf16.mxu0 0
      %4989 = vmatpush1.bf16.msra.mxu0 %v4891
      %4990 = vmatprep.subr.bf16.mxu0 0
      %4991 = vmatpush1.bf16.msra.mxu0 %v4890
      %4992 = vmatprep.subr.bf16.mxu0 0
      %4993 = vmatpush1.bf16.msra.mxu0 %v4889
      %4994 = vmatprep.subr.bf16.mxu0 0
      %4995 = vmatpush2.bf16.msra.mxu0 0
      %4996 = vmatprep.subr.bf16.mxu0 0
      %4997 = vmatpush2.bf16.msra.mxu0 0
      %4998 = vmatprep.subr.bf16.mxu0 0
      %4999 = vmatpush2.bf16.msra.mxu0 0
      %5000 = vmatprep.subr.bf16.mxu0 0
      %5001 = vmatpush2.bf16.msra.mxu0 0
      %5002 = vmatprep.subr.bf16.mxu0 0
      %5003 = vmatpush2.bf16.msra.mxu0 0
      %5004 = vmatprep.subr.bf16.mxu0 0
      %5005 = vmatpush2.bf16.msra.mxu0 0
      %5006 = vmatprep.subr.bf16.mxu0 0
      %5007 = vmatpush2.bf16.msra.mxu0 0
      %5008 = vmatprep.subr.bf16.mxu0 0
      %5009 = vmatpush2.bf16.msra.mxu0 0
      %5010 = vmatprep.mubr.bf16.mxu0 0
      %5011 = vmatmul.mubr.bf16.gmra.mxu0 %v4761
      %v5012 = vpop.f32.mrf.mxu0
      %v5013 = vadd.f32 %v4956, %v5012
      %v5014 = vpop.f32.mrf.mxu0
      %v5015 = vpop.f32.mrf.mxu0
      %v5016 = vadd.f32 %v4959, %v5015
      %v5017 = vpop.f32.mrf.mxu0
      %5018 = vmatprep.mubr.bf16.mxu0 0
      %5019 = vmatmul.mubr.bf16.gmra.mxu0 %v4764
      %v5020 = vpop.f32.mrf.mxu0
      %v5021 = vadd.f32 %v4964, %v5020
      %v5022 = vpop.f32.mrf.mxu0
      %v5023 = vpop.f32.mrf.mxu0
      %v5024 = vadd.f32 %v4967, %v5023
      %v5025 = vpop.f32.mrf.mxu0
      %5026 = vmatprep.mubr.bf16.mxu0 0
      %5027 = vmatmul.mubr.bf16.gmra.mxu0 %v4767
      %v5028 = vpop.f32.mrf.mxu0
      %v5029 = vadd.f32 %v4972, %v5028
      %v5030 = vpop.f32.mrf.mxu0
      %v5031 = vpop.f32.mrf.mxu0
      %v5032 = vadd.f32 %v4975, %v5031
      %v5033 = vpop.f32.mrf.mxu0
      %5034 = vdwg.mxu0
      %v5041 = vunpack.c.l.b16 %v4615
      %v5042 = vunpack.c.h.b16 %v4615
      %v5043 = vunpack.c.l.b16 %v4616
      %v5044 = vunpack.c.l.b16 %v4617
      %v5045 = vunpack.c.h.b16 %v4617
      %v5046 = vunpack.c.l.b16 %v4618
      %v5047 = vunpack.c.l.b16 %v4619
      %v5048 = vunpack.c.h.b16 %v4619
      %v5049 = vunpack.c.l.b16 %v4620
      %v5050 = vpack.c.b16 %v5044, %v5041
      %v5051 = vpack.c.b16 %v5045, %v5042
      %v5052 = vpack.c.b16 %v5046, %v5043
      %v5053 = vpack.c.b16 %v4741, %v5047
      %v5054 = vpack.c.b16 %v4742, %v5048
      %v5055 = vpack.c.b16 %v4743, %v5049
      %v5056 = vpack.c.b16 %v4747, %v4744
      %v5057 = vpack.c.b16 %v4748, %v4745
      %v5058 = vpack.c.b16 %v4749, %v4746
      %v5116 = vunpack.c.l.b16 %v4627
      %v5117 = vunpack.c.l.b16 %v4628
      %v5118 = vunpack.c.l.b16 %v4629
      %v5119 = vunpack.c.l.b16 %v4630
      %v5120 = vunpack.c.l.b16 %v4631
      %v5121 = vunpack.c.l.b16 %v4632
      %v5122 = vunpack.c.l.b16 %v4633
      %v5123 = vunpack.c.l.b16 %v4634
      %v5124 = vunpack.c.l.b16 %v4635
      %v5125 = vunpack.c.l.b16 %v4636
      %v5126 = vunpack.c.l.b16 %v4637
      %v5127 = vunpack.c.l.b16 %v4638
      %v5128 = vunpack.c.l.b16 %v4639
      %v5129 = vunpack.c.l.b16 %v4640
      %v5130 = vunpack.c.l.b16 %v4641
      %v5131 = vunpack.c.l.b16 %v4642
      %v5132 = vunpack.c.l.b16 %v4643
      %v5133 = vunpack.c.l.b16 %v4644
      %v5134 = vunpack.c.l.b16 %v4645
      %v5135 = vunpack.c.l.b16 %v4646
      %v5136 = vunpack.c.l.b16 %v4647
      %v5137 = vunpack.c.l.b16 %v4648
      %v5138 = vunpack.c.l.b16 %v4649
      %v5139 = vunpack.c.l.b16 %v4650
      %v5140 = vunpack.c.l.b16 %v4651
      %v5141 = vunpack.c.l.b16 %v4652
      %v5142 = vunpack.c.l.b16 %v4653
      %v5143 = vunpack.c.l.b16 %v4654
      %v5144 = vunpack.c.l.b16 %v4655
      %v5145 = vunpack.c.l.b16 %v4656
      %v5146 = vunpack.c.l.b16 %v4657
      %v5147 = vunpack.c.l.b16 %v4658
      %v5148 = vunpack.c.l.b16 %v4659
      %v5149 = vunpack.c.l.b16 %v4660
      %v5150 = vunpack.c.l.b16 %v4661
      %v5151 = vunpack.c.l.b16 %v4662
      %v5152 = vunpack.c.l.b16 %v4663
      %v5153 = vunpack.c.l.b16 %v4664
      %v5154 = vunpack.c.l.b16 %v4665
      %v5155 = vunpack.c.l.b16 %v4666
      %v5156 = vunpack.c.l.b16 %v4667
      %v5157 = vunpack.c.l.b16 %v4668
      %v5158 = vunpack.c.l.b16 %v4669
      %v5159 = vunpack.c.l.b16 %v4670
      %v5160 = vunpack.c.l.b16 %v4671
      %v5161 = vunpack.c.l.b16 %v4672
      %v5162 = vunpack.c.l.b16 %v4673
      %v5163 = vunpack.c.l.b16 %v4674
      %v5164 = vpack.c.b16 %v5117, %v5116
      %v5165 = vpack.c.b16 %v5119, %v5118
      %v5166 = vpack.c.b16 %v5121, %v5120
      %v5167 = vpack.c.b16 %v5123, %v5122
      %v5168 = vpack.c.b16 %v5125, %v5124
      %v5169 = vpack.c.b16 %v5127, %v5126
      %v5170 = vpack.c.b16 %v5129, %v5128
      %v5171 = vpack.c.b16 %v5131, %v5130
      %v5172 = vpack.c.b16 %v5133, %v5132
      %v5173 = vpack.c.b16 %v5135, %v5134
      %v5174 = vpack.c.b16 %v5137, %v5136
      %v5175 = vpack.c.b16 %v5139, %v5138
      %v5176 = vpack.c.b16 %v5141, %v5140
      %v5177 = vpack.c.b16 %v5143, %v5142
      %v5178 = vpack.c.b16 %v5145, %v5144
      %v5179 = vpack.c.b16 %v5147, %v5146
      %v5180 = vpack.c.b16 %v5149, %v5148
      %v5181 = vpack.c.b16 %v5151, %v5150
      %v5182 = vpack.c.b16 %v5153, %v5152
      %v5183 = vpack.c.b16 %v5155, %v5154
      %v5184 = vpack.c.b16 %v5157, %v5156
      %v5185 = vpack.c.b16 %v5159, %v5158
      %v5186 = vpack.c.b16 %v5161, %v5160
      %v5187 = vpack.c.b16 %v5163, %v5162
      %5212 = vmatprep.subr.bf16.mxu0 0
      %5213 = vmatpush1.bf16.msra.mxu0 %v5171
      %5214 = vmatprep.subr.bf16.mxu0 0
      %5215 = vmatpush1.bf16.msra.mxu0 %v5170
      %5216 = vmatprep.subr.bf16.mxu0 0
      %5217 = vmatpush1.bf16.msra.mxu0 %v5169
      %5218 = vmatprep.subr.bf16.mxu0 0
      %5219 = vmatpush1.bf16.msra.mxu0 %v5168
      %5220 = vmatprep.subr.bf16.mxu0 0
      %5221 = vmatpush1.bf16.msra.mxu0 %v5167
      %5222 = vmatprep.subr.bf16.mxu0 0
      %5223 = vmatpush1.bf16.msra.mxu0 %v5166
      %5224 = vmatprep.subr.bf16.mxu0 0
      %5225 = vmatpush1.bf16.msra.mxu0 %v5165
      %5226 = vmatprep.subr.bf16.mxu0 0
      %5227 = vmatpush1.bf16.msra.mxu0 %v5164
      %5228 = vmatprep.subr.bf16.mxu0 0
      %5229 = vmatpush2.bf16.msra.mxu0 %v5179
      %5230 = vmatprep.subr.bf16.mxu0 0
      %5231 = vmatpush2.bf16.msra.mxu0 %v5178
      %5232 = vmatprep.subr.bf16.mxu0 0
      %5233 = vmatpush2.bf16.msra.mxu0 %v5177
      %5234 = vmatprep.subr.bf16.mxu0 0
      %5235 = vmatpush2.bf16.msra.mxu0 %v5176
      %5236 = vmatprep.subr.bf16.mxu0 0
      %5237 = vmatpush2.bf16.msra.mxu0 %v5175
      %5238 = vmatprep.subr.bf16.mxu0 0
      %5239 = vmatpush2.bf16.msra.mxu0 %v5174
      %5240 = vmatprep.subr.bf16.mxu0 0
      %5241 = vmatpush2.bf16.msra.mxu0 %v5173
      %5242 = vmatprep.subr.bf16.mxu0 0
      %5243 = vmatpush2.bf16.msra.mxu0 %v5172
      %5244 = vmatprep.mubr.bf16.mxu0 %v5051
      %5245 = vmatmul.mubr.bf16.gmra.mxu0 %v5050
      %v5246 = vpop.f32.mrf.mxu0
      %v5247 = vadd.f32 %v5013, %v5246
      %v5248 = vpop.f32.mrf.mxu0
      %v5249 = vpop.f32.mrf.mxu0
      %v5250 = vadd.f32 %v5016, %v5249
      %v5251 = vpop.f32.mrf.mxu0
      %5252 = vmatprep.mubr.bf16.mxu0 %v5054
      %5253 = vmatmul.mubr.bf16.gmra.mxu0 %v5053
      %v5254 = vpop.f32.mrf.mxu0
      %v5255 = vadd.f32 %v5021, %v5254
      %v5256 = vpop.f32.mrf.mxu0
      %v5257 = vpop.f32.mrf.mxu0
      %v5258 = vadd.f32 %v5024, %v5257
      %v5259 = vpop.f32.mrf.mxu0
      %5260 = vmatprep.mubr.bf16.mxu0 %v5057
      %5261 = vmatmul.mubr.bf16.gmra.mxu0 %v5056
      %v5262 = vpop.f32.mrf.mxu0
      %v5263 = vadd.f32 %v5029, %v5262
      %v5264 = vpop.f32.mrf.mxu0
      %v5265 = vpop.f32.mrf.mxu0
      %v5266 = vadd.f32 %v5032, %v5265
      %v5267 = vpop.f32.mrf.mxu0
      %5268 = vdwg.mxu0
      %5269 = vmatprep.subr.bf16.mxu0 0
      %5270 = vmatpush1.bf16.msra.mxu0 %v5187
      %5271 = vmatprep.subr.bf16.mxu0 0
      %5272 = vmatpush1.bf16.msra.mxu0 %v5186
      %5273 = vmatprep.subr.bf16.mxu0 0
      %5274 = vmatpush1.bf16.msra.mxu0 %v5185
      %5275 = vmatprep.subr.bf16.mxu0 0
      %5276 = vmatpush1.bf16.msra.mxu0 %v5184
      %5277 = vmatprep.subr.bf16.mxu0 0
      %5278 = vmatpush1.bf16.msra.mxu0 %v5183
      %5279 = vmatprep.subr.bf16.mxu0 0
      %5280 = vmatpush1.bf16.msra.mxu0 %v5182
      %5281 = vmatprep.subr.bf16.mxu0 0
      %5282 = vmatpush1.bf16.msra.mxu0 %v5181
      %5283 = vmatprep.subr.bf16.mxu0 0
      %5284 = vmatpush1.bf16.msra.mxu0 %v5180
      %5285 = vmatprep.subr.bf16.mxu0 0
      %5286 = vmatpush2.bf16.msra.mxu0 0
      %5287 = vmatprep.subr.bf16.mxu0 0
      %5288 = vmatpush2.bf16.msra.mxu0 0
      %5289 = vmatprep.subr.bf16.mxu0 0
      %5290 = vmatpush2.bf16.msra.mxu0 0
      %5291 = vmatprep.subr.bf16.mxu0 0
      %5292 = vmatpush2.bf16.msra.mxu0 0
      %5293 = vmatprep.subr.bf16.mxu0 0
      %5294 = vmatpush2.bf16.msra.mxu0 0
      %5295 = vmatprep.subr.bf16.mxu0 0
      %5296 = vmatpush2.bf16.msra.mxu0 0
      %5297 = vmatprep.subr.bf16.mxu0 0
      %5298 = vmatpush2.bf16.msra.mxu0 0
      %5299 = vmatprep.subr.bf16.mxu0 0
      %5300 = vmatpush2.bf16.msra.mxu0 0
      %5301 = vmatprep.mubr.bf16.mxu0 0
      %5302 = vmatmul.mubr.bf16.gmra.mxu0 %v5052
      %v5303 = vpop.f32.mrf.mxu0
      %v5304 = vadd.f32 %v5247, %v5303
      %v5305 = vpop.f32.mrf.mxu0
      %v5306 = vpop.f32.mrf.mxu0
      %v5307 = vadd.f32 %v5250, %v5306
      %v5308 = vpop.f32.mrf.mxu0
      %5309 = vmatprep.mubr.bf16.mxu0 0
      %5310 = vmatmul.mubr.bf16.gmra.mxu0 %v5055
      %v5311 = vpop.f32.mrf.mxu0
      %v5312 = vadd.f32 %v5255, %v5311
      %v5313 = vpop.f32.mrf.mxu0
      %v5314 = vpop.f32.mrf.mxu0
      %v5315 = vadd.f32 %v5258, %v5314
      %v5316 = vpop.f32.mrf.mxu0
      %5317 = vmatprep.mubr.bf16.mxu0 0
      %5318 = vmatmul.mubr.bf16.gmra.mxu0 %v5058
      %v5319 = vpop.f32.mrf.mxu0
      %v5320 = vadd.f32 %v5263, %v5319
      %v5321 = vpop.f32.mrf.mxu0
      %v5322 = vpop.f32.mrf.mxu0
      %v5323 = vadd.f32 %v5266, %v5322
      %v5324 = vpop.f32.mrf.mxu0
      %5325 = vdwg.mxu0
      %v5326 = vld [vmem:[#allocation2 + $0x168] sm:$0xff]
      %v5327 = vld [vmem:[#allocation2 + $0x170] sm:$0xf]
      %v5328 = vld [vmem:[#allocation2 + $0x174] sm:$0xff]
      %v5329 = vld [vmem:[#allocation2 + $0x17c] sm:$0xf]
      %v5330 = vld [vmem:[#allocation2 + $0x180] sm:$0xff]
      %v5331 = vld [vmem:[#allocation2 + $0x188] sm:$0xf]
      %v5332 = vld [vmem:[#allocation2 + $0x18c] sm:$0xff]
      %v5333 = vld [vmem:[#allocation2 + $0x194] sm:$0xf]
      %v5334 = vld [vmem:[#allocation2 + $0x198] sm:$0xff]
      %v5335 = vld [vmem:[#allocation2 + $0x1a0] sm:$0xf]
      %v5336 = vld [vmem:[#allocation2 + $0x1a4] sm:$0xff]
      %v5337 = vld [vmem:[#allocation2 + $0x1ac] sm:$0xf]
      %v5338 = vld [vmem:[%s2036] sm:$0xf]
      %v5339 = vld [vmem:[%s2036 + $0x4] sm:$0xf]
      %v5340 = vld [vmem:[%s2036 + $0x8] sm:$0xf]
      %v5341 = vld [vmem:[%s2036 + $0xc] sm:$0xf]
      %v5342 = vld [vmem:[%s2036 + $0x10] sm:$0xf]
      %v5343 = vld [vmem:[%s2036 + $0x14] sm:$0xf]
      %v5344 = vld [vmem:[%s2036 + $0x18] sm:$0xf]
      %v5345 = vld [vmem:[%s2036 + $0x1c] sm:$0xf]
      %v5346 = vld [vmem:[%s2036 + $0x20] sm:$0xf]
      %v5347 = vld [vmem:[%s2036 + $0x24] sm:$0xf]
      %v5348 = vld [vmem:[%s2036 + $0x28] sm:$0xf]
      %v5349 = vld [vmem:[%s2036 + $0x2c] sm:$0xf]
      %v5350 = vld [vmem:[%s2036 + $0x30] sm:$0xf]
      %v5351 = vld [vmem:[%s2036 + $0x34] sm:$0xf]
      %v5352 = vld [vmem:[%s2036 + $0x38] sm:$0xf]
      %v5353 = vld [vmem:[%s2036 + $0x3c] sm:$0xf]
      %v5354 = vld [vmem:[%s2036 + $0x40] sm:$0xf]
      %v5355 = vld [vmem:[%s2036 + $0x44] sm:$0xf]
      %v5356 = vld [vmem:[%s2036 + $0x48] sm:$0xf]
      %v5357 = vld [vmem:[%s2036 + $0x4c] sm:$0xf]
      %v5358 = vld [vmem:[%s2036 + $0x50] sm:$0xf]
      %v5359 = vld [vmem:[%s2036 + $0x54] sm:$0xf]
      %v5360 = vld [vmem:[%s2036 + $0x58] sm:$0xf]
      %v5361 = vld [vmem:[%s2036 + $0x5c] sm:$0xf]
      %v5362 = vld [vmem:[%s2036 + $0x60] sm:$0xf]
      %v5363 = vld [vmem:[%s2036 + $0x64] sm:$0xf]
      %v5364 = vld [vmem:[%s2036 + $0x68] sm:$0xf]
      %v5365 = vld [vmem:[%s2036 + $0x6c] sm:$0xf]
      %v5366 = vld [vmem:[%s2036 + $0x70] sm:$0xf]
      %v5367 = vld [vmem:[%s2036 + $0x74] sm:$0xf]
      %v5368 = vld [vmem:[%s2036 + $0x78] sm:$0xf]
      %v5369 = vld [vmem:[%s2036 + $0x7c] sm:$0xf]
      %v5370 = vld [vmem:[%s2036 + $0x80] sm:$0xf]
      %v5371 = vld [vmem:[%s2036 + $0x84] sm:$0xf]
      %v5372 = vld [vmem:[%s2036 + $0x88] sm:$0xf]
      %v5373 = vld [vmem:[%s2036 + $0x8c] sm:$0xf]
      %v5374 = vld [vmem:[%s2036 + $0x90] sm:$0xf]
      %v5375 = vld [vmem:[%s2036 + $0x94] sm:$0xf]
      %v5376 = vld [vmem:[%s2036 + $0x98] sm:$0xf]
      %v5377 = vld [vmem:[%s2036 + $0x9c] sm:$0xf]
      %v5378 = vld [vmem:[%s2036 + $0xa0] sm:$0xf]
      %v5379 = vld [vmem:[%s2036 + $0xa4] sm:$0xf]
      %v5380 = vld [vmem:[%s2036 + $0xa8] sm:$0xf]
      %v5381 = vld [vmem:[%s2036 + $0xac] sm:$0xf]
      %v5382 = vld [vmem:[%s2036 + $0xb0] sm:$0xf]
      %v5383 = vld [vmem:[%s2036 + $0xb4] sm:$0xf]
      %v5384 = vld [vmem:[%s2036 + $0xb8] sm:$0xf]
      %v5385 = vld [vmem:[%s2036 + $0xbc] sm:$0xf]
      %v5398 = vunpack.c.l.b16 %v5326
      %v5399 = vunpack.c.h.b16 %v5326
      %v5400 = vunpack.c.l.b16 %v5327
      %v5401 = vunpack.c.l.b16 %v5328
      %v5402 = vunpack.c.h.b16 %v5328
      %v5403 = vunpack.c.l.b16 %v5329
      %v5404 = vunpack.c.l.b16 %v5330
      %v5405 = vunpack.c.h.b16 %v5330
      %v5406 = vunpack.c.l.b16 %v5331
      %v5407 = vunpack.c.l.b16 %v5332
      %v5408 = vunpack.c.h.b16 %v5332
      %v5409 = vunpack.c.l.b16 %v5333
      %v5410 = vunpack.c.l.b16 %v5334
      %v5411 = vunpack.c.h.b16 %v5334
      %v5412 = vunpack.c.l.b16 %v5335
      %v5413 = vunpack.c.l.b16 %v5336
      %v5414 = vunpack.c.h.b16 %v5336
      %v5415 = vunpack.c.l.b16 %v5337
      %v5416 = vpack.c.b16 %v5401, %v5398
      %v5417 = vpack.c.b16 %v5402, %v5399
      %v5418 = vpack.c.b16 %v5403, %v5400
      %v5419 = vpack.c.b16 %v5407, %v5404
      %v5420 = vpack.c.b16 %v5408, %v5405
      %v5421 = vpack.c.b16 %v5409, %v5406
      %v5422 = vpack.c.b16 %v5413, %v5410
      %v5423 = vpack.c.b16 %v5414, %v5411
      %v5424 = vpack.c.b16 %v5415, %v5412
      %v5482 = vunpack.c.l.b16 %v5338
      %v5483 = vunpack.c.l.b16 %v5339
      %v5484 = vunpack.c.l.b16 %v5340
      %v5485 = vunpack.c.l.b16 %v5341
      %v5486 = vunpack.c.l.b16 %v5342
      %v5487 = vunpack.c.l.b16 %v5343
      %v5488 = vunpack.c.l.b16 %v5344
      %v5489 = vunpack.c.l.b16 %v5345
      %v5490 = vunpack.c.l.b16 %v5346
      %v5491 = vunpack.c.l.b16 %v5347
      %v5492 = vunpack.c.l.b16 %v5348
      %v5493 = vunpack.c.l.b16 %v5349
      %v5494 = vunpack.c.l.b16 %v5350
      %v5495 = vunpack.c.l.b16 %v5351
      %v5496 = vunpack.c.l.b16 %v5352
      %v5497 = vunpack.c.l.b16 %v5353
      %v5498 = vunpack.c.l.b16 %v5354
      %v5499 = vunpack.c.l.b16 %v5355
      %v5500 = vunpack.c.l.b16 %v5356
      %v5501 = vunpack.c.l.b16 %v5357
      %v5502 = vunpack.c.l.b16 %v5358
      %v5503 = vunpack.c.l.b16 %v5359
      %v5504 = vunpack.c.l.b16 %v5360
      %v5505 = vunpack.c.l.b16 %v5361
      %v5506 = vunpack.c.l.b16 %v5362
      %v5507 = vunpack.c.l.b16 %v5363
      %v5508 = vunpack.c.l.b16 %v5364
      %v5509 = vunpack.c.l.b16 %v5365
      %v5510 = vunpack.c.l.b16 %v5366
      %v5511 = vunpack.c.l.b16 %v5367
      %v5512 = vunpack.c.l.b16 %v5368
      %v5513 = vunpack.c.l.b16 %v5369
      %v5514 = vunpack.c.l.b16 %v5370
      %v5515 = vunpack.c.l.b16 %v5371
      %v5516 = vunpack.c.l.b16 %v5372
      %v5517 = vunpack.c.l.b16 %v5373
      %v5518 = vunpack.c.l.b16 %v5374
      %v5519 = vunpack.c.l.b16 %v5375
      %v5520 = vunpack.c.l.b16 %v5376
      %v5521 = vunpack.c.l.b16 %v5377
      %v5522 = vunpack.c.l.b16 %v5378
      %v5523 = vunpack.c.l.b16 %v5379
      %v5524 = vunpack.c.l.b16 %v5380
      %v5525 = vunpack.c.l.b16 %v5381
      %v5526 = vunpack.c.l.b16 %v5382
      %v5527 = vunpack.c.l.b16 %v5383
      %v5528 = vunpack.c.l.b16 %v5384
      %v5529 = vunpack.c.l.b16 %v5385
      %v5530 = vpack.c.b16 %v5483, %v5482
      %v5531 = vpack.c.b16 %v5485, %v5484
      %v5532 = vpack.c.b16 %v5487, %v5486
      %v5533 = vpack.c.b16 %v5489, %v5488
      %v5534 = vpack.c.b16 %v5491, %v5490
      %v5535 = vpack.c.b16 %v5493, %v5492
      %v5536 = vpack.c.b16 %v5495, %v5494
      %v5537 = vpack.c.b16 %v5497, %v5496
      %v5538 = vpack.c.b16 %v5499, %v5498
      %v5539 = vpack.c.b16 %v5501, %v5500
      %v5540 = vpack.c.b16 %v5503, %v5502
      %v5541 = vpack.c.b16 %v5505, %v5504
      %v5542 = vpack.c.b16 %v5507, %v5506
      %v5543 = vpack.c.b16 %v5509, %v5508
      %v5544 = vpack.c.b16 %v5511, %v5510
      %v5545 = vpack.c.b16 %v5513, %v5512
      %v5546 = vpack.c.b16 %v5515, %v5514
      %v5547 = vpack.c.b16 %v5517, %v5516
      %v5548 = vpack.c.b16 %v5519, %v5518
      %v5549 = vpack.c.b16 %v5521, %v5520
      %v5550 = vpack.c.b16 %v5523, %v5522
      %v5551 = vpack.c.b16 %v5525, %v5524
      %v5552 = vpack.c.b16 %v5527, %v5526
      %v5553 = vpack.c.b16 %v5529, %v5528
      %5578 = vmatprep.subr.bf16.mxu0 0
      %5579 = vmatpush1.bf16.msra.mxu0 %v5537
      %5580 = vmatprep.subr.bf16.mxu0 0
      %5581 = vmatpush1.bf16.msra.mxu0 %v5536
      %5582 = vmatprep.subr.bf16.mxu0 0
      %5583 = vmatpush1.bf16.msra.mxu0 %v5535
      %5584 = vmatprep.subr.bf16.mxu0 0
      %5585 = vmatpush1.bf16.msra.mxu0 %v5534
      %5586 = vmatprep.subr.bf16.mxu0 0
      %5587 = vmatpush1.bf16.msra.mxu0 %v5533
      %5588 = vmatprep.subr.bf16.mxu0 0
      %5589 = vmatpush1.bf16.msra.mxu0 %v5532
      %5590 = vmatprep.subr.bf16.mxu0 0
      %5591 = vmatpush1.bf16.msra.mxu0 %v5531
      %5592 = vmatprep.subr.bf16.mxu0 0
      %5593 = vmatpush1.bf16.msra.mxu0 %v5530
      %5594 = vmatprep.subr.bf16.mxu0 0
      %5595 = vmatpush2.bf16.msra.mxu0 %v5545
      %5596 = vmatprep.subr.bf16.mxu0 0
      %5597 = vmatpush2.bf16.msra.mxu0 %v5544
      %5598 = vmatprep.subr.bf16.mxu0 0
      %5599 = vmatpush2.bf16.msra.mxu0 %v5543
      %5600 = vmatprep.subr.bf16.mxu0 0
      %5601 = vmatpush2.bf16.msra.mxu0 %v5542
      %5602 = vmatprep.subr.bf16.mxu0 0
      %5603 = vmatpush2.bf16.msra.mxu0 %v5541
      %5604 = vmatprep.subr.bf16.mxu0 0
      %5605 = vmatpush2.bf16.msra.mxu0 %v5540
      %5606 = vmatprep.subr.bf16.mxu0 0
      %5607 = vmatpush2.bf16.msra.mxu0 %v5539
      %5608 = vmatprep.subr.bf16.mxu0 0
      %5609 = vmatpush2.bf16.msra.mxu0 %v5538
      %5610 = vmatprep.mubr.bf16.mxu0 %v5417
      %5611 = vmatmul.mubr.bf16.gmra.mxu0 %v5416
      %v5612 = vpop.f32.mrf.mxu0
      %v5613 = vadd.f32 0.0, %v5612
      %v5614 = vpop.f32.mrf.mxu0
      %v5615 = vpop.f32.mrf.mxu0
      %v5616 = vadd.f32 0.0, %v5615
      %v5617 = vpop.f32.mrf.mxu0
      %5618 = vmatprep.mubr.bf16.mxu0 %v5420
      %5619 = vmatmul.mubr.bf16.gmra.mxu0 %v5419
      %v5620 = vpop.f32.mrf.mxu0
      %v5621 = vadd.f32 0.0, %v5620
      %v5622 = vpop.f32.mrf.mxu0
      %v5623 = vpop.f32.mrf.mxu0
      %v5624 = vadd.f32 0.0, %v5623
      %v5625 = vpop.f32.mrf.mxu0
      %5626 = vmatprep.mubr.bf16.mxu0 %v5423
      %5627 = vmatmul.mubr.bf16.gmra.mxu0 %v5422
      %v5628 = vpop.f32.mrf.mxu0
      %v5629 = vadd.f32 0.0, %v5628
      %v5630 = vpop.f32.mrf.mxu0
      %v5631 = vpop.f32.mrf.mxu0
      %v5632 = vadd.f32 0.0, %v5631
      %v5633 = vpop.f32.mrf.mxu0
      %5634 = vdwg.mxu0
      %5635 = vmatprep.subr.bf16.mxu0 0
      %5636 = vmatpush1.bf16.msra.mxu0 %v5553
      %5637 = vmatprep.subr.bf16.mxu0 0
      %5638 = vmatpush1.bf16.msra.mxu0 %v5552
      %5639 = vmatprep.subr.bf16.mxu0 0
      %5640 = vmatpush1.bf16.msra.mxu0 %v5551
      %5641 = vmatprep.subr.bf16.mxu0 0
      %5642 = vmatpush1.bf16.msra.mxu0 %v5550
      %5643 = vmatprep.subr.bf16.mxu0 0
      %5644 = vmatpush1.bf16.msra.mxu0 %v5549
      %5645 = vmatprep.subr.bf16.mxu0 0
      %5646 = vmatpush1.bf16.msra.mxu0 %v5548
      %5647 = vmatprep.subr.bf16.mxu0 0
      %5648 = vmatpush1.bf16.msra.mxu0 %v5547
      %5649 = vmatprep.subr.bf16.mxu0 0
      %5650 = vmatpush1.bf16.msra.mxu0 %v5546
      %5651 = vmatprep.subr.bf16.mxu0 0
      %5652 = vmatpush2.bf16.msra.mxu0 0
      %5653 = vmatprep.subr.bf16.mxu0 0
      %5654 = vmatpush2.bf16.msra.mxu0 0
      %5655 = vmatprep.subr.bf16.mxu0 0
      %5656 = vmatpush2.bf16.msra.mxu0 0
      %5657 = vmatprep.subr.bf16.mxu0 0
      %5658 = vmatpush2.bf16.msra.mxu0 0
      %5659 = vmatprep.subr.bf16.mxu0 0
      %5660 = vmatpush2.bf16.msra.mxu0 0
      %5661 = vmatprep.subr.bf16.mxu0 0
      %5662 = vmatpush2.bf16.msra.mxu0 0
      %5663 = vmatprep.subr.bf16.mxu0 0
      %5664 = vmatpush2.bf16.msra.mxu0 0
      %5665 = vmatprep.subr.bf16.mxu0 0
      %5666 = vmatpush2.bf16.msra.mxu0 0
      %5667 = vmatprep.mubr.bf16.mxu0 0
      %5668 = vmatmul.mubr.bf16.gmra.mxu0 %v5418
      %v5669 = vpop.f32.mrf.mxu0
      %v5670 = vadd.f32 %v5613, %v5669
      %v5671 = vpop.f32.mrf.mxu0
      %v5672 = vpop.f32.mrf.mxu0
      %v5673 = vadd.f32 %v5616, %v5672
      %v5674 = vpop.f32.mrf.mxu0
      %5675 = vmatprep.mubr.bf16.mxu0 0
      %5676 = vmatmul.mubr.bf16.gmra.mxu0 %v5421
      %v5677 = vpop.f32.mrf.mxu0
      %v5678 = vadd.f32 %v5621, %v5677
      %v5679 = vpop.f32.mrf.mxu0
      %v5680 = vpop.f32.mrf.mxu0
      %v5681 = vadd.f32 %v5624, %v5680
      %v5682 = vpop.f32.mrf.mxu0
      %5683 = vmatprep.mubr.bf16.mxu0 0
      %5684 = vmatmul.mubr.bf16.gmra.mxu0 %v5424
      %v5685 = vpop.f32.mrf.mxu0
      %v5686 = vadd.f32 %v5629, %v5685
      %v5687 = vpop.f32.mrf.mxu0
      %v5688 = vpop.f32.mrf.mxu0
      %v5689 = vadd.f32 %v5632, %v5688
      %v5690 = vpop.f32.mrf.mxu0
      %5691 = vdwg.mxu0
      %v5692 = vadd.f32 %v5304, %v5670
      %v5693 = vadd.f32 %v5307, %v5673
      %v5694 = vadd.f32 %v5312, %v5678
      %v5695 = vadd.f32 %v5315, %v5681
      %v5696 = vadd.f32 %v5320, %v5686
      %v5697 = vadd.f32 %v5323, %v5689
      %v5698 = vld [vmem:[%s3] sm:$0x1]
      %v5700 = vlaneseq
      %v5701 = vshrl.u32 %v5700, 7
      %v5702 = vsub.s32 0, %v5701
      %v5703 = vrot.slane %v5698, %v5702
      %v5705 = vadd.f32 %v5692, %v5703
      %v5706 = vadd.f32 %v5693, %v5703
      %v5707 = vadd.f32 %v5694, %v5703
      %v5708 = vadd.f32 %v5695, %v5703
      %v5709 = vadd.f32 %v5696, %v5703
      %v5710 = vadd.f32 %v5697, %v5703
      %v5711 = vmax.f32 %v5705, 0.0
      %v5712 = vmax.f32 %v5706, 0.0
      %v5713 = vmax.f32 %v5707, 0.0
      %v5714 = vmax.f32 %v5708, 0.0
      %v5715 = vmax.f32 %v5709, 0.0
      %v5716 = vmax.f32 %v5710, 0.0
      %s5717 = sadd.s32 %s1124, 7
      %v5718 = vstv %s5717
      %v5719 = vadd.s32 %v5718, 1
      %vm5720 = vcmp.ge.s32.totalorder %v5718, 0
      %vm5721 = vcmp.ge.s32.totalorder %v5719, 0
      %vm5722 = vcmp.lt.s32.totalorder %v5718, 16
      %vm5723 = vcmp.lt.s32.totalorder %v5719, 16
      %vm5724 = vmand %vm5720, %vm5722
      %vm5725 = vmand %vm5721, %vm5723
      %v5726 = vsel %vm5724, 1, 0
      %v5727 = vsel %vm5725, 1, 0
      %vm5728 = vcmp.eq.s32.totalorder %v5726, 1
      %vm5729 = vcmp.eq.s32.totalorder %v5727, 1
      %vm5730 = vmand %vm5728, %vm2557
      %vm5731 = vmand %vm5728, %vm2558
      %vm5732 = vmand %vm5728, %vm2559
      %vm5733 = vmand %vm5729, %vm2557
      %vm5734 = vmand %vm5729, %vm2558
      %vm5735 = vmand %vm5729, %vm2559
      %v5736 = vsel %vm5730, 1, 0
      %v5737 = vsel %vm5731, 1, 0
      %v5738 = vsel %vm5732, 1, 0
      %v5739 = vsel %vm5733, 1, 0
      %v5740 = vsel %vm5734, 1, 0
      %v5741 = vsel %vm5735, 1, 0
      %vm5742 = vcmp.eq.s32.totalorder %v5736, 1
      %vm5743 = vcmp.eq.s32.totalorder %v5737, 1
      %vm5744 = vcmp.eq.s32.totalorder %v5738, 1
      %vm5745 = vcmp.eq.s32.totalorder %v5739, 1
      %vm5746 = vcmp.eq.s32.totalorder %v5740, 1
      %vm5747 = vcmp.eq.s32.totalorder %v5741, 1
      %v5748 = vsel %vm5742, %v5711, 0.0
      %v5749 = vsel %vm5743, %v5712, 0.0
      %v5750 = vsel %vm5744, %v5713, 0.0
      %v5751 = vsel %vm5745, %v5714, 0.0
      %v5752 = vsel %vm5746, %v5715, 0.0
      %v5753 = vsel %vm5747, %v5716, 0.0
      %v5754 = vpack.c.bf16 %v5749, %v5748
      %v5755 = vpack.c.bf16 %v5751, %v5750
      %v5756 = vpack.c.bf16 %v5753, %v5752
      %v5760 = vunpack.c.l.b16 %v5754
      %v5761 = vunpack.c.h.b16 %v5754
      %v5762 = vunpack.c.l.b16 %v5755
      %v5763 = vunpack.c.h.b16 %v5755
      %v5764 = vunpack.c.l.b16 %v5756
      %v5765 = vunpack.c.h.b16 %v5756
      %v5766 = vpack.c.b16 %v5760, %v5760
      %v5767 = vpack.c.b16 %v5761, %v5761
      %v5768 = vpack.c.b16 %v5762, %v5762
      %v5769 = vpack.c.b16 %v5763, %v5763
      %v5770 = vpack.c.b16 %v5764, %v5764
      %v5771 = vpack.c.b16 %v5765, %v5765
      %5778 = vst [vmem:[#allocation3 + $0x120] sm:$0xf] %v5766
      %5779 = vst [vmem:[#allocation3 + $0x12c] sm:$0xf] %v5767
      %5780 = vst [vmem:[#allocation3 + $0x138] sm:$0xf] %v5768
      %5781 = vst [vmem:[#allocation3 + $0x144] sm:$0xf] %v5769
      %5782 = vst [vmem:[#allocation3 + $0x150] sm:$0xf] %v5770
      %5783 = vst [vmem:[#allocation3 + $0x15c] sm:$0xf] %v5771
      %v5790 = vrot.slane %v5748, 1
      %v5791 = vrot.slane %v5749, 1
      %v5792 = vsel %vm435, %v5790, %v5791
      %v5793 = vrot.slane %v5750, 1
      %v5794 = vsel %vm435, %v5791, %v5793
      %v5795 = vrot.slane %v5751, 1
      %v5796 = vsel %vm435, %v5793, %v5795
      %v5797 = vrot.slane %v5752, 1
      %v5798 = vsel %vm435, %v5795, %v5797
      %v5799 = vrot.slane %v5753, 1
      %v5800 = vsel %vm435, %v5797, %v5799
      %v5808 = vsel %vm435, %v5799, %v5790
      %v5809 = vpack.c.bf16 %v5794, %v5792
      %v5810 = vpack.c.bf16 %v5798, %v5796
      %v5811 = vpack.c.bf16 %v5808, %v5800
      %v5815 = vunpack.c.l.b16 %v5809
      %v5816 = vunpack.c.h.b16 %v5809
      %v5817 = vunpack.c.l.b16 %v5810
      %v5818 = vunpack.c.h.b16 %v5810
      %v5819 = vunpack.c.l.b16 %v5811
      %v5820 = vunpack.c.h.b16 %v5811
      %v5821 = vpack.c.b16 %v5815, %v5815
      %v5822 = vpack.c.b16 %v5816, %v5816
      %v5823 = vpack.c.b16 %v5817, %v5817
      %v5824 = vpack.c.b16 %v5818, %v5818
      %v5825 = vpack.c.b16 %v5819, %v5819
      %v5826 = vpack.c.b16 %v5820, %v5820
      %5833 = vst [vmem:[#allocation3 + $0x124] sm:$0xf] %v5821
      %5834 = vst [vmem:[#allocation3 + $0x130] sm:$0xf] %v5822
      %5835 = vst [vmem:[#allocation3 + $0x13c] sm:$0xf] %v5823
      %5836 = vst [vmem:[#allocation3 + $0x148] sm:$0xf] %v5824
      %5837 = vst [vmem:[#allocation3 + $0x154] sm:$0xf] %v5825
      %5838 = vst [vmem:[#allocation3 + $0x160] sm:$0xf] %v5826
      %v5839 = vrot.slane %v5748, 2
      %v5840 = vrot.slane %v5749, 2
      %v5841 = vsel %vm558, %v5839, %v5840
      %v5842 = vrot.slane %v5750, 2
      %v5843 = vsel %vm558, %v5840, %v5842
      %v5844 = vrot.slane %v5751, 2
      %v5845 = vsel %vm558, %v5842, %v5844
      %v5846 = vrot.slane %v5752, 2
      %v5847 = vsel %vm558, %v5844, %v5846
      %v5848 = vrot.slane %v5753, 2
      %v5849 = vsel %vm558, %v5846, %v5848
      %v5857 = vsel %vm558, %v5848, %v5839
      %v5858 = vpack.c.bf16 %v5843, %v5841
      %v5859 = vpack.c.bf16 %v5847, %v5845
      %v5860 = vpack.c.bf16 %v5857, %v5849
      %v5864 = vunpack.c.l.b16 %v5858
      %v5865 = vunpack.c.h.b16 %v5858
      %v5866 = vunpack.c.l.b16 %v5859
      %v5867 = vunpack.c.h.b16 %v5859
      %v5868 = vunpack.c.l.b16 %v5860
      %v5869 = vunpack.c.h.b16 %v5860
      %v5870 = vpack.c.b16 %v5864, %v5864
      %v5871 = vpack.c.b16 %v5865, %v5865
      %v5872 = vpack.c.b16 %v5866, %v5866
      %v5873 = vpack.c.b16 %v5867, %v5867
      %v5874 = vpack.c.b16 %v5868, %v5868
      %v5875 = vpack.c.b16 %v5869, %v5869
      %5882 = vst [vmem:[#allocation3 + $0x128] sm:$0xf] %v5870
      %5883 = vst [vmem:[#allocation3 + $0x134] sm:$0xf] %v5871
      %5884 = vst [vmem:[#allocation3 + $0x140] sm:$0xf] %v5872
      %5885 = vst [vmem:[#allocation3 + $0x14c] sm:$0xf] %v5873
      %5886 = vst [vmem:[#allocation3 + $0x158] sm:$0xf] %v5874
      %5887 = vst [vmem:[#allocation3 + $0x164] sm:$0xf] %v5875
      %v5888 = vld [vmem:[#allocation3] sm:$0xff]
      %v5889 = vld [vmem:[#allocation3 + $0x8] sm:$0xf]
      %v5890 = vld [vmem:[#allocation3 + $0xc] sm:$0xff]
      %v5891 = vld [vmem:[#allocation3 + $0x14] sm:$0xf]
      %v5892 = vld [vmem:[#allocation3 + $0x18] sm:$0xff]
      %v5893 = vld [vmem:[#allocation3 + $0x20] sm:$0xf]
      %v5894 = vld [vmem:[#allocation3 + $0x24] sm:$0xff]
      %v5895 = vld [vmem:[#allocation3 + $0x2c] sm:$0xf]
      %v5896 = vld [vmem:[#allocation3 + $0x30] sm:$0xff]
      %v5897 = vld [vmem:[#allocation3 + $0x38] sm:$0xf]
      %v5898 = vld [vmem:[#allocation3 + $0x3c] sm:$0xff]
      %v5899 = vld [vmem:[#allocation3 + $0x44] sm:$0xf]
      %v5900 = vld [vmem:[#allocation3 + $0x48] sm:$0xff]
      %v5901 = vld [vmem:[#allocation3 + $0x50] sm:$0xf]
      %v5902 = vld [vmem:[#allocation3 + $0x54] sm:$0xff]
      %v5903 = vld [vmem:[#allocation3 + $0x5c] sm:$0xf]
      %v5904 = vld [vmem:[#allocation3 + $0x60] sm:$0xff]
      %v5905 = vld [vmem:[#allocation3 + $0x68] sm:$0xf]
      %v5906 = vld [vmem:[#allocation3 + $0x6c] sm:$0xff]
      %v5907 = vld [vmem:[#allocation3 + $0x74] sm:$0xf]
      %v5908 = vld [vmem:[#allocation3 + $0x78] sm:$0xff]
      %v5909 = vld [vmem:[#allocation3 + $0x80] sm:$0xf]
      %v5910 = vld [vmem:[#allocation3 + $0x84] sm:$0xff]
      %v5911 = vld [vmem:[#allocation3 + $0x8c] sm:$0xf]
      %v5912 = vld [vmem:[%s4] sm:$0xf]
      %v5913 = vld [vmem:[%s4 + $0x4] sm:$0xf]
      %v5914 = vld [vmem:[%s4 + $0x8] sm:$0xf]
      %v5915 = vld [vmem:[%s4 + $0xc] sm:$0xf]
      %v5916 = vld [vmem:[%s4 + $0x10] sm:$0xf]
      %v5917 = vld [vmem:[%s4 + $0x14] sm:$0xf]
      %v5918 = vld [vmem:[%s4 + $0x18] sm:$0xf]
      %v5919 = vld [vmem:[%s4 + $0x1c] sm:$0xf]
      %v5920 = vld [vmem:[%s4 + $0x20] sm:$0xf]
      %v5921 = vld [vmem:[%s4 + $0x24] sm:$0xf]
      %v5922 = vld [vmem:[%s4 + $0x28] sm:$0xf]
      %v5923 = vld [vmem:[%s4 + $0x2c] sm:$0xf]
      %v5924 = vld [vmem:[%s4 + $0x30] sm:$0xf]
      %v5925 = vld [vmem:[%s4 + $0x34] sm:$0xf]
      %v5926 = vld [vmem:[%s4 + $0x38] sm:$0xf]
      %v5927 = vld [vmem:[%s4 + $0x3c] sm:$0xf]
      %v5928 = vld [vmem:[%s4 + $0x40] sm:$0xf]
      %v5929 = vld [vmem:[%s4 + $0x44] sm:$0xf]
      %v5930 = vld [vmem:[%s4 + $0x48] sm:$0xf]
      %v5931 = vld [vmem:[%s4 + $0x4c] sm:$0xf]
      %v5932 = vld [vmem:[%s4 + $0x50] sm:$0xf]
      %v5933 = vld [vmem:[%s4 + $0x54] sm:$0xf]
      %v5934 = vld [vmem:[%s4 + $0x58] sm:$0xf]
      %v5935 = vld [vmem:[%s4 + $0x5c] sm:$0xf]
      %v5936 = vld [vmem:[%s4 + $0x60] sm:$0xf]
      %v5937 = vld [vmem:[%s4 + $0x64] sm:$0xf]
      %v5938 = vld [vmem:[%s4 + $0x68] sm:$0xf]
      %v5939 = vld [vmem:[%s4 + $0x6c] sm:$0xf]
      %v5940 = vld [vmem:[%s4 + $0x70] sm:$0xf]
      %v5941 = vld [vmem:[%s4 + $0x74] sm:$0xf]
      %v5942 = vld [vmem:[%s4 + $0x78] sm:$0xf]
      %v5943 = vld [vmem:[%s4 + $0x7c] sm:$0xf]
      %v5944 = vld [vmem:[%s4 + $0x80] sm:$0xf]
      %v5945 = vld [vmem:[%s4 + $0x84] sm:$0xf]
      %v5946 = vld [vmem:[%s4 + $0x88] sm:$0xf]
      %v5947 = vld [vmem:[%s4 + $0x8c] sm:$0xf]
      %v5948 = vld [vmem:[%s4 + $0x90] sm:$0xf]
      %v5949 = vld [vmem:[%s4 + $0x94] sm:$0xf]
      %v5950 = vld [vmem:[%s4 + $0x98] sm:$0xf]
      %v5951 = vld [vmem:[%s4 + $0x9c] sm:$0xf]
      %v5952 = vld [vmem:[%s4 + $0xa0] sm:$0xf]
      %v5953 = vld [vmem:[%s4 + $0xa4] sm:$0xf]
      %v5954 = vld [vmem:[%s4 + $0xa8] sm:$0xf]
      %v5955 = vld [vmem:[%s4 + $0xac] sm:$0xf]
      %v5956 = vld [vmem:[%s4 + $0xb0] sm:$0xf]
      %v5957 = vld [vmem:[%s4 + $0xb4] sm:$0xf]
      %v5958 = vld [vmem:[%s4 + $0xb8] sm:$0xf]
      %v5959 = vld [vmem:[%s4 + $0xbc] sm:$0xf]
      %v5960 = vld [vmem:[#allocation3 + $0x90] sm:$0xff]
      %v5961 = vld [vmem:[#allocation3 + $0x98] sm:$0xf]
      %v5962 = vld [vmem:[#allocation3 + $0x9c] sm:$0xff]
      %v5963 = vld [vmem:[#allocation3 + $0xa4] sm:$0xf]
      %v5964 = vld [vmem:[#allocation3 + $0xa8] sm:$0xff]
      %v5965 = vld [vmem:[#allocation3 + $0xb0] sm:$0xf]
      %s5966 = scalar_lea.vmem %s4, 192
      %v5967 = vld [vmem:[%s5966] sm:$0xf]
      %v5968 = vld [vmem:[%s5966 + $0x4] sm:$0xf]
      %v5969 = vld [vmem:[%s5966 + $0x8] sm:$0xf]
      %v5970 = vld [vmem:[%s5966 + $0xc] sm:$0xf]
      %v5971 = vld [vmem:[%s5966 + $0x10] sm:$0xf]
      %v5972 = vld [vmem:[%s5966 + $0x14] sm:$0xf]
      %v5973 = vld [vmem:[%s5966 + $0x18] sm:$0xf]
      %v5974 = vld [vmem:[%s5966 + $0x1c] sm:$0xf]
      %v5975 = vld [vmem:[%s5966 + $0x20] sm:$0xf]
      %v5976 = vld [vmem:[%s5966 + $0x24] sm:$0xf]
      %v5977 = vld [vmem:[%s5966 + $0x28] sm:$0xf]
      %v5978 = vld [vmem:[%s5966 + $0x2c] sm:$0xf]
      %v5979 = vld [vmem:[%s5966 + $0x30] sm:$0xf]
      %v5980 = vld [vmem:[%s5966 + $0x34] sm:$0xf]
      %v5981 = vld [vmem:[%s5966 + $0x38] sm:$0xf]
      %v5982 = vld [vmem:[%s5966 + $0x3c] sm:$0xf]
      %v5983 = vld [vmem:[%s5966 + $0x40] sm:$0xf]
      %v5984 = vld [vmem:[%s5966 + $0x44] sm:$0xf]
      %v5985 = vld [vmem:[%s5966 + $0x48] sm:$0xf]
      %v5986 = vld [vmem:[%s5966 + $0x4c] sm:$0xf]
      %v5987 = vld [vmem:[%s5966 + $0x50] sm:$0xf]
      %v5988 = vld [vmem:[%s5966 + $0x54] sm:$0xf]
      %v5989 = vld [vmem:[%s5966 + $0x58] sm:$0xf]
      %v5990 = vld [vmem:[%s5966 + $0x5c] sm:$0xf]
      %v5991 = vld [vmem:[%s5966 + $0x60] sm:$0xf]
      %v5992 = vld [vmem:[%s5966 + $0x64] sm:$0xf]
      %v5993 = vld [vmem:[%s5966 + $0x68] sm:$0xf]
      %v5994 = vld [vmem:[%s5966 + $0x6c] sm:$0xf]
      %v5995 = vld [vmem:[%s5966 + $0x70] sm:$0xf]
      %v5996 = vld [vmem:[%s5966 + $0x74] sm:$0xf]
      %v5997 = vld [vmem:[%s5966 + $0x78] sm:$0xf]
      %v5998 = vld [vmem:[%s5966 + $0x7c] sm:$0xf]
      %v5999 = vld [vmem:[%s5966 + $0x80] sm:$0xf]
      %v6000 = vld [vmem:[%s5966 + $0x84] sm:$0xf]
      %v6001 = vld [vmem:[%s5966 + $0x88] sm:$0xf]
      %v6002 = vld [vmem:[%s5966 + $0x8c] sm:$0xf]
      %v6003 = vld [vmem:[%s5966 + $0x90] sm:$0xf]
      %v6004 = vld [vmem:[%s5966 + $0x94] sm:$0xf]
      %v6005 = vld [vmem:[%s5966 + $0x98] sm:$0xf]
      %v6006 = vld [vmem:[%s5966 + $0x9c] sm:$0xf]
      %v6007 = vld [vmem:[%s5966 + $0xa0] sm:$0xf]
      %v6008 = vld [vmem:[%s5966 + $0xa4] sm:$0xf]
      %v6009 = vld [vmem:[%s5966 + $0xa8] sm:$0xf]
      %v6010 = vld [vmem:[%s5966 + $0xac] sm:$0xf]
      %v6011 = vld [vmem:[%s5966 + $0xb0] sm:$0xf]
      %v6012 = vld [vmem:[%s5966 + $0xb4] sm:$0xf]
      %v6013 = vld [vmem:[%s5966 + $0xb8] sm:$0xf]
      %v6014 = vld [vmem:[%s5966 + $0xbc] sm:$0xf]
      %v6039 = vunpack.c.l.b16 %v5894
      %v6040 = vunpack.c.h.b16 %v5894
      %v6041 = vunpack.c.l.b16 %v5895
      %v6042 = vunpack.c.l.b16 %v5896
      %v6043 = vunpack.c.h.b16 %v5896
      %v6044 = vunpack.c.l.b16 %v5897
      %v6045 = vunpack.c.l.b16 %v5898
      %v6046 = vunpack.c.h.b16 %v5898
      %v6047 = vunpack.c.l.b16 %v5899
      %v6048 = vunpack.c.l.b16 %v5900
      %v6049 = vunpack.c.h.b16 %v5900
      %v6050 = vunpack.c.l.b16 %v5901
      %v6051 = vunpack.c.l.b16 %v5902
      %v6052 = vunpack.c.h.b16 %v5902
      %v6053 = vunpack.c.l.b16 %v5903
      %v6054 = vunpack.c.l.b16 %v5904
      %v6055 = vunpack.c.h.b16 %v5904
      %v6056 = vunpack.c.l.b16 %v5905
      %v6057 = vunpack.c.l.b16 %v5906
      %v6058 = vunpack.c.h.b16 %v5906
      %v6059 = vunpack.c.l.b16 %v5907
      %v6060 = vunpack.c.l.b16 %v5908
      %v6061 = vunpack.c.h.b16 %v5908
      %v6062 = vunpack.c.l.b16 %v5909
      %v6063 = vunpack.c.l.b16 %v5910
      %v6064 = vunpack.c.h.b16 %v5910
      %v6065 = vunpack.c.l.b16 %v5911
      %v6066 = vunpack.c.l.b16 %v5960
      %v6067 = vunpack.c.h.b16 %v5960
      %v6068 = vunpack.c.l.b16 %v5961
      %v6069 = vunpack.c.l.b16 %v5962
      %v6070 = vunpack.c.h.b16 %v5962
      %v6071 = vunpack.c.l.b16 %v5963
      %v6072 = vunpack.c.l.b16 %v5964
      %v6073 = vunpack.c.h.b16 %v5964
      %v6074 = vunpack.c.l.b16 %v5965
      %v6075 = vpack.c.b16 %v6042, %v6039
      %v6076 = vpack.c.b16 %v6043, %v6040
      %v6077 = vpack.c.b16 %v6044, %v6041
      %v6078 = vpack.c.b16 %v6048, %v6045
      %v6079 = vpack.c.b16 %v6049, %v6046
      %v6080 = vpack.c.b16 %v6050, %v6047
      %v6081 = vpack.c.b16 %v6054, %v6051
      %v6082 = vpack.c.b16 %v6055, %v6052
      %v6083 = vpack.c.b16 %v6056, %v6053
      %v6084 = vpack.c.b16 %v6060, %v6057
      %v6085 = vpack.c.b16 %v6061, %v6058
      %v6086 = vpack.c.b16 %v6062, %v6059
      %v6087 = vpack.c.b16 %v6066, %v6063
      %v6088 = vpack.c.b16 %v6067, %v6064
      %v6089 = vpack.c.b16 %v6068, %v6065
      %v6090 = vpack.c.b16 %v6072, %v6069
      %v6091 = vpack.c.b16 %v6073, %v6070
      %v6092 = vpack.c.b16 %v6074, %v6071
      %v6159 = vunpack.c.l.b16 %v5967
      %v6160 = vunpack.c.l.b16 %v5968
      %v6161 = vunpack.c.l.b16 %v5969
      %v6162 = vunpack.c.l.b16 %v5970
      %v6163 = vunpack.c.l.b16 %v5971
      %v6164 = vunpack.c.l.b16 %v5972
      %v6165 = vunpack.c.l.b16 %v5973
      %v6166 = vunpack.c.l.b16 %v5974
      %v6167 = vunpack.c.l.b16 %v5975
      %v6168 = vunpack.c.l.b16 %v5976
      %v6169 = vunpack.c.l.b16 %v5977
      %v6170 = vunpack.c.l.b16 %v5978
      %v6171 = vunpack.c.l.b16 %v5979
      %v6172 = vunpack.c.l.b16 %v5980
      %v6173 = vunpack.c.l.b16 %v5981
      %v6174 = vunpack.c.l.b16 %v5982
      %v6175 = vunpack.c.l.b16 %v5983
      %v6176 = vunpack.c.l.b16 %v5984
      %v6177 = vunpack.c.l.b16 %v5985
      %v6178 = vunpack.c.l.b16 %v5986
      %v6179 = vunpack.c.l.b16 %v5987
      %v6180 = vunpack.c.l.b16 %v5988
      %v6181 = vunpack.c.l.b16 %v5989
      %v6182 = vunpack.c.l.b16 %v5990
      %v6183 = vunpack.c.l.b16 %v5991
      %v6184 = vunpack.c.l.b16 %v5992
      %v6185 = vunpack.c.l.b16 %v5993
      %v6186 = vunpack.c.l.b16 %v5994
      %v6187 = vunpack.c.l.b16 %v5995
      %v6188 = vunpack.c.l.b16 %v5996
      %v6189 = vunpack.c.l.b16 %v5997
      %v6190 = vunpack.c.l.b16 %v5998
      %v6191 = vunpack.c.l.b16 %v5999
      %v6192 = vunpack.c.l.b16 %v6000
      %v6193 = vunpack.c.l.b16 %v6001
      %v6194 = vunpack.c.l.b16 %v6002
      %v6195 = vunpack.c.l.b16 %v6003
      %v6196 = vunpack.c.l.b16 %v6004
      %v6197 = vunpack.c.l.b16 %v6005
      %v6198 = vunpack.c.l.b16 %v6006
      %v6199 = vunpack.c.l.b16 %v6007
      %v6200 = vunpack.c.l.b16 %v6008
      %v6201 = vunpack.c.l.b16 %v6009
      %v6202 = vunpack.c.l.b16 %v6010
      %v6203 = vunpack.c.l.b16 %v6011
      %v6204 = vunpack.c.l.b16 %v6012
      %v6205 = vunpack.c.l.b16 %v6013
      %v6206 = vunpack.c.l.b16 %v6014
      %v6207 = vpack.c.b16 %v6160, %v6159
      %v6208 = vpack.c.b16 %v6162, %v6161
      %v6209 = vpack.c.b16 %v6164, %v6163
      %v6210 = vpack.c.b16 %v6166, %v6165
      %v6211 = vpack.c.b16 %v6168, %v6167
      %v6212 = vpack.c.b16 %v6170, %v6169
      %v6213 = vpack.c.b16 %v6172, %v6171
      %v6214 = vpack.c.b16 %v6174, %v6173
      %v6215 = vpack.c.b16 %v6176, %v6175
      %v6216 = vpack.c.b16 %v6178, %v6177
      %v6217 = vpack.c.b16 %v6180, %v6179
      %v6218 = vpack.c.b16 %v6182, %v6181
      %v6219 = vpack.c.b16 %v6184, %v6183
      %v6220 = vpack.c.b16 %v6186, %v6185
      %v6221 = vpack.c.b16 %v6188, %v6187
      %v6222 = vpack.c.b16 %v6190, %v6189
      %v6223 = vpack.c.b16 %v6192, %v6191
      %v6224 = vpack.c.b16 %v6194, %v6193
      %v6225 = vpack.c.b16 %v6196, %v6195
      %v6226 = vpack.c.b16 %v6198, %v6197
      %v6227 = vpack.c.b16 %v6200, %v6199
      %v6228 = vpack.c.b16 %v6202, %v6201
      %v6229 = vpack.c.b16 %v6204, %v6203
      %v6230 = vpack.c.b16 %v6206, %v6205
      %6255 = vmatprep.subr.bf16.mxu0 0
      %6256 = vmatpush1.bf16.msra.mxu0 %v6214
      %6257 = vmatprep.subr.bf16.mxu0 0
      %6258 = vmatpush1.bf16.msra.mxu0 %v6213
      %6259 = vmatprep.subr.bf16.mxu0 0
      %6260 = vmatpush1.bf16.msra.mxu0 %v6212
      %6261 = vmatprep.subr.bf16.mxu0 0
      %6262 = vmatpush1.bf16.msra.mxu0 %v6211
      %6263 = vmatprep.subr.bf16.mxu0 0
      %6264 = vmatpush1.bf16.msra.mxu0 %v6210
      %6265 = vmatprep.subr.bf16.mxu0 0
      %6266 = vmatpush1.bf16.msra.mxu0 %v6209
      %6267 = vmatprep.subr.bf16.mxu0 0
      %6268 = vmatpush1.bf16.msra.mxu0 %v6208
      %6269 = vmatprep.subr.bf16.mxu0 0
      %6270 = vmatpush1.bf16.msra.mxu0 %v6207
      %6271 = vmatprep.subr.bf16.mxu0 0
      %6272 = vmatpush2.bf16.msra.mxu0 %v6222
      %6273 = vmatprep.subr.bf16.mxu0 0
      %6274 = vmatpush2.bf16.msra.mxu0 %v6221
      %6275 = vmatprep.subr.bf16.mxu0 0
      %6276 = vmatpush2.bf16.msra.mxu0 %v6220
      %6277 = vmatprep.subr.bf16.mxu0 0
      %6278 = vmatpush2.bf16.msra.mxu0 %v6219
      %6279 = vmatprep.subr.bf16.mxu0 0
      %6280 = vmatpush2.bf16.msra.mxu0 %v6218
      %6281 = vmatprep.subr.bf16.mxu0 0
      %6282 = vmatpush2.bf16.msra.mxu0 %v6217
      %6283 = vmatprep.subr.bf16.mxu0 0
      %6284 = vmatpush2.bf16.msra.mxu0 %v6216
      %6285 = vmatprep.subr.bf16.mxu0 0
      %6286 = vmatpush2.bf16.msra.mxu0 %v6215
      %6287 = vmatprep.mubr.bf16.mxu0 %v6076
      %6288 = vmatmul.mubr.bf16.gmra.mxu0 %v6075
      %v6289 = vpop.f32.mrf.mxu0
      %v6290 = vadd.f32 0.0, %v6289
      %v6291 = vpop.f32.mrf.mxu0
      %v6292 = vpop.f32.mrf.mxu0
      %v6293 = vadd.f32 0.0, %v6292
      %v6294 = vpop.f32.mrf.mxu0
      %6295 = vmatprep.mubr.bf16.mxu0 %v6079
      %6296 = vmatmul.mubr.bf16.gmra.mxu0 %v6078
      %v6297 = vpop.f32.mrf.mxu0
      %v6298 = vpop.f32.mrf.mxu0
      %v6299 = vpop.f32.mrf.mxu0
      %v6300 = vadd.f32 0.0, %v6299
      %v6301 = vpop.f32.mrf.mxu0
      %6302 = vmatprep.mubr.bf16.mxu0 %v6082
      %6303 = vmatmul.mubr.bf16.gmra.mxu0 %v6081
      %v6304 = vpop.f32.mrf.mxu0
      %v6305 = vadd.f32 0.0, %v6304
      %v6306 = vpop.f32.mrf.mxu0
      %v6307 = vpop.f32.mrf.mxu0
      %v6308 = vpop.f32.mrf.mxu0
      %6309 = vmatprep.mubr.bf16.mxu0 %v6085
      %6310 = vmatmul.mubr.bf16.gmra.mxu0 %v6084
      %v6311 = vpop.f32.mrf.mxu0
      %v6312 = vadd.f32 0.0, %v6311
      %v6313 = vpop.f32.mrf.mxu0
      %v6314 = vpop.f32.mrf.mxu0
      %v6315 = vadd.f32 0.0, %v6314
      %v6316 = vpop.f32.mrf.mxu0
      %6317 = vmatprep.mubr.bf16.mxu0 %v6088
      %6318 = vmatmul.mubr.bf16.gmra.mxu0 %v6087
      %v6319 = vpop.f32.mrf.mxu0
      %v6320 = vpop.f32.mrf.mxu0
      %v6321 = vpop.f32.mrf.mxu0
      %v6322 = vadd.f32 0.0, %v6321
      %v6323 = vpop.f32.mrf.mxu0
      %6324 = vmatprep.mubr.bf16.mxu0 %v6091
      %6325 = vmatmul.mubr.bf16.gmra.mxu0 %v6090
      %v6326 = vpop.f32.mrf.mxu0
      %v6327 = vadd.f32 0.0, %v6326
      %v6328 = vpop.f32.mrf.mxu0
      %v6329 = vpop.f32.mrf.mxu0
      %v6330 = vpop.f32.mrf.mxu0
      %6331 = vdwg.mxu0
      %6332 = vmatprep.subr.bf16.mxu0 0
      %6333 = vmatpush1.bf16.msra.mxu0 %v6230
      %6334 = vmatprep.subr.bf16.mxu0 0
      %6335 = vmatpush1.bf16.msra.mxu0 %v6229
      %6336 = vmatprep.subr.bf16.mxu0 0
      %6337 = vmatpush1.bf16.msra.mxu0 %v6228
      %6338 = vmatprep.subr.bf16.mxu0 0
      %6339 = vmatpush1.bf16.msra.mxu0 %v6227
      %6340 = vmatprep.subr.bf16.mxu0 0
      %6341 = vmatpush1.bf16.msra.mxu0 %v6226
      %6342 = vmatprep.subr.bf16.mxu0 0
      %6343 = vmatpush1.bf16.msra.mxu0 %v6225
      %6344 = vmatprep.subr.bf16.mxu0 0
      %6345 = vmatpush1.bf16.msra.mxu0 %v6224
      %6346 = vmatprep.subr.bf16.mxu0 0
      %6347 = vmatpush1.bf16.msra.mxu0 %v6223
      %6348 = vmatprep.subr.bf16.mxu0 0
      %6349 = vmatpush2.bf16.msra.mxu0 0
      %6350 = vmatprep.subr.bf16.mxu0 0
      %6351 = vmatpush2.bf16.msra.mxu0 0
      %6352 = vmatprep.subr.bf16.mxu0 0
      %6353 = vmatpush2.bf16.msra.mxu0 0
      %6354 = vmatprep.subr.bf16.mxu0 0
      %6355 = vmatpush2.bf16.msra.mxu0 0
      %6356 = vmatprep.subr.bf16.mxu0 0
      %6357 = vmatpush2.bf16.msra.mxu0 0
      %6358 = vmatprep.subr.bf16.mxu0 0
      %6359 = vmatpush2.bf16.msra.mxu0 0
      %6360 = vmatprep.subr.bf16.mxu0 0
      %6361 = vmatpush2.bf16.msra.mxu0 0
      %6362 = vmatprep.subr.bf16.mxu0 0
      %6363 = vmatpush2.bf16.msra.mxu0 0
      %6364 = vmatprep.mubr.bf16.mxu0 0
      %6365 = vmatmul.mubr.bf16.gmra.mxu0 %v6077
      %v6366 = vpop.f32.mrf.mxu0
      %v6367 = vadd.f32 %v6290, %v6366
      %v6368 = vpop.f32.mrf.mxu0
      %v6369 = vpop.f32.mrf.mxu0
      %v6370 = vadd.f32 %v6293, %v6369
      %v6371 = vpop.f32.mrf.mxu0
      %6372 = vmatprep.mubr.bf16.mxu0 0
      %6373 = vmatmul.mubr.bf16.gmra.mxu0 %v6080
      %v6374 = vpop.f32.mrf.mxu0
      %v6375 = vpop.f32.mrf.mxu0
      %v6376 = vpop.f32.mrf.mxu0
      %v6377 = vadd.f32 %v6300, %v6376
      %v6378 = vpop.f32.mrf.mxu0
      %6379 = vmatprep.mubr.bf16.mxu0 0
      %6380 = vmatmul.mubr.bf16.gmra.mxu0 %v6083
      %v6381 = vpop.f32.mrf.mxu0
      %v6382 = vadd.f32 %v6305, %v6381
      %v6383 = vpop.f32.mrf.mxu0
      %v6384 = vpop.f32.mrf.mxu0
      %v6385 = vpop.f32.mrf.mxu0
      %6386 = vmatprep.mubr.bf16.mxu0 0
      %6387 = vmatmul.mubr.bf16.gmra.mxu0 %v6086
      %v6388 = vpop.f32.mrf.mxu0
      %v6389 = vadd.f32 %v6312, %v6388
      %v6390 = vpop.f32.mrf.mxu0
      %v6391 = vpop.f32.mrf.mxu0
      %v6392 = vadd.f32 %v6315, %v6391
      %v6393 = vpop.f32.mrf.mxu0
      %6394 = vmatprep.mubr.bf16.mxu0 0
      %6395 = vmatmul.mubr.bf16.gmra.mxu0 %v6089
      %v6396 = vpop.f32.mrf.mxu0
      %v6397 = vpop.f32.mrf.mxu0
      %v6398 = vpop.f32.mrf.mxu0
      %v6399 = vadd.f32 %v6322, %v6398
      %v6400 = vpop.f32.mrf.mxu0
      %6401 = vmatprep.mubr.bf16.mxu0 0
      %6402 = vmatmul.mubr.bf16.gmra.mxu0 %v6092
      %v6403 = vpop.f32.mrf.mxu0
      %v6404 = vadd.f32 %v6327, %v6403
      %v6405 = vpop.f32.mrf.mxu0
      %v6406 = vpop.f32.mrf.mxu0
      %v6407 = vpop.f32.mrf.mxu0
      %6408 = vdwg.mxu0
      %v6415 = vunpack.c.l.b16 %v5888
      %v6416 = vunpack.c.h.b16 %v5888
      %v6417 = vunpack.c.l.b16 %v5889
      %v6418 = vunpack.c.l.b16 %v5890
      %v6419 = vunpack.c.h.b16 %v5890
      %v6420 = vunpack.c.l.b16 %v5891
      %v6421 = vunpack.c.l.b16 %v5892
      %v6422 = vunpack.c.h.b16 %v5892
      %v6423 = vunpack.c.l.b16 %v5893
      %v6424 = vpack.c.b16 %v6418, %v6415
      %v6425 = vpack.c.b16 %v6419, %v6416
      %v6426 = vpack.c.b16 %v6420, %v6417
      %v6427 = vpack.c.b16 %v6039, %v6421
      %v6428 = vpack.c.b16 %v6040, %v6422
      %v6429 = vpack.c.b16 %v6041, %v6423
      %v6430 = vpack.c.b16 %v6045, %v6042
      %v6431 = vpack.c.b16 %v6046, %v6043
      %v6432 = vpack.c.b16 %v6047, %v6044
      %v6433 = vpack.c.b16 %v6051, %v6048
      %v6434 = vpack.c.b16 %v6052, %v6049
      %v6435 = vpack.c.b16 %v6053, %v6050
      %v6436 = vpack.c.b16 %v6057, %v6054
      %v6437 = vpack.c.b16 %v6058, %v6055
      %v6438 = vpack.c.b16 %v6059, %v6056
      %v6439 = vpack.c.b16 %v6063, %v6060
      %v6440 = vpack.c.b16 %v6064, %v6061
      %v6441 = vpack.c.b16 %v6065, %v6062
      %v6508 = vunpack.c.l.b16 %v5912
      %v6509 = vunpack.c.l.b16 %v5913
      %v6510 = vunpack.c.l.b16 %v5914
      %v6511 = vunpack.c.l.b16 %v5915
      %v6512 = vunpack.c.l.b16 %v5916
      %v6513 = vunpack.c.l.b16 %v5917
      %v6514 = vunpack.c.l.b16 %v5918
      %v6515 = vunpack.c.l.b16 %v5919
      %v6516 = vunpack.c.l.b16 %v5920
      %v6517 = vunpack.c.l.b16 %v5921
      %v6518 = vunpack.c.l.b16 %v5922
      %v6519 = vunpack.c.l.b16 %v5923
      %v6520 = vunpack.c.l.b16 %v5924
      %v6521 = vunpack.c.l.b16 %v5925
      %v6522 = vunpack.c.l.b16 %v5926
      %v6523 = vunpack.c.l.b16 %v5927
      %v6524 = vunpack.c.l.b16 %v5928
      %v6525 = vunpack.c.l.b16 %v5929
      %v6526 = vunpack.c.l.b16 %v5930
      %v6527 = vunpack.c.l.b16 %v5931
      %v6528 = vunpack.c.l.b16 %v5932
      %v6529 = vunpack.c.l.b16 %v5933
      %v6530 = vunpack.c.l.b16 %v5934
      %v6531 = vunpack.c.l.b16 %v5935
      %v6532 = vunpack.c.l.b16 %v5936
      %v6533 = vunpack.c.l.b16 %v5937
      %v6534 = vunpack.c.l.b16 %v5938
      %v6535 = vunpack.c.l.b16 %v5939
      %v6536 = vunpack.c.l.b16 %v5940
      %v6537 = vunpack.c.l.b16 %v5941
      %v6538 = vunpack.c.l.b16 %v5942
      %v6539 = vunpack.c.l.b16 %v5943
      %v6540 = vunpack.c.l.b16 %v5944
      %v6541 = vunpack.c.l.b16 %v5945
      %v6542 = vunpack.c.l.b16 %v5946
      %v6543 = vunpack.c.l.b16 %v5947
      %v6544 = vunpack.c.l.b16 %v5948
      %v6545 = vunpack.c.l.b16 %v5949
      %v6546 = vunpack.c.l.b16 %v5950
      %v6547 = vunpack.c.l.b16 %v5951
      %v6548 = vunpack.c.l.b16 %v5952
      %v6549 = vunpack.c.l.b16 %v5953
      %v6550 = vunpack.c.l.b16 %v5954
      %v6551 = vunpack.c.l.b16 %v5955
      %v6552 = vunpack.c.l.b16 %v5956
      %v6553 = vunpack.c.l.b16 %v5957
      %v6554 = vunpack.c.l.b16 %v5958
      %v6555 = vunpack.c.l.b16 %v5959
      %v6556 = vpack.c.b16 %v6509, %v6508
      %v6557 = vpack.c.b16 %v6511, %v6510
      %v6558 = vpack.c.b16 %v6513, %v6512
      %v6559 = vpack.c.b16 %v6515, %v6514
      %v6560 = vpack.c.b16 %v6517, %v6516
      %v6561 = vpack.c.b16 %v6519, %v6518
      %v6562 = vpack.c.b16 %v6521, %v6520
      %v6563 = vpack.c.b16 %v6523, %v6522
      %v6564 = vpack.c.b16 %v6525, %v6524
      %v6565 = vpack.c.b16 %v6527, %v6526
      %v6566 = vpack.c.b16 %v6529, %v6528
      %v6567 = vpack.c.b16 %v6531, %v6530
      %v6568 = vpack.c.b16 %v6533, %v6532
      %v6569 = vpack.c.b16 %v6535, %v6534
      %v6570 = vpack.c.b16 %v6537, %v6536
      %v6571 = vpack.c.b16 %v6539, %v6538
      %v6572 = vpack.c.b16 %v6541, %v6540
      %v6573 = vpack.c.b16 %v6543, %v6542
      %v6574 = vpack.c.b16 %v6545, %v6544
      %v6575 = vpack.c.b16 %v6547, %v6546
      %v6576 = vpack.c.b16 %v6549, %v6548
      %v6577 = vpack.c.b16 %v6551, %v6550
      %v6578 = vpack.c.b16 %v6553, %v6552
      %v6579 = vpack.c.b16 %v6555, %v6554
      %6604 = vmatprep.subr.bf16.mxu0 0
      %6605 = vmatpush1.bf16.msra.mxu0 %v6563
      %6606 = vmatprep.subr.bf16.mxu0 0
      %6607 = vmatpush1.bf16.msra.mxu0 %v6562
      %6608 = vmatprep.subr.bf16.mxu0 0
      %6609 = vmatpush1.bf16.msra.mxu0 %v6561
      %6610 = vmatprep.subr.bf16.mxu0 0
      %6611 = vmatpush1.bf16.msra.mxu0 %v6560
      %6612 = vmatprep.subr.bf16.mxu0 0
      %6613 = vmatpush1.bf16.msra.mxu0 %v6559
      %6614 = vmatprep.subr.bf16.mxu0 0
      %6615 = vmatpush1.bf16.msra.mxu0 %v6558
      %6616 = vmatprep.subr.bf16.mxu0 0
      %6617 = vmatpush1.bf16.msra.mxu0 %v6557
      %6618 = vmatprep.subr.bf16.mxu0 0
      %6619 = vmatpush1.bf16.msra.mxu0 %v6556
      %6620 = vmatprep.subr.bf16.mxu0 0
      %6621 = vmatpush2.bf16.msra.mxu0 %v6571
      %6622 = vmatprep.subr.bf16.mxu0 0
      %6623 = vmatpush2.bf16.msra.mxu0 %v6570
      %6624 = vmatprep.subr.bf16.mxu0 0
      %6625 = vmatpush2.bf16.msra.mxu0 %v6569
      %6626 = vmatprep.subr.bf16.mxu0 0
      %6627 = vmatpush2.bf16.msra.mxu0 %v6568
      %6628 = vmatprep.subr.bf16.mxu0 0
      %6629 = vmatpush2.bf16.msra.mxu0 %v6567
      %6630 = vmatprep.subr.bf16.mxu0 0
      %6631 = vmatpush2.bf16.msra.mxu0 %v6566
      %6632 = vmatprep.subr.bf16.mxu0 0
      %6633 = vmatpush2.bf16.msra.mxu0 %v6565
      %6634 = vmatprep.subr.bf16.mxu0 0
      %6635 = vmatpush2.bf16.msra.mxu0 %v6564
      %6636 = vmatprep.mubr.bf16.mxu0 %v6425
      %6637 = vmatmul.mubr.bf16.gmra.mxu0 %v6424
      %v6638 = vpop.f32.mrf.mxu0
      %v6639 = vadd.f32 %v6367, %v6638
      %v6640 = vpop.f32.mrf.mxu0
      %v6641 = vpop.f32.mrf.mxu0
      %v6642 = vadd.f32 %v6370, %v6641
      %v6643 = vpop.f32.mrf.mxu0
      %6644 = vmatprep.mubr.bf16.mxu0 %v6428
      %6645 = vmatmul.mubr.bf16.gmra.mxu0 %v6427
      %v6646 = vpop.f32.mrf.mxu0
      %v6647 = vpop.f32.mrf.mxu0
      %v6648 = vpop.f32.mrf.mxu0
      %v6649 = vadd.f32 %v6377, %v6648
      %v6650 = vpop.f32.mrf.mxu0
      %6651 = vmatprep.mubr.bf16.mxu0 %v6431
      %6652 = vmatmul.mubr.bf16.gmra.mxu0 %v6430
      %v6653 = vpop.f32.mrf.mxu0
      %v6654 = vadd.f32 %v6382, %v6653
      %v6655 = vpop.f32.mrf.mxu0
      %v6656 = vpop.f32.mrf.mxu0
      %v6657 = vpop.f32.mrf.mxu0
      %6658 = vmatprep.mubr.bf16.mxu0 %v6434
      %6659 = vmatmul.mubr.bf16.gmra.mxu0 %v6433
      %v6660 = vpop.f32.mrf.mxu0
      %v6661 = vadd.f32 %v6389, %v6660
      %v6662 = vpop.f32.mrf.mxu0
      %v6663 = vpop.f32.mrf.mxu0
      %v6664 = vadd.f32 %v6392, %v6663
      %v6665 = vpop.f32.mrf.mxu0
      %6666 = vmatprep.mubr.bf16.mxu0 %v6437
      %6667 = vmatmul.mubr.bf16.gmra.mxu0 %v6436
      %v6668 = vpop.f32.mrf.mxu0
      %v6669 = vpop.f32.mrf.mxu0
      %v6670 = vpop.f32.mrf.mxu0
      %v6671 = vadd.f32 %v6399, %v6670
      %v6672 = vpop.f32.mrf.mxu0
      %6673 = vmatprep.mubr.bf16.mxu0 %v6440
      %6674 = vmatmul.mubr.bf16.gmra.mxu0 %v6439
      %v6675 = vpop.f32.mrf.mxu0
      %v6676 = vadd.f32 %v6404, %v6675
      %v6677 = vpop.f32.mrf.mxu0
      %v6678 = vpop.f32.mrf.mxu0
      %v6679 = vpop.f32.mrf.mxu0
      %6680 = vdwg.mxu0
      %6681 = vmatprep.subr.bf16.mxu0 0
      %6682 = vmatpush1.bf16.msra.mxu0 %v6579
      %6683 = vmatprep.subr.bf16.mxu0 0
      %6684 = vmatpush1.bf16.msra.mxu0 %v6578
      %6685 = vmatprep.subr.bf16.mxu0 0
      %6686 = vmatpush1.bf16.msra.mxu0 %v6577
      %6687 = vmatprep.subr.bf16.mxu0 0
      %6688 = vmatpush1.bf16.msra.mxu0 %v6576
      %6689 = vmatprep.subr.bf16.mxu0 0
      %6690 = vmatpush1.bf16.msra.mxu0 %v6575
      %6691 = vmatprep.subr.bf16.mxu0 0
      %6692 = vmatpush1.bf16.msra.mxu0 %v6574
      %6693 = vmatprep.subr.bf16.mxu0 0
      %6694 = vmatpush1.bf16.msra.mxu0 %v6573
      %6695 = vmatprep.subr.bf16.mxu0 0
      %6696 = vmatpush1.bf16.msra.mxu0 %v6572
      %6697 = vmatprep.subr.bf16.mxu0 0
      %6698 = vmatpush2.bf16.msra.mxu0 0
      %6699 = vmatprep.subr.bf16.mxu0 0
      %6700 = vmatpush2.bf16.msra.mxu0 0
      %6701 = vmatprep.subr.bf16.mxu0 0
      %6702 = vmatpush2.bf16.msra.mxu0 0
      %6703 = vmatprep.subr.bf16.mxu0 0
      %6704 = vmatpush2.bf16.msra.mxu0 0
      %6705 = vmatprep.subr.bf16.mxu0 0
      %6706 = vmatpush2.bf16.msra.mxu0 0
      %6707 = vmatprep.subr.bf16.mxu0 0
      %6708 = vmatpush2.bf16.msra.mxu0 0
      %6709 = vmatprep.subr.bf16.mxu0 0
      %6710 = vmatpush2.bf16.msra.mxu0 0
      %6711 = vmatprep.subr.bf16.mxu0 0
      %6712 = vmatpush2.bf16.msra.mxu0 0
      %6713 = vmatprep.mubr.bf16.mxu0 0
      %6714 = vmatmul.mubr.bf16.gmra.mxu0 %v6426
      %v6715 = vpop.f32.mrf.mxu0
      %v6716 = vadd.f32 %v6639, %v6715
      %v6717 = vpop.f32.mrf.mxu0
      %v6718 = vpop.f32.mrf.mxu0
      %v6719 = vadd.f32 %v6642, %v6718
      %v6720 = vpop.f32.mrf.mxu0
      %6721 = vmatprep.mubr.bf16.mxu0 0
      %6722 = vmatmul.mubr.bf16.gmra.mxu0 %v6429
      %v6723 = vpop.f32.mrf.mxu0
      %v6724 = vpop.f32.mrf.mxu0
      %v6725 = vpop.f32.mrf.mxu0
      %v6726 = vadd.f32 %v6649, %v6725
      %v6727 = vpop.f32.mrf.mxu0
      %6728 = vmatprep.mubr.bf16.mxu0 0
      %6729 = vmatmul.mubr.bf16.gmra.mxu0 %v6432
      %v6730 = vpop.f32.mrf.mxu0
      %v6731 = vadd.f32 %v6654, %v6730
      %v6732 = vpop.f32.mrf.mxu0
      %v6733 = vpop.f32.mrf.mxu0
      %v6734 = vpop.f32.mrf.mxu0
      %6735 = vmatprep.mubr.bf16.mxu0 0
      %6736 = vmatmul.mubr.bf16.gmra.mxu0 %v6435
      %v6737 = vpop.f32.mrf.mxu0
      %v6738 = vadd.f32 %v6661, %v6737
      %v6739 = vpop.f32.mrf.mxu0
      %v6740 = vpop.f32.mrf.mxu0
      %v6741 = vadd.f32 %v6664, %v6740
      %v6742 = vpop.f32.mrf.mxu0
      %6743 = vmatprep.mubr.bf16.mxu0 0
      %6744 = vmatmul.mubr.bf16.gmra.mxu0 %v6438
      %v6745 = vpop.f32.mrf.mxu0
      %v6746 = vpop.f32.mrf.mxu0
      %v6747 = vpop.f32.mrf.mxu0
      %v6748 = vadd.f32 %v6671, %v6747
      %v6749 = vpop.f32.mrf.mxu0
      %6750 = vmatprep.mubr.bf16.mxu0 0
      %6751 = vmatmul.mubr.bf16.gmra.mxu0 %v6441
      %v6752 = vpop.f32.mrf.mxu0
      %v6753 = vadd.f32 %v6676, %v6752
      %v6754 = vpop.f32.mrf.mxu0
      %v6755 = vpop.f32.mrf.mxu0
      %v6756 = vpop.f32.mrf.mxu0
      %6757 = vdwg.mxu0
      %v6758 = vld [vmem:[#allocation3 + $0x48] sm:$0xff]
      %v6759 = vld [vmem:[#allocation3 + $0x50] sm:$0xf]
      %v6760 = vld [vmem:[#allocation3 + $0x54] sm:$0xff]
      %v6761 = vld [vmem:[#allocation3 + $0x5c] sm:$0xf]
      %v6762 = vld [vmem:[#allocation3 + $0x60] sm:$0xff]
      %v6763 = vld [vmem:[#allocation3 + $0x68] sm:$0xf]
      %v6764 = vld [vmem:[#allocation3 + $0x6c] sm:$0xff]
      %v6765 = vld [vmem:[#allocation3 + $0x74] sm:$0xf]
      %v6766 = vld [vmem:[#allocation3 + $0x78] sm:$0xff]
      %v6767 = vld [vmem:[#allocation3 + $0x80] sm:$0xf]
      %v6768 = vld [vmem:[#allocation3 + $0x84] sm:$0xff]
      %v6769 = vld [vmem:[#allocation3 + $0x8c] sm:$0xf]
      %v6770 = vld [vmem:[#allocation3 + $0x90] sm:$0xff]
      %v6771 = vld [vmem:[#allocation3 + $0x98] sm:$0xf]
      %v6772 = vld [vmem:[#allocation3 + $0x9c] sm:$0xff]
      %v6773 = vld [vmem:[#allocation3 + $0xa4] sm:$0xf]
      %v6774 = vld [vmem:[#allocation3 + $0xa8] sm:$0xff]
      %v6775 = vld [vmem:[#allocation3 + $0xb0] sm:$0xf]
      %v6776 = vld [vmem:[#allocation3 + $0xb4] sm:$0xff]
      %v6777 = vld [vmem:[#allocation3 + $0xbc] sm:$0xf]
      %v6778 = vld [vmem:[#allocation3 + $0xc0] sm:$0xff]
      %v6779 = vld [vmem:[#allocation3 + $0xc8] sm:$0xf]
      %v6780 = vld [vmem:[#allocation3 + $0xcc] sm:$0xff]
      %v6781 = vld [vmem:[#allocation3 + $0xd4] sm:$0xf]
      %s6782 = scalar_lea.vmem %s4, 384
      %v6783 = vld [vmem:[%s6782] sm:$0xf]
      %v6784 = vld [vmem:[%s6782 + $0x4] sm:$0xf]
      %v6785 = vld [vmem:[%s6782 + $0x8] sm:$0xf]
      %v6786 = vld [vmem:[%s6782 + $0xc] sm:$0xf]
      %v6787 = vld [vmem:[%s6782 + $0x10] sm:$0xf]
      %v6788 = vld [vmem:[%s6782 + $0x14] sm:$0xf]
      %v6789 = vld [vmem:[%s6782 + $0x18] sm:$0xf]
      %v6790 = vld [vmem:[%s6782 + $0x1c] sm:$0xf]
      %v6791 = vld [vmem:[%s6782 + $0x20] sm:$0xf]
      %v6792 = vld [vmem:[%s6782 + $0x24] sm:$0xf]
      %v6793 = vld [vmem:[%s6782 + $0x28] sm:$0xf]
      %v6794 = vld [vmem:[%s6782 + $0x2c] sm:$0xf]
      %v6795 = vld [vmem:[%s6782 + $0x30] sm:$0xf]
      %v6796 = vld [vmem:[%s6782 + $0x34] sm:$0xf]
      %v6797 = vld [vmem:[%s6782 + $0x38] sm:$0xf]
      %v6798 = vld [vmem:[%s6782 + $0x3c] sm:$0xf]
      %v6799 = vld [vmem:[%s6782 + $0x40] sm:$0xf]
      %v6800 = vld [vmem:[%s6782 + $0x44] sm:$0xf]
      %v6801 = vld [vmem:[%s6782 + $0x48] sm:$0xf]
      %v6802 = vld [vmem:[%s6782 + $0x4c] sm:$0xf]
      %v6803 = vld [vmem:[%s6782 + $0x50] sm:$0xf]
      %v6804 = vld [vmem:[%s6782 + $0x54] sm:$0xf]
      %v6805 = vld [vmem:[%s6782 + $0x58] sm:$0xf]
      %v6806 = vld [vmem:[%s6782 + $0x5c] sm:$0xf]
      %v6807 = vld [vmem:[%s6782 + $0x60] sm:$0xf]
      %v6808 = vld [vmem:[%s6782 + $0x64] sm:$0xf]
      %v6809 = vld [vmem:[%s6782 + $0x68] sm:$0xf]
      %v6810 = vld [vmem:[%s6782 + $0x6c] sm:$0xf]
      %v6811 = vld [vmem:[%s6782 + $0x70] sm:$0xf]
      %v6812 = vld [vmem:[%s6782 + $0x74] sm:$0xf]
      %v6813 = vld [vmem:[%s6782 + $0x78] sm:$0xf]
      %v6814 = vld [vmem:[%s6782 + $0x7c] sm:$0xf]
      %v6815 = vld [vmem:[%s6782 + $0x80] sm:$0xf]
      %v6816 = vld [vmem:[%s6782 + $0x84] sm:$0xf]
      %v6817 = vld [vmem:[%s6782 + $0x88] sm:$0xf]
      %v6818 = vld [vmem:[%s6782 + $0x8c] sm:$0xf]
      %v6819 = vld [vmem:[%s6782 + $0x90] sm:$0xf]
      %v6820 = vld [vmem:[%s6782 + $0x94] sm:$0xf]
      %v6821 = vld [vmem:[%s6782 + $0x98] sm:$0xf]
      %v6822 = vld [vmem:[%s6782 + $0x9c] sm:$0xf]
      %v6823 = vld [vmem:[%s6782 + $0xa0] sm:$0xf]
      %v6824 = vld [vmem:[%s6782 + $0xa4] sm:$0xf]
      %v6825 = vld [vmem:[%s6782 + $0xa8] sm:$0xf]
      %v6826 = vld [vmem:[%s6782 + $0xac] sm:$0xf]
      %v6827 = vld [vmem:[%s6782 + $0xb0] sm:$0xf]
      %v6828 = vld [vmem:[%s6782 + $0xb4] sm:$0xf]
      %v6829 = vld [vmem:[%s6782 + $0xb8] sm:$0xf]
      %v6830 = vld [vmem:[%s6782 + $0xbc] sm:$0xf]
      %v6855 = vunpack.c.l.b16 %v6758
      %v6856 = vunpack.c.h.b16 %v6758
      %v6857 = vunpack.c.l.b16 %v6759
      %v6858 = vunpack.c.l.b16 %v6760
      %v6859 = vunpack.c.h.b16 %v6760
      %v6860 = vunpack.c.l.b16 %v6761
      %v6861 = vunpack.c.l.b16 %v6762
      %v6862 = vunpack.c.h.b16 %v6762
      %v6863 = vunpack.c.l.b16 %v6763
      %v6864 = vunpack.c.l.b16 %v6764
      %v6865 = vunpack.c.h.b16 %v6764
      %v6866 = vunpack.c.l.b16 %v6765
      %v6867 = vunpack.c.l.b16 %v6766
      %v6868 = vunpack.c.h.b16 %v6766
      %v6869 = vunpack.c.l.b16 %v6767
      %v6870 = vunpack.c.l.b16 %v6768
      %v6871 = vunpack.c.h.b16 %v6768
      %v6872 = vunpack.c.l.b16 %v6769
      %v6873 = vunpack.c.l.b16 %v6770
      %v6874 = vunpack.c.h.b16 %v6770
      %v6875 = vunpack.c.l.b16 %v6771
      %v6876 = vunpack.c.l.b16 %v6772
      %v6877 = vunpack.c.h.b16 %v6772
      %v6878 = vunpack.c.l.b16 %v6773
      %v6879 = vunpack.c.l.b16 %v6774
      %v6880 = vunpack.c.h.b16 %v6774
      %v6881 = vunpack.c.l.b16 %v6775
      %v6882 = vunpack.c.l.b16 %v6776
      %v6883 = vunpack.c.h.b16 %v6776
      %v6884 = vunpack.c.l.b16 %v6777
      %v6885 = vunpack.c.l.b16 %v6778
      %v6886 = vunpack.c.h.b16 %v6778
      %v6887 = vunpack.c.l.b16 %v6779
      %v6888 = vunpack.c.l.b16 %v6780
      %v6889 = vunpack.c.h.b16 %v6780
      %v6890 = vunpack.c.l.b16 %v6781
      %v6891 = vpack.c.b16 %v6858, %v6855
      %v6892 = vpack.c.b16 %v6859, %v6856
      %v6893 = vpack.c.b16 %v6860, %v6857
      %v6894 = vpack.c.b16 %v6864, %v6861
      %v6895 = vpack.c.b16 %v6865, %v6862
      %v6896 = vpack.c.b16 %v6866, %v6863
      %v6897 = vpack.c.b16 %v6870, %v6867
      %v6898 = vpack.c.b16 %v6871, %v6868
      %v6899 = vpack.c.b16 %v6872, %v6869
      %v6900 = vpack.c.b16 %v6876, %v6873
      %v6901 = vpack.c.b16 %v6877, %v6874
      %v6902 = vpack.c.b16 %v6878, %v6875
      %v6903 = vpack.c.b16 %v6882, %v6879
      %v6904 = vpack.c.b16 %v6883, %v6880
      %v6905 = vpack.c.b16 %v6884, %v6881
      %v6906 = vpack.c.b16 %v6888, %v6885
      %v6907 = vpack.c.b16 %v6889, %v6886
      %v6908 = vpack.c.b16 %v6890, %v6887
      %v6975 = vunpack.c.l.b16 %v6783
      %v6976 = vunpack.c.l.b16 %v6784
      %v6977 = vunpack.c.l.b16 %v6785
      %v6978 = vunpack.c.l.b16 %v6786
      %v6979 = vunpack.c.l.b16 %v6787
      %v6980 = vunpack.c.l.b16 %v6788
      %v6981 = vunpack.c.l.b16 %v6789
      %v6982 = vunpack.c.l.b16 %v6790
      %v6983 = vunpack.c.l.b16 %v6791
      %v6984 = vunpack.c.l.b16 %v6792
      %v6985 = vunpack.c.l.b16 %v6793
      %v6986 = vunpack.c.l.b16 %v6794
      %v6987 = vunpack.c.l.b16 %v6795
      %v6988 = vunpack.c.l.b16 %v6796
      %v6989 = vunpack.c.l.b16 %v6797
      %v6990 = vunpack.c.l.b16 %v6798
      %v6991 = vunpack.c.l.b16 %v6799
      %v6992 = vunpack.c.l.b16 %v6800
      %v6993 = vunpack.c.l.b16 %v6801
      %v6994 = vunpack.c.l.b16 %v6802
      %v6995 = vunpack.c.l.b16 %v6803
      %v6996 = vunpack.c.l.b16 %v6804
      %v6997 = vunpack.c.l.b16 %v6805
      %v6998 = vunpack.c.l.b16 %v6806
      %v6999 = vunpack.c.l.b16 %v6807
      %v7000 = vunpack.c.l.b16 %v6808
      %v7001 = vunpack.c.l.b16 %v6809
      %v7002 = vunpack.c.l.b16 %v6810
      %v7003 = vunpack.c.l.b16 %v6811
      %v7004 = vunpack.c.l.b16 %v6812
      %v7005 = vunpack.c.l.b16 %v6813
      %v7006 = vunpack.c.l.b16 %v6814
      %v7007 = vunpack.c.l.b16 %v6815
      %v7008 = vunpack.c.l.b16 %v6816
      %v7009 = vunpack.c.l.b16 %v6817
      %v7010 = vunpack.c.l.b16 %v6818
      %v7011 = vunpack.c.l.b16 %v6819
      %v7012 = vunpack.c.l.b16 %v6820
      %v7013 = vunpack.c.l.b16 %v6821
      %v7014 = vunpack.c.l.b16 %v6822
      %v7015 = vunpack.c.l.b16 %v6823
      %v7016 = vunpack.c.l.b16 %v6824
      %v7017 = vunpack.c.l.b16 %v6825
      %v7018 = vunpack.c.l.b16 %v6826
      %v7019 = vunpack.c.l.b16 %v6827
      %v7020 = vunpack.c.l.b16 %v6828
      %v7021 = vunpack.c.l.b16 %v6829
      %v7022 = vunpack.c.l.b16 %v6830
      %v7023 = vpack.c.b16 %v6976, %v6975
      %v7024 = vpack.c.b16 %v6978, %v6977
      %v7025 = vpack.c.b16 %v6980, %v6979
      %v7026 = vpack.c.b16 %v6982, %v6981
      %v7027 = vpack.c.b16 %v6984, %v6983
      %v7028 = vpack.c.b16 %v6986, %v6985
      %v7029 = vpack.c.b16 %v6988, %v6987
      %v7030 = vpack.c.b16 %v6990, %v6989
      %v7031 = vpack.c.b16 %v6992, %v6991
      %v7032 = vpack.c.b16 %v6994, %v6993
      %v7033 = vpack.c.b16 %v6996, %v6995
      %v7034 = vpack.c.b16 %v6998, %v6997
      %v7035 = vpack.c.b16 %v7000, %v6999
      %v7036 = vpack.c.b16 %v7002, %v7001
      %v7037 = vpack.c.b16 %v7004, %v7003
      %v7038 = vpack.c.b16 %v7006, %v7005
      %v7039 = vpack.c.b16 %v7008, %v7007
      %v7040 = vpack.c.b16 %v7010, %v7009
      %v7041 = vpack.c.b16 %v7012, %v7011
      %v7042 = vpack.c.b16 %v7014, %v7013
      %v7043 = vpack.c.b16 %v7016, %v7015
      %v7044 = vpack.c.b16 %v7018, %v7017
      %v7045 = vpack.c.b16 %v7020, %v7019
      %v7046 = vpack.c.b16 %v7022, %v7021
      %7071 = vmatprep.subr.bf16.mxu0 0
      %7072 = vmatpush1.bf16.msra.mxu0 %v7030
      %7073 = vmatprep.subr.bf16.mxu0 0
      %7074 = vmatpush1.bf16.msra.mxu0 %v7029
      %7075 = vmatprep.subr.bf16.mxu0 0
      %7076 = vmatpush1.bf16.msra.mxu0 %v7028
      %7077 = vmatprep.subr.bf16.mxu0 0
      %7078 = vmatpush1.bf16.msra.mxu0 %v7027
      %7079 = vmatprep.subr.bf16.mxu0 0
      %7080 = vmatpush1.bf16.msra.mxu0 %v7026
      %7081 = vmatprep.subr.bf16.mxu0 0
      %7082 = vmatpush1.bf16.msra.mxu0 %v7025
      %7083 = vmatprep.subr.bf16.mxu0 0
      %7084 = vmatpush1.bf16.msra.mxu0 %v7024
      %7085 = vmatprep.subr.bf16.mxu0 0
      %7086 = vmatpush1.bf16.msra.mxu0 %v7023
      %7087 = vmatprep.subr.bf16.mxu0 0
      %7088 = vmatpush2.bf16.msra.mxu0 %v7038
      %7089 = vmatprep.subr.bf16.mxu0 0
      %7090 = vmatpush2.bf16.msra.mxu0 %v7037
      %7091 = vmatprep.subr.bf16.mxu0 0
      %7092 = vmatpush2.bf16.msra.mxu0 %v7036
      %7093 = vmatprep.subr.bf16.mxu0 0
      %7094 = vmatpush2.bf16.msra.mxu0 %v7035
      %7095 = vmatprep.subr.bf16.mxu0 0
      %7096 = vmatpush2.bf16.msra.mxu0 %v7034
      %7097 = vmatprep.subr.bf16.mxu0 0
      %7098 = vmatpush2.bf16.msra.mxu0 %v7033
      %7099 = vmatprep.subr.bf16.mxu0 0
      %7100 = vmatpush2.bf16.msra.mxu0 %v7032
      %7101 = vmatprep.subr.bf16.mxu0 0
      %7102 = vmatpush2.bf16.msra.mxu0 %v7031
      %7103 = vmatprep.mubr.bf16.mxu0 %v6892
      %7104 = vmatmul.mubr.bf16.gmra.mxu0 %v6891
      %v7105 = vpop.f32.mrf.mxu0
      %v7106 = vadd.f32 0.0, %v7105
      %v7107 = vpop.f32.mrf.mxu0
      %v7108 = vpop.f32.mrf.mxu0
      %v7109 = vadd.f32 0.0, %v7108
      %v7110 = vpop.f32.mrf.mxu0
      %7111 = vmatprep.mubr.bf16.mxu0 %v6895
      %7112 = vmatmul.mubr.bf16.gmra.mxu0 %v6894
      %v7113 = vpop.f32.mrf.mxu0
      %v7114 = vpop.f32.mrf.mxu0
      %v7115 = vpop.f32.mrf.mxu0
      %v7116 = vadd.f32 0.0, %v7115
      %v7117 = vpop.f32.mrf.mxu0
      %7118 = vmatprep.mubr.bf16.mxu0 %v6898
      %7119 = vmatmul.mubr.bf16.gmra.mxu0 %v6897
      %v7120 = vpop.f32.mrf.mxu0
      %v7121 = vadd.f32 0.0, %v7120
      %v7122 = vpop.f32.mrf.mxu0
      %v7123 = vpop.f32.mrf.mxu0
      %v7124 = vpop.f32.mrf.mxu0
      %7125 = vmatprep.mubr.bf16.mxu0 %v6901
      %7126 = vmatmul.mubr.bf16.gmra.mxu0 %v6900
      %v7127 = vpop.f32.mrf.mxu0
      %v7128 = vadd.f32 0.0, %v7127
      %v7129 = vpop.f32.mrf.mxu0
      %v7130 = vpop.f32.mrf.mxu0
      %v7131 = vadd.f32 0.0, %v7130
      %v7132 = vpop.f32.mrf.mxu0
      %7133 = vmatprep.mubr.bf16.mxu0 %v6904
      %7134 = vmatmul.mubr.bf16.gmra.mxu0 %v6903
      %v7135 = vpop.f32.mrf.mxu0
      %v7136 = vpop.f32.mrf.mxu0
      %v7137 = vpop.f32.mrf.mxu0
      %v7138 = vadd.f32 0.0, %v7137
      %v7139 = vpop.f32.mrf.mxu0
      %7140 = vmatprep.mubr.bf16.mxu0 %v6907
      %7141 = vmatmul.mubr.bf16.gmra.mxu0 %v6906
      %v7142 = vpop.f32.mrf.mxu0
      %v7143 = vadd.f32 0.0, %v7142
      %v7144 = vpop.f32.mrf.mxu0
      %v7145 = vpop.f32.mrf.mxu0
      %v7146 = vpop.f32.mrf.mxu0
      %7147 = vdwg.mxu0
      %7148 = vmatprep.subr.bf16.mxu0 0
      %7149 = vmatpush1.bf16.msra.mxu0 %v7046
      %7150 = vmatprep.subr.bf16.mxu0 0
      %7151 = vmatpush1.bf16.msra.mxu0 %v7045
      %7152 = vmatprep.subr.bf16.mxu0 0
      %7153 = vmatpush1.bf16.msra.mxu0 %v7044
      %7154 = vmatprep.subr.bf16.mxu0 0
      %7155 = vmatpush1.bf16.msra.mxu0 %v7043
      %7156 = vmatprep.subr.bf16.mxu0 0
      %7157 = vmatpush1.bf16.msra.mxu0 %v7042
      %7158 = vmatprep.subr.bf16.mxu0 0
      %7159 = vmatpush1.bf16.msra.mxu0 %v7041
      %7160 = vmatprep.subr.bf16.mxu0 0
      %7161 = vmatpush1.bf16.msra.mxu0 %v7040
      %7162 = vmatprep.subr.bf16.mxu0 0
      %7163 = vmatpush1.bf16.msra.mxu0 %v7039
      %7164 = vmatprep.subr.bf16.mxu0 0
      %7165 = vmatpush2.bf16.msra.mxu0 0
      %7166 = vmatprep.subr.bf16.mxu0 0
      %7167 = vmatpush2.bf16.msra.mxu0 0
      %7168 = vmatprep.subr.bf16.mxu0 0
      %7169 = vmatpush2.bf16.msra.mxu0 0
      %7170 = vmatprep.subr.bf16.mxu0 0
      %7171 = vmatpush2.bf16.msra.mxu0 0
      %7172 = vmatprep.subr.bf16.mxu0 0
      %7173 = vmatpush2.bf16.msra.mxu0 0
      %7174 = vmatprep.subr.bf16.mxu0 0
      %7175 = vmatpush2.bf16.msra.mxu0 0
      %7176 = vmatprep.subr.bf16.mxu0 0
      %7177 = vmatpush2.bf16.msra.mxu0 0
      %7178 = vmatprep.subr.bf16.mxu0 0
      %7179 = vmatpush2.bf16.msra.mxu0 0
      %7180 = vmatprep.mubr.bf16.mxu0 0
      %7181 = vmatmul.mubr.bf16.gmra.mxu0 %v6893
      %v7182 = vpop.f32.mrf.mxu0
      %v7183 = vadd.f32 %v7106, %v7182
      %v7184 = vpop.f32.mrf.mxu0
      %v7185 = vpop.f32.mrf.mxu0
      %v7186 = vadd.f32 %v7109, %v7185
      %v7187 = vpop.f32.mrf.mxu0
      %7188 = vmatprep.mubr.bf16.mxu0 0
      %7189 = vmatmul.mubr.bf16.gmra.mxu0 %v6896
      %v7190 = vpop.f32.mrf.mxu0
      %v7191 = vpop.f32.mrf.mxu0
      %v7192 = vpop.f32.mrf.mxu0
      %v7193 = vadd.f32 %v7116, %v7192
      %v7194 = vpop.f32.mrf.mxu0
      %7195 = vmatprep.mubr.bf16.mxu0 0
      %7196 = vmatmul.mubr.bf16.gmra.mxu0 %v6899
      %v7197 = vpop.f32.mrf.mxu0
      %v7198 = vadd.f32 %v7121, %v7197
      %v7199 = vpop.f32.mrf.mxu0
      %v7200 = vpop.f32.mrf.mxu0
      %v7201 = vpop.f32.mrf.mxu0
      %7202 = vmatprep.mubr.bf16.mxu0 0
      %7203 = vmatmul.mubr.bf16.gmra.mxu0 %v6902
      %v7204 = vpop.f32.mrf.mxu0
      %v7205 = vadd.f32 %v7128, %v7204
      %v7206 = vpop.f32.mrf.mxu0
      %v7207 = vpop.f32.mrf.mxu0
      %v7208 = vadd.f32 %v7131, %v7207
      %v7209 = vpop.f32.mrf.mxu0
      %7210 = vmatprep.mubr.bf16.mxu0 0
      %7211 = vmatmul.mubr.bf16.gmra.mxu0 %v6905
      %v7212 = vpop.f32.mrf.mxu0
      %v7213 = vpop.f32.mrf.mxu0
      %v7214 = vpop.f32.mrf.mxu0
      %v7215 = vadd.f32 %v7138, %v7214
      %v7216 = vpop.f32.mrf.mxu0
      %7217 = vmatprep.mubr.bf16.mxu0 0
      %7218 = vmatmul.mubr.bf16.gmra.mxu0 %v6908
      %v7219 = vpop.f32.mrf.mxu0
      %v7220 = vadd.f32 %v7143, %v7219
      %v7221 = vpop.f32.mrf.mxu0
      %v7222 = vpop.f32.mrf.mxu0
      %v7223 = vpop.f32.mrf.mxu0
      %7224 = vdwg.mxu0
      %v7225 = vadd.f32 %v6716, %v7183
      %v7226 = vadd.f32 %v6719, %v7186
      %v7227 = vadd.f32 %v6726, %v7193
      %v7228 = vadd.f32 %v6731, %v7198
      %v7229 = vadd.f32 %v6738, %v7205
      %v7230 = vadd.f32 %v6741, %v7208
      %v7231 = vadd.f32 %v6748, %v7215
      %v7232 = vadd.f32 %v6753, %v7220
      %v7233 = vld [vmem:[%s5] sm:$0x1]
      %v7235 = vlaneseq
      %v7236 = vshrl.u32 %v7235, 7
      %v7237 = vsub.s32 0, %v7236
      %v7238 = vrot.slane %v7233, %v7237
      %v7240 = vadd.f32 %v7225, %v7238
      %v7241 = vadd.f32 %v7226, %v7238
      %v7242 = vadd.f32 %v7227, %v7238
      %v7243 = vadd.f32 %v7228, %v7238
      %v7244 = vadd.f32 %v7229, %v7238
      %v7245 = vadd.f32 %v7230, %v7238
      %v7246 = vadd.f32 %v7231, %v7238
      %v7247 = vadd.f32 %v7232, %v7238
      %v7248 = vmax.f32 %v7240, 0.0
      %v7249 = vmax.f32 %v7241, 0.0
      %v7250 = vmax.f32 %v7242, 0.0
      %v7251 = vmax.f32 %v7243, 0.0
      %v7252 = vmax.f32 %v7244, 0.0
      %v7253 = vmax.f32 %v7245, 0.0
      %v7254 = vmax.f32 %v7246, 0.0
      %v7255 = vmax.f32 %v7247, 0.0
      %7256 = vst [vmem:[%s372] sm:$0xff] %v7248
      %7257 = vst [vmem:[%s372 + $0x8] sm:$0xff] %v7249
      %7258 = vst [vmem:[%s372 + $0x10] sm:$0xff] %v7250
      %7259 = vst [vmem:[%s372 + $0x18] sm:$0xff] %v7251
      %7260 = vst [vmem:[%s372 + $0x20] sm:$0xff] %v7252
      %7261 = vst [vmem:[%s372 + $0x28] sm:$0xff] %v7253
      %7262 = vst [vmem:[%s372 + $0x30] sm:$0xff] %v7254
      %7263 = vst [vmem:[%s372 + $0x38] sm:$0xff] %v7255
      %v7264 = vld [vmem:[#allocation3 + $0x90] sm:$0xff]
      %v7265 = vld [vmem:[#allocation3 + $0x98] sm:$0xf]
      %v7266 = vld [vmem:[#allocation3 + $0x9c] sm:$0xff]
      %v7267 = vld [vmem:[#allocation3 + $0xa4] sm:$0xf]
      %v7268 = vld [vmem:[#allocation3 + $0xa8] sm:$0xff]
      %v7269 = vld [vmem:[#allocation3 + $0xb0] sm:$0xf]
      %v7270 = vld [vmem:[#allocation3 + $0xb4] sm:$0xff]
      %v7271 = vld [vmem:[#allocation3 + $0xbc] sm:$0xf]
      %v7272 = vld [vmem:[#allocation3 + $0xc0] sm:$0xff]
      %v7273 = vld [vmem:[#allocation3 + $0xc8] sm:$0xf]
      %v7274 = vld [vmem:[#allocation3 + $0xcc] sm:$0xff]
      %v7275 = vld [vmem:[#allocation3 + $0xd4] sm:$0xf]
      %v7276 = vld [vmem:[#allocation3 + $0xd8] sm:$0xff]
      %v7277 = vld [vmem:[#allocation3 + $0xe0] sm:$0xf]
      %v7278 = vld [vmem:[#allocation3 + $0xe4] sm:$0xff]
      %v7279 = vld [vmem:[#allocation3 + $0xec] sm:$0xf]
      %v7280 = vld [vmem:[#allocation3 + $0xf0] sm:$0xff]
      %v7281 = vld [vmem:[#allocation3 + $0xf8] sm:$0xf]
      %v7282 = vld [vmem:[#allocation3 + $0xfc] sm:$0xff]
      %v7283 = vld [vmem:[#allocation3 + $0x104] sm:$0xf]
      %v7284 = vld [vmem:[#allocation3 + $0x108] sm:$0xff]
      %v7285 = vld [vmem:[#allocation3 + $0x110] sm:$0xf]
      %v7286 = vld [vmem:[#allocation3 + $0x114] sm:$0xff]
      %v7287 = vld [vmem:[#allocation3 + $0x11c] sm:$0xf]
      %v7288 = vld [vmem:[%s4] sm:$0xf]
      %v7289 = vld [vmem:[%s4 + $0x4] sm:$0xf]
      %v7290 = vld [vmem:[%s4 + $0x8] sm:$0xf]
      %v7291 = vld [vmem:[%s4 + $0xc] sm:$0xf]
      %v7292 = vld [vmem:[%s4 + $0x10] sm:$0xf]
      %v7293 = vld [vmem:[%s4 + $0x14] sm:$0xf]
      %v7294 = vld [vmem:[%s4 + $0x18] sm:$0xf]
      %v7295 = vld [vmem:[%s4 + $0x1c] sm:$0xf]
      %v7296 = vld [vmem:[%s4 + $0x20] sm:$0xf]
      %v7297 = vld [vmem:[%s4 + $0x24] sm:$0xf]
      %v7298 = vld [vmem:[%s4 + $0x28] sm:$0xf]
      %v7299 = vld [vmem:[%s4 + $0x2c] sm:$0xf]
      %v7300 = vld [vmem:[%s4 + $0x30] sm:$0xf]
      %v7301 = vld [vmem:[%s4 + $0x34] sm:$0xf]
      %v7302 = vld [vmem:[%s4 + $0x38] sm:$0xf]
      %v7303 = vld [vmem:[%s4 + $0x3c] sm:$0xf]
      %v7304 = vld [vmem:[%s4 + $0x40] sm:$0xf]
      %v7305 = vld [vmem:[%s4 + $0x44] sm:$0xf]
      %v7306 = vld [vmem:[%s4 + $0x48] sm:$0xf]
      %v7307 = vld [vmem:[%s4 + $0x4c] sm:$0xf]
      %v7308 = vld [vmem:[%s4 + $0x50] sm:$0xf]
      %v7309 = vld [vmem:[%s4 + $0x54] sm:$0xf]
      %v7310 = vld [vmem:[%s4 + $0x58] sm:$0xf]
      %v7311 = vld [vmem:[%s4 + $0x5c] sm:$0xf]
      %v7312 = vld [vmem:[%s4 + $0x60] sm:$0xf]
      %v7313 = vld [vmem:[%s4 + $0x64] sm:$0xf]
      %v7314 = vld [vmem:[%s4 + $0x68] sm:$0xf]
      %v7315 = vld [vmem:[%s4 + $0x6c] sm:$0xf]
      %v7316 = vld [vmem:[%s4 + $0x70] sm:$0xf]
      %v7317 = vld [vmem:[%s4 + $0x74] sm:$0xf]
      %v7318 = vld [vmem:[%s4 + $0x78] sm:$0xf]
      %v7319 = vld [vmem:[%s4 + $0x7c] sm:$0xf]
      %v7320 = vld [vmem:[%s4 + $0x80] sm:$0xf]
      %v7321 = vld [vmem:[%s4 + $0x84] sm:$0xf]
      %v7322 = vld [vmem:[%s4 + $0x88] sm:$0xf]
      %v7323 = vld [vmem:[%s4 + $0x8c] sm:$0xf]
      %v7324 = vld [vmem:[%s4 + $0x90] sm:$0xf]
      %v7325 = vld [vmem:[%s4 + $0x94] sm:$0xf]
      %v7326 = vld [vmem:[%s4 + $0x98] sm:$0xf]
      %v7327 = vld [vmem:[%s4 + $0x9c] sm:$0xf]
      %v7328 = vld [vmem:[%s4 + $0xa0] sm:$0xf]
      %v7329 = vld [vmem:[%s4 + $0xa4] sm:$0xf]
      %v7330 = vld [vmem:[%s4 + $0xa8] sm:$0xf]
      %v7331 = vld [vmem:[%s4 + $0xac] sm:$0xf]
      %v7332 = vld [vmem:[%s4 + $0xb0] sm:$0xf]
      %v7333 = vld [vmem:[%s4 + $0xb4] sm:$0xf]
      %v7334 = vld [vmem:[%s4 + $0xb8] sm:$0xf]
      %v7335 = vld [vmem:[%s4 + $0xbc] sm:$0xf]
      %v7336 = vld [vmem:[#allocation3 + $0x120] sm:$0xff]
      %v7337 = vld [vmem:[#allocation3 + $0x128] sm:$0xf]
      %v7338 = vld [vmem:[#allocation3 + $0x12c] sm:$0xff]
      %v7339 = vld [vmem:[#allocation3 + $0x134] sm:$0xf]
      %v7340 = vld [vmem:[#allocation3 + $0x138] sm:$0xff]
      %v7341 = vld [vmem:[#allocation3 + $0x140] sm:$0xf]
      %v7342 = vld [vmem:[%s5966] sm:$0xf]
      %v7343 = vld [vmem:[%s5966 + $0x4] sm:$0xf]
      %v7344 = vld [vmem:[%s5966 + $0x8] sm:$0xf]
      %v7345 = vld [vmem:[%s5966 + $0xc] sm:$0xf]
      %v7346 = vld [vmem:[%s5966 + $0x10] sm:$0xf]
      %v7347 = vld [vmem:[%s5966 + $0x14] sm:$0xf]
      %v7348 = vld [vmem:[%s5966 + $0x18] sm:$0xf]
      %v7349 = vld [vmem:[%s5966 + $0x1c] sm:$0xf]
      %v7350 = vld [vmem:[%s5966 + $0x20] sm:$0xf]
      %v7351 = vld [vmem:[%s5966 + $0x24] sm:$0xf]
      %v7352 = vld [vmem:[%s5966 + $0x28] sm:$0xf]
      %v7353 = vld [vmem:[%s5966 + $0x2c] sm:$0xf]
      %v7354 = vld [vmem:[%s5966 + $0x30] sm:$0xf]
      %v7355 = vld [vmem:[%s5966 + $0x34] sm:$0xf]
      %v7356 = vld [vmem:[%s5966 + $0x38] sm:$0xf]
      %v7357 = vld [vmem:[%s5966 + $0x3c] sm:$0xf]
      %v7358 = vld [vmem:[%s5966 + $0x40] sm:$0xf]
      %v7359 = vld [vmem:[%s5966 + $0x44] sm:$0xf]
      %v7360 = vld [vmem:[%s5966 + $0x48] sm:$0xf]
      %v7361 = vld [vmem:[%s5966 + $0x4c] sm:$0xf]
      %v7362 = vld [vmem:[%s5966 + $0x50] sm:$0xf]
      %v7363 = vld [vmem:[%s5966 + $0x54] sm:$0xf]
      %v7364 = vld [vmem:[%s5966 + $0x58] sm:$0xf]
      %v7365 = vld [vmem:[%s5966 + $0x5c] sm:$0xf]
      %v7366 = vld [vmem:[%s5966 + $0x60] sm:$0xf]
      %v7367 = vld [vmem:[%s5966 + $0x64] sm:$0xf]
      %v7368 = vld [vmem:[%s5966 + $0x68] sm:$0xf]
      %v7369 = vld [vmem:[%s5966 + $0x6c] sm:$0xf]
      %v7370 = vld [vmem:[%s5966 + $0x70] sm:$0xf]
      %v7371 = vld [vmem:[%s5966 + $0x74] sm:$0xf]
      %v7372 = vld [vmem:[%s5966 + $0x78] sm:$0xf]
      %v7373 = vld [vmem:[%s5966 + $0x7c] sm:$0xf]
      %v7374 = vld [vmem:[%s5966 + $0x80] sm:$0xf]
      %v7375 = vld [vmem:[%s5966 + $0x84] sm:$0xf]
      %v7376 = vld [vmem:[%s5966 + $0x88] sm:$0xf]
      %v7377 = vld [vmem:[%s5966 + $0x8c] sm:$0xf]
      %v7378 = vld [vmem:[%s5966 + $0x90] sm:$0xf]
      %v7379 = vld [vmem:[%s5966 + $0x94] sm:$0xf]
      %v7380 = vld [vmem:[%s5966 + $0x98] sm:$0xf]
      %v7381 = vld [vmem:[%s5966 + $0x9c] sm:$0xf]
      %v7382 = vld [vmem:[%s5966 + $0xa0] sm:$0xf]
      %v7383 = vld [vmem:[%s5966 + $0xa4] sm:$0xf]
      %v7384 = vld [vmem:[%s5966 + $0xa8] sm:$0xf]
      %v7385 = vld [vmem:[%s5966 + $0xac] sm:$0xf]
      %v7386 = vld [vmem:[%s5966 + $0xb0] sm:$0xf]
      %v7387 = vld [vmem:[%s5966 + $0xb4] sm:$0xf]
      %v7388 = vld [vmem:[%s5966 + $0xb8] sm:$0xf]
      %v7389 = vld [vmem:[%s5966 + $0xbc] sm:$0xf]
      %v7414 = vunpack.c.l.b16 %v7270
      %v7415 = vunpack.c.h.b16 %v7270
      %v7416 = vunpack.c.l.b16 %v7271
      %v7417 = vunpack.c.l.b16 %v7272
      %v7418 = vunpack.c.h.b16 %v7272
      %v7419 = vunpack.c.l.b16 %v7273
      %v7420 = vunpack.c.l.b16 %v7274
      %v7421 = vunpack.c.h.b16 %v7274
      %v7422 = vunpack.c.l.b16 %v7275
      %v7423 = vunpack.c.l.b16 %v7276
      %v7424 = vunpack.c.h.b16 %v7276
      %v7425 = vunpack.c.l.b16 %v7277
      %v7426 = vunpack.c.l.b16 %v7278
      %v7427 = vunpack.c.h.b16 %v7278
      %v7428 = vunpack.c.l.b16 %v7279
      %v7429 = vunpack.c.l.b16 %v7280
      %v7430 = vunpack.c.h.b16 %v7280
      %v7431 = vunpack.c.l.b16 %v7281
      %v7432 = vunpack.c.l.b16 %v7282
      %v7433 = vunpack.c.h.b16 %v7282
      %v7434 = vunpack.c.l.b16 %v7283
      %v7435 = vunpack.c.l.b16 %v7284
      %v7436 = vunpack.c.h.b16 %v7284
      %v7437 = vunpack.c.l.b16 %v7285
      %v7438 = vunpack.c.l.b16 %v7286
      %v7439 = vunpack.c.h.b16 %v7286
      %v7440 = vunpack.c.l.b16 %v7287
      %v7441 = vunpack.c.l.b16 %v7336
      %v7442 = vunpack.c.h.b16 %v7336
      %v7443 = vunpack.c.l.b16 %v7337
      %v7444 = vunpack.c.l.b16 %v7338
      %v7445 = vunpack.c.h.b16 %v7338
      %v7446 = vunpack.c.l.b16 %v7339
      %v7447 = vunpack.c.l.b16 %v7340
      %v7448 = vunpack.c.h.b16 %v7340
      %v7449 = vunpack.c.l.b16 %v7341
      %v7450 = vpack.c.b16 %v7417, %v7414
      %v7451 = vpack.c.b16 %v7418, %v7415
      %v7452 = vpack.c.b16 %v7419, %v7416
      %v7453 = vpack.c.b16 %v7423, %v7420
      %v7454 = vpack.c.b16 %v7424, %v7421
      %v7455 = vpack.c.b16 %v7425, %v7422
      %v7456 = vpack.c.b16 %v7429, %v7426
      %v7457 = vpack.c.b16 %v7430, %v7427
      %v7458 = vpack.c.b16 %v7431, %v7428
      %v7459 = vpack.c.b16 %v7435, %v7432
      %v7460 = vpack.c.b16 %v7436, %v7433
      %v7461 = vpack.c.b16 %v7437, %v7434
      %v7462 = vpack.c.b16 %v7441, %v7438
      %v7463 = vpack.c.b16 %v7442, %v7439
      %v7464 = vpack.c.b16 %v7443, %v7440
      %v7465 = vpack.c.b16 %v7447, %v7444
      %v7466 = vpack.c.b16 %v7448, %v7445
      %v7467 = vpack.c.b16 %v7449, %v7446
      %v7534 = vunpack.c.l.b16 %v7342
      %v7535 = vunpack.c.l.b16 %v7343
      %v7536 = vunpack.c.l.b16 %v7344
      %v7537 = vunpack.c.l.b16 %v7345
      %v7538 = vunpack.c.l.b16 %v7346
      %v7539 = vunpack.c.l.b16 %v7347
      %v7540 = vunpack.c.l.b16 %v7348
      %v7541 = vunpack.c.l.b16 %v7349
      %v7542 = vunpack.c.l.b16 %v7350
      %v7543 = vunpack.c.l.b16 %v7351
      %v7544 = vunpack.c.l.b16 %v7352
      %v7545 = vunpack.c.l.b16 %v7353
      %v7546 = vunpack.c.l.b16 %v7354
      %v7547 = vunpack.c.l.b16 %v7355
      %v7548 = vunpack.c.l.b16 %v7356
      %v7549 = vunpack.c.l.b16 %v7357
      %v7550 = vunpack.c.l.b16 %v7358
      %v7551 = vunpack.c.l.b16 %v7359
      %v7552 = vunpack.c.l.b16 %v7360
      %v7553 = vunpack.c.l.b16 %v7361
      %v7554 = vunpack.c.l.b16 %v7362
      %v7555 = vunpack.c.l.b16 %v7363
      %v7556 = vunpack.c.l.b16 %v7364
      %v7557 = vunpack.c.l.b16 %v7365
      %v7558 = vunpack.c.l.b16 %v7366
      %v7559 = vunpack.c.l.b16 %v7367
      %v7560 = vunpack.c.l.b16 %v7368
      %v7561 = vunpack.c.l.b16 %v7369
      %v7562 = vunpack.c.l.b16 %v7370
      %v7563 = vunpack.c.l.b16 %v7371
      %v7564 = vunpack.c.l.b16 %v7372
      %v7565 = vunpack.c.l.b16 %v7373
      %v7566 = vunpack.c.l.b16 %v7374
      %v7567 = vunpack.c.l.b16 %v7375
      %v7568 = vunpack.c.l.b16 %v7376
      %v7569 = vunpack.c.l.b16 %v7377
      %v7570 = vunpack.c.l.b16 %v7378
      %v7571 = vunpack.c.l.b16 %v7379
      %v7572 = vunpack.c.l.b16 %v7380
      %v7573 = vunpack.c.l.b16 %v7381
      %v7574 = vunpack.c.l.b16 %v7382
      %v7575 = vunpack.c.l.b16 %v7383
      %v7576 = vunpack.c.l.b16 %v7384
      %v7577 = vunpack.c.l.b16 %v7385
      %v7578 = vunpack.c.l.b16 %v7386
      %v7579 = vunpack.c.l.b16 %v7387
      %v7580 = vunpack.c.l.b16 %v7388
      %v7581 = vunpack.c.l.b16 %v7389
      %v7582 = vpack.c.b16 %v7535, %v7534
      %v7583 = vpack.c.b16 %v7537, %v7536
      %v7584 = vpack.c.b16 %v7539, %v7538
      %v7585 = vpack.c.b16 %v7541, %v7540
      %v7586 = vpack.c.b16 %v7543, %v7542
      %v7587 = vpack.c.b16 %v7545, %v7544
      %v7588 = vpack.c.b16 %v7547, %v7546
      %v7589 = vpack.c.b16 %v7549, %v7548
      %v7590 = vpack.c.b16 %v7551, %v7550
      %v7591 = vpack.c.b16 %v7553, %v7552
      %v7592 = vpack.c.b16 %v7555, %v7554
      %v7593 = vpack.c.b16 %v7557, %v7556
      %v7594 = vpack.c.b16 %v7559, %v7558
      %v7595 = vpack.c.b16 %v7561, %v7560
      %v7596 = vpack.c.b16 %v7563, %v7562
      %v7597 = vpack.c.b16 %v7565, %v7564
      %v7598 = vpack.c.b16 %v7567, %v7566
      %v7599 = vpack.c.b16 %v7569, %v7568
      %v7600 = vpack.c.b16 %v7571, %v7570
      %v7601 = vpack.c.b16 %v7573, %v7572
      %v7602 = vpack.c.b16 %v7575, %v7574
      %v7603 = vpack.c.b16 %v7577, %v7576
      %v7604 = vpack.c.b16 %v7579, %v7578
      %v7605 = vpack.c.b16 %v7581, %v7580
      %7630 = vmatprep.subr.bf16.mxu0 0
      %7631 = vmatpush1.bf16.msra.mxu0 %v7589
      %7632 = vmatprep.subr.bf16.mxu0 0
      %7633 = vmatpush1.bf16.msra.mxu0 %v7588
      %7634 = vmatprep.subr.bf16.mxu0 0
      %7635 = vmatpush1.bf16.msra.mxu0 %v7587
      %7636 = vmatprep.subr.bf16.mxu0 0
      %7637 = vmatpush1.bf16.msra.mxu0 %v7586
      %7638 = vmatprep.subr.bf16.mxu0 0
      %7639 = vmatpush1.bf16.msra.mxu0 %v7585
      %7640 = vmatprep.subr.bf16.mxu0 0
      %7641 = vmatpush1.bf16.msra.mxu0 %v7584
      %7642 = vmatprep.subr.bf16.mxu0 0
      %7643 = vmatpush1.bf16.msra.mxu0 %v7583
      %7644 = vmatprep.subr.bf16.mxu0 0
      %7645 = vmatpush1.bf16.msra.mxu0 %v7582
      %7646 = vmatprep.subr.bf16.mxu0 0
      %7647 = vmatpush2.bf16.msra.mxu0 %v7597
      %7648 = vmatprep.subr.bf16.mxu0 0
      %7649 = vmatpush2.bf16.msra.mxu0 %v7596
      %7650 = vmatprep.subr.bf16.mxu0 0
      %7651 = vmatpush2.bf16.msra.mxu0 %v7595
      %7652 = vmatprep.subr.bf16.mxu0 0
      %7653 = vmatpush2.bf16.msra.mxu0 %v7594
      %7654 = vmatprep.subr.bf16.mxu0 0
      %7655 = vmatpush2.bf16.msra.mxu0 %v7593
      %7656 = vmatprep.subr.bf16.mxu0 0
      %7657 = vmatpush2.bf16.msra.mxu0 %v7592
      %7658 = vmatprep.subr.bf16.mxu0 0
      %7659 = vmatpush2.bf16.msra.mxu0 %v7591
      %7660 = vmatprep.subr.bf16.mxu0 0
      %7661 = vmatpush2.bf16.msra.mxu0 %v7590
      %7662 = vmatprep.mubr.bf16.mxu0 %v7451
      %7663 = vmatmul.mubr.bf16.gmra.mxu0 %v7450
      %v7664 = vpop.f32.mrf.mxu0
      %v7665 = vadd.f32 0.0, %v7664
      %v7666 = vpop.f32.mrf.mxu0
      %v7667 = vpop.f32.mrf.mxu0
      %v7668 = vadd.f32 0.0, %v7667
      %v7669 = vpop.f32.mrf.mxu0
      %7670 = vmatprep.mubr.bf16.mxu0 %v7454
      %7671 = vmatmul.mubr.bf16.gmra.mxu0 %v7453
      %v7672 = vpop.f32.mrf.mxu0
      %v7673 = vpop.f32.mrf.mxu0
      %v7674 = vpop.f32.mrf.mxu0
      %v7675 = vadd.f32 0.0, %v7674
      %v7676 = vpop.f32.mrf.mxu0
      %7677 = vmatprep.mubr.bf16.mxu0 %v7457
      %7678 = vmatmul.mubr.bf16.gmra.mxu0 %v7456
      %v7679 = vpop.f32.mrf.mxu0
      %v7680 = vadd.f32 0.0, %v7679
      %v7681 = vpop.f32.mrf.mxu0
      %v7682 = vpop.f32.mrf.mxu0
      %v7683 = vpop.f32.mrf.mxu0
      %7684 = vmatprep.mubr.bf16.mxu0 %v7460
      %7685 = vmatmul.mubr.bf16.gmra.mxu0 %v7459
      %v7686 = vpop.f32.mrf.mxu0
      %v7687 = vadd.f32 0.0, %v7686
      %v7688 = vpop.f32.mrf.mxu0
      %v7689 = vpop.f32.mrf.mxu0
      %v7690 = vadd.f32 0.0, %v7689
      %v7691 = vpop.f32.mrf.mxu0
      %7692 = vmatprep.mubr.bf16.mxu0 %v7463
      %7693 = vmatmul.mubr.bf16.gmra.mxu0 %v7462
      %v7694 = vpop.f32.mrf.mxu0
      %v7695 = vpop.f32.mrf.mxu0
      %v7696 = vpop.f32.mrf.mxu0
      %v7697 = vadd.f32 0.0, %v7696
      %v7698 = vpop.f32.mrf.mxu0
      %7699 = vmatprep.mubr.bf16.mxu0 %v7466
      %7700 = vmatmul.mubr.bf16.gmra.mxu0 %v7465
      %v7701 = vpop.f32.mrf.mxu0
      %v7702 = vadd.f32 0.0, %v7701
      %v7703 = vpop.f32.mrf.mxu0
      %v7704 = vpop.f32.mrf.mxu0
      %v7705 = vpop.f32.mrf.mxu0
      %7706 = vdwg.mxu0
      %7707 = vmatprep.subr.bf16.mxu0 0
      %7708 = vmatpush1.bf16.msra.mxu0 %v7605
      %7709 = vmatprep.subr.bf16.mxu0 0
      %7710 = vmatpush1.bf16.msra.mxu0 %v7604
      %7711 = vmatprep.subr.bf16.mxu0 0
      %7712 = vmatpush1.bf16.msra.mxu0 %v7603
      %7713 = vmatprep.subr.bf16.mxu0 0
      %7714 = vmatpush1.bf16.msra.mxu0 %v7602
      %7715 = vmatprep.subr.bf16.mxu0 0
      %7716 = vmatpush1.bf16.msra.mxu0 %v7601
      %7717 = vmatprep.subr.bf16.mxu0 0
      %7718 = vmatpush1.bf16.msra.mxu0 %v7600
      %7719 = vmatprep.subr.bf16.mxu0 0
      %7720 = vmatpush1.bf16.msra.mxu0 %v7599
      %7721 = vmatprep.subr.bf16.mxu0 0
      %7722 = vmatpush1.bf16.msra.mxu0 %v7598
      %7723 = vmatprep.subr.bf16.mxu0 0
      %7724 = vmatpush2.bf16.msra.mxu0 0
      %7725 = vmatprep.subr.bf16.mxu0 0
      %7726 = vmatpush2.bf16.msra.mxu0 0
      %7727 = vmatprep.subr.bf16.mxu0 0
      %7728 = vmatpush2.bf16.msra.mxu0 0
      %7729 = vmatprep.subr.bf16.mxu0 0
      %7730 = vmatpush2.bf16.msra.mxu0 0
      %7731 = vmatprep.subr.bf16.mxu0 0
      %7732 = vmatpush2.bf16.msra.mxu0 0
      %7733 = vmatprep.subr.bf16.mxu0 0
      %7734 = vmatpush2.bf16.msra.mxu0 0
      %7735 = vmatprep.subr.bf16.mxu0 0
      %7736 = vmatpush2.bf16.msra.mxu0 0
      %7737 = vmatprep.subr.bf16.mxu0 0
      %7738 = vmatpush2.bf16.msra.mxu0 0
      %7739 = vmatprep.mubr.bf16.mxu0 0
      %7740 = vmatmul.mubr.bf16.gmra.mxu0 %v7452
      %v7741 = vpop.f32.mrf.mxu0
      %v7742 = vadd.f32 %v7665, %v7741
      %v7743 = vpop.f32.mrf.mxu0
      %v7744 = vpop.f32.mrf.mxu0
      %v7745 = vadd.f32 %v7668, %v7744
      %v7746 = vpop.f32.mrf.mxu0
      %7747 = vmatprep.mubr.bf16.mxu0 0
      %7748 = vmatmul.mubr.bf16.gmra.mxu0 %v7455
      %v7749 = vpop.f32.mrf.mxu0
      %v7750 = vpop.f32.mrf.mxu0
      %v7751 = vpop.f32.mrf.mxu0
      %v7752 = vadd.f32 %v7675, %v7751
      %v7753 = vpop.f32.mrf.mxu0
      %7754 = vmatprep.mubr.bf16.mxu0 0
      %7755 = vmatmul.mubr.bf16.gmra.mxu0 %v7458
      %v7756 = vpop.f32.mrf.mxu0
      %v7757 = vadd.f32 %v7680, %v7756
      %v7758 = vpop.f32.mrf.mxu0
      %v7759 = vpop.f32.mrf.mxu0
      %v7760 = vpop.f32.mrf.mxu0
      %7761 = vmatprep.mubr.bf16.mxu0 0
      %7762 = vmatmul.mubr.bf16.gmra.mxu0 %v7461
      %v7763 = vpop.f32.mrf.mxu0
      %v7764 = vadd.f32 %v7687, %v7763
      %v7765 = vpop.f32.mrf.mxu0
      %v7766 = vpop.f32.mrf.mxu0
      %v7767 = vadd.f32 %v7690, %v7766
      %v7768 = vpop.f32.mrf.mxu0
      %7769 = vmatprep.mubr.bf16.mxu0 0
      %7770 = vmatmul.mubr.bf16.gmra.mxu0 %v7464
      %v7771 = vpop.f32.mrf.mxu0
      %v7772 = vpop.f32.mrf.mxu0
      %v7773 = vpop.f32.mrf.mxu0
      %v7774 = vadd.f32 %v7697, %v7773
      %v7775 = vpop.f32.mrf.mxu0
      %7776 = vmatprep.mubr.bf16.mxu0 0
      %7777 = vmatmul.mubr.bf16.gmra.mxu0 %v7467
      %v7778 = vpop.f32.mrf.mxu0
      %v7779 = vadd.f32 %v7702, %v7778
      %v7780 = vpop.f32.mrf.mxu0
      %v7781 = vpop.f32.mrf.mxu0
      %v7782 = vpop.f32.mrf.mxu0
      %7783 = vdwg.mxu0
      %v7790 = vunpack.c.l.b16 %v7264
      %v7791 = vunpack.c.h.b16 %v7264
      %v7792 = vunpack.c.l.b16 %v7265
      %v7793 = vunpack.c.l.b16 %v7266
      %v7794 = vunpack.c.h.b16 %v7266
      %v7795 = vunpack.c.l.b16 %v7267
      %v7796 = vunpack.c.l.b16 %v7268
      %v7797 = vunpack.c.h.b16 %v7268
      %v7798 = vunpack.c.l.b16 %v7269
      %v7799 = vpack.c.b16 %v7793, %v7790
      %v7800 = vpack.c.b16 %v7794, %v7791
      %v7801 = vpack.c.b16 %v7795, %v7792
      %v7802 = vpack.c.b16 %v7414, %v7796
      %v7803 = vpack.c.b16 %v7415, %v7797
      %v7804 = vpack.c.b16 %v7416, %v7798
      %v7805 = vpack.c.b16 %v7420, %v7417
      %v7806 = vpack.c.b16 %v7421, %v7418
      %v7807 = vpack.c.b16 %v7422, %v7419
      %v7808 = vpack.c.b16 %v7426, %v7423
      %v7809 = vpack.c.b16 %v7427, %v7424
      %v7810 = vpack.c.b16 %v7428, %v7425
      %v7811 = vpack.c.b16 %v7432, %v7429
      %v7812 = vpack.c.b16 %v7433, %v7430
      %v7813 = vpack.c.b16 %v7434, %v7431
      %v7814 = vpack.c.b16 %v7438, %v7435
      %v7815 = vpack.c.b16 %v7439, %v7436
      %v7816 = vpack.c.b16 %v7440, %v7437
      %v7883 = vunpack.c.l.b16 %v7288
      %v7884 = vunpack.c.l.b16 %v7289
      %v7885 = vunpack.c.l.b16 %v7290
      %v7886 = vunpack.c.l.b16 %v7291
      %v7887 = vunpack.c.l.b16 %v7292
      %v7888 = vunpack.c.l.b16 %v7293
      %v7889 = vunpack.c.l.b16 %v7294
      %v7890 = vunpack.c.l.b16 %v7295
      %v7891 = vunpack.c.l.b16 %v7296
      %v7892 = vunpack.c.l.b16 %v7297
      %v7893 = vunpack.c.l.b16 %v7298
      %v7894 = vunpack.c.l.b16 %v7299
      %v7895 = vunpack.c.l.b16 %v7300
      %v7896 = vunpack.c.l.b16 %v7301
      %v7897 = vunpack.c.l.b16 %v7302
      %v7898 = vunpack.c.l.b16 %v7303
      %v7899 = vunpack.c.l.b16 %v7304
      %v7900 = vunpack.c.l.b16 %v7305
      %v7901 = vunpack.c.l.b16 %v7306
      %v7902 = vunpack.c.l.b16 %v7307
      %v7903 = vunpack.c.l.b16 %v7308
      %v7904 = vunpack.c.l.b16 %v7309
      %v7905 = vunpack.c.l.b16 %v7310
      %v7906 = vunpack.c.l.b16 %v7311
      %v7907 = vunpack.c.l.b16 %v7312
      %v7908 = vunpack.c.l.b16 %v7313
      %v7909 = vunpack.c.l.b16 %v7314
      %v7910 = vunpack.c.l.b16 %v7315
      %v7911 = vunpack.c.l.b16 %v7316
      %v7912 = vunpack.c.l.b16 %v7317
      %v7913 = vunpack.c.l.b16 %v7318
      %v7914 = vunpack.c.l.b16 %v7319
      %v7915 = vunpack.c.l.b16 %v7320
      %v7916 = vunpack.c.l.b16 %v7321
      %v7917 = vunpack.c.l.b16 %v7322
      %v7918 = vunpack.c.l.b16 %v7323
      %v7919 = vunpack.c.l.b16 %v7324
      %v7920 = vunpack.c.l.b16 %v7325
      %v7921 = vunpack.c.l.b16 %v7326
      %v7922 = vunpack.c.l.b16 %v7327
      %v7923 = vunpack.c.l.b16 %v7328
      %v7924 = vunpack.c.l.b16 %v7329
      %v7925 = vunpack.c.l.b16 %v7330
      %v7926 = vunpack.c.l.b16 %v7331
      %v7927 = vunpack.c.l.b16 %v7332
      %v7928 = vunpack.c.l.b16 %v7333
      %v7929 = vunpack.c.l.b16 %v7334
      %v7930 = vunpack.c.l.b16 %v7335
      %v7931 = vpack.c.b16 %v7884, %v7883
      %v7932 = vpack.c.b16 %v7886, %v7885
      %v7933 = vpack.c.b16 %v7888, %v7887
      %v7934 = vpack.c.b16 %v7890, %v7889
      %v7935 = vpack.c.b16 %v7892, %v7891
      %v7936 = vpack.c.b16 %v7894, %v7893
      %v7937 = vpack.c.b16 %v7896, %v7895
      %v7938 = vpack.c.b16 %v7898, %v7897
      %v7939 = vpack.c.b16 %v7900, %v7899
      %v7940 = vpack.c.b16 %v7902, %v7901
      %v7941 = vpack.c.b16 %v7904, %v7903
      %v7942 = vpack.c.b16 %v7906, %v7905
      %v7943 = vpack.c.b16 %v7908, %v7907
      %v7944 = vpack.c.b16 %v7910, %v7909
      %v7945 = vpack.c.b16 %v7912, %v7911
      %v7946 = vpack.c.b16 %v7914, %v7913
      %v7947 = vpack.c.b16 %v7916, %v7915
      %v7948 = vpack.c.b16 %v7918, %v7917
      %v7949 = vpack.c.b16 %v7920, %v7919
      %v7950 = vpack.c.b16 %v7922, %v7921
      %v7951 = vpack.c.b16 %v7924, %v7923
      %v7952 = vpack.c.b16 %v7926, %v7925
      %v7953 = vpack.c.b16 %v7928, %v7927
      %v7954 = vpack.c.b16 %v7930, %v7929
      %7979 = vmatprep.subr.bf16.mxu0 0
      %7980 = vmatpush1.bf16.msra.mxu0 %v7938
      %7981 = vmatprep.subr.bf16.mxu0 0
      %7982 = vmatpush1.bf16.msra.mxu0 %v7937
      %7983 = vmatprep.subr.bf16.mxu0 0
      %7984 = vmatpush1.bf16.msra.mxu0 %v7936
      %7985 = vmatprep.subr.bf16.mxu0 0
      %7986 = vmatpush1.bf16.msra.mxu0 %v7935
      %7987 = vmatprep.subr.bf16.mxu0 0
      %7988 = vmatpush1.bf16.msra.mxu0 %v7934
      %7989 = vmatprep.subr.bf16.mxu0 0
      %7990 = vmatpush1.bf16.msra.mxu0 %v7933
      %7991 = vmatprep.subr.bf16.mxu0 0
      %7992 = vmatpush1.bf16.msra.mxu0 %v7932
      %7993 = vmatprep.subr.bf16.mxu0 0
      %7994 = vmatpush1.bf16.msra.mxu0 %v7931
      %7995 = vmatprep.subr.bf16.mxu0 0
      %7996 = vmatpush2.bf16.msra.mxu0 %v7946
      %7997 = vmatprep.subr.bf16.mxu0 0
      %7998 = vmatpush2.bf16.msra.mxu0 %v7945
      %7999 = vmatprep.subr.bf16.mxu0 0
      %8000 = vmatpush2.bf16.msra.mxu0 %v7944
      %8001 = vmatprep.subr.bf16.mxu0 0
      %8002 = vmatpush2.bf16.msra.mxu0 %v7943
      %8003 = vmatprep.subr.bf16.mxu0 0
      %8004 = vmatpush2.bf16.msra.mxu0 %v7942
      %8005 = vmatprep.subr.bf16.mxu0 0
      %8006 = vmatpush2.bf16.msra.mxu0 %v7941
      %8007 = vmatprep.subr.bf16.mxu0 0
      %8008 = vmatpush2.bf16.msra.mxu0 %v7940
      %8009 = vmatprep.subr.bf16.mxu0 0
      %8010 = vmatpush2.bf16.msra.mxu0 %v7939
      %8011 = vmatprep.mubr.bf16.mxu0 %v7800
      %8012 = vmatmul.mubr.bf16.gmra.mxu0 %v7799
      %v8013 = vpop.f32.mrf.mxu0
      %v8014 = vadd.f32 %v7742, %v8013
      %v8015 = vpop.f32.mrf.mxu0
      %v8016 = vpop.f32.mrf.mxu0
      %v8017 = vadd.f32 %v7745, %v8016
      %v8018 = vpop.f32.mrf.mxu0
      %8019 = vmatprep.mubr.bf16.mxu0 %v7803
      %8020 = vmatmul.mubr.bf16.gmra.mxu0 %v7802
      %v8021 = vpop.f32.mrf.mxu0
      %v8022 = vpop.f32.mrf.mxu0
      %v8023 = vpop.f32.mrf.mxu0
      %v8024 = vadd.f32 %v7752, %v8023
      %v8025 = vpop.f32.mrf.mxu0
      %8026 = vmatprep.mubr.bf16.mxu0 %v7806
      %8027 = vmatmul.mubr.bf16.gmra.mxu0 %v7805
      %v8028 = vpop.f32.mrf.mxu0
      %v8029 = vadd.f32 %v7757, %v8028
      %v8030 = vpop.f32.mrf.mxu0
      %v8031 = vpop.f32.mrf.mxu0
      %v8032 = vpop.f32.mrf.mxu0
      %8033 = vmatprep.mubr.bf16.mxu0 %v7809
      %8034 = vmatmul.mubr.bf16.gmra.mxu0 %v7808
      %v8035 = vpop.f32.mrf.mxu0
      %v8036 = vadd.f32 %v7764, %v8035
      %v8037 = vpop.f32.mrf.mxu0
      %v8038 = vpop.f32.mrf.mxu0
      %v8039 = vadd.f32 %v7767, %v8038
      %v8040 = vpop.f32.mrf.mxu0
      %8041 = vmatprep.mubr.bf16.mxu0 %v7812
      %8042 = vmatmul.mubr.bf16.gmra.mxu0 %v7811
      %v8043 = vpop.f32.mrf.mxu0
      %v8044 = vpop.f32.mrf.mxu0
      %v8045 = vpop.f32.mrf.mxu0
      %v8046 = vadd.f32 %v7774, %v8045
      %v8047 = vpop.f32.mrf.mxu0
      %8048 = vmatprep.mubr.bf16.mxu0 %v7815
      %8049 = vmatmul.mubr.bf16.gmra.mxu0 %v7814
      %v8050 = vpop.f32.mrf.mxu0
      %v8051 = vadd.f32 %v7779, %v8050
      %v8052 = vpop.f32.mrf.mxu0
      %v8053 = vpop.f32.mrf.mxu0
      %v8054 = vpop.f32.mrf.mxu0
      %8055 = vdwg.mxu0
      %8056 = vmatprep.subr.bf16.mxu0 0
      %8057 = vmatpush1.bf16.msra.mxu0 %v7954
      %8058 = vmatprep.subr.bf16.mxu0 0
      %8059 = vmatpush1.bf16.msra.mxu0 %v7953
      %8060 = vmatprep.subr.bf16.mxu0 0
      %8061 = vmatpush1.bf16.msra.mxu0 %v7952
      %8062 = vmatprep.subr.bf16.mxu0 0
      %8063 = vmatpush1.bf16.msra.mxu0 %v7951
      %8064 = vmatprep.subr.bf16.mxu0 0
      %8065 = vmatpush1.bf16.msra.mxu0 %v7950
      %8066 = vmatprep.subr.bf16.mxu0 0
      %8067 = vmatpush1.bf16.msra.mxu0 %v7949
      %8068 = vmatprep.subr.bf16.mxu0 0
      %8069 = vmatpush1.bf16.msra.mxu0 %v7948
      %8070 = vmatprep.subr.bf16.mxu0 0
      %8071 = vmatpush1.bf16.msra.mxu0 %v7947
      %8072 = vmatprep.subr.bf16.mxu0 0
      %8073 = vmatpush2.bf16.msra.mxu0 0
      %8074 = vmatprep.subr.bf16.mxu0 0
      %8075 = vmatpush2.bf16.msra.mxu0 0
      %8076 = vmatprep.subr.bf16.mxu0 0
      %8077 = vmatpush2.bf16.msra.mxu0 0
      %8078 = vmatprep.subr.bf16.mxu0 0
      %8079 = vmatpush2.bf16.msra.mxu0 0
      %8080 = vmatprep.subr.bf16.mxu0 0
      %8081 = vmatpush2.bf16.msra.mxu0 0
      %8082 = vmatprep.subr.bf16.mxu0 0
      %8083 = vmatpush2.bf16.msra.mxu0 0
      %8084 = vmatprep.subr.bf16.mxu0 0
      %8085 = vmatpush2.bf16.msra.mxu0 0
      %8086 = vmatprep.subr.bf16.mxu0 0
      %8087 = vmatpush2.bf16.msra.mxu0 0
      %8088 = vmatprep.mubr.bf16.mxu0 0
      %8089 = vmatmul.mubr.bf16.gmra.mxu0 %v7801
      %v8090 = vpop.f32.mrf.mxu0
      %v8091 = vadd.f32 %v8014, %v8090
      %v8092 = vpop.f32.mrf.mxu0
      %v8093 = vpop.f32.mrf.mxu0
      %v8094 = vadd.f32 %v8017, %v8093
      %v8095 = vpop.f32.mrf.mxu0
      %8096 = vmatprep.mubr.bf16.mxu0 0
      %8097 = vmatmul.mubr.bf16.gmra.mxu0 %v7804
      %v8098 = vpop.f32.mrf.mxu0
      %v8099 = vpop.f32.mrf.mxu0
      %v8100 = vpop.f32.mrf.mxu0
      %v8101 = vadd.f32 %v8024, %v8100
      %v8102 = vpop.f32.mrf.mxu0
      %8103 = vmatprep.mubr.bf16.mxu0 0
      %8104 = vmatmul.mubr.bf16.gmra.mxu0 %v7807
      %v8105 = vpop.f32.mrf.mxu0
      %v8106 = vadd.f32 %v8029, %v8105
      %v8107 = vpop.f32.mrf.mxu0
      %v8108 = vpop.f32.mrf.mxu0
      %v8109 = vpop.f32.mrf.mxu0
      %8110 = vmatprep.mubr.bf16.mxu0 0
      %8111 = vmatmul.mubr.bf16.gmra.mxu0 %v7810
      %v8112 = vpop.f32.mrf.mxu0
      %v8113 = vadd.f32 %v8036, %v8112
      %v8114 = vpop.f32.mrf.mxu0
      %v8115 = vpop.f32.mrf.mxu0
      %v8116 = vadd.f32 %v8039, %v8115
      %v8117 = vpop.f32.mrf.mxu0
      %8118 = vmatprep.mubr.bf16.mxu0 0
      %8119 = vmatmul.mubr.bf16.gmra.mxu0 %v7813
      %v8120 = vpop.f32.mrf.mxu0
      %v8121 = vpop.f32.mrf.mxu0
      %v8122 = vpop.f32.mrf.mxu0
      %v8123 = vadd.f32 %v8046, %v8122
      %v8124 = vpop.f32.mrf.mxu0
      %8125 = vmatprep.mubr.bf16.mxu0 0
      %8126 = vmatmul.mubr.bf16.gmra.mxu0 %v7816
      %v8127 = vpop.f32.mrf.mxu0
      %v8128 = vadd.f32 %v8051, %v8127
      %v8129 = vpop.f32.mrf.mxu0
      %v8130 = vpop.f32.mrf.mxu0
      %v8131 = vpop.f32.mrf.mxu0
      %8132 = vdwg.mxu0
      %v8133 = vld [vmem:[#allocation3 + $0xd8] sm:$0xff]
      %v8134 = vld [vmem:[#allocation3 + $0xe0] sm:$0xf]
      %v8135 = vld [vmem:[#allocation3 + $0xe4] sm:$0xff]
      %v8136 = vld [vmem:[#allocation3 + $0xec] sm:$0xf]
      %v8137 = vld [vmem:[#allocation3 + $0xf0] sm:$0xff]
      %v8138 = vld [vmem:[#allocation3 + $0xf8] sm:$0xf]
      %v8139 = vld [vmem:[#allocation3 + $0xfc] sm:$0xff]
      %v8140 = vld [vmem:[#allocation3 + $0x104] sm:$0xf]
      %v8141 = vld [vmem:[#allocation3 + $0x108] sm:$0xff]
      %v8142 = vld [vmem:[#allocation3 + $0x110] sm:$0xf]
      %v8143 = vld [vmem:[#allocation3 + $0x114] sm:$0xff]
      %v8144 = vld [vmem:[#allocation3 + $0x11c] sm:$0xf]
      %v8145 = vld [vmem:[#allocation3 + $0x120] sm:$0xff]
      %v8146 = vld [vmem:[#allocation3 + $0x128] sm:$0xf]
      %v8147 = vld [vmem:[#allocation3 + $0x12c] sm:$0xff]
      %v8148 = vld [vmem:[#allocation3 + $0x134] sm:$0xf]
      %v8149 = vld [vmem:[#allocation3 + $0x138] sm:$0xff]
      %v8150 = vld [vmem:[#allocation3 + $0x140] sm:$0xf]
      %v8151 = vld [vmem:[#allocation3 + $0x144] sm:$0xff]
      %v8152 = vld [vmem:[#allocation3 + $0x14c] sm:$0xf]
      %v8153 = vld [vmem:[#allocation3 + $0x150] sm:$0xff]
      %v8154 = vld [vmem:[#allocation3 + $0x158] sm:$0xf]
      %v8155 = vld [vmem:[#allocation3 + $0x15c] sm:$0xff]
      %v8156 = vld [vmem:[#allocation3 + $0x164] sm:$0xf]
      %v8157 = vld [vmem:[%s6782] sm:$0xf]
      %v8158 = vld [vmem:[%s6782 + $0x4] sm:$0xf]
      %v8159 = vld [vmem:[%s6782 + $0x8] sm:$0xf]
      %v8160 = vld [vmem:[%s6782 + $0xc] sm:$0xf]
      %v8161 = vld [vmem:[%s6782 + $0x10] sm:$0xf]
      %v8162 = vld [vmem:[%s6782 + $0x14] sm:$0xf]
      %v8163 = vld [vmem:[%s6782 + $0x18] sm:$0xf]
      %v8164 = vld [vmem:[%s6782 + $0x1c] sm:$0xf]
      %v8165 = vld [vmem:[%s6782 + $0x20] sm:$0xf]
      %v8166 = vld [vmem:[%s6782 + $0x24] sm:$0xf]
      %v8167 = vld [vmem:[%s6782 + $0x28] sm:$0xf]
      %v8168 = vld [vmem:[%s6782 + $0x2c] sm:$0xf]
      %v8169 = vld [vmem:[%s6782 + $0x30] sm:$0xf]
      %v8170 = vld [vmem:[%s6782 + $0x34] sm:$0xf]
      %v8171 = vld [vmem:[%s6782 + $0x38] sm:$0xf]
      %v8172 = vld [vmem:[%s6782 + $0x3c] sm:$0xf]
      %v8173 = vld [vmem:[%s6782 + $0x40] sm:$0xf]
      %v8174 = vld [vmem:[%s6782 + $0x44] sm:$0xf]
      %v8175 = vld [vmem:[%s6782 + $0x48] sm:$0xf]
      %v8176 = vld [vmem:[%s6782 + $0x4c] sm:$0xf]
      %v8177 = vld [vmem:[%s6782 + $0x50] sm:$0xf]
      %v8178 = vld [vmem:[%s6782 + $0x54] sm:$0xf]
      %v8179 = vld [vmem:[%s6782 + $0x58] sm:$0xf]
      %v8180 = vld [vmem:[%s6782 + $0x5c] sm:$0xf]
      %v8181 = vld [vmem:[%s6782 + $0x60] sm:$0xf]
      %v8182 = vld [vmem:[%s6782 + $0x64] sm:$0xf]
      %v8183 = vld [vmem:[%s6782 + $0x68] sm:$0xf]
      %v8184 = vld [vmem:[%s6782 + $0x6c] sm:$0xf]
      %v8185 = vld [vmem:[%s6782 + $0x70] sm:$0xf]
      %v8186 = vld [vmem:[%s6782 + $0x74] sm:$0xf]
      %v8187 = vld [vmem:[%s6782 + $0x78] sm:$0xf]
      %v8188 = vld [vmem:[%s6782 + $0x7c] sm:$0xf]
      %v8189 = vld [vmem:[%s6782 + $0x80] sm:$0xf]
      %v8190 = vld [vmem:[%s6782 + $0x84] sm:$0xf]
      %v8191 = vld [vmem:[%s6782 + $0x88] sm:$0xf]
      %v8192 = vld [vmem:[%s6782 + $0x8c] sm:$0xf]
      %v8193 = vld [vmem:[%s6782 + $0x90] sm:$0xf]
      %v8194 = vld [vmem:[%s6782 + $0x94] sm:$0xf]
      %v8195 = vld [vmem:[%s6782 + $0x98] sm:$0xf]
      %v8196 = vld [vmem:[%s6782 + $0x9c] sm:$0xf]
      %v8197 = vld [vmem:[%s6782 + $0xa0] sm:$0xf]
      %v8198 = vld [vmem:[%s6782 + $0xa4] sm:$0xf]
      %v8199 = vld [vmem:[%s6782 + $0xa8] sm:$0xf]
      %v8200 = vld [vmem:[%s6782 + $0xac] sm:$0xf]
      %v8201 = vld [vmem:[%s6782 + $0xb0] sm:$0xf]
      %v8202 = vld [vmem:[%s6782 + $0xb4] sm:$0xf]
      %v8203 = vld [vmem:[%s6782 + $0xb8] sm:$0xf]
      %v8204 = vld [vmem:[%s6782 + $0xbc] sm:$0xf]
      %v8229 = vunpack.c.l.b16 %v8133
      %v8230 = vunpack.c.h.b16 %v8133
      %v8231 = vunpack.c.l.b16 %v8134
      %v8232 = vunpack.c.l.b16 %v8135
      %v8233 = vunpack.c.h.b16 %v8135
      %v8234 = vunpack.c.l.b16 %v8136
      %v8235 = vunpack.c.l.b16 %v8137
      %v8236 = vunpack.c.h.b16 %v8137
      %v8237 = vunpack.c.l.b16 %v8138
      %v8238 = vunpack.c.l.b16 %v8139
      %v8239 = vunpack.c.h.b16 %v8139
      %v8240 = vunpack.c.l.b16 %v8140
      %v8241 = vunpack.c.l.b16 %v8141
      %v8242 = vunpack.c.h.b16 %v8141
      %v8243 = vunpack.c.l.b16 %v8142
      %v8244 = vunpack.c.l.b16 %v8143
      %v8245 = vunpack.c.h.b16 %v8143
      %v8246 = vunpack.c.l.b16 %v8144
      %v8247 = vunpack.c.l.b16 %v8145
      %v8248 = vunpack.c.h.b16 %v8145
      %v8249 = vunpack.c.l.b16 %v8146
      %v8250 = vunpack.c.l.b16 %v8147
      %v8251 = vunpack.c.h.b16 %v8147
      %v8252 = vunpack.c.l.b16 %v8148
      %v8253 = vunpack.c.l.b16 %v8149
      %v8254 = vunpack.c.h.b16 %v8149
      %v8255 = vunpack.c.l.b16 %v8150
      %v8256 = vunpack.c.l.b16 %v8151
      %v8257 = vunpack.c.h.b16 %v8151
      %v8258 = vunpack.c.l.b16 %v8152
      %v8259 = vunpack.c.l.b16 %v8153
      %v8260 = vunpack.c.h.b16 %v8153
      %v8261 = vunpack.c.l.b16 %v8154
      %v8262 = vunpack.c.l.b16 %v8155
      %v8263 = vunpack.c.h.b16 %v8155
      %v8264 = vunpack.c.l.b16 %v8156
      %v8265 = vpack.c.b16 %v8232, %v8229
      %v8266 = vpack.c.b16 %v8233, %v8230
      %v8267 = vpack.c.b16 %v8234, %v8231
      %v8268 = vpack.c.b16 %v8238, %v8235
      %v8269 = vpack.c.b16 %v8239, %v8236
      %v8270 = vpack.c.b16 %v8240, %v8237
      %v8271 = vpack.c.b16 %v8244, %v8241
      %v8272 = vpack.c.b16 %v8245, %v8242
      %v8273 = vpack.c.b16 %v8246, %v8243
      %v8274 = vpack.c.b16 %v8250, %v8247
      %v8275 = vpack.c.b16 %v8251, %v8248
      %v8276 = vpack.c.b16 %v8252, %v8249
      %v8277 = vpack.c.b16 %v8256, %v8253
      %v8278 = vpack.c.b16 %v8257, %v8254
      %v8279 = vpack.c.b16 %v8258, %v8255
      %v8280 = vpack.c.b16 %v8262, %v8259
      %v8281 = vpack.c.b16 %v8263, %v8260
      %v8282 = vpack.c.b16 %v8264, %v8261
      %v8349 = vunpack.c.l.b16 %v8157
      %v8350 = vunpack.c.l.b16 %v8158
      %v8351 = vunpack.c.l.b16 %v8159
      %v8352 = vunpack.c.l.b16 %v8160
      %v8353 = vunpack.c.l.b16 %v8161
      %v8354 = vunpack.c.l.b16 %v8162
      %v8355 = vunpack.c.l.b16 %v8163
      %v8356 = vunpack.c.l.b16 %v8164
      %v8357 = vunpack.c.l.b16 %v8165
      %v8358 = vunpack.c.l.b16 %v8166
      %v8359 = vunpack.c.l.b16 %v8167
      %v8360 = vunpack.c.l.b16 %v8168
      %v8361 = vunpack.c.l.b16 %v8169
      %v8362 = vunpack.c.l.b16 %v8170
      %v8363 = vunpack.c.l.b16 %v8171
      %v8364 = vunpack.c.l.b16 %v8172
      %v8365 = vunpack.c.l.b16 %v8173
      %v8366 = vunpack.c.l.b16 %v8174
      %v8367 = vunpack.c.l.b16 %v8175
      %v8368 = vunpack.c.l.b16 %v8176
      %v8369 = vunpack.c.l.b16 %v8177
      %v8370 = vunpack.c.l.b16 %v8178
      %v8371 = vunpack.c.l.b16 %v8179
      %v8372 = vunpack.c.l.b16 %v8180
      %v8373 = vunpack.c.l.b16 %v8181
      %v8374 = vunpack.c.l.b16 %v8182
      %v8375 = vunpack.c.l.b16 %v8183
      %v8376 = vunpack.c.l.b16 %v8184
      %v8377 = vunpack.c.l.b16 %v8185
      %v8378 = vunpack.c.l.b16 %v8186
      %v8379 = vunpack.c.l.b16 %v8187
      %v8380 = vunpack.c.l.b16 %v8188
      %v8381 = vunpack.c.l.b16 %v8189
      %v8382 = vunpack.c.l.b16 %v8190
      %v8383 = vunpack.c.l.b16 %v8191
      %v8384 = vunpack.c.l.b16 %v8192
      %v8385 = vunpack.c.l.b16 %v8193
      %v8386 = vunpack.c.l.b16 %v8194
      %v8387 = vunpack.c.l.b16 %v8195
      %v8388 = vunpack.c.l.b16 %v8196
      %v8389 = vunpack.c.l.b16 %v8197
      %v8390 = vunpack.c.l.b16 %v8198
      %v8391 = vunpack.c.l.b16 %v8199
      %v8392 = vunpack.c.l.b16 %v8200
      %v8393 = vunpack.c.l.b16 %v8201
      %v8394 = vunpack.c.l.b16 %v8202
      %v8395 = vunpack.c.l.b16 %v8203
      %v8396 = vunpack.c.l.b16 %v8204
      %v8397 = vpack.c.b16 %v8350, %v8349
      %v8398 = vpack.c.b16 %v8352, %v8351
      %v8399 = vpack.c.b16 %v8354, %v8353
      %v8400 = vpack.c.b16 %v8356, %v8355
      %v8401 = vpack.c.b16 %v8358, %v8357
      %v8402 = vpack.c.b16 %v8360, %v8359
      %v8403 = vpack.c.b16 %v8362, %v8361
      %v8404 = vpack.c.b16 %v8364, %v8363
      %v8405 = vpack.c.b16 %v8366, %v8365
      %v8406 = vpack.c.b16 %v8368, %v8367
      %v8407 = vpack.c.b16 %v8370, %v8369
      %v8408 = vpack.c.b16 %v8372, %v8371
      %v8409 = vpack.c.b16 %v8374, %v8373
      %v8410 = vpack.c.b16 %v8376, %v8375
      %v8411 = vpack.c.b16 %v8378, %v8377
      %v8412 = vpack.c.b16 %v8380, %v8379
      %v8413 = vpack.c.b16 %v8382, %v8381
      %v8414 = vpack.c.b16 %v8384, %v8383
      %v8415 = vpack.c.b16 %v8386, %v8385
      %v8416 = vpack.c.b16 %v8388, %v8387
      %v8417 = vpack.c.b16 %v8390, %v8389
      %v8418 = vpack.c.b16 %v8392, %v8391
      %v8419 = vpack.c.b16 %v8394, %v8393
      %v8420 = vpack.c.b16 %v8396, %v8395
      %8445 = vmatprep.subr.bf16.mxu0 0
      %8446 = vmatpush1.bf16.msra.mxu0 %v8404
      %8447 = vmatprep.subr.bf16.mxu0 0
      %8448 = vmatpush1.bf16.msra.mxu0 %v8403
      %8449 = vmatprep.subr.bf16.mxu0 0
      %8450 = vmatpush1.bf16.msra.mxu0 %v8402
      %8451 = vmatprep.subr.bf16.mxu0 0
      %8452 = vmatpush1.bf16.msra.mxu0 %v8401
      %8453 = vmatprep.subr.bf16.mxu0 0
      %8454 = vmatpush1.bf16.msra.mxu0 %v8400
      %8455 = vmatprep.subr.bf16.mxu0 0
      %8456 = vmatpush1.bf16.msra.mxu0 %v8399
      %8457 = vmatprep.subr.bf16.mxu0 0
      %8458 = vmatpush1.bf16.msra.mxu0 %v8398
      %8459 = vmatprep.subr.bf16.mxu0 0
      %8460 = vmatpush1.bf16.msra.mxu0 %v8397
      %8461 = vmatprep.subr.bf16.mxu0 0
      %8462 = vmatpush2.bf16.msra.mxu0 %v8412
      %8463 = vmatprep.subr.bf16.mxu0 0
      %8464 = vmatpush2.bf16.msra.mxu0 %v8411
      %8465 = vmatprep.subr.bf16.mxu0 0
      %8466 = vmatpush2.bf16.msra.mxu0 %v8410
      %8467 = vmatprep.subr.bf16.mxu0 0
      %8468 = vmatpush2.bf16.msra.mxu0 %v8409
      %8469 = vmatprep.subr.bf16.mxu0 0
      %8470 = vmatpush2.bf16.msra.mxu0 %v8408
      %8471 = vmatprep.subr.bf16.mxu0 0
      %8472 = vmatpush2.bf16.msra.mxu0 %v8407
      %8473 = vmatprep.subr.bf16.mxu0 0
      %8474 = vmatpush2.bf16.msra.mxu0 %v8406
      %8475 = vmatprep.subr.bf16.mxu0 0
      %8476 = vmatpush2.bf16.msra.mxu0 %v8405
      %8477 = vmatprep.mubr.bf16.mxu0 %v8266
      %8478 = vmatmul.mubr.bf16.gmra.mxu0 %v8265
      %v8479 = vpop.f32.mrf.mxu0
      %v8480 = vadd.f32 0.0, %v8479
      %v8481 = vpop.f32.mrf.mxu0
      %v8482 = vpop.f32.mrf.mxu0
      %v8483 = vadd.f32 0.0, %v8482
      %v8484 = vpop.f32.mrf.mxu0
      %8485 = vmatprep.mubr.bf16.mxu0 %v8269
      %8486 = vmatmul.mubr.bf16.gmra.mxu0 %v8268
      %v8487 = vpop.f32.mrf.mxu0
      %v8488 = vpop.f32.mrf.mxu0
      %v8489 = vpop.f32.mrf.mxu0
      %v8490 = vadd.f32 0.0, %v8489
      %v8491 = vpop.f32.mrf.mxu0
      %8492 = vmatprep.mubr.bf16.mxu0 %v8272
      %8493 = vmatmul.mubr.bf16.gmra.mxu0 %v8271
      %v8494 = vpop.f32.mrf.mxu0
      %v8495 = vadd.f32 0.0, %v8494
      %v8496 = vpop.f32.mrf.mxu0
      %v8497 = vpop.f32.mrf.mxu0
      %v8498 = vpop.f32.mrf.mxu0
      %8499 = vmatprep.mubr.bf16.mxu0 %v8275
      %8500 = vmatmul.mubr.bf16.gmra.mxu0 %v8274
      %v8501 = vpop.f32.mrf.mxu0
      %v8502 = vadd.f32 0.0, %v8501
      %v8503 = vpop.f32.mrf.mxu0
      %v8504 = vpop.f32.mrf.mxu0
      %v8505 = vadd.f32 0.0, %v8504
      %v8506 = vpop.f32.mrf.mxu0
      %8507 = vmatprep.mubr.bf16.mxu0 %v8278
      %8508 = vmatmul.mubr.bf16.gmra.mxu0 %v8277
      %v8509 = vpop.f32.mrf.mxu0
      %v8510 = vpop.f32.mrf.mxu0
      %v8511 = vpop.f32.mrf.mxu0
      %v8512 = vadd.f32 0.0, %v8511
      %v8513 = vpop.f32.mrf.mxu0
      %8514 = vmatprep.mubr.bf16.mxu0 %v8281
      %8515 = vmatmul.mubr.bf16.gmra.mxu0 %v8280
      %v8516 = vpop.f32.mrf.mxu0
      %v8517 = vadd.f32 0.0, %v8516
      %v8518 = vpop.f32.mrf.mxu0
      %v8519 = vpop.f32.mrf.mxu0
      %v8520 = vpop.f32.mrf.mxu0
      %8521 = vdwg.mxu0
      %8522 = vmatprep.subr.bf16.mxu0 0
      %8523 = vmatpush1.bf16.msra.mxu0 %v8420
      %8524 = vmatprep.subr.bf16.mxu0 0
      %8525 = vmatpush1.bf16.msra.mxu0 %v8419
      %8526 = vmatprep.subr.bf16.mxu0 0
      %8527 = vmatpush1.bf16.msra.mxu0 %v8418
      %8528 = vmatprep.subr.bf16.mxu0 0
      %8529 = vmatpush1.bf16.msra.mxu0 %v8417
      %8530 = vmatprep.subr.bf16.mxu0 0
      %8531 = vmatpush1.bf16.msra.mxu0 %v8416
      %8532 = vmatprep.subr.bf16.mxu0 0
      %8533 = vmatpush1.bf16.msra.mxu0 %v8415
      %8534 = vmatprep.subr.bf16.mxu0 0
      %8535 = vmatpush1.bf16.msra.mxu0 %v8414
      %8536 = vmatprep.subr.bf16.mxu0 0
      %8537 = vmatpush1.bf16.msra.mxu0 %v8413
      %8538 = vmatprep.subr.bf16.mxu0 0
      %8539 = vmatpush2.bf16.msra.mxu0 0
      %8540 = vmatprep.subr.bf16.mxu0 0
      %8541 = vmatpush2.bf16.msra.mxu0 0
      %8542 = vmatprep.subr.bf16.mxu0 0
      %8543 = vmatpush2.bf16.msra.mxu0 0
      %8544 = vmatprep.subr.bf16.mxu0 0
      %8545 = vmatpush2.bf16.msra.mxu0 0
      %8546 = vmatprep.subr.bf16.mxu0 0
      %8547 = vmatpush2.bf16.msra.mxu0 0
      %8548 = vmatprep.subr.bf16.mxu0 0
      %8549 = vmatpush2.bf16.msra.mxu0 0
      %8550 = vmatprep.subr.bf16.mxu0 0
      %8551 = vmatpush2.bf16.msra.mxu0 0
      %8552 = vmatprep.subr.bf16.mxu0 0
      %8553 = vmatpush2.bf16.msra.mxu0 0
      %8554 = vmatprep.mubr.bf16.mxu0 0
      %8555 = vmatmul.mubr.bf16.gmra.mxu0 %v8267
      %v8556 = vpop.f32.mrf.mxu0
      %v8557 = vadd.f32 %v8480, %v8556
      %v8558 = vpop.f32.mrf.mxu0
      %v8559 = vpop.f32.mrf.mxu0
      %v8560 = vadd.f32 %v8483, %v8559
      %v8561 = vpop.f32.mrf.mxu0
      %8562 = vmatprep.mubr.bf16.mxu0 0
      %8563 = vmatmul.mubr.bf16.gmra.mxu0 %v8270
      %v8564 = vpop.f32.mrf.mxu0
      %v8565 = vpop.f32.mrf.mxu0
      %v8566 = vpop.f32.mrf.mxu0
      %v8567 = vadd.f32 %v8490, %v8566
      %v8568 = vpop.f32.mrf.mxu0
      %8569 = vmatprep.mubr.bf16.mxu0 0
      %8570 = vmatmul.mubr.bf16.gmra.mxu0 %v8273
      %v8571 = vpop.f32.mrf.mxu0
      %v8572 = vadd.f32 %v8495, %v8571
      %v8573 = vpop.f32.mrf.mxu0
      %v8574 = vpop.f32.mrf.mxu0
      %v8575 = vpop.f32.mrf.mxu0
      %8576 = vmatprep.mubr.bf16.mxu0 0
      %8577 = vmatmul.mubr.bf16.gmra.mxu0 %v8276
      %v8578 = vpop.f32.mrf.mxu0
      %v8579 = vadd.f32 %v8502, %v8578
      %v8580 = vpop.f32.mrf.mxu0
      %v8581 = vpop.f32.mrf.mxu0
      %v8582 = vadd.f32 %v8505, %v8581
      %v8583 = vpop.f32.mrf.mxu0
      %8584 = vmatprep.mubr.bf16.mxu0 0
      %8585 = vmatmul.mubr.bf16.gmra.mxu0 %v8279
      %v8586 = vpop.f32.mrf.mxu0
      %v8587 = vpop.f32.mrf.mxu0
      %v8588 = vpop.f32.mrf.mxu0
      %v8589 = vadd.f32 %v8512, %v8588
      %v8590 = vpop.f32.mrf.mxu0
      %8591 = vmatprep.mubr.bf16.mxu0 0
      %8592 = vmatmul.mubr.bf16.gmra.mxu0 %v8282
      %v8593 = vpop.f32.mrf.mxu0
      %v8594 = vadd.f32 %v8517, %v8593
      %v8595 = vpop.f32.mrf.mxu0
      %v8596 = vpop.f32.mrf.mxu0
      %v8597 = vpop.f32.mrf.mxu0
      %8598 = vdwg.mxu0
      %v8599 = vadd.f32 %v8091, %v8557
      %v8600 = vadd.f32 %v8094, %v8560
      %v8601 = vadd.f32 %v8101, %v8567
      %v8602 = vadd.f32 %v8106, %v8572
      %v8603 = vadd.f32 %v8113, %v8579
      %v8604 = vadd.f32 %v8116, %v8582
      %v8605 = vadd.f32 %v8123, %v8589
      %v8606 = vadd.f32 %v8128, %v8594
      %v8607 = vld [vmem:[%s5] sm:$0x1]
      %v8609 = vlaneseq
      %v8610 = vshrl.u32 %v8609, 7
      %v8611 = vsub.s32 0, %v8610
      %v8612 = vrot.slane %v8607, %v8611
      %v8614 = vadd.f32 %v8599, %v8612
      %v8615 = vadd.f32 %v8600, %v8612
      %v8616 = vadd.f32 %v8601, %v8612
      %v8617 = vadd.f32 %v8602, %v8612
      %v8618 = vadd.f32 %v8603, %v8612
      %v8619 = vadd.f32 %v8604, %v8612
      %v8620 = vadd.f32 %v8605, %v8612
      %v8621 = vadd.f32 %v8606, %v8612
      %v8622 = vmax.f32 %v8614, 0.0
      %v8623 = vmax.f32 %v8615, 0.0
      %v8624 = vmax.f32 %v8616, 0.0
      %v8625 = vmax.f32 %v8617, 0.0
      %v8626 = vmax.f32 %v8618, 0.0
      %v8627 = vmax.f32 %v8619, 0.0
      %v8628 = vmax.f32 %v8620, 0.0
      %v8629 = vmax.f32 %v8621, 0.0
      %s8630 = scalar_lea.vmem %s372, 64
      %8631 = vst [vmem:[%s8630] sm:$0xff] %v8622
      %8632 = vst [vmem:[%s8630 + $0x8] sm:$0xff] %v8623
      %8633 = vst [vmem:[%s8630 + $0x10] sm:$0xff] %v8624
      %8634 = vst [vmem:[%s8630 + $0x18] sm:$0xff] %v8625
      %8635 = vst [vmem:[%s8630 + $0x20] sm:$0xff] %v8626
      %8636 = vst [vmem:[%s8630 + $0x28] sm:$0xff] %v8627
      %8637 = vst [vmem:[%s8630 + $0x30] sm:$0xff] %v8628
      %8638 = vst [vmem:[%s8630 + $0x38] sm:$0xff] %v8629
      %s8639 = smul.u32 8, %s22
      %p8640 = scmp.lt.s32.totalorder %s21, 1
      %s8641 = scalar_select %p8640, %s21, 1
      %p8642 = scmp.lt.s32.totalorder %s8639, 15
      %s8643 = scalar_select %p8642, %s8639, 15
      %s8644 = smul.addr %s8643, 2
      %s8645 = smul.addr %s8641, 32
      %s8646 = sadd.s32 %s8644, %s8645
      %s8647 = smul.addr %s8646, 8
      %s8648 = scalar_lea.vmem %s6, %s8647
      // Predicated region
      $region45: #{up_forward.1} parent=43 // pred_check
        %p8649 = pneg %p193
      $region46: #{up_forward.1} parent=43 // pred_check_branch
        %8651 = sbr.rel (%p8649) target = $region48
      $region47: #{up_forward.1} parent=43 // pred_region
        %s8652 = smul.u32 8, %s22
      $region48: #{up_forward.1} parent=43 // pred_fallthru
        _
    $region44: #{up_forward.1} parent=5 // pred_fallthru
      _
    %p8653 = scmp.le.s32.totalorder 2, %s12
    // Predicated region
    $region49: #{up_forward.1} parent=5 // pred_check
      %p8654 = pneg %p8653
    $region50: #{up_forward.1} parent=5 // pred_check_branch
      %8656 = sbr.rel (%p8654) target = $region52
    $region51: #{up_forward.1} parent=5 // pred_region
      %s8657 = ssub.s32 %s12, 2
      // Predicated region
      $region53: #{up_forward.1} parent=51 // pred_check
        %p8658 = pneg %p199
      $region54: #{up_forward.1} parent=51 // pred_check_branch
        %8660 = sbr.rel (%p8658) target = $region56
      $region55: #{up_forward.1} parent=51 // pred_region
        %s8661 = smul.u32 8, %s24
        %p8662 = scmp.lt.s32.totalorder %s23, 1
        %s8663 = scalar_select %p8662, %s23, 1
        %p8664 = scmp.lt.s32.totalorder %s8661, 15
        %s8665 = scalar_select %p8664, %s8661, 15
        %s8666 = smul.addr %s8665, 2
        %s8667 = smul.addr %s8663, 32
        %s8668 = sadd.s32 %s8666, %s8667
        %s8669 = smul.addr %s8668, 8
        %s8670 = scalar_lea.vmem %s6, %s8669
      $region56: #{up_forward.1} parent=51 // pred_fallthru
        _
    $region52: #{up_forward.1} parent=5 // pred_fallthru
      _
  $region6: #{up_forward.1} parent=0 // loop_footer
    %s16 = sadd.s32 1, %s12
  $region7: #{up_forward.1} parent=0 // loop_footer_branch
    %11 = sbr.rel target = $region3
  $region8: #{up_forward.1} parent=0 // loop_exit
    _

</llo_original>
